<compile_context>
chip_gen: v7x
topology: tpu7x:2x2x1
jax: 0.10.0
libtpu: 0.0.40
codegen_flags: <defaults>
</compile_context>

<pallas_src>
import functools

import jax
import jax.numpy as jnp
from jax import lax
from jax.experimental import pallas as pl
from jax.experimental.pallas import tpu as pltpu

KSIZE = 5
STRIDE = 2


def _conv_out(size):
    return (size - (KSIZE - 1) - 1) // STRIDE + 1


# ---------------------------------------------------------------------------
# Fused kernel: one grid step == NB batch samples through the whole network.
# ---------------------------------------------------------------------------
def _dqn_kernel(x_ref, sel1_ref, w1_ref, s1_ref, sel2_ref, w2_ref, s2_ref,
                sel3_ref, w3_ref, s3_ref, selh_ref, wh_ref, bh_ref, o_ref,
                *, dims, nb):
    f32 = jnp.float32

    def conv_bn_relu(act, sel_ref, w_ref, s_ref, layer_dims):
        H, W, cin, cout = layer_dims
        OH = _conv_out(H)
        M = nb * OH
        # One block-diagonal 0/1 matmul performs the stride-2 row sampling for
        # all KSIZE kernel-row offsets and all NB stacked samples at once.
        # It is exact for bf16 inputs (each output row copies one input row).
        rows = jnp.dot(sel_ref[...], act, preferred_element_type=f32)
        rows = rows.astype(w_ref.dtype)
        acc = None
        for kh in range(KSIZE):
            term = jnp.dot(rows[kh * M:(kh + 1) * M, :], w_ref[kh],
                           preferred_element_type=f32)
            acc = term if acc is None else acc + term
        # Folded conv-bias + BatchNorm shift and ReLU in f32 (VPU work stays
        # f32); cast back to the MXU operand dtype only for the next layer.
        return jnp.maximum(acc + s_ref[...], 0.0).astype(w_ref.dtype)

    act = x_ref[...]                                   # (NB*H0, W0*C0)
    act = conv_bn_relu(act, sel1_ref, w1_ref, s1_ref, dims[0])
    act = conv_bn_relu(act, sel2_ref, w2_ref, s2_ref, dims[1])
    act = conv_bn_relu(act, sel3_ref, w3_ref, s3_ref, dims[2])

    # Linear head:  out[b] = bias + sum_h act[b*OH3 + h, :] @ wh[h]
    # (PyTorch's NCHW flatten order is baked into the precomputed wh.)
    OH3 = _conv_out(dims[2][0])
    acc = None
    for hh in range(OH3):
        rows_h = jnp.dot(selh_ref[hh], act, preferred_element_type=f32)
        term = jnp.dot(rows_h.astype(wh_ref.dtype), wh_ref[hh],
                       preferred_element_type=f32)
        acc = term if acc is None else acc + term
    o_ref[...] = (acc + bh_ref[...]).astype(o_ref.dtype)   # bias once/sample


# ---------------------------------------------------------------------------
# One-time parameter preprocessing (runs once per parameter set, not per call)
# ---------------------------------------------------------------------------
def prepare_params(params, h, w, *, nb=8, param_dtype=jnp.bfloat16, eps=1e-5):
    def conv_operands(layer, H, W):
        conv_w, conv_b, gamma, beta, mean, var = layer
        cout, cin, k, _ = conv_w.shape
        assert k == KSIZE
        OH, OW = _conv_out(H), _conv_out(W)
        scale = gamma / jnp.sqrt(var + eps)
        wf = conv_w * scale[:, None, None, None]          # BN scale folded in
        shift = (conv_b - mean) * scale + beta

        # Banded weight: wband[kh, w*cin+ci, ow*cout+co] = wf[co,ci,kh,w-2*ow]
        # (zero outside the 5-wide band).  One matmul per kh applies the
        # kw/cin window and the channel projection at once.
        w_idx = jnp.arange(W)[None, :, None]
        ow_idx = jnp.arange(OW)[None, None, :]
        kw_idx = jnp.arange(KSIZE)[:, None, None]
        band = (w_idx == STRIDE * ow_idx + kw_idx).astype(jnp.float32)
        wband = jnp.einsum("qwo,cihq->hwioc", band, wf)    # (k, W, cin, OW, cout)
        wband = wband.reshape(KSIZE, W * cin, OW * cout).astype(param_dtype)

        shift_row = jnp.tile(shift, OW).reshape(1, OW * cout).astype(jnp.float32)

        # Block-diagonal 0/1 row-selection matrix, all KSIZE offsets and all
        # NB per-step samples stacked:
        #   sel[kh*NB*OH + b*OH + oh, b*H + 2*oh + kh] = 1
        kh_i = jnp.arange(KSIZE)[:, None, None, None]
        b_i = jnp.arange(nb)[None, :, None, None]
        oh_i = jnp.arange(OH)[None, None, :, None]
        r_i = jnp.arange(nb * H)[None, None, None, :]
        sel = (r_i == b_i * H + STRIDE * oh_i + kh_i).astype(param_dtype)
        sel = sel.reshape(KSIZE * nb * OH, nb * H)

        return sel, wband, shift_row, (H, W, cin, cout), (OH, OW, cout)

    sel1, w1, s1, d1, o1 = conv_operands(params["layer1"], h, w)
    sel2, w2, s2, d2, o2 = conv_operands(params["layer2"], o1[0], o1[1])
    sel3, w3, s3, d3, o3 = conv_operands(params["layer3"], o2[0], o2[1])
    OH3, OW3, C3 = o3

    head_w, head_b = params["head"]                        # (outputs, C3*OH3*OW3)
    outputs = head_w.shape[0]
    assert head_w.shape[1] == C3 * OH3 * OW3
    # PyTorch flattens NCHW as index c*OH3*OW3 + h*OW3 + w (channels outermost);
    # permute once into the kernel's per-row (w*C3 + c) activation layout.
    wh = head_w.reshape(outputs, C3, OH3, OW3)
    wh = jnp.transpose(wh, (2, 3, 1, 0)).reshape(OH3, OW3 * C3, outputs)
    wh = wh.astype(param_dtype)
    bh = head_b.reshape(1, outputs).astype(jnp.float32)

    # Per-sample row selection for the head: selh[h, b, b*OH3 + h] = 1
    h_i = jnp.arange(OH3)[:, None, None]
    b_i = jnp.arange(nb)[None, :, None]
    r_i = jnp.arange(nb * OH3)[None, None, :]
    selh = (r_i == b_i * OH3 + h_i).astype(param_dtype)
    selh = selh.reshape(OH3, nb, nb * OH3)

    operands = (sel1, w1, s1, sel2, w2, s2, sel3, w3, s3, selh, wh, bh)
    cfg = {"dims": (d1, d2, d3), "in_shape": (h, w, d1[2]),
           "outputs": outputs, "nb": nb, "param_dtype": param_dtype}
    return operands, cfg


def make_dqn_forward(cfg):
    dims = cfg["dims"]
    outputs = cfg["outputs"]
    nb = cfg["nb"]
    pdt = cfg["param_dtype"]
    H0, W0, C0 = cfg["in_shape"]

    kernel = functools.partial(_dqn_kernel, dims=dims, nb=nb)

    # Advisory cost: selection + banded matmuls + head (per grid step).
    step_flops = 0
    for (H, W, cin, cout) in dims:
        OH, OW = _conv_out(H), _conv_out(W)
        step_flops += 2 * (KSIZE * nb * OH) * (nb * H) * (W * cin)      # SEL
        step_flops += 2 * KSIZE * (nb * OH) * (W * cin) * (OW * cout)   # band
    H3, W3, _, C3 = dims[2]
    OH3, OW3 = _conv_out(H3), _conv_out(W3)
    step_flops += 2 * OH3 * (nb * (nb * OH3) * (OW3 * C3)
                             + nb * (OW3 * C3) * outputs)

    def _const_spec(arr):
        # Constant index_map -> block is resident across the grid.
        n = arr.ndim
        return pl.BlockSpec(arr.shape, lambda b, _n=n: (0,) * _n)

    def forward(x_nchw, operands):
        B = x_nchw.shape[0]
        # Per-call glue: NCHW -> channels-fastest rows, NB samples stacked
        # along the sublane axis.
        x2d = jnp.transpose(x_nchw, (0, 2, 3, 1)).reshape(B, H0, W0 * C0)
        x2d = x2d.astype(pdt)
        nsteps = pl.cdiv(B, nb)
        Bp = nsteps * nb
        if Bp != B:
            x2d = jnp.pad(x2d, ((0, Bp - B), (0, 0), (0, 0)))
        x2d = x2d.reshape(Bp * H0, W0 * C0)

        bytes_accessed = x2d.size * x2d.dtype.itemsize + Bp * outputs * 4
        bytes_accessed += sum(op.size * op.dtype.itemsize for op in operands)

        out = pl.pallas_call(
            kernel,
            out_shape=jax.ShapeDtypeStruct((Bp, outputs), jnp.float32),
            grid=(nsteps,),
            in_specs=[pl.BlockSpec((nb * H0, W0 * C0), lambda b: (b, 0))]
                    + [_const_spec(op) for op in operands],
            out_specs=pl.BlockSpec((nb, outputs), lambda b: (b, 0)),
            compiler_params=pltpu.CompilerParams(
                dimension_semantics=("parallel",)),
            cost_estimate=pl.CostEstimate(
                flops=int(nsteps * step_flops),
                transcendentals=0,
                bytes_accessed=int(bytes_accessed)),
        )(x2d, *operands)
        return out[:B]

    return jax.jit(forward)


# ---------------------------------------------------------------------------
# Plain-JAX reference (inference-mode BatchNorm) for a sanity check.
# ---------------------------------------------------------------------------
def reference_forward(x_nchw, params, eps=1e-5):
    def conv_bn_relu(x, layer):
        w, b, gamma, beta, mean, var = layer
        y = lax.conv_general_dilated(
            x, w, window_strides=(STRIDE, STRIDE), padding="VALID",
            dimension_numbers=("NCHW", "OIHW", "NCHW"),
            precision=lax.Precision.HIGHEST)
        y = y + b[None, :, None, None]
        y = (y - mean[None, :, None, None]) * (
            gamma[None, :, None, None]
            / jnp.sqrt(var[None, :, None, None] + eps))
        y = y + beta[None, :, None, None]
        return jnp.maximum(y, 0.0)

    x = x_nchw.astype(jnp.float32)
    x = conv_bn_relu(x, params["layer1"])
    x = conv_bn_relu(x, params["layer2"])
    x = conv_bn_relu(x, params["layer3"])
    head_w, head_b = params["head"]
    flat = x.reshape(x.shape[0], -1)
    return jnp.dot(flat, head_w.T, precision=lax.Precision.HIGHEST) + head_b


# ---------------------------------------------------------------------------
# Deterministic parameter initialization (shapes from DQN.__init__)
# ---------------------------------------------------------------------------
def _init_conv(key, cout, cin, k):
    kw, kb = jax.random.split(key)
    bound = 1.0 / jnp.sqrt(float(cin * k * k))
    w = jax.random.uniform(kw, (cout, cin, k, k), jnp.float32, -bound, bound)
    b = jax.random.uniform(kb, (cout,), jnp.float32, -bound, bound)
    return w, b


def _init_bn(key, c):
    k1, k2, k3, k4 = jax.random.split(key, 4)
    gamma = jax.random.uniform(k1, (c,), jnp.float32, 0.5, 1.5)
    beta = 0.1 * jax.random.normal(k2, (c,), jnp.float32)
    mean = 0.1 * jax.random.normal(k3, (c,), jnp.float32)
    var = jax.random.uniform(k4, (c,), jnp.float32, 0.5, 1.5)
    return gamma, beta, mean, var


def make_params(key, h, w, outputs):
    convw = _conv_out(_conv_out(_conv_out(w)))
    convh = _conv_out(_conv_out(_conv_out(h)))
    linear_input_size = convw * convh * 32

    keys = jax.random.split(key, 7)
    c1w, c1b = _init_conv(keys[0], 16, 3, 5)
    bn1 = _init_bn(keys[1], 16)
    c2w, c2b = _init_conv(keys[2], 32, 16, 5)
    bn2 = _init_bn(keys[3], 32)
    c3w, c3b = _init_conv(keys[4], 32, 32, 5)
    bn3 = _init_bn(keys[5], 32)
    kw, kb = jax.random.split(keys[6])
    bound = 1.0 / jnp.sqrt(float(linear_input_size))
    head_w = jax.random.uniform(kw, (outputs, linear_input_size), jnp.float32,
                                -bound, bound)
    head_b = jax.random.uniform(kb, (outputs,), jnp.float32, -bound, bound)
    return {
        "layer1": (c1w, c1b) + bn1,
        "layer2": (c2w, c2b) + bn2,
        "layer3": (c3w, c3b) + bn3,
        "head": (head_w, head_b),
    }


if __name__ == "__main__":
    # 40 -> 18 -> 7 -> 2 spatially; linear head sees 2*2*32 = 128 features.
    B, H, W, OUTPUTS = 16, 40, 40, 4
    NB = 8                                   # samples per grid step; grid = 2
    root = jax.random.PRNGKey(0)
    k_params, k_x = jax.random.split(root)
    params = make_params(k_params, H, W, OUTPUTS)
    x = jax.random.normal(k_x, (B, 3, H, W), jnp.float32)   # NCHW, like PyTorch

    operands, cfg = prepare_params(params, H, W, nb=NB,
                                   param_dtype=jnp.bfloat16)  # one-time prep
    forward = make_dqn_forward(cfg)

    out = jax.block_until_ready(forward(x, operands))
    assert out.shape == (B, OUTPUTS), out.shape
    assert out.dtype == jnp.float32

    # Sanity check vs. a plain-JAX (HIGHEST-precision) reference.  Tolerance
    # accounts for bf16 MXU operands with f32 accumulation.
    ref = jax.block_until_ready(reference_forward(x, params))
    err = float(jnp.max(jnp.abs(out - ref)))
    scale = float(jnp.max(jnp.abs(ref))) + 1e-6
    assert err <= 0.1 * scale, (err, scale)

    print("KERNEL_OK")
</pallas_src>

<mosaic_0001>
module attributes {stable_mosaic.version = 11 : i64} {
  func.func @_dqn_kernel(%arg0: i32, %arg1: memref<320x120xbf16, #tpu.memory_space<vmem>>, %arg2: memref<720x320xbf16, #tpu.memory_space<vmem>>, %arg3: memref<5x120x288xbf16, #tpu.memory_space<vmem>>, %arg4: memref<1x288xf32, #tpu.memory_space<vmem>>, %arg5: memref<280x144xbf16, #tpu.memory_space<vmem>>, %arg6: memref<5x288x224xbf16, #tpu.memory_space<vmem>>, %arg7: memref<1x224xf32, #tpu.memory_space<vmem>>, %arg8: memref<80x56xbf16, #tpu.memory_space<vmem>>, %arg9: memref<5x224x64xbf16, #tpu.memory_space<vmem>>, %arg10: memref<1x64xf32, #tpu.memory_space<vmem>>, %arg11: memref<2x8x16xbf16, #tpu.memory_space<vmem>>, %arg12: memref<2x64x4xbf16, #tpu.memory_space<vmem>>, %arg13: memref<1x4xf32, #tpu.memory_space<vmem>>, %arg14: memref<8x4xf32, #tpu.memory_space<vmem>>) attributes {dimension_semantics = [#tpu.dimension_semantics<parallel>], iteration_bounds = array<i64: 2>, scalar_prefetch = 0 : i64, scratch_operands = 0 : i64, tpu.core_type = #tpu.core_type<tc>, window_params = [{transform_indices = @transform_0, window_bounds = array<i64: 320, 120>}, {pipeline_mode = #tpu.pipeline_mode<synchronous>, transform_indices = @transform_1, window_bounds = array<i64: 720, 320>}, {pipeline_mode = #tpu.pipeline_mode<synchronous>, transform_indices = @transform_2, window_bounds = array<i64: 5, 120, 288>}, {pipeline_mode = #tpu.pipeline_mode<synchronous>, transform_indices = @transform_3, window_bounds = array<i64: 1, 288>}, {pipeline_mode = #tpu.pipeline_mode<synchronous>, transform_indices = @transform_4, window_bounds = array<i64: 280, 144>}, {pipeline_mode = #tpu.pipeline_mode<synchronous>, transform_indices = @transform_5, window_bounds = array<i64: 5, 288, 224>}, {pipeline_mode = #tpu.pipeline_mode<synchronous>, transform_indices = @transform_6, window_bounds = array<i64: 1, 224>}, {pipeline_mode = #tpu.pipeline_mode<synchronous>, transform_indices = @transform_7, window_bounds = array<i64: 80, 56>}, {pipeline_mode = #tpu.pipeline_mode<synchronous>, transform_indices = @transform_8, window_bounds = array<i64: 5, 224, 64>}, {pipeline_mode = #tpu.pipeline_mode<synchronous>, transform_indices = @transform_9, window_bounds = array<i64: 1, 64>}, {pipeline_mode = #tpu.pipeline_mode<synchronous>, transform_indices = @transform_10, window_bounds = array<i64: 2, 8, 16>}, {pipeline_mode = #tpu.pipeline_mode<synchronous>, transform_indices = @transform_11, window_bounds = array<i64: 2, 64, 4>}, {pipeline_mode = #tpu.pipeline_mode<synchronous>, transform_indices = @transform_12, window_bounds = array<i64: 1, 4>}, {transform_indices = @transform_13, window_bounds = array<i64: 8, 4>}]} {
    %c0 = arith.constant 0 : index
    %c0_0 = arith.constant 0 : index
    %0 = vector.load %arg1[%c0, %c0_0] : memref<320x120xbf16, #tpu.memory_space<vmem>>, vector<320x120xbf16>
    %c0_1 = arith.constant 0 : index
    %c0_2 = arith.constant 0 : index
    %1 = vector.load %arg2[%c0_1, %c0_2] : memref<720x320xbf16, #tpu.memory_space<vmem>>, vector<720x320xbf16>
    %cst = arith.constant dense<0.000000e+00> : vector<720x120xf32>
    %2 = tpu.matmul %1, %0, %cst {dimension_numbers = #tpu.dot_dimension_numbers<[1], [0], [0], [1], [0, 0, 1, 1], [], []>} : vector<720x320xbf16>, vector<320x120xbf16>, vector<720x120xf32> -> vector<720x120xf32>
    %3 = arith.truncf %2 : vector<720x120xf32> to vector<720x120xbf16>
    %4 = vector.extract_strided_slice %3 {offsets = [0, 0], sizes = [144, 120], strides = [1, 1]} : vector<720x120xbf16> to vector<144x120xbf16>
    %c0_3 = arith.constant 0 : index
    %c0_4 = arith.constant 0 : index
    %c0_5 = arith.constant 0 : index
    %5 = vector.load %arg3[%c0_3, %c0_4, %c0_5] : memref<5x120x288xbf16, #tpu.memory_space<vmem>>, vector<1x120x288xbf16>
    %6 = vector.shape_cast %5 : vector<1x120x288xbf16> to vector<120x288xbf16>
    %cst_6 = arith.constant dense<0.000000e+00> : vector<144x288xf32>
    %7 = tpu.matmul %4, %6, %cst_6 {dimension_numbers = #tpu.dot_dimension_numbers<[1], [0], [0], [1], [0, 0, 1, 1], [], []>} : vector<144x120xbf16>, vector<120x288xbf16>, vector<144x288xf32> -> vector<144x288xf32>
    %8 = vector.extract_strided_slice %3 {offsets = [144, 0], sizes = [144, 120], strides = [1, 1]} : vector<720x120xbf16> to vector<144x120xbf16>
    %c1 = arith.constant 1 : index
    %c0_7 = arith.constant 0 : index
    %c0_8 = arith.constant 0 : index
    %9 = vector.load %arg3[%c1, %c0_7, %c0_8] : memref<5x120x288xbf16, #tpu.memory_space<vmem>>, vector<1x120x288xbf16>
    %10 = vector.shape_cast %9 : vector<1x120x288xbf16> to vector<120x288xbf16>
    %cst_9 = arith.constant dense<0.000000e+00> : vector<144x288xf32>
    %11 = tpu.matmul %8, %10, %cst_9 {dimension_numbers = #tpu.dot_dimension_numbers<[1], [0], [0], [1], [0, 0, 1, 1], [], []>} : vector<144x120xbf16>, vector<120x288xbf16>, vector<144x288xf32> -> vector<144x288xf32>
    %12 = arith.addf %7, %11 : vector<144x288xf32>
    %13 = vector.extract_strided_slice %3 {offsets = [288, 0], sizes = [144, 120], strides = [1, 1]} : vector<720x120xbf16> to vector<144x120xbf16>
    %c2 = arith.constant 2 : index
    %c0_10 = arith.constant 0 : index
    %c0_11 = arith.constant 0 : index
    %14 = vector.load %arg3[%c2, %c0_10, %c0_11] : memref<5x120x288xbf16, #tpu.memory_space<vmem>>, vector<1x120x288xbf16>
    %15 = vector.shape_cast %14 : vector<1x120x288xbf16> to vector<120x288xbf16>
    %cst_12 = arith.constant dense<0.000000e+00> : vector<144x288xf32>
    %16 = tpu.matmul %13, %15, %cst_12 {dimension_numbers = #tpu.dot_dimension_numbers<[1], [0], [0], [1], [0, 0, 1, 1], [], []>} : vector<144x120xbf16>, vector<120x288xbf16>, vector<144x288xf32> -> vector<144x288xf32>
    %17 = arith.addf %12, %16 : vector<144x288xf32>
    %18 = vector.extract_strided_slice %3 {offsets = [432, 0], sizes = [144, 120], strides = [1, 1]} : vector<720x120xbf16> to vector<144x120xbf16>
    %c3 = arith.constant 3 : index
    %c0_13 = arith.constant 0 : index
    %c0_14 = arith.constant 0 : index
    %19 = vector.load %arg3[%c3, %c0_13, %c0_14] : memref<5x120x288xbf16, #tpu.memory_space<vmem>>, vector<1x120x288xbf16>
    %20 = vector.shape_cast %19 : vector<1x120x288xbf16> to vector<120x288xbf16>
    %cst_15 = arith.constant dense<0.000000e+00> : vector<144x288xf32>
    %21 = tpu.matmul %18, %20, %cst_15 {dimension_numbers = #tpu.dot_dimension_numbers<[1], [0], [0], [1], [0, 0, 1, 1], [], []>} : vector<144x120xbf16>, vector<120x288xbf16>, vector<144x288xf32> -> vector<144x288xf32>
    %22 = arith.addf %17, %21 : vector<144x288xf32>
    %23 = vector.extract_strided_slice %3 {offsets = [576, 0], sizes = [144, 120], strides = [1, 1]} : vector<720x120xbf16> to vector<144x120xbf16>
    %c4 = arith.constant 4 : index
    %c0_16 = arith.constant 0 : index
    %c0_17 = arith.constant 0 : index
    %24 = vector.load %arg3[%c4, %c0_16, %c0_17] : memref<5x120x288xbf16, #tpu.memory_space<vmem>>, vector<1x120x288xbf16>
    %25 = vector.shape_cast %24 : vector<1x120x288xbf16> to vector<120x288xbf16>
    %cst_18 = arith.constant dense<0.000000e+00> : vector<144x288xf32>
    %26 = tpu.matmul %23, %25, %cst_18 {dimension_numbers = #tpu.dot_dimension_numbers<[1], [0], [0], [1], [0, 0, 1, 1], [], []>} : vector<144x120xbf16>, vector<120x288xbf16>, vector<144x288xf32> -> vector<144x288xf32>
    %27 = arith.addf %22, %26 : vector<144x288xf32>
    %c0_19 = arith.constant 0 : index
    %c0_20 = arith.constant 0 : index
    %28 = vector.load %arg4[%c0_19, %c0_20] : memref<1x288xf32, #tpu.memory_space<vmem>>, vector<1x288xf32>
    %29 = vector.broadcast %28 : vector<1x288xf32> to vector<144x288xf32>
    %30 = arith.addf %27, %29 : vector<144x288xf32>
    %cst_21 = arith.constant 0.000000e+00 : f32
    %31 = vector.broadcast %cst_21 : f32 to vector<144x288xf32>
    %32 = arith.maximumf %30, %31 : vector<144x288xf32>
    %33 = arith.truncf %32 : vector<144x288xf32> to vector<144x288xbf16>
    %c0_22 = arith.constant 0 : index
    %c0_23 = arith.constant 0 : index
    %34 = vector.load %arg5[%c0_22, %c0_23] : memref<280x144xbf16, #tpu.memory_space<vmem>>, vector<280x144xbf16>
    %cst_24 = arith.constant dense<0.000000e+00> : vector<280x288xf32>
    %35 = tpu.matmul %34, %33, %cst_24 {dimension_numbers = #tpu.dot_dimension_numbers<[1], [0], [0], [1], [0, 0, 1, 1], [], []>} : vector<280x144xbf16>, vector<144x288xbf16>, vector<280x288xf32> -> vector<280x288xf32>
    %36 = arith.truncf %35 : vector<280x288xf32> to vector<280x288xbf16>
    %37 = vector.extract_strided_slice %36 {offsets = [0, 0], sizes = [56, 288], strides = [1, 1]} : vector<280x288xbf16> to vector<56x288xbf16>
    %c0_25 = arith.constant 0 : index
    %c0_26 = arith.constant 0 : index
    %c0_27 = arith.constant 0 : index
    %38 = vector.load %arg6[%c0_25, %c0_26, %c0_27] : memref<5x288x224xbf16, #tpu.memory_space<vmem>>, vector<1x288x224xbf16>
    %39 = vector.shape_cast %38 : vector<1x288x224xbf16> to vector<288x224xbf16>
    %cst_28 = arith.constant dense<0.000000e+00> : vector<56x224xf32>
    %40 = tpu.matmul %37, %39, %cst_28 {dimension_numbers = #tpu.dot_dimension_numbers<[1], [0], [0], [1], [0, 0, 1, 1], [], []>} : vector<56x288xbf16>, vector<288x224xbf16>, vector<56x224xf32> -> vector<56x224xf32>
    %41 = vector.extract_strided_slice %36 {offsets = [56, 0], sizes = [56, 288], strides = [1, 1]} : vector<280x288xbf16> to vector<56x288xbf16>
    %c1_29 = arith.constant 1 : index
    %c0_30 = arith.constant 0 : index
    %c0_31 = arith.constant 0 : index
    %42 = vector.load %arg6[%c1_29, %c0_30, %c0_31] : memref<5x288x224xbf16, #tpu.memory_space<vmem>>, vector<1x288x224xbf16>
    %43 = vector.shape_cast %42 : vector<1x288x224xbf16> to vector<288x224xbf16>
    %cst_32 = arith.constant dense<0.000000e+00> : vector<56x224xf32>
    %44 = tpu.matmul %41, %43, %cst_32 {dimension_numbers = #tpu.dot_dimension_numbers<[1], [0], [0], [1], [0, 0, 1, 1], [], []>} : vector<56x288xbf16>, vector<288x224xbf16>, vector<56x224xf32> -> vector<56x224xf32>
    %45 = arith.addf %40, %44 : vector<56x224xf32>
    %46 = vector.extract_strided_slice %36 {offsets = [112, 0], sizes = [56, 288], strides = [1, 1]} : vector<280x288xbf16> to vector<56x288xbf16>
    %c2_33 = arith.constant 2 : index
    %c0_34 = arith.constant 0 : index
    %c0_35 = arith.constant 0 : index
    %47 = vector.load %arg6[%c2_33, %c0_34, %c0_35] : memref<5x288x224xbf16, #tpu.memory_space<vmem>>, vector<1x288x224xbf16>
    %48 = vector.shape_cast %47 : vector<1x288x224xbf16> to vector<288x224xbf16>
    %cst_36 = arith.constant dense<0.000000e+00> : vector<56x224xf32>
    %49 = tpu.matmul %46, %48, %cst_36 {dimension_numbers = #tpu.dot_dimension_numbers<[1], [0], [0], [1], [0, 0, 1, 1], [], []>} : vector<56x288xbf16>, vector<288x224xbf16>, vector<56x224xf32> -> vector<56x224xf32>
    %50 = arith.addf %45, %49 : vector<56x224xf32>
    %51 = vector.extract_strided_slice %36 {offsets = [168, 0], sizes = [56, 288], strides = [1, 1]} : vector<280x288xbf16> to vector<56x288xbf16>
    %c3_37 = arith.constant 3 : index
    %c0_38 = arith.constant 0 : index
    %c0_39 = arith.constant 0 : index
    %52 = vector.load %arg6[%c3_37, %c0_38, %c0_39] : memref<5x288x224xbf16, #tpu.memory_space<vmem>>, vector<1x288x224xbf16>
    %53 = vector.shape_cast %52 : vector<1x288x224xbf16> to vector<288x224xbf16>
    %cst_40 = arith.constant dense<0.000000e+00> : vector<56x224xf32>
    %54 = tpu.matmul %51, %53, %cst_40 {dimension_numbers = #tpu.dot_dimension_numbers<[1], [0], [0], [1], [0, 0, 1, 1], [], []>} : vector<56x288xbf16>, vector<288x224xbf16>, vector<56x224xf32> -> vector<56x224xf32>
    %55 = arith.addf %50, %54 : vector<56x224xf32>
    %56 = vector.extract_strided_slice %36 {offsets = [224, 0], sizes = [56, 288], strides = [1, 1]} : vector<280x288xbf16> to vector<56x288xbf16>
    %c4_41 = arith.constant 4 : index
    %c0_42 = arith.constant 0 : index
    %c0_43 = arith.constant 0 : index
    %57 = vector.load %arg6[%c4_41, %c0_42, %c0_43] : memref<5x288x224xbf16, #tpu.memory_space<vmem>>, vector<1x288x224xbf16>
    %58 = vector.shape_cast %57 : vector<1x288x224xbf16> to vector<288x224xbf16>
    %cst_44 = arith.constant dense<0.000000e+00> : vector<56x224xf32>
    %59 = tpu.matmul %56, %58, %cst_44 {dimension_numbers = #tpu.dot_dimension_numbers<[1], [0], [0], [1], [0, 0, 1, 1], [], []>} : vector<56x288xbf16>, vector<288x224xbf16>, vector<56x224xf32> -> vector<56x224xf32>
    %60 = arith.addf %55, %59 : vector<56x224xf32>
    %c0_45 = arith.constant 0 : index
    %c0_46 = arith.constant 0 : index
    %61 = vector.load %arg7[%c0_45, %c0_46] : memref<1x224xf32, #tpu.memory_space<vmem>>, vector<1x224xf32>
    %62 = vector.broadcast %61 : vector<1x224xf32> to vector<56x224xf32>
    %63 = arith.addf %60, %62 : vector<56x224xf32>
    %cst_47 = arith.constant 0.000000e+00 : f32
    %64 = vector.broadcast %cst_47 : f32 to vector<56x224xf32>
    %65 = arith.maximumf %63, %64 : vector<56x224xf32>
    %66 = arith.truncf %65 : vector<56x224xf32> to vector<56x224xbf16>
    %c0_48 = arith.constant 0 : index
    %c0_49 = arith.constant 0 : index
    %67 = vector.load %arg8[%c0_48, %c0_49] : memref<80x56xbf16, #tpu.memory_space<vmem>>, vector<80x56xbf16>
    %cst_50 = arith.constant dense<0.000000e+00> : vector<80x224xf32>
    %68 = tpu.matmul %67, %66, %cst_50 {dimension_numbers = #tpu.dot_dimension_numbers<[1], [0], [0], [1], [0, 0, 1, 1], [], []>} : vector<80x56xbf16>, vector<56x224xbf16>, vector<80x224xf32> -> vector<80x224xf32>
    %69 = arith.truncf %68 : vector<80x224xf32> to vector<80x224xbf16>
    %70 = vector.extract_strided_slice %69 {offsets = [0, 0], sizes = [16, 224], strides = [1, 1]} : vector<80x224xbf16> to vector<16x224xbf16>
    %c0_51 = arith.constant 0 : index
    %c0_52 = arith.constant 0 : index
    %c0_53 = arith.constant 0 : index
    %71 = vector.load %arg9[%c0_51, %c0_52, %c0_53] : memref<5x224x64xbf16, #tpu.memory_space<vmem>>, vector<1x224x64xbf16>
    %72 = vector.shape_cast %71 : vector<1x224x64xbf16> to vector<224x64xbf16>
    %cst_54 = arith.constant dense<0.000000e+00> : vector<16x64xf32>
    %73 = tpu.matmul %70, %72, %cst_54 {dimension_numbers = #tpu.dot_dimension_numbers<[1], [0], [0], [1], [0, 0, 1, 1], [], []>} : vector<16x224xbf16>, vector<224x64xbf16>, vector<16x64xf32> -> vector<16x64xf32>
    %74 = vector.extract_strided_slice %69 {offsets = [16, 0], sizes = [16, 224], strides = [1, 1]} : vector<80x224xbf16> to vector<16x224xbf16>
    %c1_55 = arith.constant 1 : index
    %c0_56 = arith.constant 0 : index
    %c0_57 = arith.constant 0 : index
    %75 = vector.load %arg9[%c1_55, %c0_56, %c0_57] : memref<5x224x64xbf16, #tpu.memory_space<vmem>>, vector<1x224x64xbf16>
    %76 = vector.shape_cast %75 : vector<1x224x64xbf16> to vector<224x64xbf16>
    %cst_58 = arith.constant dense<0.000000e+00> : vector<16x64xf32>
    %77 = tpu.matmul %74, %76, %cst_58 {dimension_numbers = #tpu.dot_dimension_numbers<[1], [0], [0], [1], [0, 0, 1, 1], [], []>} : vector<16x224xbf16>, vector<224x64xbf16>, vector<16x64xf32> -> vector<16x64xf32>
    %78 = arith.addf %73, %77 : vector<16x64xf32>
    %79 = vector.extract_strided_slice %69 {offsets = [32, 0], sizes = [16, 224], strides = [1, 1]} : vector<80x224xbf16> to vector<16x224xbf16>
    %c2_59 = arith.constant 2 : index
    %c0_60 = arith.constant 0 : index
    %c0_61 = arith.constant 0 : index
    %80 = vector.load %arg9[%c2_59, %c0_60, %c0_61] : memref<5x224x64xbf16, #tpu.memory_space<vmem>>, vector<1x224x64xbf16>
    %81 = vector.shape_cast %80 : vector<1x224x64xbf16> to vector<224x64xbf16>
    %cst_62 = arith.constant dense<0.000000e+00> : vector<16x64xf32>
    %82 = tpu.matmul %79, %81, %cst_62 {dimension_numbers = #tpu.dot_dimension_numbers<[1], [0], [0], [1], [0, 0, 1, 1], [], []>} : vector<16x224xbf16>, vector<224x64xbf16>, vector<16x64xf32> -> vector<16x64xf32>
    %83 = arith.addf %78, %82 : vector<16x64xf32>
    %84 = vector.extract_strided_slice %69 {offsets = [48, 0], sizes = [16, 224], strides = [1, 1]} : vector<80x224xbf16> to vector<16x224xbf16>
    %c3_63 = arith.constant 3 : index
    %c0_64 = arith.constant 0 : index
    %c0_65 = arith.constant 0 : index
    %85 = vector.load %arg9[%c3_63, %c0_64, %c0_65] : memref<5x224x64xbf16, #tpu.memory_space<vmem>>, vector<1x224x64xbf16>
    %86 = vector.shape_cast %85 : vector<1x224x64xbf16> to vector<224x64xbf16>
    %cst_66 = arith.constant dense<0.000000e+00> : vector<16x64xf32>
    %87 = tpu.matmul %84, %86, %cst_66 {dimension_numbers = #tpu.dot_dimension_numbers<[1], [0], [0], [1], [0, 0, 1, 1], [], []>} : vector<16x224xbf16>, vector<224x64xbf16>, vector<16x64xf32> -> vector<16x64xf32>
    %88 = arith.addf %83, %87 : vector<16x64xf32>
    %89 = vector.extract_strided_slice %69 {offsets = [64, 0], sizes = [16, 224], strides = [1, 1]} : vector<80x224xbf16> to vector<16x224xbf16>
    %c4_67 = arith.constant 4 : index
    %c0_68 = arith.constant 0 : index
    %c0_69 = arith.constant 0 : index
    %90 = vector.load %arg9[%c4_67, %c0_68, %c0_69] : memref<5x224x64xbf16, #tpu.memory_space<vmem>>, vector<1x224x64xbf16>
    %91 = vector.shape_cast %90 : vector<1x224x64xbf16> to vector<224x64xbf16>
    %cst_70 = arith.constant dense<0.000000e+00> : vector<16x64xf32>
    %92 = tpu.matmul %89, %91, %cst_70 {dimension_numbers = #tpu.dot_dimension_numbers<[1], [0], [0], [1], [0, 0, 1, 1], [], []>} : vector<16x224xbf16>, vector<224x64xbf16>, vector<16x64xf32> -> vector<16x64xf32>
    %93 = arith.addf %88, %92 : vector<16x64xf32>
    %c0_71 = arith.constant 0 : index
    %c0_72 = arith.constant 0 : index
    %94 = vector.load %arg10[%c0_71, %c0_72] : memref<1x64xf32, #tpu.memory_space<vmem>>, vector<1x64xf32>
    %95 = vector.broadcast %94 : vector<1x64xf32> to vector<16x64xf32>
    %96 = arith.addf %93, %95 : vector<16x64xf32>
    %cst_73 = arith.constant 0.000000e+00 : f32
    %97 = vector.broadcast %cst_73 : f32 to vector<16x64xf32>
    %98 = arith.maximumf %96, %97 : vector<16x64xf32>
    %99 = arith.truncf %98 : vector<16x64xf32> to vector<16x64xbf16>
    %c0_74 = arith.constant 0 : index
    %c0_75 = arith.constant 0 : index
    %c0_76 = arith.constant 0 : index
    %100 = vector.load %arg11[%c0_74, %c0_75, %c0_76] : memref<2x8x16xbf16, #tpu.memory_space<vmem>>, vector<1x8x16xbf16>
    %101 = vector.shape_cast %100 : vector<1x8x16xbf16> to vector<8x16xbf16>
    %cst_77 = arith.constant dense<0.000000e+00> : vector<8x64xf32>
    %102 = tpu.matmul %101, %99, %cst_77 {dimension_numbers = #tpu.dot_dimension_numbers<[1], [0], [0], [1], [0, 0, 1, 1], [], []>} : vector<8x16xbf16>, vector<16x64xbf16>, vector<8x64xf32> -> vector<8x64xf32>
    %103 = arith.truncf %102 : vector<8x64xf32> to vector<8x64xbf16>
    %c0_78 = arith.constant 0 : index
    %c0_79 = arith.constant 0 : index
    %c0_80 = arith.constant 0 : index
    %104 = vector.load %arg12[%c0_78, %c0_79, %c0_80] : memref<2x64x4xbf16, #tpu.memory_space<vmem>>, vector<1x64x4xbf16>
    %105 = vector.shape_cast %104 : vector<1x64x4xbf16> to vector<64x4xbf16>
    %cst_81 = arith.constant dense<0.000000e+00> : vector<8x4xf32>
    %106 = tpu.matmul %103, %105, %cst_81 {dimension_numbers = #tpu.dot_dimension_numbers<[1], [0], [0], [1], [0, 0, 1, 1], [], []>} : vector<8x64xbf16>, vector<64x4xbf16>, vector<8x4xf32> -> vector<8x4xf32>
    %c1_82 = arith.constant 1 : index
    %c0_83 = arith.constant 0 : index
    %c0_84 = arith.constant 0 : index
    %107 = vector.load %arg11[%c1_82, %c0_83, %c0_84] : memref<2x8x16xbf16, #tpu.memory_space<vmem>>, vector<1x8x16xbf16>
    %108 = vector.shape_cast %107 : vector<1x8x16xbf16> to vector<8x16xbf16>
    %cst_85 = arith.constant dense<0.000000e+00> : vector<8x64xf32>
    %109 = tpu.matmul %108, %99, %cst_85 {dimension_numbers = #tpu.dot_dimension_numbers<[1], [0], [0], [1], [0, 0, 1, 1], [], []>} : vector<8x16xbf16>, vector<16x64xbf16>, vector<8x64xf32> -> vector<8x64xf32>
    %110 = arith.truncf %109 : vector<8x64xf32> to vector<8x64xbf16>
    %c1_86 = arith.constant 1 : index
    %c0_87 = arith.constant 0 : index
    %c0_88 = arith.constant 0 : index
    %111 = vector.load %arg12[%c1_86, %c0_87, %c0_88] : memref<2x64x4xbf16, #tpu.memory_space<vmem>>, vector<1x64x4xbf16>
    %112 = vector.shape_cast %111 : vector<1x64x4xbf16> to vector<64x4xbf16>
    %cst_89 = arith.constant dense<0.000000e+00> : vector<8x4xf32>
    %113 = tpu.matmul %110, %112, %cst_89 {dimension_numbers = #tpu.dot_dimension_numbers<[1], [0], [0], [1], [0, 0, 1, 1], [], []>} : vector<8x64xbf16>, vector<64x4xbf16>, vector<8x4xf32> -> vector<8x4xf32>
    %114 = arith.addf %106, %113 : vector<8x4xf32>
    %c0_90 = arith.constant 0 : index
    %c0_91 = arith.constant 0 : index
    %115 = vector.load %arg13[%c0_90, %c0_91] : memref<1x4xf32, #tpu.memory_space<vmem>>, vector<1x4xf32>
    %116 = vector.broadcast %115 : vector<1x4xf32> to vector<8x4xf32>
    %117 = arith.addf %114, %116 : vector<8x4xf32>
    %c0_92 = arith.constant 0 : index
    %c0_93 = arith.constant 0 : index
    %118 = vector.load %arg14[%c0_92, %c0_93] : memref<8x4xf32, #tpu.memory_space<vmem>>, vector<8x4xf32>
    tpu.vector_store %arg14[%c0_92, %c0_93], %117 {strides = array<i32>} : memref<8x4xf32, #tpu.memory_space<vmem>>, vector<8x4xf32>,
    return
  }
  func.func @transform_0(%arg0: i32) -> (i32, i32) {
    %c0_i32 = arith.constant 0 : i32
    %c0_i32_0 = arith.constant 0 : i32
    return %arg0, %c0_i32 : i32, i32
  }
  func.func @transform_1(%arg0: i32) -> (i32, i32) {
    %c0_i32 = arith.constant 0 : i32
    %c0_i32_0 = arith.constant 0 : i32
    %c0_i32_1 = arith.constant 0 : i32
    return %c0_i32, %c0_i32_0 : i32, i32
  }
  func.func @transform_2(%arg0: i32) -> (i32, i32, i32) {
    %c0_i32 = arith.constant 0 : i32
    %c0_i32_0 = arith.constant 0 : i32
    %c0_i32_1 = arith.constant 0 : i32
    %c0_i32_2 = arith.constant 0 : i32
    return %c0_i32, %c0_i32_0, %c0_i32_1 : i32, i32, i32
  }
  func.func @transform_3(%arg0: i32) -> (i32, i32) {
    %c0_i32 = arith.constant 0 : i32
    %c0_i32_0 = arith.constant 0 : i32
    %c0_i32_1 = arith.constant 0 : i32
    return %c0_i32, %c0_i32_0 : i32, i32
  }
  func.func @transform_4(%arg0: i32) -> (i32, i32) {
    %c0_i32 = arith.constant 0 : i32
    %c0_i32_0 = arith.constant 0 : i32
    %c0_i32_1 = arith.constant 0 : i32
    return %c0_i32, %c0_i32_0 : i32, i32
  }
  func.func @transform_5(%arg0: i32) -> (i32, i32, i32) {
    %c0_i32 = arith.constant 0 : i32
    %c0_i32_0 = arith.constant 0 : i32
    %c0_i32_1 = arith.constant 0 : i32
    %c0_i32_2 = arith.constant 0 : i32
    return %c0_i32, %c0_i32_0, %c0_i32_1 : i32, i32, i32
  }
  func.func @transform_6(%arg0: i32) -> (i32, i32) {
    %c0_i32 = arith.constant 0 : i32
    %c0_i32_0 = arith.constant 0 : i32
    %c0_i32_1 = arith.constant 0 : i32
    return %c0_i32, %c0_i32_0 : i32, i32
  }
  func.func @transform_7(%arg0: i32) -> (i32, i32) {
    %c0_i32 = arith.constant 0 : i32
    %c0_i32_0 = arith.constant 0 : i32
    %c0_i32_1 = arith.constant 0 : i32
    return %c0_i32, %c0_i32_0 : i32, i32
  }
  func.func @transform_8(%arg0: i32) -> (i32, i32, i32) {
    %c0_i32 = arith.constant 0 : i32
    %c0_i32_0 = arith.constant 0 : i32
    %c0_i32_1 = arith.constant 0 : i32
    %c0_i32_2 = arith.constant 0 : i32
    return %c0_i32, %c0_i32_0, %c0_i32_1 : i32, i32, i32
  }
  func.func @transform_9(%arg0: i32) -> (i32, i32) {
    %c0_i32 = arith.constant 0 : i32
    %c0_i32_0 = arith.constant 0 : i32
    %c0_i32_1 = arith.constant 0 : i32
    return %c0_i32, %c0_i32_0 : i32, i32
  }
  func.func @transform_10(%arg0: i32) -> (i32, i32, i32) {
    %c0_i32 = arith.constant 0 : i32
    %c0_i32_0 = arith.constant 0 : i32
    %c0_i32_1 = arith.constant 0 : i32
    %c0_i32_2 = arith.constant 0 : i32
    return %c0_i32, %c0_i32_0, %c0_i32_1 : i32, i32, i32
  }
  func.func @transform_11(%arg0: i32) -> (i32, i32, i32) {
    %c0_i32 = arith.constant 0 : i32
    %c0_i32_0 = arith.constant 0 : i32
    %c0_i32_1 = arith.constant 0 : i32
    %c0_i32_2 = arith.constant 0 : i32
    return %c0_i32, %c0_i32_0, %c0_i32_1 : i32, i32, i32
  }
  func.func @transform_12(%arg0: i32) -> (i32, i32) {
    %c0_i32 = arith.constant 0 : i32
    %c0_i32_0 = arith.constant 0 : i32
    %c0_i32_1 = arith.constant 0 : i32
    return %c0_i32, %c0_i32_0 : i32, i32
  }
  func.func @transform_13(%arg0: i32) -> (i32, i32) {
    %c0_i32 = arith.constant 0 : i32
    %c0_i32_0 = arith.constant 0 : i32
    return %arg0, %c0_i32 : i32, i32
  }
}

</mosaic_0001>

<llo_original>
// kernel: forward.1
$region0: #{forward.1}
  #allocation0 [shape = 'u32[]', space=smem, size = 0x4, offset = 0x4, fixed_abs, tag = 'smem constant byte address 0x4 - core index']
  #allocation1 [shape = 'u32[144,128]{1,0:T(1,128)}', space=vmem, size = 0x12000, scoped, tag = 'internal scratch']
  %s0 = inlined_call_operand.vmem [shape: bf16[640,120], index: 0, kind: input, shape index: {}]
  %s1 = inlined_call_operand.vmem [shape: bf16[720,320], index: 1, kind: input, shape index: {}]
  %s2 = inlined_call_operand.vmem [shape: bf16[5,120,288], index: 2, kind: input, shape index: {}]
  %s3 = inlined_call_operand.vmem [shape: f32[1,288], index: 3, kind: input, shape index: {}]
  %s4 = inlined_call_operand.vmem [shape: bf16[280,144], index: 4, kind: input, shape index: {}]
  %s5 = inlined_call_operand.vmem [shape: bf16[5,288,224], index: 5, kind: input, shape index: {}]
  %s6 = inlined_call_operand.vmem [shape: f32[1,224], index: 6, kind: input, shape index: {}]
  %s7 = inlined_call_operand.vmem [shape: bf16[80,56], index: 7, kind: input, shape index: {}]
  %s8 = inlined_call_operand.vmem [shape: bf16[5,224,64], index: 8, kind: input, shape index: {}]
  %s9 = inlined_call_operand.vmem [shape: f32[1,64], index: 9, kind: input, shape index: {}]
  %s10 = inlined_call_operand.vmem [shape: bf16[2,8,16], index: 10, kind: input, shape index: {}]
  %s11 = inlined_call_operand.vmem [shape: bf16[2,64,4], index: 11, kind: input, shape index: {}]
  %s12 = inlined_call_operand.vmem [shape: f32[1,4], index: 12, kind: input, shape index: {}]
  %s13 = inlined_call_operand.vmem [shape: f32[16,4], index: 13, kind: output, shape index: {}]
  %s14 = sld [smem:[#allocation0]]
  $region85: #{forward.1} parent=0
    _
  %s16 = ssub.s32 1, %s14
  %s17 = scalar_select 0, %s16, %s14
  loop: start=0, step=1, limit=4
  $region2: #{forward.1} parent=0 // loop_pre_header
    _
  $region3: #{forward.1} parent=0 // loop_header
    %s19 = sphi 0, %s23
    %p20 = scmp.ge.s32.totalorder %s19, 4
    %s29 = sphi 0, %s31
    %s32 = sphi 0, %s29
    %s33 = sphi 0, %s32
    %s49 = sphi 0, %s33
    %s53 = sphi 0, %s53
    %s55 = sphi 0, %s53
    %s56 = sphi 0, %s55
    %s70 = sphi 0, %s56
    %s74 = sphi 0, %s74
    %s76 = sphi 0, %s74
    %s77 = sphi 0, %s76
    %s91 = sphi 0, %s77
    %s95 = sphi 0, %s95
    %s97 = sphi 0, %s95
    %s98 = sphi 0, %s97
    %s112 = sphi 0, %s98
    %s116 = sphi 0, %s116
    %s118 = sphi 0, %s116
    %s119 = sphi 0, %s118
    %s133 = sphi 0, %s119
    %s137 = sphi 0, %s137
    %s139 = sphi 0, %s137
    %s140 = sphi 0, %s139
    %s154 = sphi 0, %s140
    %s158 = sphi 0, %s158
    %s160 = sphi 0, %s158
    %s161 = sphi 0, %s160
    %s175 = sphi 0, %s161
    %s179 = sphi 0, %s179
    %s181 = sphi 0, %s179
    %s182 = sphi 0, %s181
    %s196 = sphi 0, %s182
    %s200 = sphi 0, %s200
    %s202 = sphi 0, %s200
    %s203 = sphi 0, %s202
    %s217 = sphi 0, %s203
    %s221 = sphi 0, %s221
    %s223 = sphi 0, %s221
    %s224 = sphi 0, %s223
    %s238 = sphi 0, %s224
    %s242 = sphi 0, %s242
    %s244 = sphi 0, %s242
    %s245 = sphi 0, %s244
    %s259 = sphi 0, %s245
    %s263 = sphi 0, %s263
    %s265 = sphi 0, %s263
    %s266 = sphi 0, %s265
    %s280 = sphi 0, %s266
    %s284 = sphi 0, %s284
    %s286 = sphi 0, %s284
    %s287 = sphi 0, %s286
    %s301 = sphi 0, %s287
    %s307 = sphi 0, %s309
    %s310 = sphi 0, %s307
    %s311 = sphi 0, %s310
    %s327 = sphi 0, %s311
  $region4: #{forward.1} parent=0 // loop_header_branch
    %22 = sbr.rel (%p20) target = $region8
  $region5: #{forward.1} parent=0 // loop_body
    %s24 = ssub.s32 %s19, 1
    %s25 = ssub.s32 %s19, 2
    %s26 = sadd.s32 %s19, 1
    %s27 = ssub.s32 %s19, %s26
    %p28 = scmp.eq.s32.totalorder %s27, 0
    %s30 = sadd.s32 %s29, 1
    %s31 = scalar_select %p28, %s29, %s30
    %p34 = pneg %p28
    %p35 = scmp.eq.s32.totalorder %s19, 1
    %p36 = por %p34, %p35
    %p37 = scmp.ne.s32.totalorder %s29, %s32
    %p38 = scmp.eq.s32.totalorder %s19, 0
    %p39 = por %p37, %p38
    %p40 = scmp.ne.s32.totalorder %s29, %s32
    %p41 = scmp.eq.s32.totalorder %s24, 1
    %p42 = por %p40, %p41
    %p43 = scmp.ne.s32.totalorder %s32, %s33
    %p44 = scmp.eq.s32.totalorder %s24, 0
    %p45 = por %p43, %p44
    %p46 = scmp.ne.s32.totalorder %s32, %s33
    %p47 = scmp.eq.s32.totalorder %s25, 1
    %p48 = por %p46, %p47
    %p50 = scmp.ne.s32.totalorder %s33, %s49
    %p51 = scmp.eq.s32.totalorder %s25, 0
    %p52 = por %p50, %p51
    %s54 = sadd.s32 %s53, 1
    %p57 = scmp.eq.s32.totalorder %s19, 1
    %p58 = scmp.ne.s32.totalorder %s53, %s55
    %p59 = scmp.eq.s32.totalorder %s19, 0
    %p60 = por %p58, %p59
    %p61 = scmp.ne.s32.totalorder %s53, %s55
    %p62 = scmp.eq.s32.totalorder %s24, 1
    %p63 = por %p61, %p62
    %p64 = scmp.ne.s32.totalorder %s55, %s56
    %p65 = scmp.eq.s32.totalorder %s24, 0
    %p66 = por %p64, %p65
    %p67 = scmp.ne.s32.totalorder %s55, %s56
    %p68 = scmp.eq.s32.totalorder %s25, 1
    %p69 = por %p67, %p68
    %p71 = scmp.ne.s32.totalorder %s56, %s70
    %p72 = scmp.eq.s32.totalorder %s25, 0
    %p73 = por %p71, %p72
    %s75 = sadd.s32 %s74, 1
    %p78 = scmp.eq.s32.totalorder %s19, 1
    %p79 = scmp.ne.s32.totalorder %s74, %s76
    %p80 = scmp.eq.s32.totalorder %s19, 0
    %p81 = por %p79, %p80
    %p82 = scmp.ne.s32.totalorder %s74, %s76
    %p83 = scmp.eq.s32.totalorder %s24, 1
    %p84 = por %p82, %p83
    %p85 = scmp.ne.s32.totalorder %s76, %s77
    %p86 = scmp.eq.s32.totalorder %s24, 0
    %p87 = por %p85, %p86
    %p88 = scmp.ne.s32.totalorder %s76, %s77
    %p89 = scmp.eq.s32.totalorder %s25, 1
    %p90 = por %p88, %p89
    %p92 = scmp.ne.s32.totalorder %s77, %s91
    %p93 = scmp.eq.s32.totalorder %s25, 0
    %p94 = por %p92, %p93
    %s96 = sadd.s32 %s95, 1
    %p99 = scmp.eq.s32.totalorder %s19, 1
    %p100 = scmp.ne.s32.totalorder %s95, %s97
    %p101 = scmp.eq.s32.totalorder %s19, 0
    %p102 = por %p100, %p101
    %p103 = scmp.ne.s32.totalorder %s95, %s97
    %p104 = scmp.eq.s32.totalorder %s24, 1
    %p105 = por %p103, %p104
    %p106 = scmp.ne.s32.totalorder %s97, %s98
    %p107 = scmp.eq.s32.totalorder %s24, 0
    %p108 = por %p106, %p107
    %p109 = scmp.ne.s32.totalorder %s97, %s98
    %p110 = scmp.eq.s32.totalorder %s25, 1
    %p111 = por %p109, %p110
    %p113 = scmp.ne.s32.totalorder %s98, %s112
    %p114 = scmp.eq.s32.totalorder %s25, 0
    %p115 = por %p113, %p114
    %s117 = sadd.s32 %s116, 1
    %p120 = scmp.eq.s32.totalorder %s19, 1
    %p121 = scmp.ne.s32.totalorder %s116, %s118
    %p122 = scmp.eq.s32.totalorder %s19, 0
    %p123 = por %p121, %p122
    %p124 = scmp.ne.s32.totalorder %s116, %s118
    %p125 = scmp.eq.s32.totalorder %s24, 1
    %p126 = por %p124, %p125
    %p127 = scmp.ne.s32.totalorder %s118, %s119
    %p128 = scmp.eq.s32.totalorder %s24, 0
    %p129 = por %p127, %p128
    %p130 = scmp.ne.s32.totalorder %s118, %s119
    %p131 = scmp.eq.s32.totalorder %s25, 1
    %p132 = por %p130, %p131
    %p134 = scmp.ne.s32.totalorder %s119, %s133
    %p135 = scmp.eq.s32.totalorder %s25, 0
    %p136 = por %p134, %p135
    %s138 = sadd.s32 %s137, 1
    %p141 = scmp.eq.s32.totalorder %s19, 1
    %p142 = scmp.ne.s32.totalorder %s137, %s139
    %p143 = scmp.eq.s32.totalorder %s19, 0
    %p144 = por %p142, %p143
    %p145 = scmp.ne.s32.totalorder %s137, %s139
    %p146 = scmp.eq.s32.totalorder %s24, 1
    %p147 = por %p145, %p146
    %p148 = scmp.ne.s32.totalorder %s139, %s140
    %p149 = scmp.eq.s32.totalorder %s24, 0
    %p150 = por %p148, %p149
    %p151 = scmp.ne.s32.totalorder %s139, %s140
    %p152 = scmp.eq.s32.totalorder %s25, 1
    %p153 = por %p151, %p152
    %p155 = scmp.ne.s32.totalorder %s140, %s154
    %p156 = scmp.eq.s32.totalorder %s25, 0
    %p157 = por %p155, %p156
    %s159 = sadd.s32 %s158, 1
    %p162 = scmp.eq.s32.totalorder %s19, 1
    %p163 = scmp.ne.s32.totalorder %s158, %s160
    %p164 = scmp.eq.s32.totalorder %s19, 0
    %p165 = por %p163, %p164
    %p166 = scmp.ne.s32.totalorder %s158, %s160
    %p167 = scmp.eq.s32.totalorder %s24, 1
    %p168 = por %p166, %p167
    %p169 = scmp.ne.s32.totalorder %s160, %s161
    %p170 = scmp.eq.s32.totalorder %s24, 0
    %p171 = por %p169, %p170
    %p172 = scmp.ne.s32.totalorder %s160, %s161
    %p173 = scmp.eq.s32.totalorder %s25, 1
    %p174 = por %p172, %p173
    %p176 = scmp.ne.s32.totalorder %s161, %s175
    %p177 = scmp.eq.s32.totalorder %s25, 0
    %p178 = por %p176, %p177
    %s180 = sadd.s32 %s179, 1
    %p183 = scmp.eq.s32.totalorder %s19, 1
    %p184 = scmp.ne.s32.totalorder %s179, %s181
    %p185 = scmp.eq.s32.totalorder %s19, 0
    %p186 = por %p184, %p185
    %p187 = scmp.ne.s32.totalorder %s179, %s181
    %p188 = scmp.eq.s32.totalorder %s24, 1
    %p189 = por %p187, %p188
    %p190 = scmp.ne.s32.totalorder %s181, %s182
    %p191 = scmp.eq.s32.totalorder %s24, 0
    %p192 = por %p190, %p191
    %p193 = scmp.ne.s32.totalorder %s181, %s182
    %p194 = scmp.eq.s32.totalorder %s25, 1
    %p195 = por %p193, %p194
    %p197 = scmp.ne.s32.totalorder %s182, %s196
    %p198 = scmp.eq.s32.totalorder %s25, 0
    %p199 = por %p197, %p198
    %s201 = sadd.s32 %s200, 1
    %p204 = scmp.eq.s32.totalorder %s19, 1
    %p205 = scmp.ne.s32.totalorder %s200, %s202
    %p206 = scmp.eq.s32.totalorder %s19, 0
    %p207 = por %p205, %p206
    %p208 = scmp.ne.s32.totalorder %s200, %s202
    %p209 = scmp.eq.s32.totalorder %s24, 1
    %p210 = por %p208, %p209
    %p211 = scmp.ne.s32.totalorder %s202, %s203
    %p212 = scmp.eq.s32.totalorder %s24, 0
    %p213 = por %p211, %p212
    %p214 = scmp.ne.s32.totalorder %s202, %s203
    %p215 = scmp.eq.s32.totalorder %s25, 1
    %p216 = por %p214, %p215
    %p218 = scmp.ne.s32.totalorder %s203, %s217
    %p219 = scmp.eq.s32.totalorder %s25, 0
    %p220 = por %p218, %p219
    %s222 = sadd.s32 %s221, 1
    %p225 = scmp.eq.s32.totalorder %s19, 1
    %p226 = scmp.ne.s32.totalorder %s221, %s223
    %p227 = scmp.eq.s32.totalorder %s19, 0
    %p228 = por %p226, %p227
    %p229 = scmp.ne.s32.totalorder %s221, %s223
    %p230 = scmp.eq.s32.totalorder %s24, 1
    %p231 = por %p229, %p230
    %p232 = scmp.ne.s32.totalorder %s223, %s224
    %p233 = scmp.eq.s32.totalorder %s24, 0
    %p234 = por %p232, %p233
    %p235 = scmp.ne.s32.totalorder %s223, %s224
    %p236 = scmp.eq.s32.totalorder %s25, 1
    %p237 = por %p235, %p236
    %p239 = scmp.ne.s32.totalorder %s224, %s238
    %p240 = scmp.eq.s32.totalorder %s25, 0
    %p241 = por %p239, %p240
    %s243 = sadd.s32 %s242, 1
    %p246 = scmp.eq.s32.totalorder %s19, 1
    %p247 = scmp.ne.s32.totalorder %s242, %s244
    %p248 = scmp.eq.s32.totalorder %s19, 0
    %p249 = por %p247, %p248
    %p250 = scmp.ne.s32.totalorder %s242, %s244
    %p251 = scmp.eq.s32.totalorder %s24, 1
    %p252 = por %p250, %p251
    %p253 = scmp.ne.s32.totalorder %s244, %s245
    %p254 = scmp.eq.s32.totalorder %s24, 0
    %p255 = por %p253, %p254
    %p256 = scmp.ne.s32.totalorder %s244, %s245
    %p257 = scmp.eq.s32.totalorder %s25, 1
    %p258 = por %p256, %p257
    %p260 = scmp.ne.s32.totalorder %s245, %s259
    %p261 = scmp.eq.s32.totalorder %s25, 0
    %p262 = por %p260, %p261
    %s264 = sadd.s32 %s263, 1
    %p267 = scmp.eq.s32.totalorder %s19, 1
    %p268 = scmp.ne.s32.totalorder %s263, %s265
    %p269 = scmp.eq.s32.totalorder %s19, 0
    %p270 = por %p268, %p269
    %p271 = scmp.ne.s32.totalorder %s263, %s265
    %p272 = scmp.eq.s32.totalorder %s24, 1
    %p273 = por %p271, %p272
    %p274 = scmp.ne.s32.totalorder %s265, %s266
    %p275 = scmp.eq.s32.totalorder %s24, 0
    %p276 = por %p274, %p275
    %p277 = scmp.ne.s32.totalorder %s265, %s266
    %p278 = scmp.eq.s32.totalorder %s25, 1
    %p279 = por %p277, %p278
    %p281 = scmp.ne.s32.totalorder %s266, %s280
    %p282 = scmp.eq.s32.totalorder %s25, 0
    %p283 = por %p281, %p282
    %s285 = sadd.s32 %s284, 1
    %p288 = scmp.eq.s32.totalorder %s19, 1
    %p289 = scmp.ne.s32.totalorder %s284, %s286
    %p290 = scmp.eq.s32.totalorder %s19, 0
    %p291 = por %p289, %p290
    %p292 = scmp.ne.s32.totalorder %s284, %s286
    %p293 = scmp.eq.s32.totalorder %s24, 1
    %p294 = por %p292, %p293
    %p295 = scmp.ne.s32.totalorder %s286, %s287
    %p296 = scmp.eq.s32.totalorder %s24, 0
    %p297 = por %p295, %p296
    %p298 = scmp.ne.s32.totalorder %s286, %s287
    %p299 = scmp.eq.s32.totalorder %s25, 1
    %p300 = por %p298, %p299
    %p302 = scmp.ne.s32.totalorder %s287, %s301
    %p303 = scmp.eq.s32.totalorder %s25, 0
    %p304 = por %p302, %p303
    %s305 = ssub.s32 %s19, %s26
    %p306 = scmp.eq.s32.totalorder %s305, 0
    %s308 = sadd.s32 %s307, 1
    %s309 = scalar_select %p306, %s307, %s308
    %p312 = pneg %p306
    %p313 = scmp.eq.s32.totalorder %s19, 1
    %p314 = por %p312, %p313
    %p315 = scmp.ne.s32.totalorder %s307, %s310
    %p316 = scmp.eq.s32.totalorder %s19, 0
    %p317 = por %p315, %p316
    %p318 = scmp.ne.s32.totalorder %s307, %s310
    %p319 = scmp.eq.s32.totalorder %s24, 1
    %p320 = por %p318, %p319
    %p321 = scmp.ne.s32.totalorder %s310, %s311
    %p322 = scmp.eq.s32.totalorder %s24, 0
    %p323 = por %p321, %p322
    %p324 = scmp.ne.s32.totalorder %s310, %s311
    %p325 = scmp.eq.s32.totalorder %s25, 1
    %p326 = por %p324, %p325
    %p328 = scmp.ne.s32.totalorder %s311, %s327
    %p329 = scmp.eq.s32.totalorder %s25, 0
    %p330 = por %p328, %p329
    %p331 = scmp.le.s32.totalorder 1, %s19
    %p332 = scmp.lt.s32.totalorder %s19, 3
    %p333 = pnand %p331, %p332
    %p334 = pneg %p333
    // Predicated region
    $region9: #{forward.1} parent=5 // pred_check
      _
    $region10: #{forward.1} parent=5 // pred_check_branch
      %336 = sbr.rel (%p333) target = $region12
    $region11: #{forward.1} parent=5 // pred_region
      %s337 = ssub.s32 %s19, 1
      // Predicated region
      $region13: #{forward.1} parent=11 // pred_check
        %p338 = pneg %p66
      $region14: #{forward.1} parent=11 // pred_check_branch
        %340 = sbr.rel (%p338) target = $region16
      $region15: #{forward.1} parent=11 // pred_region
        _
      $region16: #{forward.1} parent=11 // pred_fallthru
        _
      // Predicated region
      $region17: #{forward.1} parent=11 // pred_check
        %p341 = pneg %p87
      $region18: #{forward.1} parent=11 // pred_check_branch
        %343 = sbr.rel (%p341) target = $region20
      $region19: #{forward.1} parent=11 // pred_region
        _
      $region20: #{forward.1} parent=11 // pred_fallthru
        _
      // Predicated region
      $region21: #{forward.1} parent=11 // pred_check
        %p344 = pneg %p108
      $region22: #{forward.1} parent=11 // pred_check_branch
        %346 = sbr.rel (%p344) target = $region24
      $region23: #{forward.1} parent=11 // pred_region
        _
      $region24: #{forward.1} parent=11 // pred_fallthru
        _
      // Predicated region
      $region25: #{forward.1} parent=11 // pred_check
        %p347 = pneg %p129
      $region26: #{forward.1} parent=11 // pred_check_branch
        %349 = sbr.rel (%p347) target = $region28
      $region27: #{forward.1} parent=11 // pred_region
        _
      $region28: #{forward.1} parent=11 // pred_fallthru
        _
      // Predicated region
      $region29: #{forward.1} parent=11 // pred_check
        %p350 = pneg %p150
      $region30: #{forward.1} parent=11 // pred_check_branch
        %352 = sbr.rel (%p350) target = $region32
      $region31: #{forward.1} parent=11 // pred_region
        _
      $region32: #{forward.1} parent=11 // pred_fallthru
        _
      // Predicated region
      $region33: #{forward.1} parent=11 // pred_check
        %p353 = pneg %p171
      $region34: #{forward.1} parent=11 // pred_check_branch
        %355 = sbr.rel (%p353) target = $region36
      $region35: #{forward.1} parent=11 // pred_region
        _
      $region36: #{forward.1} parent=11 // pred_fallthru
        _
      // Predicated region
      $region37: #{forward.1} parent=11 // pred_check
        %p356 = pneg %p192
      $region38: #{forward.1} parent=11 // pred_check_branch
        %358 = sbr.rel (%p356) target = $region40
      $region39: #{forward.1} parent=11 // pred_region
        _
      $region40: #{forward.1} parent=11 // pred_fallthru
        _
      // Predicated region
      $region41: #{forward.1} parent=11 // pred_check
        %p359 = pneg %p213
      $region42: #{forward.1} parent=11 // pred_check_branch
        %361 = sbr.rel (%p359) target = $region44
      $region43: #{forward.1} parent=11 // pred_region
        _
      $region44: #{forward.1} parent=11 // pred_fallthru
        _
      // Predicated region
      $region45: #{forward.1} parent=11 // pred_check
        %p362 = pneg %p234
      $region46: #{forward.1} parent=11 // pred_check_branch
        %364 = sbr.rel (%p362) target = $region48
      $region47: #{forward.1} parent=11 // pred_region
        _
      $region48: #{forward.1} parent=11 // pred_fallthru
        _
      // Predicated region
      $region49: #{forward.1} parent=11 // pred_check
        %p365 = pneg %p255
      $region50: #{forward.1} parent=11 // pred_check_branch
        %367 = sbr.rel (%p365) target = $region52
      $region51: #{forward.1} parent=11 // pred_region
        _
      $region52: #{forward.1} parent=11 // pred_fallthru
        _
      // Predicated region
      $region53: #{forward.1} parent=11 // pred_check
        %p368 = pneg %p276
      $region54: #{forward.1} parent=11 // pred_check_branch
        %370 = sbr.rel (%p368) target = $region56
      $region55: #{forward.1} parent=11 // pred_region
        _
      $region56: #{forward.1} parent=11 // pred_fallthru
        _
      // Predicated region
      $region57: #{forward.1} parent=11 // pred_check
        %p371 = pneg %p297
      $region58: #{forward.1} parent=11 // pred_check_branch
        %373 = sbr.rel (%p371) target = $region60
      $region59: #{forward.1} parent=11 // pred_region
        _
      $region60: #{forward.1} parent=11 // pred_fallthru
        _
    $region12: #{forward.1} parent=5 // pred_fallthru
      _
    %p374 = scmp.lt.s32.totalorder %s19, 2
    // Predicated region
    $region61: #{forward.1} parent=5 // pred_check
      %p375 = pneg %p374
    $region62: #{forward.1} parent=5 // pred_check_branch
      %377 = sbr.rel (%p375) target = $region64
    $region63: #{forward.1} parent=5 // pred_region
      // Predicated region
      $region65: #{forward.1} parent=63 // pred_check
        %p378 = pneg %p39
      $region66: #{forward.1} parent=63 // pred_check_branch
        %380 = sbr.rel (%p378) target = $region68
      $region67: #{forward.1} parent=63 // pred_region
        %s381 = smul.u32 40, %s19
        %p382 = scmp.lt.s32.totalorder %s381, 79
        %s383 = scalar_select %p382, %s381, 79
        %s384 = smul.addr %s383, 4
        %s385 = scalar_lea.vmem %s0, %s384
        %s386 = smul.u32 40, %s19
      $region68: #{forward.1} parent=63 // pred_fallthru
        _
    $region64: #{forward.1} parent=5 // pred_fallthru
      _
    %p387 = scmp.le.s32.totalorder 1, %s19
    %p388 = scmp.lt.s32.totalorder %s19, 3
    %p389 = pnand %p387, %p388
    %p390 = pneg %p389
    // Predicated region
    $region69: #{forward.1} parent=5 // pred_check
      _
    $region70: #{forward.1} parent=5 // pred_check_branch
      %392 = sbr.rel (%p389) target = $region72
    $region71: #{forward.1} parent=5 // pred_region
      %s393 = ssub.s32 %s19, 1
      %s394 = smul.u32 40, %s24
      %p395 = scmp.lt.s32.totalorder %s394, 79
      %s396 = scalar_select %p395, %s394, 79
      %s397 = smul.addr %s396, 4
      %s398 = scalar_lea.vmem %s0, %s397
      %p399 = pneg %p45
      %p400 = pneg %p42
      %p401 = pneg %p66
      %p402 = pneg %p63
      %p403 = pneg %p87
      %p404 = pneg %p84
      %p405 = pneg %p108
      %p406 = pneg %p105
      %p407 = pneg %p129
      %p408 = pneg %p126
      %p409 = pneg %p150
      %p410 = pneg %p147
      %p411 = pneg %p171
      %p412 = pneg %p168
      %p413 = pneg %p192
      %p414 = pneg %p189
      %p415 = pneg %p213
      %p416 = pneg %p210
      %p417 = pneg %p234
      %p418 = pneg %p231
      %p419 = pneg %p255
      %p420 = pneg %p252
      %p421 = pneg %p276
      %p422 = pneg %p273
      %p423 = pneg %p297
      %p424 = pneg %p294
      %p425 = pneg %p323
      %p426 = pneg %p320
      %p427 = scmp.lt.s32.totalorder %s24, 1
      %s428 = scalar_select %p427, %s24, 1
      %s429 = smul.addr %s428, 8
      %s430 = scalar_lea.vmem %s13, %s429
      %s431 = smul.u32 40, %s24
      %p432 = scmp.lt.s32.totalorder %s431, 79
      %s433 = scalar_select %p432, %s431, 79
      %s434 = smul.addr %s433, 4
      %s435 = scalar_lea.vmem %s0, %s434
      %s436 = smul.u32 40, %s24
      %p437 = scmp.lt.s32.totalorder %s24, 1
      %s438 = scalar_select %p437, %s24, 1
      %s439 = smul.addr %s438, 8
      %s440 = scalar_lea.vmem %s13, %s439
      %v442 = vld [vmem:[%s435] sm:$0xf]
      %v443 = vld [vmem:[%s435 + $0x4] sm:$0xf]
      %v444 = vld [vmem:[%s435 + $0x8] sm:$0xf]
      %v445 = vld [vmem:[%s435 + $0xc] sm:$0xf]
      %v446 = vld [vmem:[%s435 + $0x10] sm:$0xf]
      %v447 = vld [vmem:[%s435 + $0x14] sm:$0xf]
      %v448 = vld [vmem:[%s435 + $0x18] sm:$0xf]
      %v449 = vld [vmem:[%s435 + $0x1c] sm:$0xf]
      %v450 = vld [vmem:[%s435 + $0x20] sm:$0xf]
      %v451 = vld [vmem:[%s435 + $0x24] sm:$0xf]
      %v452 = vld [vmem:[%s435 + $0x28] sm:$0xf]
      %v453 = vld [vmem:[%s435 + $0x2c] sm:$0xf]
      %v454 = vld [vmem:[%s435 + $0x30] sm:$0xf]
      %v455 = vld [vmem:[%s435 + $0x34] sm:$0xf]
      %v456 = vld [vmem:[%s435 + $0x38] sm:$0xf]
      %v457 = vld [vmem:[%s435 + $0x3c] sm:$0xf]
      %v458 = vld [vmem:[%s435 + $0x40] sm:$0xf]
      %v459 = vld [vmem:[%s435 + $0x44] sm:$0xf]
      %v460 = vld [vmem:[%s435 + $0x48] sm:$0xf]
      %v461 = vld [vmem:[%s435 + $0x4c] sm:$0xf]
      %v462 = vld [vmem:[%s435 + $0x50] sm:$0xf]
      %v463 = vld [vmem:[%s435 + $0x54] sm:$0xf]
      %v464 = vld [vmem:[%s435 + $0x58] sm:$0xf]
      %v465 = vld [vmem:[%s435 + $0x5c] sm:$0xf]
      %v466 = vld [vmem:[%s435 + $0x60] sm:$0xf]
      %v467 = vld [vmem:[%s435 + $0x64] sm:$0xf]
      %v468 = vld [vmem:[%s435 + $0x68] sm:$0xf]
      %v469 = vld [vmem:[%s435 + $0x6c] sm:$0xf]
      %v470 = vld [vmem:[%s435 + $0x70] sm:$0xf]
      %v471 = vld [vmem:[%s435 + $0x74] sm:$0xf]
      %v472 = vld [vmem:[%s435 + $0x78] sm:$0xf]
      %v473 = vld [vmem:[%s435 + $0x7c] sm:$0xf]
      %v474 = vld [vmem:[%s435 + $0x80] sm:$0xf]
      %v475 = vld [vmem:[%s435 + $0x84] sm:$0xf]
      %v476 = vld [vmem:[%s435 + $0x88] sm:$0xf]
      %v477 = vld [vmem:[%s435 + $0x8c] sm:$0xf]
      %v478 = vld [vmem:[%s435 + $0x90] sm:$0xf]
      %v479 = vld [vmem:[%s435 + $0x94] sm:$0xf]
      %v480 = vld [vmem:[%s435 + $0x98] sm:$0xf]
      %v481 = vld [vmem:[%s435 + $0x9c] sm:$0xf]
      %v482 = vld [vmem:[%s1] sm:$0xff]
      %v483 = vld [vmem:[%s1 + $0x8] sm:$0xf]
      %v484 = vld [vmem:[%s1 + $0xc] sm:$0xff]
      %v485 = vld [vmem:[%s1 + $0x14] sm:$0xf]
      %v486 = vld [vmem:[%s1 + $0x18] sm:$0xff]
      %v487 = vld [vmem:[%s1 + $0x20] sm:$0xf]
      %v488 = vld [vmem:[%s1 + $0x24] sm:$0xff]
      %v489 = vld [vmem:[%s1 + $0x2c] sm:$0xf]
      %v490 = vld [vmem:[%s1 + $0x30] sm:$0xff]
      %v491 = vld [vmem:[%s1 + $0x38] sm:$0xf]
      %v492 = vld [vmem:[%s1 + $0x3c] sm:$0xff]
      %v493 = vld [vmem:[%s1 + $0x44] sm:$0xf]
      %v494 = vld [vmem:[%s1 + $0x48] sm:$0xff]
      %v495 = vld [vmem:[%s1 + $0x50] sm:$0xf]
      %v496 = vld [vmem:[%s1 + $0x54] sm:$0xff]
      %v497 = vld [vmem:[%s1 + $0x5c] sm:$0xf]
      %v498 = vld [vmem:[%s1 + $0x60] sm:$0xff]
      %v499 = vld [vmem:[%s1 + $0x68] sm:$0xf]
      %v500 = vld [vmem:[%s1 + $0x6c] sm:$0xff]
      %v501 = vld [vmem:[%s1 + $0x74] sm:$0xf]
      %v502 = vld [vmem:[%s1 + $0x78] sm:$0xff]
      %v503 = vld [vmem:[%s1 + $0x80] sm:$0xf]
      %v504 = vld [vmem:[%s1 + $0x84] sm:$0xff]
      %v505 = vld [vmem:[%s1 + $0x8c] sm:$0xf]
      %v506 = vld [vmem:[%s1 + $0x90] sm:$0xff]
      %v507 = vld [vmem:[%s1 + $0x98] sm:$0xf]
      %v508 = vld [vmem:[%s1 + $0x9c] sm:$0xff]
      %v509 = vld [vmem:[%s1 + $0xa4] sm:$0xf]
      %v510 = vld [vmem:[%s1 + $0xa8] sm:$0xff]
      %v511 = vld [vmem:[%s1 + $0xb0] sm:$0xf]
      %v512 = vld [vmem:[%s1 + $0xb4] sm:$0xff]
      %v513 = vld [vmem:[%s1 + $0xbc] sm:$0xf]
      %v514 = vld [vmem:[%s1 + $0xc0] sm:$0xff]
      %v515 = vld [vmem:[%s1 + $0xc8] sm:$0xf]
      %v516 = vld [vmem:[%s1 + $0xcc] sm:$0xff]
      %v517 = vld [vmem:[%s1 + $0xd4] sm:$0xf]
      %v518 = vld [vmem:[%s1 + $0xd8] sm:$0xff]
      %v519 = vld [vmem:[%s1 + $0xe0] sm:$0xf]
      %v520 = vld [vmem:[%s1 + $0xe4] sm:$0xff]
      %v521 = vld [vmem:[%s1 + $0xec] sm:$0xf]
      %v522 = vld [vmem:[%s1 + $0xf0] sm:$0xff]
      %v523 = vld [vmem:[%s1 + $0xf8] sm:$0xf]
      %v524 = vld [vmem:[%s1 + $0xfc] sm:$0xff]
      %v525 = vld [vmem:[%s1 + $0x104] sm:$0xf]
      %v526 = vld [vmem:[%s1 + $0x108] sm:$0xff]
      %v527 = vld [vmem:[%s1 + $0x110] sm:$0xf]
      %v528 = vld [vmem:[%s1 + $0x114] sm:$0xff]
      %v529 = vld [vmem:[%s1 + $0x11c] sm:$0xf]
      %v530 = vld [vmem:[%s1 + $0x120] sm:$0xff]
      %v531 = vld [vmem:[%s1 + $0x128] sm:$0xf]
      %v532 = vld [vmem:[%s1 + $0x12c] sm:$0xff]
      %v533 = vld [vmem:[%s1 + $0x134] sm:$0xf]
      %v534 = vld [vmem:[%s1 + $0x138] sm:$0xff]
      %v535 = vld [vmem:[%s1 + $0x140] sm:$0xf]
      %v536 = vld [vmem:[%s1 + $0x144] sm:$0xff]
      %v537 = vld [vmem:[%s1 + $0x14c] sm:$0xf]
      %v538 = vld [vmem:[%s1 + $0x150] sm:$0xff]
      %v539 = vld [vmem:[%s1 + $0x158] sm:$0xf]
      %v540 = vld [vmem:[%s1 + $0x15c] sm:$0xff]
      %v541 = vld [vmem:[%s1 + $0x164] sm:$0xf]
      %v542 = vld [vmem:[%s1 + $0x168] sm:$0xff]
      %v543 = vld [vmem:[%s1 + $0x170] sm:$0xf]
      %v544 = vld [vmem:[%s1 + $0x174] sm:$0xff]
      %v545 = vld [vmem:[%s1 + $0x17c] sm:$0xf]
      %v546 = vld [vmem:[%s1 + $0x180] sm:$0xff]
      %v547 = vld [vmem:[%s1 + $0x188] sm:$0xf]
      %v548 = vld [vmem:[%s1 + $0x18c] sm:$0xff]
      %v549 = vld [vmem:[%s1 + $0x194] sm:$0xf]
      %v550 = vld [vmem:[%s1 + $0x198] sm:$0xff]
      %v551 = vld [vmem:[%s1 + $0x1a0] sm:$0xf]
      %v552 = vld [vmem:[%s1 + $0x1a4] sm:$0xff]
      %v553 = vld [vmem:[%s1 + $0x1ac] sm:$0xf]
      %v554 = vld [vmem:[%s1 + $0x1b0] sm:$0xff]
      %v555 = vld [vmem:[%s1 + $0x1b8] sm:$0xf]
      %v556 = vld [vmem:[%s1 + $0x1bc] sm:$0xff]
      %v557 = vld [vmem:[%s1 + $0x1c4] sm:$0xf]
      %v558 = vld [vmem:[%s1 + $0x1c8] sm:$0xff]
      %v559 = vld [vmem:[%s1 + $0x1d0] sm:$0xf]
      %v560 = vld [vmem:[%s1 + $0x1d4] sm:$0xff]
      %v561 = vld [vmem:[%s1 + $0x1dc] sm:$0xf]
      %v562 = vld [vmem:[%s1 + $0x1e0] sm:$0xff]
      %v563 = vld [vmem:[%s1 + $0x1e8] sm:$0xf]
      %v564 = vld [vmem:[%s1 + $0x1ec] sm:$0xff]
      %v565 = vld [vmem:[%s1 + $0x1f4] sm:$0xf]
      %v566 = vld [vmem:[%s1 + $0x1f8] sm:$0xff]
      %v567 = vld [vmem:[%s1 + $0x200] sm:$0xf]
      %v568 = vld [vmem:[%s1 + $0x204] sm:$0xff]
      %v569 = vld [vmem:[%s1 + $0x20c] sm:$0xf]
      %v570 = vld [vmem:[%s1 + $0x210] sm:$0xff]
      %v571 = vld [vmem:[%s1 + $0x218] sm:$0xf]
      %v572 = vld [vmem:[%s1 + $0x21c] sm:$0xff]
      %v573 = vld [vmem:[%s1 + $0x224] sm:$0xf]
      %v574 = vld [vmem:[%s1 + $0x228] sm:$0xff]
      %v575 = vld [vmem:[%s1 + $0x230] sm:$0xf]
      %v576 = vld [vmem:[%s1 + $0x234] sm:$0xff]
      %v577 = vld [vmem:[%s1 + $0x23c] sm:$0xf]
      %v578 = vld [vmem:[%s1 + $0x240] sm:$0xff]
      %v579 = vld [vmem:[%s1 + $0x248] sm:$0xf]
      %v580 = vld [vmem:[%s1 + $0x24c] sm:$0xff]
      %v581 = vld [vmem:[%s1 + $0x254] sm:$0xf]
      %v582 = vld [vmem:[%s1 + $0x258] sm:$0xff]
      %v583 = vld [vmem:[%s1 + $0x260] sm:$0xf]
      %v584 = vld [vmem:[%s1 + $0x264] sm:$0xff]
      %v585 = vld [vmem:[%s1 + $0x26c] sm:$0xf]
      %v586 = vld [vmem:[%s1 + $0x270] sm:$0xff]
      %v587 = vld [vmem:[%s1 + $0x278] sm:$0xf]
      %v588 = vld [vmem:[%s1 + $0x27c] sm:$0xff]
      %v589 = vld [vmem:[%s1 + $0x284] sm:$0xf]
      %v590 = vld [vmem:[%s1 + $0x288] sm:$0xff]
      %v591 = vld [vmem:[%s1 + $0x290] sm:$0xf]
      %v592 = vld [vmem:[%s1 + $0x294] sm:$0xff]
      %v593 = vld [vmem:[%s1 + $0x29c] sm:$0xf]
      %v594 = vld [vmem:[%s1 + $0x2a0] sm:$0xff]
      %v595 = vld [vmem:[%s1 + $0x2a8] sm:$0xf]
      %v596 = vld [vmem:[%s1 + $0x2ac] sm:$0xff]
      %v597 = vld [vmem:[%s1 + $0x2b4] sm:$0xf]
      %v598 = vld [vmem:[%s1 + $0x2b8] sm:$0xff]
      %v599 = vld [vmem:[%s1 + $0x2c0] sm:$0xf]
      %v600 = vld [vmem:[%s1 + $0x2c4] sm:$0xff]
      %v601 = vld [vmem:[%s1 + $0x2cc] sm:$0xf]
      %v602 = vld [vmem:[%s1 + $0x2d0] sm:$0xff]
      %v603 = vld [vmem:[%s1 + $0x2d8] sm:$0xf]
      %v604 = vld [vmem:[%s1 + $0x2dc] sm:$0xff]
      %v605 = vld [vmem:[%s1 + $0x2e4] sm:$0xf]
      %v606 = vld [vmem:[%s1 + $0x2e8] sm:$0xff]
      %v607 = vld [vmem:[%s1 + $0x2f0] sm:$0xf]
      %v608 = vld [vmem:[%s1 + $0x2f4] sm:$0xff]
      %v609 = vld [vmem:[%s1 + $0x2fc] sm:$0xf]
      %v610 = vld [vmem:[%s1 + $0x300] sm:$0xff]
      %v611 = vld [vmem:[%s1 + $0x308] sm:$0xf]
      %v612 = vld [vmem:[%s1 + $0x30c] sm:$0xff]
      %v613 = vld [vmem:[%s1 + $0x314] sm:$0xf]
      %v614 = vld [vmem:[%s1 + $0x318] sm:$0xff]
      %v615 = vld [vmem:[%s1 + $0x320] sm:$0xf]
      %v616 = vld [vmem:[%s1 + $0x324] sm:$0xff]
      %v617 = vld [vmem:[%s1 + $0x32c] sm:$0xf]
      %v618 = vld [vmem:[%s1 + $0x330] sm:$0xff]
      %v619 = vld [vmem:[%s1 + $0x338] sm:$0xf]
      %v620 = vld [vmem:[%s1 + $0x33c] sm:$0xff]
      %v621 = vld [vmem:[%s1 + $0x344] sm:$0xf]
      %v622 = vld [vmem:[%s1 + $0x348] sm:$0xff]
      %v623 = vld [vmem:[%s1 + $0x350] sm:$0xf]
      %v624 = vld [vmem:[%s1 + $0x354] sm:$0xff]
      %v625 = vld [vmem:[%s1 + $0x35c] sm:$0xf]
      %v626 = vld [vmem:[%s1 + $0x360] sm:$0xff]
      %v627 = vld [vmem:[%s1 + $0x368] sm:$0xf]
      %v628 = vld [vmem:[%s1 + $0x36c] sm:$0xff]
      %v629 = vld [vmem:[%s1 + $0x374] sm:$0xf]
      %v630 = vld [vmem:[%s1 + $0x378] sm:$0xff]
      %v631 = vld [vmem:[%s1 + $0x380] sm:$0xf]
      %v632 = vld [vmem:[%s1 + $0x384] sm:$0xff]
      %v633 = vld [vmem:[%s1 + $0x38c] sm:$0xf]
      %v634 = vld [vmem:[%s1 + $0x390] sm:$0xff]
      %v635 = vld [vmem:[%s1 + $0x398] sm:$0xf]
      %v636 = vld [vmem:[%s1 + $0x39c] sm:$0xff]
      %v637 = vld [vmem:[%s1 + $0x3a4] sm:$0xf]
      %v638 = vld [vmem:[%s1 + $0x3a8] sm:$0xff]
      %v639 = vld [vmem:[%s1 + $0x3b0] sm:$0xf]
      %v640 = vld [vmem:[%s1 + $0x3b4] sm:$0xff]
      %v641 = vld [vmem:[%s1 + $0x3bc] sm:$0xf]
      %v642 = vld [vmem:[%s1 + $0x3c0] sm:$0xff]
      %v643 = vld [vmem:[%s1 + $0x3c8] sm:$0xf]
      %v644 = vld [vmem:[%s1 + $0x3cc] sm:$0xff]
      %v645 = vld [vmem:[%s1 + $0x3d4] sm:$0xf]
      %v646 = vld [vmem:[%s1 + $0x3d8] sm:$0xff]
      %v647 = vld [vmem:[%s1 + $0x3e0] sm:$0xf]
      %v648 = vld [vmem:[%s1 + $0x3e4] sm:$0xff]
      %v649 = vld [vmem:[%s1 + $0x3ec] sm:$0xf]
      %v650 = vld [vmem:[%s1 + $0x3f0] sm:$0xff]
      %v651 = vld [vmem:[%s1 + $0x3f8] sm:$0xf]
      %v652 = vld [vmem:[%s1 + $0x3fc] sm:$0xff]
      %v653 = vld [vmem:[%s1 + $0x404] sm:$0xf]
      %v654 = vld [vmem:[%s1 + $0x408] sm:$0xff]
      %v655 = vld [vmem:[%s1 + $0x410] sm:$0xf]
      %v656 = vld [vmem:[%s1 + $0x414] sm:$0xff]
      %v657 = vld [vmem:[%s1 + $0x41c] sm:$0xf]
      %v658 = vld [vmem:[%s1 + $0x420] sm:$0xff]
      %v659 = vld [vmem:[%s1 + $0x428] sm:$0xf]
      %v660 = vld [vmem:[%s1 + $0x42c] sm:$0xff]
      %v661 = vld [vmem:[%s1 + $0x434] sm:$0xf]
      %v842 = vunpack.c.l.b16 %v482
      %v843 = vunpack.c.h.b16 %v482
      %v844 = vunpack.c.l.b16 %v483
      %v845 = vunpack.c.l.b16 %v484
      %v846 = vunpack.c.h.b16 %v484
      %v847 = vunpack.c.l.b16 %v485
      %v848 = vunpack.c.l.b16 %v486
      %v849 = vunpack.c.h.b16 %v486
      %v850 = vunpack.c.l.b16 %v487
      %v851 = vunpack.c.l.b16 %v488
      %v852 = vunpack.c.h.b16 %v488
      %v853 = vunpack.c.l.b16 %v489
      %v854 = vunpack.c.l.b16 %v490
      %v855 = vunpack.c.h.b16 %v490
      %v856 = vunpack.c.l.b16 %v491
      %v857 = vunpack.c.l.b16 %v492
      %v858 = vunpack.c.h.b16 %v492
      %v859 = vunpack.c.l.b16 %v493
      %v860 = vunpack.c.l.b16 %v494
      %v861 = vunpack.c.h.b16 %v494
      %v862 = vunpack.c.l.b16 %v495
      %v863 = vunpack.c.l.b16 %v496
      %v864 = vunpack.c.h.b16 %v496
      %v865 = vunpack.c.l.b16 %v497
      %v866 = vunpack.c.l.b16 %v498
      %v867 = vunpack.c.h.b16 %v498
      %v868 = vunpack.c.l.b16 %v499
      %v869 = vunpack.c.l.b16 %v500
      %v870 = vunpack.c.h.b16 %v500
      %v871 = vunpack.c.l.b16 %v501
      %v872 = vunpack.c.l.b16 %v502
      %v873 = vunpack.c.h.b16 %v502
      %v874 = vunpack.c.l.b16 %v503
      %v875 = vunpack.c.l.b16 %v504
      %v876 = vunpack.c.h.b16 %v504
      %v877 = vunpack.c.l.b16 %v505
      %v878 = vunpack.c.l.b16 %v506
      %v879 = vunpack.c.h.b16 %v506
      %v880 = vunpack.c.l.b16 %v507
      %v881 = vunpack.c.l.b16 %v508
      %v882 = vunpack.c.h.b16 %v508
      %v883 = vunpack.c.l.b16 %v509
      %v884 = vunpack.c.l.b16 %v510
      %v885 = vunpack.c.h.b16 %v510
      %v886 = vunpack.c.l.b16 %v511
      %v887 = vunpack.c.l.b16 %v512
      %v888 = vunpack.c.h.b16 %v512
      %v889 = vunpack.c.l.b16 %v513
      %v890 = vunpack.c.l.b16 %v514
      %v891 = vunpack.c.h.b16 %v514
      %v892 = vunpack.c.l.b16 %v515
      %v893 = vunpack.c.l.b16 %v516
      %v894 = vunpack.c.h.b16 %v516
      %v895 = vunpack.c.l.b16 %v517
      %v896 = vunpack.c.l.b16 %v518
      %v897 = vunpack.c.h.b16 %v518
      %v898 = vunpack.c.l.b16 %v519
      %v899 = vunpack.c.l.b16 %v520
      %v900 = vunpack.c.h.b16 %v520
      %v901 = vunpack.c.l.b16 %v521
      %v902 = vunpack.c.l.b16 %v522
      %v903 = vunpack.c.h.b16 %v522
      %v904 = vunpack.c.l.b16 %v523
      %v905 = vunpack.c.l.b16 %v524
      %v906 = vunpack.c.h.b16 %v524
      %v907 = vunpack.c.l.b16 %v525
      %v908 = vunpack.c.l.b16 %v526
      %v909 = vunpack.c.h.b16 %v526
      %v910 = vunpack.c.l.b16 %v527
      %v911 = vunpack.c.l.b16 %v528
      %v912 = vunpack.c.h.b16 %v528
      %v913 = vunpack.c.l.b16 %v529
      %v914 = vunpack.c.l.b16 %v530
      %v915 = vunpack.c.h.b16 %v530
      %v916 = vunpack.c.l.b16 %v531
      %v917 = vunpack.c.l.b16 %v532
      %v918 = vunpack.c.h.b16 %v532
      %v919 = vunpack.c.l.b16 %v533
      %v920 = vunpack.c.l.b16 %v534
      %v921 = vunpack.c.h.b16 %v534
      %v922 = vunpack.c.l.b16 %v535
      %v923 = vunpack.c.l.b16 %v536
      %v924 = vunpack.c.h.b16 %v536
      %v925 = vunpack.c.l.b16 %v537
      %v926 = vunpack.c.l.b16 %v538
      %v927 = vunpack.c.h.b16 %v538
      %v928 = vunpack.c.l.b16 %v539
      %v929 = vunpack.c.l.b16 %v540
      %v930 = vunpack.c.h.b16 %v540
      %v931 = vunpack.c.l.b16 %v541
      %v932 = vunpack.c.l.b16 %v542
      %v933 = vunpack.c.h.b16 %v542
      %v934 = vunpack.c.l.b16 %v543
      %v935 = vunpack.c.l.b16 %v544
      %v936 = vunpack.c.h.b16 %v544
      %v937 = vunpack.c.l.b16 %v545
      %v938 = vunpack.c.l.b16 %v546
      %v939 = vunpack.c.h.b16 %v546
      %v940 = vunpack.c.l.b16 %v547
      %v941 = vunpack.c.l.b16 %v548
      %v942 = vunpack.c.h.b16 %v548
      %v943 = vunpack.c.l.b16 %v549
      %v944 = vunpack.c.l.b16 %v550
      %v945 = vunpack.c.h.b16 %v550
      %v946 = vunpack.c.l.b16 %v551
      %v947 = vunpack.c.l.b16 %v552
      %v948 = vunpack.c.h.b16 %v552
      %v949 = vunpack.c.l.b16 %v553
      %v950 = vunpack.c.l.b16 %v554
      %v951 = vunpack.c.h.b16 %v554
      %v952 = vunpack.c.l.b16 %v555
      %v953 = vunpack.c.l.b16 %v556
      %v954 = vunpack.c.h.b16 %v556
      %v955 = vunpack.c.l.b16 %v557
      %v956 = vunpack.c.l.b16 %v558
      %v957 = vunpack.c.h.b16 %v558
      %v958 = vunpack.c.l.b16 %v559
      %v959 = vunpack.c.l.b16 %v560
      %v960 = vunpack.c.h.b16 %v560
      %v961 = vunpack.c.l.b16 %v561
      %v962 = vunpack.c.l.b16 %v562
      %v963 = vunpack.c.h.b16 %v562
      %v964 = vunpack.c.l.b16 %v563
      %v965 = vunpack.c.l.b16 %v564
      %v966 = vunpack.c.h.b16 %v564
      %v967 = vunpack.c.l.b16 %v565
      %v968 = vunpack.c.l.b16 %v566
      %v969 = vunpack.c.h.b16 %v566
      %v970 = vunpack.c.l.b16 %v567
      %v971 = vunpack.c.l.b16 %v568
      %v972 = vunpack.c.h.b16 %v568
      %v973 = vunpack.c.l.b16 %v569
      %v974 = vunpack.c.l.b16 %v570
      %v975 = vunpack.c.h.b16 %v570
      %v976 = vunpack.c.l.b16 %v571
      %v977 = vunpack.c.l.b16 %v572
      %v978 = vunpack.c.h.b16 %v572
      %v979 = vunpack.c.l.b16 %v573
      %v980 = vunpack.c.l.b16 %v574
      %v981 = vunpack.c.h.b16 %v574
      %v982 = vunpack.c.l.b16 %v575
      %v983 = vunpack.c.l.b16 %v576
      %v984 = vunpack.c.h.b16 %v576
      %v985 = vunpack.c.l.b16 %v577
      %v986 = vunpack.c.l.b16 %v578
      %v987 = vunpack.c.h.b16 %v578
      %v988 = vunpack.c.l.b16 %v579
      %v989 = vunpack.c.l.b16 %v580
      %v990 = vunpack.c.h.b16 %v580
      %v991 = vunpack.c.l.b16 %v581
      %v992 = vunpack.c.l.b16 %v582
      %v993 = vunpack.c.h.b16 %v582
      %v994 = vunpack.c.l.b16 %v583
      %v995 = vunpack.c.l.b16 %v584
      %v996 = vunpack.c.h.b16 %v584
      %v997 = vunpack.c.l.b16 %v585
      %v998 = vunpack.c.l.b16 %v586
      %v999 = vunpack.c.h.b16 %v586
      %v1000 = vunpack.c.l.b16 %v587
      %v1001 = vunpack.c.l.b16 %v588
      %v1002 = vunpack.c.h.b16 %v588
      %v1003 = vunpack.c.l.b16 %v589
      %v1004 = vunpack.c.l.b16 %v590
      %v1005 = vunpack.c.h.b16 %v590
      %v1006 = vunpack.c.l.b16 %v591
      %v1007 = vunpack.c.l.b16 %v592
      %v1008 = vunpack.c.h.b16 %v592
      %v1009 = vunpack.c.l.b16 %v593
      %v1010 = vunpack.c.l.b16 %v594
      %v1011 = vunpack.c.h.b16 %v594
      %v1012 = vunpack.c.l.b16 %v595
      %v1013 = vunpack.c.l.b16 %v596
      %v1014 = vunpack.c.h.b16 %v596
      %v1015 = vunpack.c.l.b16 %v597
      %v1016 = vunpack.c.l.b16 %v598
      %v1017 = vunpack.c.h.b16 %v598
      %v1018 = vunpack.c.l.b16 %v599
      %v1019 = vunpack.c.l.b16 %v600
      %v1020 = vunpack.c.h.b16 %v600
      %v1021 = vunpack.c.l.b16 %v601
      %v1022 = vunpack.c.l.b16 %v602
      %v1023 = vunpack.c.h.b16 %v602
      %v1024 = vunpack.c.l.b16 %v603
      %v1025 = vunpack.c.l.b16 %v604
      %v1026 = vunpack.c.h.b16 %v604
      %v1027 = vunpack.c.l.b16 %v605
      %v1028 = vunpack.c.l.b16 %v606
      %v1029 = vunpack.c.h.b16 %v606
      %v1030 = vunpack.c.l.b16 %v607
      %v1031 = vunpack.c.l.b16 %v608
      %v1032 = vunpack.c.h.b16 %v608
      %v1033 = vunpack.c.l.b16 %v609
      %v1034 = vunpack.c.l.b16 %v610
      %v1035 = vunpack.c.h.b16 %v610
      %v1036 = vunpack.c.l.b16 %v611
      %v1037 = vunpack.c.l.b16 %v612
      %v1038 = vunpack.c.h.b16 %v612
      %v1039 = vunpack.c.l.b16 %v613
      %v1040 = vunpack.c.l.b16 %v614
      %v1041 = vunpack.c.h.b16 %v614
      %v1042 = vunpack.c.l.b16 %v615
      %v1043 = vunpack.c.l.b16 %v616
      %v1044 = vunpack.c.h.b16 %v616
      %v1045 = vunpack.c.l.b16 %v617
      %v1046 = vunpack.c.l.b16 %v618
      %v1047 = vunpack.c.h.b16 %v618
      %v1048 = vunpack.c.l.b16 %v619
      %v1049 = vunpack.c.l.b16 %v620
      %v1050 = vunpack.c.h.b16 %v620
      %v1051 = vunpack.c.l.b16 %v621
      %v1052 = vunpack.c.l.b16 %v622
      %v1053 = vunpack.c.h.b16 %v622
      %v1054 = vunpack.c.l.b16 %v623
      %v1055 = vunpack.c.l.b16 %v624
      %v1056 = vunpack.c.h.b16 %v624
      %v1057 = vunpack.c.l.b16 %v625
      %v1058 = vunpack.c.l.b16 %v626
      %v1059 = vunpack.c.h.b16 %v626
      %v1060 = vunpack.c.l.b16 %v627
      %v1061 = vunpack.c.l.b16 %v628
      %v1062 = vunpack.c.h.b16 %v628
      %v1063 = vunpack.c.l.b16 %v629
      %v1064 = vunpack.c.l.b16 %v630
      %v1065 = vunpack.c.h.b16 %v630
      %v1066 = vunpack.c.l.b16 %v631
      %v1067 = vunpack.c.l.b16 %v632
      %v1068 = vunpack.c.h.b16 %v632
      %v1069 = vunpack.c.l.b16 %v633
      %v1070 = vunpack.c.l.b16 %v634
      %v1071 = vunpack.c.h.b16 %v634
      %v1072 = vunpack.c.l.b16 %v635
      %v1073 = vunpack.c.l.b16 %v636
      %v1074 = vunpack.c.h.b16 %v636
      %v1075 = vunpack.c.l.b16 %v637
      %v1076 = vunpack.c.l.b16 %v638
      %v1077 = vunpack.c.h.b16 %v638
      %v1078 = vunpack.c.l.b16 %v639
      %v1079 = vunpack.c.l.b16 %v640
      %v1080 = vunpack.c.h.b16 %v640
      %v1081 = vunpack.c.l.b16 %v641
      %v1082 = vunpack.c.l.b16 %v642
      %v1083 = vunpack.c.h.b16 %v642
      %v1084 = vunpack.c.l.b16 %v643
      %v1085 = vunpack.c.l.b16 %v644
      %v1086 = vunpack.c.h.b16 %v644
      %v1087 = vunpack.c.l.b16 %v645
      %v1088 = vunpack.c.l.b16 %v646
      %v1089 = vunpack.c.h.b16 %v646
      %v1090 = vunpack.c.l.b16 %v647
      %v1091 = vunpack.c.l.b16 %v648
      %v1092 = vunpack.c.h.b16 %v648
      %v1093 = vunpack.c.l.b16 %v649
      %v1094 = vunpack.c.l.b16 %v650
      %v1095 = vunpack.c.h.b16 %v650
      %v1096 = vunpack.c.l.b16 %v651
      %v1097 = vunpack.c.l.b16 %v652
      %v1098 = vunpack.c.h.b16 %v652
      %v1099 = vunpack.c.l.b16 %v653
      %v1100 = vunpack.c.l.b16 %v654
      %v1101 = vunpack.c.h.b16 %v654
      %v1102 = vunpack.c.l.b16 %v655
      %v1103 = vunpack.c.l.b16 %v656
      %v1104 = vunpack.c.h.b16 %v656
      %v1105 = vunpack.c.l.b16 %v657
      %v1106 = vunpack.c.l.b16 %v658
      %v1107 = vunpack.c.h.b16 %v658
      %v1108 = vunpack.c.l.b16 %v659
      %v1109 = vunpack.c.l.b16 %v660
      %v1110 = vunpack.c.h.b16 %v660
      %v1111 = vunpack.c.l.b16 %v661
      %v1112 = vpack.c.b16 %v845, %v842
      %v1113 = vpack.c.b16 %v846, %v843
      %v1114 = vpack.c.b16 %v847, %v844
      %v1115 = vpack.c.b16 %v851, %v848
      %v1116 = vpack.c.b16 %v852, %v849
      %v1117 = vpack.c.b16 %v853, %v850
      %v1118 = vpack.c.b16 %v857, %v854
      %v1119 = vpack.c.b16 %v858, %v855
      %v1120 = vpack.c.b16 %v859, %v856
      %v1121 = vpack.c.b16 %v863, %v860
      %v1122 = vpack.c.b16 %v864, %v861
      %v1123 = vpack.c.b16 %v865, %v862
      %v1124 = vpack.c.b16 %v869, %v866
      %v1125 = vpack.c.b16 %v870, %v867
      %v1126 = vpack.c.b16 %v871, %v868
      %v1127 = vpack.c.b16 %v875, %v872
      %v1128 = vpack.c.b16 %v876, %v873
      %v1129 = vpack.c.b16 %v877, %v874
      %v1130 = vpack.c.b16 %v881, %v878
      %v1131 = vpack.c.b16 %v882, %v879
      %v1132 = vpack.c.b16 %v883, %v880
      %v1133 = vpack.c.b16 %v887, %v884
      %v1134 = vpack.c.b16 %v888, %v885
      %v1135 = vpack.c.b16 %v889, %v886
      %v1136 = vpack.c.b16 %v893, %v890
      %v1137 = vpack.c.b16 %v894, %v891
      %v1138 = vpack.c.b16 %v895, %v892
      %v1139 = vpack.c.b16 %v899, %v896
      %v1140 = vpack.c.b16 %v900, %v897
      %v1141 = vpack.c.b16 %v901, %v898
      %v1142 = vpack.c.b16 %v905, %v902
      %v1143 = vpack.c.b16 %v906, %v903
      %v1144 = vpack.c.b16 %v907, %v904
      %v1145 = vpack.c.b16 %v911, %v908
      %v1146 = vpack.c.b16 %v912, %v909
      %v1147 = vpack.c.b16 %v913, %v910
      %v1148 = vpack.c.b16 %v917, %v914
      %v1149 = vpack.c.b16 %v918, %v915
      %v1150 = vpack.c.b16 %v919, %v916
      %v1151 = vpack.c.b16 %v923, %v920
      %v1152 = vpack.c.b16 %v924, %v921
      %v1153 = vpack.c.b16 %v925, %v922
      %v1154 = vpack.c.b16 %v929, %v926
      %v1155 = vpack.c.b16 %v930, %v927
      %v1156 = vpack.c.b16 %v931, %v928
      %v1157 = vpack.c.b16 %v935, %v932
      %v1158 = vpack.c.b16 %v936, %v933
      %v1159 = vpack.c.b16 %v937, %v934
      %v1160 = vpack.c.b16 %v941, %v938
      %v1161 = vpack.c.b16 %v942, %v939
      %v1162 = vpack.c.b16 %v943, %v940
      %v1163 = vpack.c.b16 %v947, %v944
      %v1164 = vpack.c.b16 %v948, %v945
      %v1165 = vpack.c.b16 %v949, %v946
      %v1166 = vpack.c.b16 %v953, %v950
      %v1167 = vpack.c.b16 %v954, %v951
      %v1168 = vpack.c.b16 %v955, %v952
      %v1169 = vpack.c.b16 %v959, %v956
      %v1170 = vpack.c.b16 %v960, %v957
      %v1171 = vpack.c.b16 %v961, %v958
      %v1172 = vpack.c.b16 %v965, %v962
      %v1173 = vpack.c.b16 %v966, %v963
      %v1174 = vpack.c.b16 %v967, %v964
      %v1175 = vpack.c.b16 %v971, %v968
      %v1176 = vpack.c.b16 %v972, %v969
      %v1177 = vpack.c.b16 %v973, %v970
      %v1178 = vpack.c.b16 %v977, %v974
      %v1179 = vpack.c.b16 %v978, %v975
      %v1180 = vpack.c.b16 %v979, %v976
      %v1181 = vpack.c.b16 %v983, %v980
      %v1182 = vpack.c.b16 %v984, %v981
      %v1183 = vpack.c.b16 %v985, %v982
      %v1184 = vpack.c.b16 %v989, %v986
      %v1185 = vpack.c.b16 %v990, %v987
      %v1186 = vpack.c.b16 %v991, %v988
      %v1187 = vpack.c.b16 %v995, %v992
      %v1188 = vpack.c.b16 %v996, %v993
      %v1189 = vpack.c.b16 %v997, %v994
      %v1190 = vpack.c.b16 %v1001, %v998
      %v1191 = vpack.c.b16 %v1002, %v999
      %v1192 = vpack.c.b16 %v1003, %v1000
      %v1193 = vpack.c.b16 %v1007, %v1004
      %v1194 = vpack.c.b16 %v1008, %v1005
      %v1195 = vpack.c.b16 %v1009, %v1006
      %v1196 = vpack.c.b16 %v1013, %v1010
      %v1197 = vpack.c.b16 %v1014, %v1011
      %v1198 = vpack.c.b16 %v1015, %v1012
      %v1199 = vpack.c.b16 %v1019, %v1016
      %v1200 = vpack.c.b16 %v1020, %v1017
      %v1201 = vpack.c.b16 %v1021, %v1018
      %v1202 = vpack.c.b16 %v1025, %v1022
      %v1203 = vpack.c.b16 %v1026, %v1023
      %v1204 = vpack.c.b16 %v1027, %v1024
      %v1205 = vpack.c.b16 %v1031, %v1028
      %v1206 = vpack.c.b16 %v1032, %v1029
      %v1207 = vpack.c.b16 %v1033, %v1030
      %v1208 = vpack.c.b16 %v1037, %v1034
      %v1209 = vpack.c.b16 %v1038, %v1035
      %v1210 = vpack.c.b16 %v1039, %v1036
      %v1211 = vpack.c.b16 %v1043, %v1040
      %v1212 = vpack.c.b16 %v1044, %v1041
      %v1213 = vpack.c.b16 %v1045, %v1042
      %v1214 = vpack.c.b16 %v1049, %v1046
      %v1215 = vpack.c.b16 %v1050, %v1047
      %v1216 = vpack.c.b16 %v1051, %v1048
      %v1217 = vpack.c.b16 %v1055, %v1052
      %v1218 = vpack.c.b16 %v1056, %v1053
      %v1219 = vpack.c.b16 %v1057, %v1054
      %v1220 = vpack.c.b16 %v1061, %v1058
      %v1221 = vpack.c.b16 %v1062, %v1059
      %v1222 = vpack.c.b16 %v1063, %v1060
      %v1223 = vpack.c.b16 %v1067, %v1064
      %v1224 = vpack.c.b16 %v1068, %v1065
      %v1225 = vpack.c.b16 %v1069, %v1066
      %v1226 = vpack.c.b16 %v1073, %v1070
      %v1227 = vpack.c.b16 %v1074, %v1071
      %v1228 = vpack.c.b16 %v1075, %v1072
      %v1229 = vpack.c.b16 %v1079, %v1076
      %v1230 = vpack.c.b16 %v1080, %v1077
      %v1231 = vpack.c.b16 %v1081, %v1078
      %v1232 = vpack.c.b16 %v1085, %v1082
      %v1233 = vpack.c.b16 %v1086, %v1083
      %v1234 = vpack.c.b16 %v1087, %v1084
      %v1235 = vpack.c.b16 %v1091, %v1088
      %v1236 = vpack.c.b16 %v1092, %v1089
      %v1237 = vpack.c.b16 %v1093, %v1090
      %v1238 = vpack.c.b16 %v1097, %v1094
      %v1239 = vpack.c.b16 %v1098, %v1095
      %v1240 = vpack.c.b16 %v1099, %v1096
      %v1241 = vpack.c.b16 %v1103, %v1100
      %v1242 = vpack.c.b16 %v1104, %v1101
      %v1243 = vpack.c.b16 %v1105, %v1102
      %v1244 = vpack.c.b16 %v1109, %v1106
      %v1245 = vpack.c.b16 %v1110, %v1107
      %v1246 = vpack.c.b16 %v1111, %v1108
      %v1377 = vunpack.c.l.b16 %v442
      %v1378 = vunpack.c.l.b16 %v443
      %v1379 = vunpack.c.l.b16 %v444
      %v1380 = vunpack.c.l.b16 %v445
      %v1381 = vunpack.c.l.b16 %v446
      %v1382 = vunpack.c.l.b16 %v447
      %v1383 = vunpack.c.l.b16 %v448
      %v1384 = vunpack.c.l.b16 %v449
      %v1385 = vunpack.c.l.b16 %v450
      %v1386 = vunpack.c.l.b16 %v451
      %v1387 = vunpack.c.l.b16 %v452
      %v1388 = vunpack.c.l.b16 %v453
      %v1389 = vunpack.c.l.b16 %v454
      %v1390 = vunpack.c.l.b16 %v455
      %v1391 = vunpack.c.l.b16 %v456
      %v1392 = vunpack.c.l.b16 %v457
      %v1393 = vunpack.c.l.b16 %v458
      %v1394 = vunpack.c.l.b16 %v459
      %v1395 = vunpack.c.l.b16 %v460
      %v1396 = vunpack.c.l.b16 %v461
      %v1397 = vunpack.c.l.b16 %v462
      %v1398 = vunpack.c.l.b16 %v463
      %v1399 = vunpack.c.l.b16 %v464
      %v1400 = vunpack.c.l.b16 %v465
      %v1401 = vunpack.c.l.b16 %v466
      %v1402 = vunpack.c.l.b16 %v467
      %v1403 = vunpack.c.l.b16 %v468
      %v1404 = vunpack.c.l.b16 %v469
      %v1405 = vunpack.c.l.b16 %v470
      %v1406 = vunpack.c.l.b16 %v471
      %v1407 = vunpack.c.l.b16 %v472
      %v1408 = vunpack.c.l.b16 %v473
      %v1409 = vunpack.c.l.b16 %v474
      %v1410 = vunpack.c.l.b16 %v475
      %v1411 = vunpack.c.l.b16 %v476
      %v1412 = vunpack.c.l.b16 %v477
      %v1413 = vunpack.c.l.b16 %v478
      %v1414 = vunpack.c.l.b16 %v479
      %v1415 = vunpack.c.l.b16 %v480
      %v1416 = vunpack.c.l.b16 %v481
      %v1417 = vpack.c.b16 %v1378, %v1377
      %v1418 = vpack.c.b16 %v1380, %v1379
      %v1419 = vpack.c.b16 %v1382, %v1381
      %v1420 = vpack.c.b16 %v1384, %v1383
      %v1421 = vpack.c.b16 %v1386, %v1385
      %v1422 = vpack.c.b16 %v1388, %v1387
      %v1423 = vpack.c.b16 %v1390, %v1389
      %v1424 = vpack.c.b16 %v1392, %v1391
      %v1425 = vpack.c.b16 %v1394, %v1393
      %v1426 = vpack.c.b16 %v1396, %v1395
      %v1427 = vpack.c.b16 %v1398, %v1397
      %v1428 = vpack.c.b16 %v1400, %v1399
      %v1429 = vpack.c.b16 %v1402, %v1401
      %v1430 = vpack.c.b16 %v1404, %v1403
      %v1431 = vpack.c.b16 %v1406, %v1405
      %v1432 = vpack.c.b16 %v1408, %v1407
      %v1433 = vpack.c.b16 %v1410, %v1409
      %v1434 = vpack.c.b16 %v1412, %v1411
      %v1435 = vpack.c.b16 %v1414, %v1413
      %v1436 = vpack.c.b16 %v1416, %v1415
      %vm1457 = vcmask 523264
      %v1459 = vsel %vm1457, %v1114, 0
      %v1462 = vsel %vm1457, %v1117, 0
      %v1465 = vsel %vm1457, %v1120, 0
      %v1468 = vsel %vm1457, %v1123, 0
      %v1471 = vsel %vm1457, %v1126, 0
      %v1474 = vsel %vm1457, %v1129, 0
      %v1477 = vsel %vm1457, %v1132, 0
      %v1480 = vsel %vm1457, %v1135, 0
      %v1483 = vsel %vm1457, %v1138, 0
      %v1486 = vsel %vm1457, %v1141, 0
      %v1489 = vsel %vm1457, %v1144, 0
      %v1492 = vsel %vm1457, %v1147, 0
      %v1495 = vsel %vm1457, %v1150, 0
      %v1498 = vsel %vm1457, %v1153, 0
      %v1501 = vsel %vm1457, %v1156, 0
      %v1504 = vsel %vm1457, %v1159, 0
      %v1507 = vsel %vm1457, %v1162, 0
      %v1510 = vsel %vm1457, %v1165, 0
      %v1513 = vsel %vm1457, %v1168, 0
      %v1516 = vsel %vm1457, %v1171, 0
      %v1519 = vsel %vm1457, %v1174, 0
      %v1522 = vsel %vm1457, %v1177, 0
      %v1525 = vsel %vm1457, %v1180, 0
      %v1528 = vsel %vm1457, %v1183, 0
      %v1531 = vsel %vm1457, %v1186, 0
      %v1534 = vsel %vm1457, %v1189, 0
      %v1537 = vsel %vm1457, %v1192, 0
      %v1540 = vsel %vm1457, %v1195, 0
      %v1543 = vsel %vm1457, %v1198, 0
      %v1546 = vsel %vm1457, %v1201, 0
      %v1549 = vsel %vm1457, %v1204, 0
      %v1552 = vsel %vm1457, %v1207, 0
      %v1555 = vsel %vm1457, %v1210, 0
      %v1558 = vsel %vm1457, %v1213, 0
      %v1561 = vsel %vm1457, %v1216, 0
      %v1564 = vsel %vm1457, %v1219, 0
      %v1567 = vsel %vm1457, %v1222, 0
      %v1570 = vsel %vm1457, %v1225, 0
      %v1573 = vsel %vm1457, %v1228, 0
      %v1576 = vsel %vm1457, %v1231, 0
      %v1579 = vsel %vm1457, %v1234, 0
      %v1582 = vsel %vm1457, %v1237, 0
      %v1585 = vsel %vm1457, %v1240, 0
      %v1588 = vsel %vm1457, %v1243, 0
      %v1591 = vsel %vm1457, %v1246, 0
      %1593 = vmatprep.subr.bf16.mxu0 0
      %1594 = vmatpush1.bf16.msra.mxu0 %v1417
      %1595 = vmatprep.subr.bf16.mxu0 0
      %1596 = vmatpush1.bf16.msra.mxu0 %v1418
      %1597 = vmatprep.subr.bf16.mxu0 0
      %1598 = vmatpush1.bf16.msra.mxu0 %v1419
      %1599 = vmatprep.subr.bf16.mxu0 0
      %1600 = vmatpush1.bf16.msra.mxu0 %v1420
      %1601 = vmatprep.subr.bf16.mxu0 0
      %1602 = vmatpush1.bf16.msra.mxu0 %v1421
      %1603 = vmatprep.subr.bf16.mxu0 0
      %1604 = vmatpush1.bf16.msra.mxu0 %v1422
      %1605 = vmatprep.subr.bf16.mxu0 0
      %1606 = vmatpush1.bf16.msra.mxu0 %v1423
      %1607 = vmatprep.subr.bf16.mxu0 0
      %1608 = vmatpush1.bf16.msra.mxu0 %v1424
      %1609 = vmatprep.subr.bf16.mxu0 0
      %1610 = vmatpush1.bf16.msra.mxu0 %v1425
      %1611 = vmatprep.subr.bf16.mxu0 0
      %1612 = vmatpush1.bf16.msra.mxu0 %v1426
      %1613 = vmatprep.subr.bf16.mxu0 0
      %1614 = vmatpush1.bf16.msra.mxu0 %v1427
      %1615 = vmatprep.subr.bf16.mxu0 0
      %1616 = vmatpush1.bf16.msra.mxu0 %v1428
      %1617 = vmatprep.subr.bf16.mxu0 0
      %1618 = vmatpush1.bf16.msra.mxu0 %v1429
      %1619 = vmatprep.subr.bf16.mxu0 0
      %1620 = vmatpush1.bf16.msra.mxu0 %v1430
      %1621 = vmatprep.subr.bf16.mxu0 0
      %1622 = vmatpush1.bf16.msra.mxu0 %v1431
      %1623 = vmatprep.subr.bf16.mxu0 0
      %1624 = vmatpush1.bf16.msra.mxu0 %v1432
      %1625 = vmatprep.mubr.bf16.mxu0 %v1113
      %1626 = vmatmul.mubr.bf16.gmra.mrb[0].mxu0 %v1112
      %v1627 = vpop.f32.mrb[0].mxu0
      %v1628 = vadd.f32 0.0, %v1627
      %v1629 = vpop.f32.mrb[0].mxu0
      %v1630 = vpop.f32.mrb[0].mxu0
      %v1631 = vadd.f32 0.0, %v1630
      %v1632 = vpop.f32.mrb[0].mxu0
      %1633 = vmatprep.mubr.bf16.mxu0 %v1116
      %1634 = vmatmul.mubr.bf16.gmra.mrb[0].mxu0 %v1115
      %v1635 = vpop.f32.mrb[0].mxu0
      %v1636 = vadd.f32 0.0, %v1635
      %v1637 = vpop.f32.mrb[0].mxu0
      %v1638 = vpop.f32.mrb[0].mxu0
      %v1639 = vadd.f32 0.0, %v1638
      %v1640 = vpop.f32.mrb[0].mxu0
      %1641 = vmatprep.mubr.bf16.mxu0 %v1119
      %1642 = vmatmul.mubr.bf16.gmra.mrb[0].mxu0 %v1118
      %v1643 = vpop.f32.mrb[0].mxu0
      %v1644 = vadd.f32 0.0, %v1643
      %v1645 = vpop.f32.mrb[0].mxu0
      %v1646 = vpop.f32.mrb[0].mxu0
      %v1647 = vadd.f32 0.0, %v1646
      %v1648 = vpop.f32.mrb[0].mxu0
      %1649 = vmatprep.mubr.bf16.mxu0 %v1122
      %1650 = vmatmul.mubr.bf16.gmra.mrb[0].mxu0 %v1121
      %v1651 = vpop.f32.mrb[0].mxu0
      %v1652 = vadd.f32 0.0, %v1651
      %v1653 = vpop.f32.mrb[0].mxu0
      %v1654 = vpop.f32.mrb[0].mxu0
      %v1655 = vadd.f32 0.0, %v1654
      %v1656 = vpop.f32.mrb[0].mxu0
      %1657 = vmatprep.mubr.bf16.mxu0 %v1125
      %1658 = vmatmul.mubr.bf16.gmra.mrb[0].mxu0 %v1124
      %v1659 = vpop.f32.mrb[0].mxu0
      %v1660 = vadd.f32 0.0, %v1659
      %v1661 = vpop.f32.mrb[0].mxu0
      %v1662 = vpop.f32.mrb[0].mxu0
      %v1663 = vadd.f32 0.0, %v1662
      %v1664 = vpop.f32.mrb[0].mxu0
      %1665 = vmatprep.mubr.bf16.mxu0 %v1128
      %1666 = vmatmul.mubr.bf16.gmra.mrb[0].mxu0 %v1127
      %v1667 = vpop.f32.mrb[0].mxu0
      %v1668 = vadd.f32 0.0, %v1667
      %v1669 = vpop.f32.mrb[0].mxu0
      %v1670 = vpop.f32.mrb[0].mxu0
      %v1671 = vadd.f32 0.0, %v1670
      %v1672 = vpop.f32.mrb[0].mxu0
      %1673 = vmatprep.mubr.bf16.mxu0 %v1131
      %1674 = vmatmul.mubr.bf16.gmra.mrb[0].mxu0 %v1130
      %v1675 = vpop.f32.mrb[0].mxu0
      %v1676 = vadd.f32 0.0, %v1675
      %v1677 = vpop.f32.mrb[0].mxu0
      %v1678 = vpop.f32.mrb[0].mxu0
      %v1679 = vadd.f32 0.0, %v1678
      %v1680 = vpop.f32.mrb[0].mxu0
      %1681 = vmatprep.mubr.bf16.mxu0 %v1134
      %1682 = vmatmul.mubr.bf16.gmra.mrb[0].mxu0 %v1133
      %v1683 = vpop.f32.mrb[0].mxu0
      %v1684 = vadd.f32 0.0, %v1683
      %v1685 = vpop.f32.mrb[0].mxu0
      %v1686 = vpop.f32.mrb[0].mxu0
      %v1687 = vadd.f32 0.0, %v1686
      %v1688 = vpop.f32.mrb[0].mxu0
      %1689 = vmatprep.mubr.bf16.mxu0 %v1137
      %1690 = vmatmul.mubr.bf16.gmra.mrb[0].mxu0 %v1136
      %v1691 = vpop.f32.mrb[0].mxu0
      %v1692 = vadd.f32 0.0, %v1691
      %v1693 = vpop.f32.mrb[0].mxu0
      %v1694 = vpop.f32.mrb[0].mxu0
      %v1695 = vadd.f32 0.0, %v1694
      %v1696 = vpop.f32.mrb[0].mxu0
      %1697 = vmatprep.mubr.bf16.mxu0 %v1140
      %1698 = vmatmul.mubr.bf16.gmra.mrb[0].mxu0 %v1139
      %v1699 = vpop.f32.mrb[0].mxu0
      %v1700 = vadd.f32 0.0, %v1699
      %v1701 = vpop.f32.mrb[0].mxu0
      %v1702 = vpop.f32.mrb[0].mxu0
      %v1703 = vadd.f32 0.0, %v1702
      %v1704 = vpop.f32.mrb[0].mxu0
      %1705 = vmatprep.mubr.bf16.mxu0 %v1143
      %1706 = vmatmul.mubr.bf16.gmra.mrb[0].mxu0 %v1142
      %v1707 = vpop.f32.mrb[0].mxu0
      %v1708 = vadd.f32 0.0, %v1707
      %v1709 = vpop.f32.mrb[0].mxu0
      %v1710 = vpop.f32.mrb[0].mxu0
      %v1711 = vadd.f32 0.0, %v1710
      %v1712 = vpop.f32.mrb[0].mxu0
      %1713 = vmatprep.mubr.bf16.mxu0 %v1146
      %1714 = vmatmul.mubr.bf16.gmra.mrb[0].mxu0 %v1145
      %v1715 = vpop.f32.mrb[0].mxu0
      %v1716 = vadd.f32 0.0, %v1715
      %v1717 = vpop.f32.mrb[0].mxu0
      %v1718 = vpop.f32.mrb[0].mxu0
      %v1719 = vadd.f32 0.0, %v1718
      %v1720 = vpop.f32.mrb[0].mxu0
      %1721 = vmatprep.mubr.bf16.mxu0 %v1149
      %1722 = vmatmul.mubr.bf16.gmra.mrb[0].mxu0 %v1148
      %v1723 = vpop.f32.mrb[0].mxu0
      %v1724 = vadd.f32 0.0, %v1723
      %v1725 = vpop.f32.mrb[0].mxu0
      %v1726 = vpop.f32.mrb[0].mxu0
      %v1727 = vadd.f32 0.0, %v1726
      %v1728 = vpop.f32.mrb[0].mxu0
      %1729 = vmatprep.mubr.bf16.mxu0 %v1152
      %1730 = vmatmul.mubr.bf16.gmra.mrb[0].mxu0 %v1151
      %v1731 = vpop.f32.mrb[0].mxu0
      %v1732 = vadd.f32 0.0, %v1731
      %v1733 = vpop.f32.mrb[0].mxu0
      %v1734 = vpop.f32.mrb[0].mxu0
      %v1735 = vadd.f32 0.0, %v1734
      %v1736 = vpop.f32.mrb[0].mxu0
      %1737 = vmatprep.mubr.bf16.mxu0 %v1155
      %1738 = vmatmul.mubr.bf16.gmra.mrb[0].mxu0 %v1154
      %v1739 = vpop.f32.mrb[0].mxu0
      %v1740 = vadd.f32 0.0, %v1739
      %v1741 = vpop.f32.mrb[0].mxu0
      %v1742 = vpop.f32.mrb[0].mxu0
      %v1743 = vadd.f32 0.0, %v1742
      %v1744 = vpop.f32.mrb[0].mxu0
      %1745 = vmatprep.mubr.bf16.mxu0 %v1158
      %1746 = vmatmul.mubr.bf16.gmra.mrb[0].mxu0 %v1157
      %v1747 = vpop.f32.mrb[0].mxu0
      %v1748 = vadd.f32 0.0, %v1747
      %v1749 = vpop.f32.mrb[0].mxu0
      %v1750 = vpop.f32.mrb[0].mxu0
      %v1751 = vadd.f32 0.0, %v1750
      %v1752 = vpop.f32.mrb[0].mxu0
      %1753 = vmatprep.mubr.bf16.mxu0 %v1161
      %1754 = vmatmul.mubr.bf16.gmra.mrb[0].mxu0 %v1160
      %v1755 = vpop.f32.mrb[0].mxu0
      %v1756 = vadd.f32 0.0, %v1755
      %v1757 = vpop.f32.mrb[0].mxu0
      %v1758 = vpop.f32.mrb[0].mxu0
      %v1759 = vadd.f32 0.0, %v1758
      %v1760 = vpop.f32.mrb[0].mxu0
      %1761 = vmatprep.mubr.bf16.mxu0 %v1164
      %1762 = vmatmul.mubr.bf16.gmra.mrb[0].mxu0 %v1163
      %v1763 = vpop.f32.mrb[0].mxu0
      %v1764 = vadd.f32 0.0, %v1763
      %v1765 = vpop.f32.mrb[0].mxu0
      %v1766 = vpop.f32.mrb[0].mxu0
      %v1767 = vadd.f32 0.0, %v1766
      %v1768 = vpop.f32.mrb[0].mxu0
      %1769 = vmatprep.mubr.bf16.mxu0 %v1167
      %1770 = vmatmul.mubr.bf16.gmra.mrb[0].mxu0 %v1166
      %v1771 = vpop.f32.mrb[0].mxu0
      %v1772 = vadd.f32 0.0, %v1771
      %v1773 = vpop.f32.mrb[0].mxu0
      %v1774 = vpop.f32.mrb[0].mxu0
      %v1775 = vadd.f32 0.0, %v1774
      %v1776 = vpop.f32.mrb[0].mxu0
      %1777 = vmatprep.mubr.bf16.mxu0 %v1170
      %1778 = vmatmul.mubr.bf16.gmra.mrb[0].mxu0 %v1169
      %v1779 = vpop.f32.mrb[0].mxu0
      %v1780 = vadd.f32 0.0, %v1779
      %v1781 = vpop.f32.mrb[0].mxu0
      %v1782 = vpop.f32.mrb[0].mxu0
      %v1783 = vadd.f32 0.0, %v1782
      %v1784 = vpop.f32.mrb[0].mxu0
      %1785 = vmatprep.mubr.bf16.mxu0 %v1173
      %1786 = vmatmul.mubr.bf16.gmra.mrb[0].mxu0 %v1172
      %v1787 = vpop.f32.mrb[0].mxu0
      %v1788 = vadd.f32 0.0, %v1787
      %v1789 = vpop.f32.mrb[0].mxu0
      %v1790 = vpop.f32.mrb[0].mxu0
      %v1791 = vadd.f32 0.0, %v1790
      %v1792 = vpop.f32.mrb[0].mxu0
      %1793 = vmatprep.mubr.bf16.mxu0 %v1176
      %1794 = vmatmul.mubr.bf16.gmra.mrb[0].mxu0 %v1175
      %v1795 = vpop.f32.mrb[0].mxu0
      %v1796 = vadd.f32 0.0, %v1795
      %v1797 = vpop.f32.mrb[0].mxu0
      %v1798 = vpop.f32.mrb[0].mxu0
      %v1799 = vadd.f32 0.0, %v1798
      %v1800 = vpop.f32.mrb[0].mxu0
      %1801 = vmatprep.mubr.bf16.mxu0 %v1179
      %1802 = vmatmul.mubr.bf16.gmra.mrb[0].mxu0 %v1178
      %v1803 = vpop.f32.mrb[0].mxu0
      %v1804 = vadd.f32 0.0, %v1803
      %v1805 = vpop.f32.mrb[0].mxu0
      %v1806 = vpop.f32.mrb[0].mxu0
      %v1807 = vadd.f32 0.0, %v1806
      %v1808 = vpop.f32.mrb[0].mxu0
      %1809 = vmatprep.mubr.bf16.mxu0 %v1182
      %1810 = vmatmul.mubr.bf16.gmra.mrb[0].mxu0 %v1181
      %v1811 = vpop.f32.mrb[0].mxu0
      %v1812 = vadd.f32 0.0, %v1811
      %v1813 = vpop.f32.mrb[0].mxu0
      %v1814 = vpop.f32.mrb[0].mxu0
      %v1815 = vadd.f32 0.0, %v1814
      %v1816 = vpop.f32.mrb[0].mxu0
      %1817 = vmatprep.mubr.bf16.mxu0 %v1185
      %1818 = vmatmul.mubr.bf16.gmra.mrb[0].mxu0 %v1184
      %v1819 = vpop.f32.mrb[0].mxu0
      %v1820 = vadd.f32 0.0, %v1819
      %v1821 = vpop.f32.mrb[0].mxu0
      %v1822 = vpop.f32.mrb[0].mxu0
      %v1823 = vadd.f32 0.0, %v1822
      %v1824 = vpop.f32.mrb[0].mxu0
      %1825 = vmatprep.mubr.bf16.mxu0 %v1188
      %1826 = vmatmul.mubr.bf16.gmra.mrb[0].mxu0 %v1187
      %v1827 = vpop.f32.mrb[0].mxu0
      %v1828 = vadd.f32 0.0, %v1827
      %v1829 = vpop.f32.mrb[0].mxu0
      %v1830 = vpop.f32.mrb[0].mxu0
      %v1831 = vadd.f32 0.0, %v1830
      %v1832 = vpop.f32.mrb[0].mxu0
      %1833 = vmatprep.mubr.bf16.mxu0 %v1191
      %1834 = vmatmul.mubr.bf16.gmra.mrb[0].mxu0 %v1190
      %v1835 = vpop.f32.mrb[0].mxu0
      %v1836 = vadd.f32 0.0, %v1835
      %v1837 = vpop.f32.mrb[0].mxu0
      %v1838 = vpop.f32.mrb[0].mxu0
      %v1839 = vadd.f32 0.0, %v1838
      %v1840 = vpop.f32.mrb[0].mxu0
      %1841 = vmatprep.mubr.bf16.mxu0 %v1194
      %1842 = vmatmul.mubr.bf16.gmra.mrb[0].mxu0 %v1193
      %v1843 = vpop.f32.mrb[0].mxu0
      %v1844 = vadd.f32 0.0, %v1843
      %v1845 = vpop.f32.mrb[0].mxu0
      %v1846 = vpop.f32.mrb[0].mxu0
      %v1847 = vadd.f32 0.0, %v1846
      %v1848 = vpop.f32.mrb[0].mxu0
      %1849 = vmatprep.mubr.bf16.mxu0 %v1197
      %1850 = vmatmul.mubr.bf16.gmra.mrb[0].mxu0 %v1196
      %v1851 = vpop.f32.mrb[0].mxu0
      %v1852 = vadd.f32 0.0, %v1851
      %v1853 = vpop.f32.mrb[0].mxu0
      %v1854 = vpop.f32.mrb[0].mxu0
      %v1855 = vadd.f32 0.0, %v1854
      %v1856 = vpop.f32.mrb[0].mxu0
      %1857 = vmatprep.mubr.bf16.mxu0 %v1200
      %1858 = vmatmul.mubr.bf16.gmra.mrb[0].mxu0 %v1199
      %v1859 = vpop.f32.mrb[0].mxu0
      %v1860 = vadd.f32 0.0, %v1859
      %v1861 = vpop.f32.mrb[0].mxu0
      %v1862 = vpop.f32.mrb[0].mxu0
      %v1863 = vadd.f32 0.0, %v1862
      %v1864 = vpop.f32.mrb[0].mxu0
      %1865 = vmatprep.mubr.bf16.mxu0 %v1203
      %1866 = vmatmul.mubr.bf16.gmra.mrb[0].mxu0 %v1202
      %v1867 = vpop.f32.mrb[0].mxu0
      %v1868 = vadd.f32 0.0, %v1867
      %v1869 = vpop.f32.mrb[0].mxu0
      %v1870 = vpop.f32.mrb[0].mxu0
      %v1871 = vadd.f32 0.0, %v1870
      %v1872 = vpop.f32.mrb[0].mxu0
      %1873 = vmatprep.mubr.bf16.mxu0 %v1206
      %1874 = vmatmul.mubr.bf16.gmra.mrb[0].mxu0 %v1205
      %v1875 = vpop.f32.mrb[0].mxu0
      %v1876 = vadd.f32 0.0, %v1875
      %v1877 = vpop.f32.mrb[0].mxu0
      %v1878 = vpop.f32.mrb[0].mxu0
      %v1879 = vadd.f32 0.0, %v1878
      %v1880 = vpop.f32.mrb[0].mxu0
      %1881 = vmatprep.mubr.bf16.mxu0 %v1209
      %1882 = vmatmul.mubr.bf16.gmra.mrb[0].mxu0 %v1208
      %v1883 = vpop.f32.mrb[0].mxu0
      %v1884 = vadd.f32 0.0, %v1883
      %v1885 = vpop.f32.mrb[0].mxu0
      %v1886 = vpop.f32.mrb[0].mxu0
      %v1887 = vadd.f32 0.0, %v1886
      %v1888 = vpop.f32.mrb[0].mxu0
      %1889 = vmatprep.mubr.bf16.mxu0 %v1212
      %1890 = vmatmul.mubr.bf16.gmra.mrb[0].mxu0 %v1211
      %v1891 = vpop.f32.mrb[0].mxu0
      %v1892 = vadd.f32 0.0, %v1891
      %v1893 = vpop.f32.mrb[0].mxu0
      %v1894 = vpop.f32.mrb[0].mxu0
      %v1895 = vadd.f32 0.0, %v1894
      %v1896 = vpop.f32.mrb[0].mxu0
      %1897 = vmatprep.mubr.bf16.mxu0 %v1215
      %1898 = vmatmul.mubr.bf16.gmra.mrb[0].mxu0 %v1214
      %v1899 = vpop.f32.mrb[0].mxu0
      %v1900 = vadd.f32 0.0, %v1899
      %v1901 = vpop.f32.mrb[0].mxu0
      %v1902 = vpop.f32.mrb[0].mxu0
      %v1903 = vadd.f32 0.0, %v1902
      %v1904 = vpop.f32.mrb[0].mxu0
      %1905 = vmatprep.mubr.bf16.mxu0 %v1218
      %1906 = vmatmul.mubr.bf16.gmra.mrb[0].mxu0 %v1217
      %v1907 = vpop.f32.mrb[0].mxu0
      %v1908 = vadd.f32 0.0, %v1907
      %v1909 = vpop.f32.mrb[0].mxu0
      %v1910 = vpop.f32.mrb[0].mxu0
      %v1911 = vadd.f32 0.0, %v1910
      %v1912 = vpop.f32.mrb[0].mxu0
      %1913 = vmatprep.mubr.bf16.mxu0 %v1221
      %1914 = vmatmul.mubr.bf16.gmra.mrb[0].mxu0 %v1220
      %v1915 = vpop.f32.mrb[0].mxu0
      %v1916 = vadd.f32 0.0, %v1915
      %v1917 = vpop.f32.mrb[0].mxu0
      %v1918 = vpop.f32.mrb[0].mxu0
      %v1919 = vadd.f32 0.0, %v1918
      %v1920 = vpop.f32.mrb[0].mxu0
      %1921 = vmatprep.mubr.bf16.mxu0 %v1224
      %1922 = vmatmul.mubr.bf16.gmra.mrb[0].mxu0 %v1223
      %v1923 = vpop.f32.mrb[0].mxu0
      %v1924 = vadd.f32 0.0, %v1923
      %v1925 = vpop.f32.mrb[0].mxu0
      %v1926 = vpop.f32.mrb[0].mxu0
      %v1927 = vadd.f32 0.0, %v1926
      %v1928 = vpop.f32.mrb[0].mxu0
      %1929 = vmatprep.mubr.bf16.mxu0 %v1227
      %1930 = vmatmul.mubr.bf16.gmra.mrb[0].mxu0 %v1226
      %v1931 = vpop.f32.mrb[0].mxu0
      %v1932 = vadd.f32 0.0, %v1931
      %v1933 = vpop.f32.mrb[0].mxu0
      %v1934 = vpop.f32.mrb[0].mxu0
      %v1935 = vadd.f32 0.0, %v1934
      %v1936 = vpop.f32.mrb[0].mxu0
      %1937 = vmatprep.mubr.bf16.mxu0 %v1230
      %1938 = vmatmul.mubr.bf16.gmra.mrb[0].mxu0 %v1229
      %v1939 = vpop.f32.mrb[0].mxu0
      %v1940 = vadd.f32 0.0, %v1939
      %v1941 = vpop.f32.mrb[0].mxu0
      %v1942 = vpop.f32.mrb[0].mxu0
      %v1943 = vadd.f32 0.0, %v1942
      %v1944 = vpop.f32.mrb[0].mxu0
      %1945 = vmatprep.mubr.bf16.mxu0 %v1233
      %1946 = vmatmul.mubr.bf16.gmra.mrb[0].mxu0 %v1232
      %v1947 = vpop.f32.mrb[0].mxu0
      %v1948 = vadd.f32 0.0, %v1947
      %v1949 = vpop.f32.mrb[0].mxu0
      %v1950 = vpop.f32.mrb[0].mxu0
      %v1951 = vadd.f32 0.0, %v1950
      %v1952 = vpop.f32.mrb[0].mxu0
      %1953 = vmatprep.mubr.bf16.mxu0 %v1236
      %1954 = vmatmul.mubr.bf16.gmra.mrb[0].mxu0 %v1235
      %v1955 = vpop.f32.mrb[0].mxu0
      %v1956 = vadd.f32 0.0, %v1955
      %v1957 = vpop.f32.mrb[0].mxu0
      %v1958 = vpop.f32.mrb[0].mxu0
      %v1959 = vadd.f32 0.0, %v1958
      %v1960 = vpop.f32.mrb[0].mxu0
      %1961 = vmatprep.mubr.bf16.mxu0 %v1239
      %1962 = vmatmul.mubr.bf16.gmra.mrb[0].mxu0 %v1238
      %v1963 = vpop.f32.mrb[0].mxu0
      %v1964 = vadd.f32 0.0, %v1963
      %v1965 = vpop.f32.mrb[0].mxu0
      %v1966 = vpop.f32.mrb[0].mxu0
      %v1967 = vadd.f32 0.0, %v1966
      %v1968 = vpop.f32.mrb[0].mxu0
      %1969 = vmatprep.mubr.bf16.mxu0 %v1242
      %1970 = vmatmul.mubr.bf16.gmra.mrb[0].mxu0 %v1241
      %v1971 = vpop.f32.mrb[0].mxu0
      %v1972 = vadd.f32 0.0, %v1971
      %v1973 = vpop.f32.mrb[0].mxu0
      %v1974 = vpop.f32.mrb[0].mxu0
      %v1975 = vadd.f32 0.0, %v1974
      %v1976 = vpop.f32.mrb[0].mxu0
      %1977 = vmatprep.mubr.bf16.mxu0 %v1245
      %1978 = vmatmul.mubr.bf16.gmra.mrb[0].mxu0 %v1244
      %v1979 = vpop.f32.mrb[0].mxu0
      %v1980 = vadd.f32 0.0, %v1979
      %v1981 = vpop.f32.mrb[0].mxu0
      %v1982 = vpop.f32.mrb[0].mxu0
      %v1983 = vadd.f32 0.0, %v1982
      %v1984 = vpop.f32.mrb[0].mxu0
      %1985 = vdwg.mxu0
      %1986 = vmatprep.subr.bf16.mxu0 0
      %1987 = vmatpush1.bf16.msra.mxu0 %v1433
      %1988 = vmatprep.subr.bf16.mxu0 0
      %1989 = vmatpush1.bf16.msra.mxu0 %v1434
      %1990 = vmatprep.subr.bf16.mxu0 0
      %1991 = vmatpush1.bf16.msra.mxu0 %v1435
      %1992 = vmatprep.subr.bf16.mxu0 0
      %1993 = vmatpush1.bf16.msra.mxu0 %v1436
      %1994 = vmatprep.subr.bf16.mxu0 0
      %1995 = vmatpush1.bf16.msra.mxu0 0
      %1996 = vmatprep.subr.bf16.mxu0 0
      %1997 = vmatpush1.bf16.msra.mxu0 0
      %1998 = vmatprep.subr.bf16.mxu0 0
      %1999 = vmatpush1.bf16.msra.mxu0 0
      %2000 = vmatprep.subr.bf16.mxu0 0
      %2001 = vmatpush1.bf16.msra.mxu0 0
      %2002 = vmatprep.subr.bf16.mxu0 0
      %2003 = vmatpush1.bf16.msra.mxu0 0
      %2004 = vmatprep.subr.bf16.mxu0 0
      %2005 = vmatpush1.bf16.msra.mxu0 0
      %2006 = vmatprep.subr.bf16.mxu0 0
      %2007 = vmatpush1.bf16.msra.mxu0 0
      %2008 = vmatprep.subr.bf16.mxu0 0
      %2009 = vmatpush1.bf16.msra.mxu0 0
      %2010 = vmatprep.subr.bf16.mxu0 0
      %2011 = vmatpush1.bf16.msra.mxu0 0
      %2012 = vmatprep.subr.bf16.mxu0 0
      %2013 = vmatpush1.bf16.msra.mxu0 0
      %2014 = vmatprep.subr.bf16.mxu0 0
      %2015 = vmatpush1.bf16.msra.mxu0 0
      %2016 = vmatprep.subr.bf16.mxu0 0
      %2017 = vmatpush1.bf16.msra.mxu0 0
      %2018 = vmatprep.mubr.bf16.mxu0 0
      %2019 = vmatmul.mubr.bf16.gmra.mrb[0].mxu0 %v1459
      %v2020 = vpop.f32.mrb[0].mxu0
      %v2021 = vadd.f32 %v1628, %v2020
      %v2022 = vpop.f32.mrb[0].mxu0
      %v2023 = vpop.f32.mrb[0].mxu0
      %v2024 = vadd.f32 %v1631, %v2023
      %v2025 = vpop.f32.mrb[0].mxu0
      %2026 = vmatprep.mubr.bf16.mxu0 0
      %2027 = vmatmul.mubr.bf16.gmra.mrb[0].mxu0 %v1462
      %v2028 = vpop.f32.mrb[0].mxu0
      %v2029 = vadd.f32 %v1636, %v2028
      %v2030 = vpop.f32.mrb[0].mxu0
      %v2031 = vpop.f32.mrb[0].mxu0
      %v2032 = vadd.f32 %v1639, %v2031
      %v2033 = vpop.f32.mrb[0].mxu0
      %2034 = vmatprep.mubr.bf16.mxu0 0
      %2035 = vmatmul.mubr.bf16.gmra.mrb[0].mxu0 %v1465
      %v2036 = vpop.f32.mrb[0].mxu0
      %v2037 = vadd.f32 %v1644, %v2036
      %v2038 = vpop.f32.mrb[0].mxu0
      %v2039 = vpop.f32.mrb[0].mxu0
      %v2040 = vadd.f32 %v1647, %v2039
      %v2041 = vpop.f32.mrb[0].mxu0
      %2042 = vmatprep.mubr.bf16.mxu0 0
      %2043 = vmatmul.mubr.bf16.gmra.mrb[0].mxu0 %v1468
      %v2044 = vpop.f32.mrb[0].mxu0
      %v2045 = vadd.f32 %v1652, %v2044
      %v2046 = vpop.f32.mrb[0].mxu0
      %v2047 = vpop.f32.mrb[0].mxu0
      %v2048 = vadd.f32 %v1655, %v2047
      %v2049 = vpop.f32.mrb[0].mxu0
      %2050 = vmatprep.mubr.bf16.mxu0 0
      %2051 = vmatmul.mubr.bf16.gmra.mrb[0].mxu0 %v1471
      %v2052 = vpop.f32.mrb[0].mxu0
      %v2053 = vadd.f32 %v1660, %v2052
      %v2054 = vpop.f32.mrb[0].mxu0
      %v2055 = vpop.f32.mrb[0].mxu0
      %v2056 = vadd.f32 %v1663, %v2055
      %v2057 = vpop.f32.mrb[0].mxu0
      %2058 = vmatprep.mubr.bf16.mxu0 0
      %2059 = vmatmul.mubr.bf16.gmra.mrb[0].mxu0 %v1474
      %v2060 = vpop.f32.mrb[0].mxu0
      %v2061 = vadd.f32 %v1668, %v2060
      %v2062 = vpop.f32.mrb[0].mxu0
      %v2063 = vpop.f32.mrb[0].mxu0
      %v2064 = vadd.f32 %v1671, %v2063
      %v2065 = vpop.f32.mrb[0].mxu0
      %2066 = vmatprep.mubr.bf16.mxu0 0
      %2067 = vmatmul.mubr.bf16.gmra.mrb[0].mxu0 %v1477
      %v2068 = vpop.f32.mrb[0].mxu0
      %v2069 = vadd.f32 %v1676, %v2068
      %v2070 = vpop.f32.mrb[0].mxu0
      %v2071 = vpop.f32.mrb[0].mxu0
      %v2072 = vadd.f32 %v1679, %v2071
      %v2073 = vpop.f32.mrb[0].mxu0
      %2074 = vmatprep.mubr.bf16.mxu0 0
      %2075 = vmatmul.mubr.bf16.gmra.mrb[0].mxu0 %v1480
      %v2076 = vpop.f32.mrb[0].mxu0
      %v2077 = vadd.f32 %v1684, %v2076
      %v2078 = vpop.f32.mrb[0].mxu0
      %v2079 = vpop.f32.mrb[0].mxu0
      %v2080 = vadd.f32 %v1687, %v2079
      %v2081 = vpop.f32.mrb[0].mxu0
      %2082 = vmatprep.mubr.bf16.mxu0 0
      %2083 = vmatmul.mubr.bf16.gmra.mrb[0].mxu0 %v1483
      %v2084 = vpop.f32.mrb[0].mxu0
      %v2085 = vadd.f32 %v1692, %v2084
      %v2086 = vpop.f32.mrb[0].mxu0
      %v2087 = vpop.f32.mrb[0].mxu0
      %v2088 = vadd.f32 %v1695, %v2087
      %v2089 = vpop.f32.mrb[0].mxu0
      %2090 = vmatprep.mubr.bf16.mxu0 0
      %2091 = vmatmul.mubr.bf16.gmra.mrb[0].mxu0 %v1486
      %v2092 = vpop.f32.mrb[0].mxu0
      %v2093 = vadd.f32 %v1700, %v2092
      %v2094 = vpop.f32.mrb[0].mxu0
      %v2095 = vpop.f32.mrb[0].mxu0
      %v2096 = vadd.f32 %v1703, %v2095
      %v2097 = vpop.f32.mrb[0].mxu0
      %2098 = vmatprep.mubr.bf16.mxu0 0
      %2099 = vmatmul.mubr.bf16.gmra.mrb[0].mxu0 %v1489
      %v2100 = vpop.f32.mrb[0].mxu0
      %v2101 = vadd.f32 %v1708, %v2100
      %v2102 = vpop.f32.mrb[0].mxu0
      %v2103 = vpop.f32.mrb[0].mxu0
      %v2104 = vadd.f32 %v1711, %v2103
      %v2105 = vpop.f32.mrb[0].mxu0
      %2106 = vmatprep.mubr.bf16.mxu0 0
      %2107 = vmatmul.mubr.bf16.gmra.mrb[0].mxu0 %v1492
      %v2108 = vpop.f32.mrb[0].mxu0
      %v2109 = vadd.f32 %v1716, %v2108
      %v2110 = vpop.f32.mrb[0].mxu0
      %v2111 = vpop.f32.mrb[0].mxu0
      %v2112 = vadd.f32 %v1719, %v2111
      %v2113 = vpop.f32.mrb[0].mxu0
      %2114 = vmatprep.mubr.bf16.mxu0 0
      %2115 = vmatmul.mubr.bf16.gmra.mrb[0].mxu0 %v1495
      %v2116 = vpop.f32.mrb[0].mxu0
      %v2117 = vadd.f32 %v1724, %v2116
      %v2118 = vpop.f32.mrb[0].mxu0
      %v2119 = vpop.f32.mrb[0].mxu0
      %v2120 = vadd.f32 %v1727, %v2119
      %v2121 = vpop.f32.mrb[0].mxu0
      %2122 = vmatprep.mubr.bf16.mxu0 0
      %2123 = vmatmul.mubr.bf16.gmra.mrb[0].mxu0 %v1498
      %v2124 = vpop.f32.mrb[0].mxu0
      %v2125 = vadd.f32 %v1732, %v2124
      %v2126 = vpop.f32.mrb[0].mxu0
      %v2127 = vpop.f32.mrb[0].mxu0
      %v2128 = vadd.f32 %v1735, %v2127
      %v2129 = vpop.f32.mrb[0].mxu0
      %2130 = vmatprep.mubr.bf16.mxu0 0
      %2131 = vmatmul.mubr.bf16.gmra.mrb[0].mxu0 %v1501
      %v2132 = vpop.f32.mrb[0].mxu0
      %v2133 = vadd.f32 %v1740, %v2132
      %v2134 = vpop.f32.mrb[0].mxu0
      %v2135 = vpop.f32.mrb[0].mxu0
      %v2136 = vadd.f32 %v1743, %v2135
      %v2137 = vpop.f32.mrb[0].mxu0
      %2138 = vmatprep.mubr.bf16.mxu0 0
      %2139 = vmatmul.mubr.bf16.gmra.mrb[0].mxu0 %v1504
      %v2140 = vpop.f32.mrb[0].mxu0
      %v2141 = vadd.f32 %v1748, %v2140
      %v2142 = vpop.f32.mrb[0].mxu0
      %v2143 = vpop.f32.mrb[0].mxu0
      %v2144 = vadd.f32 %v1751, %v2143
      %v2145 = vpop.f32.mrb[0].mxu0
      %2146 = vmatprep.mubr.bf16.mxu0 0
      %2147 = vmatmul.mubr.bf16.gmra.mrb[0].mxu0 %v1507
      %v2148 = vpop.f32.mrb[0].mxu0
      %v2149 = vadd.f32 %v1756, %v2148
      %v2150 = vpop.f32.mrb[0].mxu0
      %v2151 = vpop.f32.mrb[0].mxu0
      %v2152 = vadd.f32 %v1759, %v2151
      %v2153 = vpop.f32.mrb[0].mxu0
      %2154 = vmatprep.mubr.bf16.mxu0 0
      %2155 = vmatmul.mubr.bf16.gmra.mrb[0].mxu0 %v1510
      %v2156 = vpop.f32.mrb[0].mxu0
      %v2157 = vadd.f32 %v1764, %v2156
      %v2158 = vpop.f32.mrb[0].mxu0
      %v2159 = vpop.f32.mrb[0].mxu0
      %v2160 = vadd.f32 %v1767, %v2159
      %v2161 = vpop.f32.mrb[0].mxu0
      %2162 = vmatprep.mubr.bf16.mxu0 0
      %2163 = vmatmul.mubr.bf16.gmra.mrb[0].mxu0 %v1513
      %v2164 = vpop.f32.mrb[0].mxu0
      %v2165 = vadd.f32 %v1772, %v2164
      %v2166 = vpop.f32.mrb[0].mxu0
      %v2167 = vpop.f32.mrb[0].mxu0
      %v2168 = vadd.f32 %v1775, %v2167
      %v2169 = vpop.f32.mrb[0].mxu0
      %2170 = vmatprep.mubr.bf16.mxu0 0
      %2171 = vmatmul.mubr.bf16.gmra.mrb[0].mxu0 %v1516
      %v2172 = vpop.f32.mrb[0].mxu0
      %v2173 = vadd.f32 %v1780, %v2172
      %v2174 = vpop.f32.mrb[0].mxu0
      %v2175 = vpop.f32.mrb[0].mxu0
      %v2176 = vadd.f32 %v1783, %v2175
      %v2177 = vpop.f32.mrb[0].mxu0
      %2178 = vmatprep.mubr.bf16.mxu0 0
      %2179 = vmatmul.mubr.bf16.gmra.mrb[0].mxu0 %v1519
      %v2180 = vpop.f32.mrb[0].mxu0
      %v2181 = vadd.f32 %v1788, %v2180
      %v2182 = vpop.f32.mrb[0].mxu0
      %v2183 = vpop.f32.mrb[0].mxu0
      %v2184 = vadd.f32 %v1791, %v2183
      %v2185 = vpop.f32.mrb[0].mxu0
      %2186 = vmatprep.mubr.bf16.mxu0 0
      %2187 = vmatmul.mubr.bf16.gmra.mrb[0].mxu0 %v1522
      %v2188 = vpop.f32.mrb[0].mxu0
      %v2189 = vadd.f32 %v1796, %v2188
      %v2190 = vpop.f32.mrb[0].mxu0
      %v2191 = vpop.f32.mrb[0].mxu0
      %v2192 = vadd.f32 %v1799, %v2191
      %v2193 = vpop.f32.mrb[0].mxu0
      %2194 = vmatprep.mubr.bf16.mxu0 0
      %2195 = vmatmul.mubr.bf16.gmra.mrb[0].mxu0 %v1525
      %v2196 = vpop.f32.mrb[0].mxu0
      %v2197 = vadd.f32 %v1804, %v2196
      %v2198 = vpop.f32.mrb[0].mxu0
      %v2199 = vpop.f32.mrb[0].mxu0
      %v2200 = vadd.f32 %v1807, %v2199
      %v2201 = vpop.f32.mrb[0].mxu0
      %2202 = vmatprep.mubr.bf16.mxu0 0
      %2203 = vmatmul.mubr.bf16.gmra.mrb[0].mxu0 %v1528
      %v2204 = vpop.f32.mrb[0].mxu0
      %v2205 = vadd.f32 %v1812, %v2204
      %v2206 = vpop.f32.mrb[0].mxu0
      %v2207 = vpop.f32.mrb[0].mxu0
      %v2208 = vadd.f32 %v1815, %v2207
      %v2209 = vpop.f32.mrb[0].mxu0
      %2210 = vmatprep.mubr.bf16.mxu0 0
      %2211 = vmatmul.mubr.bf16.gmra.mrb[0].mxu0 %v1531
      %v2212 = vpop.f32.mrb[0].mxu0
      %v2213 = vadd.f32 %v1820, %v2212
      %v2214 = vpop.f32.mrb[0].mxu0
      %v2215 = vpop.f32.mrb[0].mxu0
      %v2216 = vadd.f32 %v1823, %v2215
      %v2217 = vpop.f32.mrb[0].mxu0
      %2218 = vmatprep.mubr.bf16.mxu0 0
      %2219 = vmatmul.mubr.bf16.gmra.mrb[0].mxu0 %v1534
      %v2220 = vpop.f32.mrb[0].mxu0
      %v2221 = vadd.f32 %v1828, %v2220
      %v2222 = vpop.f32.mrb[0].mxu0
      %v2223 = vpop.f32.mrb[0].mxu0
      %v2224 = vadd.f32 %v1831, %v2223
      %v2225 = vpop.f32.mrb[0].mxu0
      %2226 = vmatprep.mubr.bf16.mxu0 0
      %2227 = vmatmul.mubr.bf16.gmra.mrb[0].mxu0 %v1537
      %v2228 = vpop.f32.mrb[0].mxu0
      %v2229 = vadd.f32 %v1836, %v2228
      %v2230 = vpop.f32.mrb[0].mxu0
      %v2231 = vpop.f32.mrb[0].mxu0
      %v2232 = vadd.f32 %v1839, %v2231
      %v2233 = vpop.f32.mrb[0].mxu0
      %2234 = vmatprep.mubr.bf16.mxu0 0
      %2235 = vmatmul.mubr.bf16.gmra.mrb[0].mxu0 %v1540
      %v2236 = vpop.f32.mrb[0].mxu0
      %v2237 = vadd.f32 %v1844, %v2236
      %v2238 = vpop.f32.mrb[0].mxu0
      %v2239 = vpop.f32.mrb[0].mxu0
      %v2240 = vadd.f32 %v1847, %v2239
      %v2241 = vpop.f32.mrb[0].mxu0
      %2242 = vmatprep.mubr.bf16.mxu0 0
      %2243 = vmatmul.mubr.bf16.gmra.mrb[0].mxu0 %v1543
      %v2244 = vpop.f32.mrb[0].mxu0
      %v2245 = vadd.f32 %v1852, %v2244
      %v2246 = vpop.f32.mrb[0].mxu0
      %v2247 = vpop.f32.mrb[0].mxu0
      %v2248 = vadd.f32 %v1855, %v2247
      %v2249 = vpop.f32.mrb[0].mxu0
      %2250 = vmatprep.mubr.bf16.mxu0 0
      %2251 = vmatmul.mubr.bf16.gmra.mrb[0].mxu0 %v1546
      %v2252 = vpop.f32.mrb[0].mxu0
      %v2253 = vadd.f32 %v1860, %v2252
      %v2254 = vpop.f32.mrb[0].mxu0
      %v2255 = vpop.f32.mrb[0].mxu0
      %v2256 = vadd.f32 %v1863, %v2255
      %v2257 = vpop.f32.mrb[0].mxu0
      %2258 = vmatprep.mubr.bf16.mxu0 0
      %2259 = vmatmul.mubr.bf16.gmra.mrb[0].mxu0 %v1549
      %v2260 = vpop.f32.mrb[0].mxu0
      %v2261 = vadd.f32 %v1868, %v2260
      %v2262 = vpop.f32.mrb[0].mxu0
      %v2263 = vpop.f32.mrb[0].mxu0
      %v2264 = vadd.f32 %v1871, %v2263
      %v2265 = vpop.f32.mrb[0].mxu0
      %2266 = vmatprep.mubr.bf16.mxu0 0
      %2267 = vmatmul.mubr.bf16.gmra.mrb[0].mxu0 %v1552
      %v2268 = vpop.f32.mrb[0].mxu0
      %v2269 = vadd.f32 %v1876, %v2268
      %v2270 = vpop.f32.mrb[0].mxu0
      %v2271 = vpop.f32.mrb[0].mxu0
      %v2272 = vadd.f32 %v1879, %v2271
      %v2273 = vpop.f32.mrb[0].mxu0
      %2274 = vmatprep.mubr.bf16.mxu0 0
      %2275 = vmatmul.mubr.bf16.gmra.mrb[0].mxu0 %v1555
      %v2276 = vpop.f32.mrb[0].mxu0
      %v2277 = vadd.f32 %v1884, %v2276
      %v2278 = vpop.f32.mrb[0].mxu0
      %v2279 = vpop.f32.mrb[0].mxu0
      %v2280 = vadd.f32 %v1887, %v2279
      %v2281 = vpop.f32.mrb[0].mxu0
      %2282 = vmatprep.mubr.bf16.mxu0 0
      %2283 = vmatmul.mubr.bf16.gmra.mrb[0].mxu0 %v1558
      %v2284 = vpop.f32.mrb[0].mxu0
      %v2285 = vadd.f32 %v1892, %v2284
      %v2286 = vpop.f32.mrb[0].mxu0
      %v2287 = vpop.f32.mrb[0].mxu0
      %v2288 = vadd.f32 %v1895, %v2287
      %v2289 = vpop.f32.mrb[0].mxu0
      %2290 = vmatprep.mubr.bf16.mxu0 0
      %2291 = vmatmul.mubr.bf16.gmra.mrb[0].mxu0 %v1561
      %v2292 = vpop.f32.mrb[0].mxu0
      %v2293 = vadd.f32 %v1900, %v2292
      %v2294 = vpop.f32.mrb[0].mxu0
      %v2295 = vpop.f32.mrb[0].mxu0
      %v2296 = vadd.f32 %v1903, %v2295
      %v2297 = vpop.f32.mrb[0].mxu0
      %2298 = vmatprep.mubr.bf16.mxu0 0
      %2299 = vmatmul.mubr.bf16.gmra.mrb[0].mxu0 %v1564
      %v2300 = vpop.f32.mrb[0].mxu0
      %v2301 = vadd.f32 %v1908, %v2300
      %v2302 = vpop.f32.mrb[0].mxu0
      %v2303 = vpop.f32.mrb[0].mxu0
      %v2304 = vadd.f32 %v1911, %v2303
      %v2305 = vpop.f32.mrb[0].mxu0
      %2306 = vmatprep.mubr.bf16.mxu0 0
      %2307 = vmatmul.mubr.bf16.gmra.mrb[0].mxu0 %v1567
      %v2308 = vpop.f32.mrb[0].mxu0
      %v2309 = vadd.f32 %v1916, %v2308
      %v2310 = vpop.f32.mrb[0].mxu0
      %v2311 = vpop.f32.mrb[0].mxu0
      %v2312 = vadd.f32 %v1919, %v2311
      %v2313 = vpop.f32.mrb[0].mxu0
      %2314 = vmatprep.mubr.bf16.mxu0 0
      %2315 = vmatmul.mubr.bf16.gmra.mrb[0].mxu0 %v1570
      %v2316 = vpop.f32.mrb[0].mxu0
      %v2317 = vadd.f32 %v1924, %v2316
      %v2318 = vpop.f32.mrb[0].mxu0
      %v2319 = vpop.f32.mrb[0].mxu0
      %v2320 = vadd.f32 %v1927, %v2319
      %v2321 = vpop.f32.mrb[0].mxu0
      %2322 = vmatprep.mubr.bf16.mxu0 0
      %2323 = vmatmul.mubr.bf16.gmra.mrb[0].mxu0 %v1573
      %v2324 = vpop.f32.mrb[0].mxu0
      %v2325 = vadd.f32 %v1932, %v2324
      %v2326 = vpop.f32.mrb[0].mxu0
      %v2327 = vpop.f32.mrb[0].mxu0
      %v2328 = vadd.f32 %v1935, %v2327
      %v2329 = vpop.f32.mrb[0].mxu0
      %2330 = vmatprep.mubr.bf16.mxu0 0
      %2331 = vmatmul.mubr.bf16.gmra.mrb[0].mxu0 %v1576
      %v2332 = vpop.f32.mrb[0].mxu0
      %v2333 = vadd.f32 %v1940, %v2332
      %v2334 = vpop.f32.mrb[0].mxu0
      %v2335 = vpop.f32.mrb[0].mxu0
      %v2336 = vadd.f32 %v1943, %v2335
      %v2337 = vpop.f32.mrb[0].mxu0
      %2338 = vmatprep.mubr.bf16.mxu0 0
      %2339 = vmatmul.mubr.bf16.gmra.mrb[0].mxu0 %v1579
      %v2340 = vpop.f32.mrb[0].mxu0
      %v2341 = vadd.f32 %v1948, %v2340
      %v2342 = vpop.f32.mrb[0].mxu0
      %v2343 = vpop.f32.mrb[0].mxu0
      %v2344 = vadd.f32 %v1951, %v2343
      %v2345 = vpop.f32.mrb[0].mxu0
      %2346 = vmatprep.mubr.bf16.mxu0 0
      %2347 = vmatmul.mubr.bf16.gmra.mrb[0].mxu0 %v1582
      %v2348 = vpop.f32.mrb[0].mxu0
      %v2349 = vadd.f32 %v1956, %v2348
      %v2350 = vpop.f32.mrb[0].mxu0
      %v2351 = vpop.f32.mrb[0].mxu0
      %v2352 = vadd.f32 %v1959, %v2351
      %v2353 = vpop.f32.mrb[0].mxu0
      %2354 = vmatprep.mubr.bf16.mxu0 0
      %2355 = vmatmul.mubr.bf16.gmra.mrb[0].mxu0 %v1585
      %v2356 = vpop.f32.mrb[0].mxu0
      %v2357 = vadd.f32 %v1964, %v2356
      %v2358 = vpop.f32.mrb[0].mxu0
      %v2359 = vpop.f32.mrb[0].mxu0
      %v2360 = vadd.f32 %v1967, %v2359
      %v2361 = vpop.f32.mrb[0].mxu0
      %2362 = vmatprep.mubr.bf16.mxu0 0
      %2363 = vmatmul.mubr.bf16.gmra.mrb[0].mxu0 %v1588
      %v2364 = vpop.f32.mrb[0].mxu0
      %v2365 = vadd.f32 %v1972, %v2364
      %v2366 = vpop.f32.mrb[0].mxu0
      %v2367 = vpop.f32.mrb[0].mxu0
      %v2368 = vadd.f32 %v1975, %v2367
      %v2369 = vpop.f32.mrb[0].mxu0
      %2370 = vmatprep.mubr.bf16.mxu0 0
      %2371 = vmatmul.mubr.bf16.gmra.mrb[0].mxu0 %v1591
      %v2372 = vpop.f32.mrb[0].mxu0
      %v2373 = vadd.f32 %v1980, %v2372
      %v2374 = vpop.f32.mrb[0].mxu0
      %v2375 = vpop.f32.mrb[0].mxu0
      %v2376 = vadd.f32 %v1983, %v2375
      %v2377 = vpop.f32.mrb[0].mxu0
      %2378 = vdwg.mxu0
      %v2379 = vpack.c.bf16 %v2024, %v2021
      %v2380 = vpack.c.bf16 %v2032, %v2029
      %v2381 = vpack.c.bf16 %v2040, %v2037
      %v2382 = vpack.c.bf16 %v2048, %v2045
      %v2383 = vpack.c.bf16 %v2056, %v2053
      %v2384 = vpack.c.bf16 %v2064, %v2061
      %v2385 = vpack.c.bf16 %v2072, %v2069
      %v2386 = vpack.c.bf16 %v2080, %v2077
      %v2387 = vpack.c.bf16 %v2088, %v2085
      %v2388 = vpack.c.bf16 %v2096, %v2093
      %v2389 = vpack.c.bf16 %v2104, %v2101
      %v2390 = vpack.c.bf16 %v2112, %v2109
      %v2391 = vpack.c.bf16 %v2120, %v2117
      %v2392 = vpack.c.bf16 %v2128, %v2125
      %v2393 = vpack.c.bf16 %v2136, %v2133
      %v2394 = vpack.c.bf16 %v2144, %v2141
      %v2395 = vpack.c.bf16 %v2152, %v2149
      %v2396 = vpack.c.bf16 %v2160, %v2157
      %v2397 = vpack.c.bf16 %v2168, %v2165
      %v2398 = vpack.c.bf16 %v2176, %v2173
      %v2399 = vpack.c.bf16 %v2184, %v2181
      %v2400 = vpack.c.bf16 %v2192, %v2189
      %v2401 = vpack.c.bf16 %v2200, %v2197
      %v2402 = vpack.c.bf16 %v2208, %v2205
      %v2403 = vpack.c.bf16 %v2216, %v2213
      %v2404 = vpack.c.bf16 %v2224, %v2221
      %v2405 = vpack.c.bf16 %v2232, %v2229
      %v2406 = vpack.c.bf16 %v2240, %v2237
      %v2407 = vpack.c.bf16 %v2248, %v2245
      %v2408 = vpack.c.bf16 %v2256, %v2253
      %v2409 = vpack.c.bf16 %v2264, %v2261
      %v2410 = vpack.c.bf16 %v2272, %v2269
      %v2411 = vpack.c.bf16 %v2280, %v2277
      %v2412 = vpack.c.bf16 %v2288, %v2285
      %v2413 = vpack.c.bf16 %v2296, %v2293
      %v2414 = vpack.c.bf16 %v2304, %v2301
      %v2415 = vpack.c.bf16 %v2312, %v2309
      %v2416 = vpack.c.bf16 %v2320, %v2317
      %v2417 = vpack.c.bf16 %v2328, %v2325
      %v2418 = vpack.c.bf16 %v2336, %v2333
      %v2419 = vpack.c.bf16 %v2344, %v2341
      %v2420 = vpack.c.bf16 %v2352, %v2349
      %v2421 = vpack.c.bf16 %v2360, %v2357
      %v2422 = vpack.c.bf16 %v2368, %v2365
      %v2423 = vpack.c.bf16 %v2376, %v2373
      %v2424 = vld [vmem:[%s2] sm:$0xff]
      %v2425 = vld [vmem:[%s2 + $0x8] sm:$0xf]
      %v2426 = vld [vmem:[%s2 + $0xc] sm:$0xff]
      %v2427 = vld [vmem:[%s2 + $0x14] sm:$0xf]
      %v2428 = vld [vmem:[%s2 + $0x18] sm:$0xff]
      %v2429 = vld [vmem:[%s2 + $0x20] sm:$0xf]
      %v2430 = vld [vmem:[%s2 + $0x24] sm:$0xff]
      %v2431 = vld [vmem:[%s2 + $0x2c] sm:$0xf]
      %v2432 = vld [vmem:[%s2 + $0x30] sm:$0xff]
      %v2433 = vld [vmem:[%s2 + $0x38] sm:$0xf]
      %v2434 = vld [vmem:[%s2 + $0x3c] sm:$0xff]
      %v2435 = vld [vmem:[%s2 + $0x44] sm:$0xf]
      %v2436 = vld [vmem:[%s2 + $0x48] sm:$0xff]
      %v2437 = vld [vmem:[%s2 + $0x50] sm:$0xf]
      %v2438 = vld [vmem:[%s2 + $0x54] sm:$0xff]
      %v2439 = vld [vmem:[%s2 + $0x5c] sm:$0xf]
      %v2440 = vld [vmem:[%s2 + $0x60] sm:$0xff]
      %v2441 = vld [vmem:[%s2 + $0x68] sm:$0xf]
      %v2442 = vld [vmem:[%s2 + $0x6c] sm:$0xff]
      %v2443 = vld [vmem:[%s2 + $0x74] sm:$0xf]
      %v2444 = vld [vmem:[%s2 + $0x78] sm:$0xff]
      %v2445 = vld [vmem:[%s2 + $0x80] sm:$0xf]
      %v2446 = vld [vmem:[%s2 + $0x84] sm:$0xff]
      %v2447 = vld [vmem:[%s2 + $0x8c] sm:$0xf]
      %v2448 = vld [vmem:[%s2 + $0x90] sm:$0xff]
      %v2449 = vld [vmem:[%s2 + $0x98] sm:$0xf]
      %v2450 = vld [vmem:[%s2 + $0x9c] sm:$0xff]
      %v2451 = vld [vmem:[%s2 + $0xa4] sm:$0xf]
      %v2452 = vld [vmem:[%s2 + $0xa8] sm:$0xff]
      %v2453 = vld [vmem:[%s2 + $0xb0] sm:$0xf]
      %s2454 = scalar_lea.vmem %s2, 180
      %v2455 = vld [vmem:[%s2454] sm:$0xff]
      %v2456 = vld [vmem:[%s2454 + $0x8] sm:$0xf]
      %v2457 = vld [vmem:[%s2454 + $0xc] sm:$0xff]
      %v2458 = vld [vmem:[%s2454 + $0x14] sm:$0xf]
      %v2459 = vld [vmem:[%s2454 + $0x18] sm:$0xff]
      %v2460 = vld [vmem:[%s2454 + $0x20] sm:$0xf]
      %v2461 = vld [vmem:[%s2454 + $0x24] sm:$0xff]
      %v2462 = vld [vmem:[%s2454 + $0x2c] sm:$0xf]
      %v2463 = vld [vmem:[%s2454 + $0x30] sm:$0xff]
      %v2464 = vld [vmem:[%s2454 + $0x38] sm:$0xf]
      %v2465 = vld [vmem:[%s2454 + $0x3c] sm:$0xff]
      %v2466 = vld [vmem:[%s2454 + $0x44] sm:$0xf]
      %v2467 = vld [vmem:[%s2454 + $0x48] sm:$0xff]
      %v2468 = vld [vmem:[%s2454 + $0x50] sm:$0xf]
      %v2469 = vld [vmem:[%s2454 + $0x54] sm:$0xff]
      %v2470 = vld [vmem:[%s2454 + $0x5c] sm:$0xf]
      %v2471 = vld [vmem:[%s2454 + $0x60] sm:$0xff]
      %v2472 = vld [vmem:[%s2454 + $0x68] sm:$0xf]
      %v2473 = vld [vmem:[%s2454 + $0x6c] sm:$0xff]
      %v2474 = vld [vmem:[%s2454 + $0x74] sm:$0xf]
      %v2475 = vld [vmem:[%s2454 + $0x78] sm:$0xff]
      %v2476 = vld [vmem:[%s2454 + $0x80] sm:$0xf]
      %v2477 = vld [vmem:[%s2454 + $0x84] sm:$0xff]
      %v2478 = vld [vmem:[%s2454 + $0x8c] sm:$0xf]
      %v2479 = vld [vmem:[%s2454 + $0x90] sm:$0xff]
      %v2480 = vld [vmem:[%s2454 + $0x98] sm:$0xf]
      %v2481 = vld [vmem:[%s2454 + $0x9c] sm:$0xff]
      %v2482 = vld [vmem:[%s2454 + $0xa4] sm:$0xf]
      %v2483 = vld [vmem:[%s2454 + $0xa8] sm:$0xff]
      %v2484 = vld [vmem:[%s2454 + $0xb0] sm:$0xf]
      %v2515 = vunpack.c.l.b16 %v2455
      %v2516 = vunpack.c.h.b16 %v2455
      %v2517 = vunpack.c.l.b16 %v2456
      %v2518 = vunpack.c.l.b16 %v2457
      %v2519 = vunpack.c.h.b16 %v2457
      %v2520 = vunpack.c.l.b16 %v2458
      %v2521 = vunpack.c.l.b16 %v2459
      %v2522 = vunpack.c.h.b16 %v2459
      %v2523 = vunpack.c.l.b16 %v2460
      %v2524 = vunpack.c.l.b16 %v2461
      %v2525 = vunpack.c.h.b16 %v2461
      %v2526 = vunpack.c.l.b16 %v2462
      %v2527 = vunpack.c.l.b16 %v2463
      %v2528 = vunpack.c.h.b16 %v2463
      %v2529 = vunpack.c.l.b16 %v2464
      %v2530 = vunpack.c.l.b16 %v2465
      %v2531 = vunpack.c.h.b16 %v2465
      %v2532 = vunpack.c.l.b16 %v2466
      %v2533 = vunpack.c.l.b16 %v2467
      %v2534 = vunpack.c.h.b16 %v2467
      %v2535 = vunpack.c.l.b16 %v2468
      %v2536 = vunpack.c.l.b16 %v2469
      %v2537 = vunpack.c.h.b16 %v2469
      %v2538 = vunpack.c.l.b16 %v2470
      %v2539 = vunpack.c.l.b16 %v2471
      %v2540 = vunpack.c.h.b16 %v2471
      %v2541 = vunpack.c.l.b16 %v2472
      %v2542 = vunpack.c.l.b16 %v2473
      %v2543 = vunpack.c.h.b16 %v2473
      %v2544 = vunpack.c.l.b16 %v2474
      %v2545 = vunpack.c.l.b16 %v2475
      %v2546 = vunpack.c.h.b16 %v2475
      %v2547 = vunpack.c.l.b16 %v2476
      %v2548 = vunpack.c.l.b16 %v2477
      %v2549 = vunpack.c.h.b16 %v2477
      %v2550 = vunpack.c.l.b16 %v2478
      %v2551 = vunpack.c.l.b16 %v2479
      %v2552 = vunpack.c.h.b16 %v2479
      %v2553 = vunpack.c.l.b16 %v2480
      %v2554 = vunpack.c.l.b16 %v2481
      %v2555 = vunpack.c.h.b16 %v2481
      %v2556 = vunpack.c.l.b16 %v2482
      %v2557 = vunpack.c.l.b16 %v2483
      %v2558 = vunpack.c.h.b16 %v2483
      %v2559 = vunpack.c.l.b16 %v2484
      %v2560 = vpack.c.b16 %v2518, %v2515
      %v2561 = vpack.c.b16 %v2519, %v2516
      %v2562 = vpack.c.b16 %v2520, %v2517
      %v2563 = vpack.c.b16 %v2524, %v2521
      %v2564 = vpack.c.b16 %v2525, %v2522
      %v2565 = vpack.c.b16 %v2526, %v2523
      %v2566 = vpack.c.b16 %v2530, %v2527
      %v2567 = vpack.c.b16 %v2531, %v2528
      %v2568 = vpack.c.b16 %v2532, %v2529
      %v2569 = vpack.c.b16 %v2536, %v2533
      %v2570 = vpack.c.b16 %v2537, %v2534
      %v2571 = vpack.c.b16 %v2538, %v2535
      %v2572 = vpack.c.b16 %v2542, %v2539
      %v2573 = vpack.c.b16 %v2543, %v2540
      %v2574 = vpack.c.b16 %v2544, %v2541
      %v2575 = vpack.c.b16 %v2548, %v2545
      %v2576 = vpack.c.b16 %v2549, %v2546
      %v2577 = vpack.c.b16 %v2550, %v2547
      %v2578 = vpack.c.b16 %v2554, %v2551
      %v2579 = vpack.c.b16 %v2555, %v2552
      %v2580 = vpack.c.b16 %v2556, %v2553
      %v2581 = vpack.c.b16 %v2557, %v2557
      %v2582 = vpack.c.b16 %v2558, %v2558
      %v2583 = vpack.c.b16 %v2559, %v2559
      %vm2605 = vcmask 982016
      %v2607 = vsel %vm2605, %v2388, 0
      %v2610 = vsel %vm2605, %v2389, 0
      %v2613 = vsel %vm2605, %v2390, 0
      %v2616 = vsel %vm2605, %v2391, 0
      %v2619 = vsel %vm2605, %v2392, 0
      %v2622 = vsel %vm2605, %v2393, 0
      %v2625 = vsel %vm2605, %v2394, 0
      %v2628 = vsel %vm2605, %v2395, 0
      %v2631 = vsel %vm2605, %v2396, 0
      %vm2633 = vcmask 1043456
      %v2635 = vsel %vm2633, %v2581, 0
      %v2638 = vsel %vm2633, %v2582, 0
      %v2641 = vsel %vm2633, %v2583, 0
      %2643 = vmatprep.subr.bf16.mxu0 %v2561
      %2644 = vmatpush1.bf16.msra.mxu0 %v2560
      %2645 = vmatprep.subr.bf16.mxu0 %v2564
      %2646 = vmatpush1.bf16.msra.mxu0 %v2563
      %2647 = vmatprep.subr.bf16.mxu0 %v2567
      %2648 = vmatpush1.bf16.msra.mxu0 %v2566
      %2649 = vmatprep.subr.bf16.mxu0 %v2570
      %2650 = vmatpush1.bf16.msra.mxu0 %v2569
      %2651 = vmatprep.subr.bf16.mxu0 %v2573
      %2652 = vmatpush1.bf16.msra.mxu0 %v2572
      %2653 = vmatprep.subr.bf16.mxu0 %v2576
      %2654 = vmatpush1.bf16.msra.mxu0 %v2575
      %2655 = vmatprep.subr.bf16.mxu0 %v2579
      %2656 = vmatpush1.bf16.msra.mxu0 %v2578
      %2657 = vmatprep.subr.bf16.mxu0 %v2638
      %2658 = vmatpush1.bf16.msra.mxu0 %v2635
      %2659 = vmatprep.subr.bf16.mxu0 0
      %2660 = vmatpush1.bf16.msra.mxu0 0
      %2661 = vmatprep.subr.bf16.mxu0 0
      %2662 = vmatpush1.bf16.msra.mxu0 0
      %2663 = vmatprep.subr.bf16.mxu0 0
      %2664 = vmatpush1.bf16.msra.mxu0 0
      %2665 = vmatprep.subr.bf16.mxu0 0
      %2666 = vmatpush1.bf16.msra.mxu0 0
      %2667 = vmatprep.subr.bf16.mxu0 0
      %2668 = vmatpush1.bf16.msra.mxu0 0
      %2669 = vmatprep.subr.bf16.mxu0 0
      %2670 = vmatpush1.bf16.msra.mxu0 0
      %2671 = vmatprep.subr.bf16.mxu0 0
      %2672 = vmatpush1.bf16.msra.mxu0 0
      %2673 = vmatprep.subr.bf16.mxu0 0
      %2674 = vmatpush1.bf16.msra.mxu0 0
      %2675 = vmatprep.mubr.bf16.mxu0 0
      %2676 = vmatmul.mubr.bf16.gmra.mrb[0].mxu0 %v2607
      %v2677 = vpop.f32.mrb[0].mxu0
      %v2678 = vadd.f32 0.0, %v2677
      %v2679 = vpop.f32.mrb[0].mxu0
      %v2680 = vadd.f32 0.0, %v2679
      %v2681 = vpop.f32.mrb[0].mxu0
      %v2682 = vadd.f32 0.0, %v2681
      %v2683 = vpop.f32.mrb[0].mxu0
      %v2684 = vadd.f32 0.0, %v2683
      %2685 = vmatprep.mubr.bf16.mxu0 0
      %2686 = vmatmul.mubr.bf16.gmra.mrb[0].mxu0 %v2610
      %v2687 = vpop.f32.mrb[0].mxu0
      %v2688 = vadd.f32 0.0, %v2687
      %v2689 = vpop.f32.mrb[0].mxu0
      %v2690 = vadd.f32 0.0, %v2689
      %v2691 = vpop.f32.mrb[0].mxu0
      %v2692 = vadd.f32 0.0, %v2691
      %v2693 = vpop.f32.mrb[0].mxu0
      %v2694 = vadd.f32 0.0, %v2693
      %2695 = vmatprep.mubr.bf16.mxu0 0
      %2696 = vmatmul.mubr.bf16.gmra.mrb[0].mxu0 %v2613
      %v2697 = vpop.f32.mrb[0].mxu0
      %v2698 = vadd.f32 0.0, %v2697
      %v2699 = vpop.f32.mrb[0].mxu0
      %v2700 = vadd.f32 0.0, %v2699
      %v2701 = vpop.f32.mrb[0].mxu0
      %v2702 = vadd.f32 0.0, %v2701
      %v2703 = vpop.f32.mrb[0].mxu0
      %v2704 = vadd.f32 0.0, %v2703
      %2705 = vmatprep.mubr.bf16.mxu0 0
      %2706 = vmatmul.mubr.bf16.gmra.mrb[0].mxu0 %v2616
      %v2707 = vpop.f32.mrb[0].mxu0
      %v2708 = vadd.f32 0.0, %v2707
      %v2709 = vpop.f32.mrb[0].mxu0
      %v2710 = vadd.f32 0.0, %v2709
      %v2711 = vpop.f32.mrb[0].mxu0
      %v2712 = vadd.f32 0.0, %v2711
      %v2713 = vpop.f32.mrb[0].mxu0
      %v2714 = vadd.f32 0.0, %v2713
      %2715 = vmatprep.mubr.bf16.mxu0 0
      %2716 = vmatmul.mubr.bf16.gmra.mrb[0].mxu0 %v2619
      %v2717 = vpop.f32.mrb[0].mxu0
      %v2718 = vadd.f32 0.0, %v2717
      %v2719 = vpop.f32.mrb[0].mxu0
      %v2720 = vadd.f32 0.0, %v2719
      %v2721 = vpop.f32.mrb[0].mxu0
      %v2722 = vadd.f32 0.0, %v2721
      %v2723 = vpop.f32.mrb[0].mxu0
      %v2724 = vadd.f32 0.0, %v2723
      %2725 = vmatprep.mubr.bf16.mxu0 0
      %2726 = vmatmul.mubr.bf16.gmra.mrb[0].mxu0 %v2622
      %v2727 = vpop.f32.mrb[0].mxu0
      %v2728 = vadd.f32 0.0, %v2727
      %v2729 = vpop.f32.mrb[0].mxu0
      %v2730 = vadd.f32 0.0, %v2729
      %v2731 = vpop.f32.mrb[0].mxu0
      %v2732 = vadd.f32 0.0, %v2731
      %v2733 = vpop.f32.mrb[0].mxu0
      %v2734 = vadd.f32 0.0, %v2733
      %2735 = vmatprep.mubr.bf16.mxu0 0
      %2736 = vmatmul.mubr.bf16.gmra.mrb[0].mxu0 %v2625
      %v2737 = vpop.f32.mrb[0].mxu0
      %v2738 = vadd.f32 0.0, %v2737
      %v2739 = vpop.f32.mrb[0].mxu0
      %v2740 = vadd.f32 0.0, %v2739
      %v2741 = vpop.f32.mrb[0].mxu0
      %v2742 = vadd.f32 0.0, %v2741
      %v2743 = vpop.f32.mrb[0].mxu0
      %v2744 = vadd.f32 0.0, %v2743
      %2745 = vmatprep.mubr.bf16.mxu0 0
      %2746 = vmatmul.mubr.bf16.gmra.mrb[0].mxu0 %v2628
      %v2747 = vpop.f32.mrb[0].mxu0
      %v2748 = vadd.f32 0.0, %v2747
      %v2749 = vpop.f32.mrb[0].mxu0
      %v2750 = vadd.f32 0.0, %v2749
      %v2751 = vpop.f32.mrb[0].mxu0
      %v2752 = vadd.f32 0.0, %v2751
      %v2753 = vpop.f32.mrb[0].mxu0
      %v2754 = vadd.f32 0.0, %v2753
      %2755 = vmatprep.mubr.bf16.mxu0 0
      %2756 = vmatmul.mubr.bf16.gmra.mrb[0].mxu0 %v2631
      %v2757 = vpop.f32.mrb[0].mxu0
      %v2758 = vadd.f32 0.0, %v2757
      %v2759 = vpop.f32.mrb[0].mxu0
      %v2760 = vadd.f32 0.0, %v2759
      %v2761 = vpop.f32.mrb[0].mxu0
      %v2762 = vadd.f32 0.0, %v2761
      %v2763 = vpop.f32.mrb[0].mxu0
      %v2764 = vadd.f32 0.0, %v2763
      %2765 = vdwg.mxu0
      %2766 = vmatprep.subr.bf16.mxu0 0
      %2767 = vmatpush1.bf16.msra.mxu0 %v2562
      %2768 = vmatprep.subr.bf16.mxu0 0
      %2769 = vmatpush1.bf16.msra.mxu0 %v2565
      %2770 = vmatprep.subr.bf16.mxu0 0
      %2771 = vmatpush1.bf16.msra.mxu0 %v2568
      %2772 = vmatprep.subr.bf16.mxu0 0
      %2773 = vmatpush1.bf16.msra.mxu0 %v2571
      %2774 = vmatprep.subr.bf16.mxu0 0
      %2775 = vmatpush1.bf16.msra.mxu0 %v2574
      %2776 = vmatprep.subr.bf16.mxu0 0
      %2777 = vmatpush1.bf16.msra.mxu0 %v2577
      %2778 = vmatprep.subr.bf16.mxu0 0
      %2779 = vmatpush1.bf16.msra.mxu0 %v2580
      %2780 = vmatprep.subr.bf16.mxu0 0
      %2781 = vmatpush1.bf16.msra.mxu0 %v2641
      %2782 = vmatprep.subr.bf16.mxu0 0
      %2783 = vmatpush1.bf16.msra.mxu0 0
      %2784 = vmatprep.subr.bf16.mxu0 0
      %2785 = vmatpush1.bf16.msra.mxu0 0
      %2786 = vmatprep.subr.bf16.mxu0 0
      %2787 = vmatpush1.bf16.msra.mxu0 0
      %2788 = vmatprep.subr.bf16.mxu0 0
      %2789 = vmatpush1.bf16.msra.mxu0 0
      %2790 = vmatprep.subr.bf16.mxu0 0
      %2791 = vmatpush1.bf16.msra.mxu0 0
      %2792 = vmatprep.subr.bf16.mxu0 0
      %2793 = vmatpush1.bf16.msra.mxu0 0
      %2794 = vmatprep.subr.bf16.mxu0 0
      %2795 = vmatpush1.bf16.msra.mxu0 0
      %2796 = vmatprep.subr.bf16.mxu0 0
      %2797 = vmatpush1.bf16.msra.mxu0 0
      %2798 = vmatprep.mubr.bf16.mxu0 0
      %2799 = vmatmul.mubr.bf16.gmra.mrb[0].mxu0 %v2607
      %v2800 = vpop.f32.mrb[0].mxu0
      %v2801 = vadd.f32 0.0, %v2800
      %v2802 = vpop.f32.mrb[0].mxu0
      %v2803 = vpop.f32.mrb[0].mxu0
      %v2804 = vadd.f32 0.0, %v2803
      %v2805 = vpop.f32.mrb[0].mxu0
      %2806 = vmatprep.mubr.bf16.mxu0 0
      %2807 = vmatmul.mubr.bf16.gmra.mrb[0].mxu0 %v2610
      %v2808 = vpop.f32.mrb[0].mxu0
      %v2809 = vadd.f32 0.0, %v2808
      %v2810 = vpop.f32.mrb[0].mxu0
      %v2811 = vpop.f32.mrb[0].mxu0
      %v2812 = vadd.f32 0.0, %v2811
      %v2813 = vpop.f32.mrb[0].mxu0
      %2814 = vmatprep.mubr.bf16.mxu0 0
      %2815 = vmatmul.mubr.bf16.gmra.mrb[0].mxu0 %v2613
      %v2816 = vpop.f32.mrb[0].mxu0
      %v2817 = vadd.f32 0.0, %v2816
      %v2818 = vpop.f32.mrb[0].mxu0
      %v2819 = vpop.f32.mrb[0].mxu0
      %v2820 = vadd.f32 0.0, %v2819
      %v2821 = vpop.f32.mrb[0].mxu0
      %2822 = vmatprep.mubr.bf16.mxu0 0
      %2823 = vmatmul.mubr.bf16.gmra.mrb[0].mxu0 %v2616
      %v2824 = vpop.f32.mrb[0].mxu0
      %v2825 = vadd.f32 0.0, %v2824
      %v2826 = vpop.f32.mrb[0].mxu0
      %v2827 = vpop.f32.mrb[0].mxu0
      %v2828 = vadd.f32 0.0, %v2827
      %v2829 = vpop.f32.mrb[0].mxu0
      %2830 = vmatprep.mubr.bf16.mxu0 0
      %2831 = vmatmul.mubr.bf16.gmra.mrb[0].mxu0 %v2619
      %v2832 = vpop.f32.mrb[0].mxu0
      %v2833 = vadd.f32 0.0, %v2832
      %v2834 = vpop.f32.mrb[0].mxu0
      %v2835 = vpop.f32.mrb[0].mxu0
      %v2836 = vadd.f32 0.0, %v2835
      %v2837 = vpop.f32.mrb[0].mxu0
      %2838 = vmatprep.mubr.bf16.mxu0 0
      %2839 = vmatmul.mubr.bf16.gmra.mrb[0].mxu0 %v2622
      %v2840 = vpop.f32.mrb[0].mxu0
      %v2841 = vadd.f32 0.0, %v2840
      %v2842 = vpop.f32.mrb[0].mxu0
      %v2843 = vpop.f32.mrb[0].mxu0
      %v2844 = vadd.f32 0.0, %v2843
      %v2845 = vpop.f32.mrb[0].mxu0
      %2846 = vmatprep.mubr.bf16.mxu0 0
      %2847 = vmatmul.mubr.bf16.gmra.mrb[0].mxu0 %v2625
      %v2848 = vpop.f32.mrb[0].mxu0
      %v2849 = vadd.f32 0.0, %v2848
      %v2850 = vpop.f32.mrb[0].mxu0
      %v2851 = vpop.f32.mrb[0].mxu0
      %v2852 = vadd.f32 0.0, %v2851
      %v2853 = vpop.f32.mrb[0].mxu0
      %2854 = vmatprep.mubr.bf16.mxu0 0
      %2855 = vmatmul.mubr.bf16.gmra.mrb[0].mxu0 %v2628
      %v2856 = vpop.f32.mrb[0].mxu0
      %v2857 = vadd.f32 0.0, %v2856
      %v2858 = vpop.f32.mrb[0].mxu0
      %v2859 = vpop.f32.mrb[0].mxu0
      %v2860 = vadd.f32 0.0, %v2859
      %v2861 = vpop.f32.mrb[0].mxu0
      %2862 = vmatprep.mubr.bf16.mxu0 0
      %2863 = vmatmul.mubr.bf16.gmra.mrb[0].mxu0 %v2631
      %v2864 = vpop.f32.mrb[0].mxu0
      %v2865 = vadd.f32 0.0, %v2864
      %v2866 = vpop.f32.mrb[0].mxu0
      %v2867 = vpop.f32.mrb[0].mxu0
      %v2868 = vadd.f32 0.0, %v2867
      %v2869 = vpop.f32.mrb[0].mxu0
      %2870 = vdwg.mxu0
      %v2901 = vunpack.c.l.b16 %v2424
      %v2902 = vunpack.c.h.b16 %v2424
      %v2903 = vunpack.c.l.b16 %v2425
      %v2904 = vunpack.c.l.b16 %v2426
      %v2905 = vunpack.c.h.b16 %v2426
      %v2906 = vunpack.c.l.b16 %v2427
      %v2907 = vunpack.c.l.b16 %v2428
      %v2908 = vunpack.c.h.b16 %v2428
      %v2909 = vunpack.c.l.b16 %v2429
      %v2910 = vunpack.c.l.b16 %v2430
      %v2911 = vunpack.c.h.b16 %v2430
      %v2912 = vunpack.c.l.b16 %v2431
      %v2913 = vunpack.c.l.b16 %v2432
      %v2914 = vunpack.c.h.b16 %v2432
      %v2915 = vunpack.c.l.b16 %v2433
      %v2916 = vunpack.c.l.b16 %v2434
      %v2917 = vunpack.c.h.b16 %v2434
      %v2918 = vunpack.c.l.b16 %v2435
      %v2919 = vunpack.c.l.b16 %v2436
      %v2920 = vunpack.c.h.b16 %v2436
      %v2921 = vunpack.c.l.b16 %v2437
      %v2922 = vunpack.c.l.b16 %v2438
      %v2923 = vunpack.c.h.b16 %v2438
      %v2924 = vunpack.c.l.b16 %v2439
      %v2925 = vunpack.c.l.b16 %v2440
      %v2926 = vunpack.c.h.b16 %v2440
      %v2927 = vunpack.c.l.b16 %v2441
      %v2928 = vunpack.c.l.b16 %v2442
      %v2929 = vunpack.c.h.b16 %v2442
      %v2930 = vunpack.c.l.b16 %v2443
      %v2931 = vunpack.c.l.b16 %v2444
      %v2932 = vunpack.c.h.b16 %v2444
      %v2933 = vunpack.c.l.b16 %v2445
      %v2934 = vunpack.c.l.b16 %v2446
      %v2935 = vunpack.c.h.b16 %v2446
      %v2936 = vunpack.c.l.b16 %v2447
      %v2937 = vunpack.c.l.b16 %v2448
      %v2938 = vunpack.c.h.b16 %v2448
      %v2939 = vunpack.c.l.b16 %v2449
      %v2940 = vunpack.c.l.b16 %v2450
      %v2941 = vunpack.c.h.b16 %v2450
      %v2942 = vunpack.c.l.b16 %v2451
      %v2943 = vunpack.c.l.b16 %v2452
      %v2944 = vunpack.c.h.b16 %v2452
      %v2945 = vunpack.c.l.b16 %v2453
      %v2946 = vpack.c.b16 %v2904, %v2901
      %v2947 = vpack.c.b16 %v2905, %v2902
      %v2948 = vpack.c.b16 %v2906, %v2903
      %v2949 = vpack.c.b16 %v2910, %v2907
      %v2950 = vpack.c.b16 %v2911, %v2908
      %v2951 = vpack.c.b16 %v2912, %v2909
      %v2952 = vpack.c.b16 %v2916, %v2913
      %v2953 = vpack.c.b16 %v2917, %v2914
      %v2954 = vpack.c.b16 %v2918, %v2915
      %v2955 = vpack.c.b16 %v2922, %v2919
      %v2956 = vpack.c.b16 %v2923, %v2920
      %v2957 = vpack.c.b16 %v2924, %v2921
      %v2958 = vpack.c.b16 %v2928, %v2925
      %v2959 = vpack.c.b16 %v2929, %v2926
      %v2960 = vpack.c.b16 %v2930, %v2927
      %v2961 = vpack.c.b16 %v2934, %v2931
      %v2962 = vpack.c.b16 %v2935, %v2932
      %v2963 = vpack.c.b16 %v2936, %v2933
      %v2964 = vpack.c.b16 %v2940, %v2937
      %v2965 = vpack.c.b16 %v2941, %v2938
      %v2966 = vpack.c.b16 %v2942, %v2939
      %v2967 = vpack.c.b16 %v2943, %v2943
      %v2968 = vpack.c.b16 %v2944, %v2944
      %v2969 = vpack.c.b16 %v2945, %v2945
      %v2992 = vsel %vm2605, %v2379, 0
      %v2995 = vsel %vm2605, %v2380, 0
      %v2998 = vsel %vm2605, %v2381, 0
      %v3001 = vsel %vm2605, %v2382, 0
      %v3004 = vsel %vm2605, %v2383, 0
      %v3007 = vsel %vm2605, %v2384, 0
      %v3010 = vsel %vm2605, %v2385, 0
      %v3013 = vsel %vm2605, %v2386, 0
      %v3016 = vsel %vm2605, %v2387, 0
      %v3019 = vsel %vm2633, %v2967, 0
      %v3022 = vsel %vm2633, %v2968, 0
      %v3025 = vsel %vm2633, %v2969, 0
      %3027 = vmatprep.subr.bf16.mxu0 %v2947
      %3028 = vmatpush1.bf16.msra.mxu0 %v2946
      %3029 = vmatprep.subr.bf16.mxu0 %v2950
      %3030 = vmatpush1.bf16.msra.mxu0 %v2949
      %3031 = vmatprep.subr.bf16.mxu0 %v2953
      %3032 = vmatpush1.bf16.msra.mxu0 %v2952
      %3033 = vmatprep.subr.bf16.mxu0 %v2956
      %3034 = vmatpush1.bf16.msra.mxu0 %v2955
      %3035 = vmatprep.subr.bf16.mxu0 %v2959
      %3036 = vmatpush1.bf16.msra.mxu0 %v2958
      %3037 = vmatprep.subr.bf16.mxu0 %v2962
      %3038 = vmatpush1.bf16.msra.mxu0 %v2961
      %3039 = vmatprep.subr.bf16.mxu0 %v2965
      %3040 = vmatpush1.bf16.msra.mxu0 %v2964
      %3041 = vmatprep.subr.bf16.mxu0 %v3022
      %3042 = vmatpush1.bf16.msra.mxu0 %v3019
      %3043 = vmatprep.subr.bf16.mxu0 0
      %3044 = vmatpush1.bf16.msra.mxu0 0
      %3045 = vmatprep.subr.bf16.mxu0 0
      %3046 = vmatpush1.bf16.msra.mxu0 0
      %3047 = vmatprep.subr.bf16.mxu0 0
      %3048 = vmatpush1.bf16.msra.mxu0 0
      %3049 = vmatprep.subr.bf16.mxu0 0
      %3050 = vmatpush1.bf16.msra.mxu0 0
      %3051 = vmatprep.subr.bf16.mxu0 0
      %3052 = vmatpush1.bf16.msra.mxu0 0
      %3053 = vmatprep.subr.bf16.mxu0 0
      %3054 = vmatpush1.bf16.msra.mxu0 0
      %3055 = vmatprep.subr.bf16.mxu0 0
      %3056 = vmatpush1.bf16.msra.mxu0 0
      %3057 = vmatprep.subr.bf16.mxu0 0
      %3058 = vmatpush1.bf16.msra.mxu0 0
      %3059 = vmatprep.mubr.bf16.mxu0 0
      %3060 = vmatmul.mubr.bf16.gmra.mrb[0].mxu0 %v2992
      %v3061 = vpop.f32.mrb[0].mxu0
      %v3062 = vadd.f32 %v2678, %v3061
      %v3063 = vpop.f32.mrb[0].mxu0
      %v3064 = vadd.f32 %v2680, %v3063
      %v3065 = vpop.f32.mrb[0].mxu0
      %v3066 = vadd.f32 %v2682, %v3065
      %v3067 = vpop.f32.mrb[0].mxu0
      %v3068 = vadd.f32 %v2684, %v3067
      %3069 = vmatprep.mubr.bf16.mxu0 0
      %3070 = vmatmul.mubr.bf16.gmra.mrb[0].mxu0 %v2995
      %v3071 = vpop.f32.mrb[0].mxu0
      %v3072 = vadd.f32 %v2688, %v3071
      %v3073 = vpop.f32.mrb[0].mxu0
      %v3074 = vadd.f32 %v2690, %v3073
      %v3075 = vpop.f32.mrb[0].mxu0
      %v3076 = vadd.f32 %v2692, %v3075
      %v3077 = vpop.f32.mrb[0].mxu0
      %v3078 = vadd.f32 %v2694, %v3077
      %3079 = vmatprep.mubr.bf16.mxu0 0
      %3080 = vmatmul.mubr.bf16.gmra.mrb[0].mxu0 %v2998
      %v3081 = vpop.f32.mrb[0].mxu0
      %v3082 = vadd.f32 %v2698, %v3081
      %v3083 = vpop.f32.mrb[0].mxu0
      %v3084 = vadd.f32 %v2700, %v3083
      %v3085 = vpop.f32.mrb[0].mxu0
      %v3086 = vadd.f32 %v2702, %v3085
      %v3087 = vpop.f32.mrb[0].mxu0
      %v3088 = vadd.f32 %v2704, %v3087
      %3089 = vmatprep.mubr.bf16.mxu0 0
      %3090 = vmatmul.mubr.bf16.gmra.mrb[0].mxu0 %v3001
      %v3091 = vpop.f32.mrb[0].mxu0
      %v3092 = vadd.f32 %v2708, %v3091
      %v3093 = vpop.f32.mrb[0].mxu0
      %v3094 = vadd.f32 %v2710, %v3093
      %v3095 = vpop.f32.mrb[0].mxu0
      %v3096 = vadd.f32 %v2712, %v3095
      %v3097 = vpop.f32.mrb[0].mxu0
      %v3098 = vadd.f32 %v2714, %v3097
      %3099 = vmatprep.mubr.bf16.mxu0 0
      %3100 = vmatmul.mubr.bf16.gmra.mrb[0].mxu0 %v3004
      %v3101 = vpop.f32.mrb[0].mxu0
      %v3102 = vadd.f32 %v2718, %v3101
      %v3103 = vpop.f32.mrb[0].mxu0
      %v3104 = vadd.f32 %v2720, %v3103
      %v3105 = vpop.f32.mrb[0].mxu0
      %v3106 = vadd.f32 %v2722, %v3105
      %v3107 = vpop.f32.mrb[0].mxu0
      %v3108 = vadd.f32 %v2724, %v3107
      %3109 = vmatprep.mubr.bf16.mxu0 0
      %3110 = vmatmul.mubr.bf16.gmra.mrb[0].mxu0 %v3007
      %v3111 = vpop.f32.mrb[0].mxu0
      %v3112 = vadd.f32 %v2728, %v3111
      %v3113 = vpop.f32.mrb[0].mxu0
      %v3114 = vadd.f32 %v2730, %v3113
      %v3115 = vpop.f32.mrb[0].mxu0
      %v3116 = vadd.f32 %v2732, %v3115
      %v3117 = vpop.f32.mrb[0].mxu0
      %v3118 = vadd.f32 %v2734, %v3117
      %3119 = vmatprep.mubr.bf16.mxu0 0
      %3120 = vmatmul.mubr.bf16.gmra.mrb[0].mxu0 %v3010
      %v3121 = vpop.f32.mrb[0].mxu0
      %v3122 = vadd.f32 %v2738, %v3121
      %v3123 = vpop.f32.mrb[0].mxu0
      %v3124 = vadd.f32 %v2740, %v3123
      %v3125 = vpop.f32.mrb[0].mxu0
      %v3126 = vadd.f32 %v2742, %v3125
      %v3127 = vpop.f32.mrb[0].mxu0
      %v3128 = vadd.f32 %v2744, %v3127
      %3129 = vmatprep.mubr.bf16.mxu0 0
      %3130 = vmatmul.mubr.bf16.gmra.mrb[0].mxu0 %v3013
      %v3131 = vpop.f32.mrb[0].mxu0
      %v3132 = vadd.f32 %v2748, %v3131
      %v3133 = vpop.f32.mrb[0].mxu0
      %v3134 = vadd.f32 %v2750, %v3133
      %v3135 = vpop.f32.mrb[0].mxu0
      %v3136 = vadd.f32 %v2752, %v3135
      %v3137 = vpop.f32.mrb[0].mxu0
      %v3138 = vadd.f32 %v2754, %v3137
      %3139 = vmatprep.mubr.bf16.mxu0 0
      %3140 = vmatmul.mubr.bf16.gmra.mrb[0].mxu0 %v3016
      %v3141 = vpop.f32.mrb[0].mxu0
      %v3142 = vadd.f32 %v2758, %v3141
      %v3143 = vpop.f32.mrb[0].mxu0
      %v3144 = vadd.f32 %v2760, %v3143
      %v3145 = vpop.f32.mrb[0].mxu0
      %v3146 = vadd.f32 %v2762, %v3145
      %v3147 = vpop.f32.mrb[0].mxu0
      %v3148 = vadd.f32 %v2764, %v3147
      %3149 = vdwg.mxu0
      %3150 = vmatprep.subr.bf16.mxu0 0
      %3151 = vmatpush1.bf16.msra.mxu0 %v2948
      %3152 = vmatprep.subr.bf16.mxu0 0
      %3153 = vmatpush1.bf16.msra.mxu0 %v2951
      %3154 = vmatprep.subr.bf16.mxu0 0
      %3155 = vmatpush1.bf16.msra.mxu0 %v2954
      %3156 = vmatprep.subr.bf16.mxu0 0
      %3157 = vmatpush1.bf16.msra.mxu0 %v2957
      %3158 = vmatprep.subr.bf16.mxu0 0
      %3159 = vmatpush1.bf16.msra.mxu0 %v2960
      %3160 = vmatprep.subr.bf16.mxu0 0
      %3161 = vmatpush1.bf16.msra.mxu0 %v2963
      %3162 = vmatprep.subr.bf16.mxu0 0
      %3163 = vmatpush1.bf16.msra.mxu0 %v2966
      %3164 = vmatprep.subr.bf16.mxu0 0
      %3165 = vmatpush1.bf16.msra.mxu0 %v3025
      %3166 = vmatprep.subr.bf16.mxu0 0
      %3167 = vmatpush1.bf16.msra.mxu0 0
      %3168 = vmatprep.subr.bf16.mxu0 0
      %3169 = vmatpush1.bf16.msra.mxu0 0
      %3170 = vmatprep.subr.bf16.mxu0 0
      %3171 = vmatpush1.bf16.msra.mxu0 0
      %3172 = vmatprep.subr.bf16.mxu0 0
      %3173 = vmatpush1.bf16.msra.mxu0 0
      %3174 = vmatprep.subr.bf16.mxu0 0
      %3175 = vmatpush1.bf16.msra.mxu0 0
      %3176 = vmatprep.subr.bf16.mxu0 0
      %3177 = vmatpush1.bf16.msra.mxu0 0
      %3178 = vmatprep.subr.bf16.mxu0 0
      %3179 = vmatpush1.bf16.msra.mxu0 0
      %3180 = vmatprep.subr.bf16.mxu0 0
      %3181 = vmatpush1.bf16.msra.mxu0 0
      %3182 = vmatprep.mubr.bf16.mxu0 0
      %3183 = vmatmul.mubr.bf16.gmra.mrb[0].mxu0 %v2992
      %v3184 = vpop.f32.mrb[0].mxu0
      %v3185 = vadd.f32 %v2801, %v3184
      %v3186 = vpop.f32.mrb[0].mxu0
      %v3187 = vpop.f32.mrb[0].mxu0
      %v3188 = vadd.f32 %v2804, %v3187
      %v3189 = vpop.f32.mrb[0].mxu0
      %3190 = vmatprep.mubr.bf16.mxu0 0
      %3191 = vmatmul.mubr.bf16.gmra.mrb[0].mxu0 %v2995
      %v3192 = vpop.f32.mrb[0].mxu0
      %v3193 = vadd.f32 %v2809, %v3192
      %v3194 = vpop.f32.mrb[0].mxu0
      %v3195 = vpop.f32.mrb[0].mxu0
      %v3196 = vadd.f32 %v2812, %v3195
      %v3197 = vpop.f32.mrb[0].mxu0
      %3198 = vmatprep.mubr.bf16.mxu0 0
      %3199 = vmatmul.mubr.bf16.gmra.mrb[0].mxu0 %v2998
      %v3200 = vpop.f32.mrb[0].mxu0
      %v3201 = vadd.f32 %v2817, %v3200
      %v3202 = vpop.f32.mrb[0].mxu0
      %v3203 = vpop.f32.mrb[0].mxu0
      %v3204 = vadd.f32 %v2820, %v3203
      %v3205 = vpop.f32.mrb[0].mxu0
      %3206 = vmatprep.mubr.bf16.mxu0 0
      %3207 = vmatmul.mubr.bf16.gmra.mrb[0].mxu0 %v3001
      %v3208 = vpop.f32.mrb[0].mxu0
      %v3209 = vadd.f32 %v2825, %v3208
      %v3210 = vpop.f32.mrb[0].mxu0
      %v3211 = vpop.f32.mrb[0].mxu0
      %v3212 = vadd.f32 %v2828, %v3211
      %v3213 = vpop.f32.mrb[0].mxu0
      %3214 = vmatprep.mubr.bf16.mxu0 0
      %3215 = vmatmul.mubr.bf16.gmra.mrb[0].mxu0 %v3004
      %v3216 = vpop.f32.mrb[0].mxu0
      %v3217 = vadd.f32 %v2833, %v3216
      %v3218 = vpop.f32.mrb[0].mxu0
      %v3219 = vpop.f32.mrb[0].mxu0
      %v3220 = vadd.f32 %v2836, %v3219
      %v3221 = vpop.f32.mrb[0].mxu0
      %3222 = vmatprep.mubr.bf16.mxu0 0
      %3223 = vmatmul.mubr.bf16.gmra.mrb[0].mxu0 %v3007
      %v3224 = vpop.f32.mrb[0].mxu0
      %v3225 = vadd.f32 %v2841, %v3224
      %v3226 = vpop.f32.mrb[0].mxu0
      %v3227 = vpop.f32.mrb[0].mxu0
      %v3228 = vadd.f32 %v2844, %v3227
      %v3229 = vpop.f32.mrb[0].mxu0
      %3230 = vmatprep.mubr.bf16.mxu0 0
      %3231 = vmatmul.mubr.bf16.gmra.mrb[0].mxu0 %v3010
      %v3232 = vpop.f32.mrb[0].mxu0
      %v3233 = vadd.f32 %v2849, %v3232
      %v3234 = vpop.f32.mrb[0].mxu0
      %v3235 = vpop.f32.mrb[0].mxu0
      %v3236 = vadd.f32 %v2852, %v3235
      %v3237 = vpop.f32.mrb[0].mxu0
      %3238 = vmatprep.mubr.bf16.mxu0 0
      %3239 = vmatmul.mubr.bf16.gmra.mrb[0].mxu0 %v3013
      %v3240 = vpop.f32.mrb[0].mxu0
      %v3241 = vadd.f32 %v2857, %v3240
      %v3242 = vpop.f32.mrb[0].mxu0
      %v3243 = vpop.f32.mrb[0].mxu0
      %v3244 = vadd.f32 %v2860, %v3243
      %v3245 = vpop.f32.mrb[0].mxu0
      %3246 = vmatprep.mubr.bf16.mxu0 0
      %3247 = vmatmul.mubr.bf16.gmra.mrb[0].mxu0 %v3016
      %v3248 = vpop.f32.mrb[0].mxu0
      %v3249 = vadd.f32 %v2865, %v3248
      %v3250 = vpop.f32.mrb[0].mxu0
      %v3251 = vpop.f32.mrb[0].mxu0
      %v3252 = vadd.f32 %v2868, %v3251
      %v3253 = vpop.f32.mrb[0].mxu0
      %3254 = vdwg.mxu0
      %s3255 = scalar_lea.vmem %s2, 360
      %v3256 = vld [vmem:[%s3255] sm:$0xff]
      %v3257 = vld [vmem:[%s3255 + $0x8] sm:$0xf]
      %v3258 = vld [vmem:[%s3255 + $0xc] sm:$0xff]
      %v3259 = vld [vmem:[%s3255 + $0x14] sm:$0xf]
      %v3260 = vld [vmem:[%s3255 + $0x18] sm:$0xff]
      %v3261 = vld [vmem:[%s3255 + $0x20] sm:$0xf]
      %v3262 = vld [vmem:[%s3255 + $0x24] sm:$0xff]
      %v3263 = vld [vmem:[%s3255 + $0x2c] sm:$0xf]
      %v3264 = vld [vmem:[%s3255 + $0x30] sm:$0xff]
      %v3265 = vld [vmem:[%s3255 + $0x38] sm:$0xf]
      %v3266 = vld [vmem:[%s3255 + $0x3c] sm:$0xff]
      %v3267 = vld [vmem:[%s3255 + $0x44] sm:$0xf]
      %v3268 = vld [vmem:[%s3255 + $0x48] sm:$0xff]
      %v3269 = vld [vmem:[%s3255 + $0x50] sm:$0xf]
      %v3270 = vld [vmem:[%s3255 + $0x54] sm:$0xff]
      %v3271 = vld [vmem:[%s3255 + $0x5c] sm:$0xf]
      %v3272 = vld [vmem:[%s3255 + $0x60] sm:$0xff]
      %v3273 = vld [vmem:[%s3255 + $0x68] sm:$0xf]
      %v3274 = vld [vmem:[%s3255 + $0x6c] sm:$0xff]
      %v3275 = vld [vmem:[%s3255 + $0x74] sm:$0xf]
      %v3276 = vld [vmem:[%s3255 + $0x78] sm:$0xff]
      %v3277 = vld [vmem:[%s3255 + $0x80] sm:$0xf]
      %v3278 = vld [vmem:[%s3255 + $0x84] sm:$0xff]
      %v3279 = vld [vmem:[%s3255 + $0x8c] sm:$0xf]
      %v3280 = vld [vmem:[%s3255 + $0x90] sm:$0xff]
      %v3281 = vld [vmem:[%s3255 + $0x98] sm:$0xf]
      %v3282 = vld [vmem:[%s3255 + $0x9c] sm:$0xff]
      %v3283 = vld [vmem:[%s3255 + $0xa4] sm:$0xf]
      %v3284 = vld [vmem:[%s3255 + $0xa8] sm:$0xff]
      %v3285 = vld [vmem:[%s3255 + $0xb0] sm:$0xf]
      %v3316 = vunpack.c.l.b16 %v3256
      %v3317 = vunpack.c.h.b16 %v3256
      %v3318 = vunpack.c.l.b16 %v3257
      %v3319 = vunpack.c.l.b16 %v3258
      %v3320 = vunpack.c.h.b16 %v3258
      %v3321 = vunpack.c.l.b16 %v3259
      %v3322 = vunpack.c.l.b16 %v3260
      %v3323 = vunpack.c.h.b16 %v3260
      %v3324 = vunpack.c.l.b16 %v3261
      %v3325 = vunpack.c.l.b16 %v3262
      %v3326 = vunpack.c.h.b16 %v3262
      %v3327 = vunpack.c.l.b16 %v3263
      %v3328 = vunpack.c.l.b16 %v3264
      %v3329 = vunpack.c.h.b16 %v3264
      %v3330 = vunpack.c.l.b16 %v3265
      %v3331 = vunpack.c.l.b16 %v3266
      %v3332 = vunpack.c.h.b16 %v3266
      %v3333 = vunpack.c.l.b16 %v3267
      %v3334 = vunpack.c.l.b16 %v3268
      %v3335 = vunpack.c.h.b16 %v3268
      %v3336 = vunpack.c.l.b16 %v3269
      %v3337 = vunpack.c.l.b16 %v3270
      %v3338 = vunpack.c.h.b16 %v3270
      %v3339 = vunpack.c.l.b16 %v3271
      %v3340 = vunpack.c.l.b16 %v3272
      %v3341 = vunpack.c.h.b16 %v3272
      %v3342 = vunpack.c.l.b16 %v3273
      %v3343 = vunpack.c.l.b16 %v3274
      %v3344 = vunpack.c.h.b16 %v3274
      %v3345 = vunpack.c.l.b16 %v3275
      %v3346 = vunpack.c.l.b16 %v3276
      %v3347 = vunpack.c.h.b16 %v3276
      %v3348 = vunpack.c.l.b16 %v3277
      %v3349 = vunpack.c.l.b16 %v3278
      %v3350 = vunpack.c.h.b16 %v3278
      %v3351 = vunpack.c.l.b16 %v3279
      %v3352 = vunpack.c.l.b16 %v3280
      %v3353 = vunpack.c.h.b16 %v3280
      %v3354 = vunpack.c.l.b16 %v3281
      %v3355 = vunpack.c.l.b16 %v3282
      %v3356 = vunpack.c.h.b16 %v3282
      %v3357 = vunpack.c.l.b16 %v3283
      %v3358 = vunpack.c.l.b16 %v3284
      %v3359 = vunpack.c.h.b16 %v3284
      %v3360 = vunpack.c.l.b16 %v3285
      %v3361 = vpack.c.b16 %v3319, %v3316
      %v3362 = vpack.c.b16 %v3320, %v3317
      %v3363 = vpack.c.b16 %v3321, %v3318
      %v3364 = vpack.c.b16 %v3325, %v3322
      %v3365 = vpack.c.b16 %v3326, %v3323
      %v3366 = vpack.c.b16 %v3327, %v3324
      %v3367 = vpack.c.b16 %v3331, %v3328
      %v3368 = vpack.c.b16 %v3332, %v3329
      %v3369 = vpack.c.b16 %v3333, %v3330
      %v3370 = vpack.c.b16 %v3337, %v3334
      %v3371 = vpack.c.b16 %v3338, %v3335
      %v3372 = vpack.c.b16 %v3339, %v3336
      %v3373 = vpack.c.b16 %v3343, %v3340
      %v3374 = vpack.c.b16 %v3344, %v3341
      %v3375 = vpack.c.b16 %v3345, %v3342
      %v3376 = vpack.c.b16 %v3349, %v3346
      %v3377 = vpack.c.b16 %v3350, %v3347
      %v3378 = vpack.c.b16 %v3351, %v3348
      %v3379 = vpack.c.b16 %v3355, %v3352
      %v3380 = vpack.c.b16 %v3356, %v3353
      %v3381 = vpack.c.b16 %v3357, %v3354
      %v3382 = vpack.c.b16 %v3358, %v3358
      %v3383 = vpack.c.b16 %v3359, %v3359
      %v3384 = vpack.c.b16 %v3360, %v3360
      %v3407 = vsel %vm2605, %v2397, 0
      %v3410 = vsel %vm2605, %v2398, 0
      %v3413 = vsel %vm2605, %v2399, 0
      %v3416 = vsel %vm2605, %v2400, 0
      %v3419 = vsel %vm2605, %v2401, 0
      %v3422 = vsel %vm2605, %v2402, 0
      %v3425 = vsel %vm2605, %v2403, 0
      %v3428 = vsel %vm2605, %v2404, 0
      %v3431 = vsel %vm2605, %v2405, 0
      %v3434 = vsel %vm2633, %v3382, 0
      %v3437 = vsel %vm2633, %v3383, 0
      %v3440 = vsel %vm2633, %v3384, 0
      %3442 = vmatprep.subr.bf16.mxu0 %v3362
      %3443 = vmatpush1.bf16.msra.mxu0 %v3361
      %3444 = vmatprep.subr.bf16.mxu0 %v3365
      %3445 = vmatpush1.bf16.msra.mxu0 %v3364
      %3446 = vmatprep.subr.bf16.mxu0 %v3368
      %3447 = vmatpush1.bf16.msra.mxu0 %v3367
      %3448 = vmatprep.subr.bf16.mxu0 %v3371
      %3449 = vmatpush1.bf16.msra.mxu0 %v3370
      %3450 = vmatprep.subr.bf16.mxu0 %v3374
      %3451 = vmatpush1.bf16.msra.mxu0 %v3373
      %3452 = vmatprep.subr.bf16.mxu0 %v3377
      %3453 = vmatpush1.bf16.msra.mxu0 %v3376
      %3454 = vmatprep.subr.bf16.mxu0 %v3380
      %3455 = vmatpush1.bf16.msra.mxu0 %v3379
      %3456 = vmatprep.subr.bf16.mxu0 %v3437
      %3457 = vmatpush1.bf16.msra.mxu0 %v3434
      %3458 = vmatprep.subr.bf16.mxu0 0
      %3459 = vmatpush1.bf16.msra.mxu0 0
      %3460 = vmatprep.subr.bf16.mxu0 0
      %3461 = vmatpush1.bf16.msra.mxu0 0
      %3462 = vmatprep.subr.bf16.mxu0 0
      %3463 = vmatpush1.bf16.msra.mxu0 0
      %3464 = vmatprep.subr.bf16.mxu0 0
      %3465 = vmatpush1.bf16.msra.mxu0 0
      %3466 = vmatprep.subr.bf16.mxu0 0
      %3467 = vmatpush1.bf16.msra.mxu0 0
      %3468 = vmatprep.subr.bf16.mxu0 0
      %3469 = vmatpush1.bf16.msra.mxu0 0
      %3470 = vmatprep.subr.bf16.mxu0 0
      %3471 = vmatpush1.bf16.msra.mxu0 0
      %3472 = vmatprep.subr.bf16.mxu0 0
      %3473 = vmatpush1.bf16.msra.mxu0 0
      %3474 = vmatprep.mubr.bf16.mxu0 0
      %3475 = vmatmul.mubr.bf16.gmra.mrb[0].mxu0 %v3407
      %v3476 = vpop.f32.mrb[0].mxu0
      %v3477 = vadd.f32 0.0, %v3476
      %v3478 = vpop.f32.mrb[0].mxu0
      %v3479 = vadd.f32 0.0, %v3478
      %v3480 = vpop.f32.mrb[0].mxu0
      %v3481 = vadd.f32 0.0, %v3480
      %v3482 = vpop.f32.mrb[0].mxu0
      %v3483 = vadd.f32 0.0, %v3482
      %3484 = vmatprep.mubr.bf16.mxu0 0
      %3485 = vmatmul.mubr.bf16.gmra.mrb[0].mxu0 %v3410
      %v3486 = vpop.f32.mrb[0].mxu0
      %v3487 = vadd.f32 0.0, %v3486
      %v3488 = vpop.f32.mrb[0].mxu0
      %v3489 = vadd.f32 0.0, %v3488
      %v3490 = vpop.f32.mrb[0].mxu0
      %v3491 = vadd.f32 0.0, %v3490
      %v3492 = vpop.f32.mrb[0].mxu0
      %v3493 = vadd.f32 0.0, %v3492
      %3494 = vmatprep.mubr.bf16.mxu0 0
      %3495 = vmatmul.mubr.bf16.gmra.mrb[0].mxu0 %v3413
      %v3496 = vpop.f32.mrb[0].mxu0
      %v3497 = vadd.f32 0.0, %v3496
      %v3498 = vpop.f32.mrb[0].mxu0
      %v3499 = vadd.f32 0.0, %v3498
      %v3500 = vpop.f32.mrb[0].mxu0
      %v3501 = vadd.f32 0.0, %v3500
      %v3502 = vpop.f32.mrb[0].mxu0
      %v3503 = vadd.f32 0.0, %v3502
      %3504 = vmatprep.mubr.bf16.mxu0 0
      %3505 = vmatmul.mubr.bf16.gmra.mrb[0].mxu0 %v3416
      %v3506 = vpop.f32.mrb[0].mxu0
      %v3507 = vadd.f32 0.0, %v3506
      %v3508 = vpop.f32.mrb[0].mxu0
      %v3509 = vadd.f32 0.0, %v3508
      %v3510 = vpop.f32.mrb[0].mxu0
      %v3511 = vadd.f32 0.0, %v3510
      %v3512 = vpop.f32.mrb[0].mxu0
      %v3513 = vadd.f32 0.0, %v3512
      %3514 = vmatprep.mubr.bf16.mxu0 0
      %3515 = vmatmul.mubr.bf16.gmra.mrb[0].mxu0 %v3419
      %v3516 = vpop.f32.mrb[0].mxu0
      %v3517 = vadd.f32 0.0, %v3516
      %v3518 = vpop.f32.mrb[0].mxu0
      %v3519 = vadd.f32 0.0, %v3518
      %v3520 = vpop.f32.mrb[0].mxu0
      %v3521 = vadd.f32 0.0, %v3520
      %v3522 = vpop.f32.mrb[0].mxu0
      %v3523 = vadd.f32 0.0, %v3522
      %3524 = vmatprep.mubr.bf16.mxu0 0
      %3525 = vmatmul.mubr.bf16.gmra.mrb[0].mxu0 %v3422
      %v3526 = vpop.f32.mrb[0].mxu0
      %v3527 = vadd.f32 0.0, %v3526
      %v3528 = vpop.f32.mrb[0].mxu0
      %v3529 = vadd.f32 0.0, %v3528
      %v3530 = vpop.f32.mrb[0].mxu0
      %v3531 = vadd.f32 0.0, %v3530
      %v3532 = vpop.f32.mrb[0].mxu0
      %v3533 = vadd.f32 0.0, %v3532
      %3534 = vmatprep.mubr.bf16.mxu0 0
      %3535 = vmatmul.mubr.bf16.gmra.mrb[0].mxu0 %v3425
      %v3536 = vpop.f32.mrb[0].mxu0
      %v3537 = vadd.f32 0.0, %v3536
      %v3538 = vpop.f32.mrb[0].mxu0
      %v3539 = vadd.f32 0.0, %v3538
      %v3540 = vpop.f32.mrb[0].mxu0
      %v3541 = vadd.f32 0.0, %v3540
      %v3542 = vpop.f32.mrb[0].mxu0
      %v3543 = vadd.f32 0.0, %v3542
      %3544 = vmatprep.mubr.bf16.mxu0 0
      %3545 = vmatmul.mubr.bf16.gmra.mrb[0].mxu0 %v3428
      %v3546 = vpop.f32.mrb[0].mxu0
      %v3547 = vadd.f32 0.0, %v3546
      %v3548 = vpop.f32.mrb[0].mxu0
      %v3549 = vadd.f32 0.0, %v3548
      %v3550 = vpop.f32.mrb[0].mxu0
      %v3551 = vadd.f32 0.0, %v3550
      %v3552 = vpop.f32.mrb[0].mxu0
      %v3553 = vadd.f32 0.0, %v3552
      %3554 = vmatprep.mubr.bf16.mxu0 0
      %3555 = vmatmul.mubr.bf16.gmra.mrb[0].mxu0 %v3431
      %v3556 = vpop.f32.mrb[0].mxu0
      %v3557 = vadd.f32 0.0, %v3556
      %v3558 = vpop.f32.mrb[0].mxu0
      %v3559 = vadd.f32 0.0, %v3558
      %v3560 = vpop.f32.mrb[0].mxu0
      %v3561 = vadd.f32 0.0, %v3560
      %v3562 = vpop.f32.mrb[0].mxu0
      %v3563 = vadd.f32 0.0, %v3562
      %3564 = vdwg.mxu0
      %3565 = vmatprep.subr.bf16.mxu0 0
      %3566 = vmatpush1.bf16.msra.mxu0 %v3363
      %3567 = vmatprep.subr.bf16.mxu0 0
      %3568 = vmatpush1.bf16.msra.mxu0 %v3366
      %3569 = vmatprep.subr.bf16.mxu0 0
      %3570 = vmatpush1.bf16.msra.mxu0 %v3369
      %3571 = vmatprep.subr.bf16.mxu0 0
      %3572 = vmatpush1.bf16.msra.mxu0 %v3372
      %3573 = vmatprep.subr.bf16.mxu0 0
      %3574 = vmatpush1.bf16.msra.mxu0 %v3375
      %3575 = vmatprep.subr.bf16.mxu0 0
      %3576 = vmatpush1.bf16.msra.mxu0 %v3378
      %3577 = vmatprep.subr.bf16.mxu0 0
      %3578 = vmatpush1.bf16.msra.mxu0 %v3381
      %3579 = vmatprep.subr.bf16.mxu0 0
      %3580 = vmatpush1.bf16.msra.mxu0 %v3440
      %3581 = vmatprep.subr.bf16.mxu0 0
      %3582 = vmatpush1.bf16.msra.mxu0 0
      %3583 = vmatprep.subr.bf16.mxu0 0
      %3584 = vmatpush1.bf16.msra.mxu0 0
      %3585 = vmatprep.subr.bf16.mxu0 0
      %3586 = vmatpush1.bf16.msra.mxu0 0
      %3587 = vmatprep.subr.bf16.mxu0 0
      %3588 = vmatpush1.bf16.msra.mxu0 0
      %3589 = vmatprep.subr.bf16.mxu0 0
      %3590 = vmatpush1.bf16.msra.mxu0 0
      %3591 = vmatprep.subr.bf16.mxu0 0
      %3592 = vmatpush1.bf16.msra.mxu0 0
      %3593 = vmatprep.subr.bf16.mxu0 0
      %3594 = vmatpush1.bf16.msra.mxu0 0
      %3595 = vmatprep.subr.bf16.mxu0 0
      %3596 = vmatpush1.bf16.msra.mxu0 0
      %3597 = vmatprep.mubr.bf16.mxu0 0
      %3598 = vmatmul.mubr.bf16.gmra.mrb[0].mxu0 %v3407
      %v3599 = vpop.f32.mrb[0].mxu0
      %v3600 = vadd.f32 0.0, %v3599
      %v3601 = vpop.f32.mrb[0].mxu0
      %v3602 = vpop.f32.mrb[0].mxu0
      %v3603 = vadd.f32 0.0, %v3602
      %v3604 = vpop.f32.mrb[0].mxu0
      %3605 = vmatprep.mubr.bf16.mxu0 0
      %3606 = vmatmul.mubr.bf16.gmra.mrb[0].mxu0 %v3410
      %v3607 = vpop.f32.mrb[0].mxu0
      %v3608 = vadd.f32 0.0, %v3607
      %v3609 = vpop.f32.mrb[0].mxu0
      %v3610 = vpop.f32.mrb[0].mxu0
      %v3611 = vadd.f32 0.0, %v3610
      %v3612 = vpop.f32.mrb[0].mxu0
      %3613 = vmatprep.mubr.bf16.mxu0 0
      %3614 = vmatmul.mubr.bf16.gmra.mrb[0].mxu0 %v3413
      %v3615 = vpop.f32.mrb[0].mxu0
      %v3616 = vadd.f32 0.0, %v3615
      %v3617 = vpop.f32.mrb[0].mxu0
      %v3618 = vpop.f32.mrb[0].mxu0
      %v3619 = vadd.f32 0.0, %v3618
      %v3620 = vpop.f32.mrb[0].mxu0
      %3621 = vmatprep.mubr.bf16.mxu0 0
      %3622 = vmatmul.mubr.bf16.gmra.mrb[0].mxu0 %v3416
      %v3623 = vpop.f32.mrb[0].mxu0
      %v3624 = vadd.f32 0.0, %v3623
      %v3625 = vpop.f32.mrb[0].mxu0
      %v3626 = vpop.f32.mrb[0].mxu0
      %v3627 = vadd.f32 0.0, %v3626
      %v3628 = vpop.f32.mrb[0].mxu0
      %3629 = vmatprep.mubr.bf16.mxu0 0
      %3630 = vmatmul.mubr.bf16.gmra.mrb[0].mxu0 %v3419
      %v3631 = vpop.f32.mrb[0].mxu0
      %v3632 = vadd.f32 0.0, %v3631
      %v3633 = vpop.f32.mrb[0].mxu0
      %v3634 = vpop.f32.mrb[0].mxu0
      %v3635 = vadd.f32 0.0, %v3634
      %v3636 = vpop.f32.mrb[0].mxu0
      %3637 = vmatprep.mubr.bf16.mxu0 0
      %3638 = vmatmul.mubr.bf16.gmra.mrb[0].mxu0 %v3422
      %v3639 = vpop.f32.mrb[0].mxu0
      %v3640 = vadd.f32 0.0, %v3639
      %v3641 = vpop.f32.mrb[0].mxu0
      %v3642 = vpop.f32.mrb[0].mxu0
      %v3643 = vadd.f32 0.0, %v3642
      %v3644 = vpop.f32.mrb[0].mxu0
      %3645 = vmatprep.mubr.bf16.mxu0 0
      %3646 = vmatmul.mubr.bf16.gmra.mrb[0].mxu0 %v3425
      %v3647 = vpop.f32.mrb[0].mxu0
      %v3648 = vadd.f32 0.0, %v3647
      %v3649 = vpop.f32.mrb[0].mxu0
      %v3650 = vpop.f32.mrb[0].mxu0
      %v3651 = vadd.f32 0.0, %v3650
      %v3652 = vpop.f32.mrb[0].mxu0
      %3653 = vmatprep.mubr.bf16.mxu0 0
      %3654 = vmatmul.mubr.bf16.gmra.mrb[0].mxu0 %v3428
      %v3655 = vpop.f32.mrb[0].mxu0
      %v3656 = vadd.f32 0.0, %v3655
      %v3657 = vpop.f32.mrb[0].mxu0
      %v3658 = vpop.f32.mrb[0].mxu0
      %v3659 = vadd.f32 0.0, %v3658
      %v3660 = vpop.f32.mrb[0].mxu0
      %3661 = vmatprep.mubr.bf16.mxu0 0
      %3662 = vmatmul.mubr.bf16.gmra.mrb[0].mxu0 %v3431
      %v3663 = vpop.f32.mrb[0].mxu0
      %v3664 = vadd.f32 0.0, %v3663
      %v3665 = vpop.f32.mrb[0].mxu0
      %v3666 = vpop.f32.mrb[0].mxu0
      %v3667 = vadd.f32 0.0, %v3666
      %v3668 = vpop.f32.mrb[0].mxu0
      %3669 = vdwg.mxu0
      %v3670 = vadd.f32 %v3062, %v3477
      %v3671 = vadd.f32 %v3064, %v3479
      %v3672 = vadd.f32 %v3185, %v3600
      %v3673 = vadd.f32 %v3066, %v3481
      %v3674 = vadd.f32 %v3068, %v3483
      %v3675 = vadd.f32 %v3188, %v3603
      %v3676 = vadd.f32 %v3072, %v3487
      %v3677 = vadd.f32 %v3074, %v3489
      %v3678 = vadd.f32 %v3193, %v3608
      %v3679 = vadd.f32 %v3076, %v3491
      %v3680 = vadd.f32 %v3078, %v3493
      %v3681 = vadd.f32 %v3196, %v3611
      %v3682 = vadd.f32 %v3082, %v3497
      %v3683 = vadd.f32 %v3084, %v3499
      %v3684 = vadd.f32 %v3201, %v3616
      %v3685 = vadd.f32 %v3086, %v3501
      %v3686 = vadd.f32 %v3088, %v3503
      %v3687 = vadd.f32 %v3204, %v3619
      %v3688 = vadd.f32 %v3092, %v3507
      %v3689 = vadd.f32 %v3094, %v3509
      %v3690 = vadd.f32 %v3209, %v3624
      %v3691 = vadd.f32 %v3096, %v3511
      %v3692 = vadd.f32 %v3098, %v3513
      %v3693 = vadd.f32 %v3212, %v3627
      %v3694 = vadd.f32 %v3102, %v3517
      %v3695 = vadd.f32 %v3104, %v3519
      %v3696 = vadd.f32 %v3217, %v3632
      %v3697 = vadd.f32 %v3106, %v3521
      %v3698 = vadd.f32 %v3108, %v3523
      %v3699 = vadd.f32 %v3220, %v3635
      %v3700 = vadd.f32 %v3112, %v3527
      %v3701 = vadd.f32 %v3114, %v3529
      %v3702 = vadd.f32 %v3225, %v3640
      %v3703 = vadd.f32 %v3116, %v3531
      %v3704 = vadd.f32 %v3118, %v3533
      %v3705 = vadd.f32 %v3228, %v3643
      %v3706 = vadd.f32 %v3122, %v3537
      %v3707 = vadd.f32 %v3124, %v3539
      %v3708 = vadd.f32 %v3233, %v3648
      %v3709 = vadd.f32 %v3126, %v3541
      %v3710 = vadd.f32 %v3128, %v3543
      %v3711 = vadd.f32 %v3236, %v3651
      %v3712 = vadd.f32 %v3132, %v3547
      %v3713 = vadd.f32 %v3134, %v3549
      %v3714 = vadd.f32 %v3241, %v3656
      %v3715 = vadd.f32 %v3136, %v3551
      %v3716 = vadd.f32 %v3138, %v3553
      %v3717 = vadd.f32 %v3244, %v3659
      %v3718 = vadd.f32 %v3142, %v3557
      %v3719 = vadd.f32 %v3144, %v3559
      %v3720 = vadd.f32 %v3249, %v3664
      %v3721 = vadd.f32 %v3146, %v3561
      %v3722 = vadd.f32 %v3148, %v3563
      %v3723 = vadd.f32 %v3252, %v3667
      %s3724 = scalar_lea.vmem %s2, 540
      %v3725 = vld [vmem:[%s3724] sm:$0xff]
      %v3726 = vld [vmem:[%s3724 + $0x8] sm:$0xf]
      %v3727 = vld [vmem:[%s3724 + $0xc] sm:$0xff]
      %v3728 = vld [vmem:[%s3724 + $0x14] sm:$0xf]
      %v3729 = vld [vmem:[%s3724 + $0x18] sm:$0xff]
      %v3730 = vld [vmem:[%s3724 + $0x20] sm:$0xf]
      %v3731 = vld [vmem:[%s3724 + $0x24] sm:$0xff]
      %v3732 = vld [vmem:[%s3724 + $0x2c] sm:$0xf]
      %v3733 = vld [vmem:[%s3724 + $0x30] sm:$0xff]
      %v3734 = vld [vmem:[%s3724 + $0x38] sm:$0xf]
      %v3735 = vld [vmem:[%s3724 + $0x3c] sm:$0xff]
      %v3736 = vld [vmem:[%s3724 + $0x44] sm:$0xf]
      %v3737 = vld [vmem:[%s3724 + $0x48] sm:$0xff]
      %v3738 = vld [vmem:[%s3724 + $0x50] sm:$0xf]
      %v3739 = vld [vmem:[%s3724 + $0x54] sm:$0xff]
      %v3740 = vld [vmem:[%s3724 + $0x5c] sm:$0xf]
      %v3741 = vld [vmem:[%s3724 + $0x60] sm:$0xff]
      %v3742 = vld [vmem:[%s3724 + $0x68] sm:$0xf]
      %v3743 = vld [vmem:[%s3724 + $0x6c] sm:$0xff]
      %v3744 = vld [vmem:[%s3724 + $0x74] sm:$0xf]
      %v3745 = vld [vmem:[%s3724 + $0x78] sm:$0xff]
      %v3746 = vld [vmem:[%s3724 + $0x80] sm:$0xf]
      %v3747 = vld [vmem:[%s3724 + $0x84] sm:$0xff]
      %v3748 = vld [vmem:[%s3724 + $0x8c] sm:$0xf]
      %v3749 = vld [vmem:[%s3724 + $0x90] sm:$0xff]
      %v3750 = vld [vmem:[%s3724 + $0x98] sm:$0xf]
      %v3751 = vld [vmem:[%s3724 + $0x9c] sm:$0xff]
      %v3752 = vld [vmem:[%s3724 + $0xa4] sm:$0xf]
      %v3753 = vld [vmem:[%s3724 + $0xa8] sm:$0xff]
      %v3754 = vld [vmem:[%s3724 + $0xb0] sm:$0xf]
      %v3785 = vunpack.c.l.b16 %v3725
      %v3786 = vunpack.c.h.b16 %v3725
      %v3787 = vunpack.c.l.b16 %v3726
      %v3788 = vunpack.c.l.b16 %v3727
      %v3789 = vunpack.c.h.b16 %v3727
      %v3790 = vunpack.c.l.b16 %v3728
      %v3791 = vunpack.c.l.b16 %v3729
      %v3792 = vunpack.c.h.b16 %v3729
      %v3793 = vunpack.c.l.b16 %v3730
      %v3794 = vunpack.c.l.b16 %v3731
      %v3795 = vunpack.c.h.b16 %v3731
      %v3796 = vunpack.c.l.b16 %v3732
      %v3797 = vunpack.c.l.b16 %v3733
      %v3798 = vunpack.c.h.b16 %v3733
      %v3799 = vunpack.c.l.b16 %v3734
      %v3800 = vunpack.c.l.b16 %v3735
      %v3801 = vunpack.c.h.b16 %v3735
      %v3802 = vunpack.c.l.b16 %v3736
      %v3803 = vunpack.c.l.b16 %v3737
      %v3804 = vunpack.c.h.b16 %v3737
      %v3805 = vunpack.c.l.b16 %v3738
      %v3806 = vunpack.c.l.b16 %v3739
      %v3807 = vunpack.c.h.b16 %v3739
      %v3808 = vunpack.c.l.b16 %v3740
      %v3809 = vunpack.c.l.b16 %v3741
      %v3810 = vunpack.c.h.b16 %v3741
      %v3811 = vunpack.c.l.b16 %v3742
      %v3812 = vunpack.c.l.b16 %v3743
      %v3813 = vunpack.c.h.b16 %v3743
      %v3814 = vunpack.c.l.b16 %v3744
      %v3815 = vunpack.c.l.b16 %v3745
      %v3816 = vunpack.c.h.b16 %v3745
      %v3817 = vunpack.c.l.b16 %v3746
      %v3818 = vunpack.c.l.b16 %v3747
      %v3819 = vunpack.c.h.b16 %v3747
      %v3820 = vunpack.c.l.b16 %v3748
      %v3821 = vunpack.c.l.b16 %v3749
      %v3822 = vunpack.c.h.b16 %v3749
      %v3823 = vunpack.c.l.b16 %v3750
      %v3824 = vunpack.c.l.b16 %v3751
      %v3825 = vunpack.c.h.b16 %v3751
      %v3826 = vunpack.c.l.b16 %v3752
      %v3827 = vunpack.c.l.b16 %v3753
      %v3828 = vunpack.c.h.b16 %v3753
      %v3829 = vunpack.c.l.b16 %v3754
      %v3830 = vpack.c.b16 %v3788, %v3785
      %v3831 = vpack.c.b16 %v3789, %v3786
      %v3832 = vpack.c.b16 %v3790, %v3787
      %v3833 = vpack.c.b16 %v3794, %v3791
      %v3834 = vpack.c.b16 %v3795, %v3792
      %v3835 = vpack.c.b16 %v3796, %v3793
      %v3836 = vpack.c.b16 %v3800, %v3797
      %v3837 = vpack.c.b16 %v3801, %v3798
      %v3838 = vpack.c.b16 %v3802, %v3799
      %v3839 = vpack.c.b16 %v3806, %v3803
      %v3840 = vpack.c.b16 %v3807, %v3804
      %v3841 = vpack.c.b16 %v3808, %v3805
      %v3842 = vpack.c.b16 %v3812, %v3809
      %v3843 = vpack.c.b16 %v3813, %v3810
      %v3844 = vpack.c.b16 %v3814, %v3811
      %v3845 = vpack.c.b16 %v3818, %v3815
      %v3846 = vpack.c.b16 %v3819, %v3816
      %v3847 = vpack.c.b16 %v3820, %v3817
      %v3848 = vpack.c.b16 %v3824, %v3821
      %v3849 = vpack.c.b16 %v3825, %v3822
      %v3850 = vpack.c.b16 %v3826, %v3823
      %v3851 = vpack.c.b16 %v3827, %v3827
      %v3852 = vpack.c.b16 %v3828, %v3828
      %v3853 = vpack.c.b16 %v3829, %v3829
      %v3876 = vsel %vm2605, %v2406, 0
      %v3879 = vsel %vm2605, %v2407, 0
      %v3882 = vsel %vm2605, %v2408, 0
      %v3885 = vsel %vm2605, %v2409, 0
      %v3888 = vsel %vm2605, %v2410, 0
      %v3891 = vsel %vm2605, %v2411, 0
      %v3894 = vsel %vm2605, %v2412, 0
      %v3897 = vsel %vm2605, %v2413, 0
      %v3900 = vsel %vm2605, %v2414, 0
      %v3903 = vsel %vm2633, %v3851, 0
      %v3906 = vsel %vm2633, %v3852, 0
      %v3909 = vsel %vm2633, %v3853, 0
      %3911 = vmatprep.subr.bf16.mxu0 %v3831
      %3912 = vmatpush1.bf16.msra.mxu0 %v3830
      %3913 = vmatprep.subr.bf16.mxu0 %v3834
      %3914 = vmatpush1.bf16.msra.mxu0 %v3833
      %3915 = vmatprep.subr.bf16.mxu0 %v3837
      %3916 = vmatpush1.bf16.msra.mxu0 %v3836
      %3917 = vmatprep.subr.bf16.mxu0 %v3840
      %3918 = vmatpush1.bf16.msra.mxu0 %v3839
      %3919 = vmatprep.subr.bf16.mxu0 %v3843
      %3920 = vmatpush1.bf16.msra.mxu0 %v3842
      %3921 = vmatprep.subr.bf16.mxu0 %v3846
      %3922 = vmatpush1.bf16.msra.mxu0 %v3845
      %3923 = vmatprep.subr.bf16.mxu0 %v3849
      %3924 = vmatpush1.bf16.msra.mxu0 %v3848
      %3925 = vmatprep.subr.bf16.mxu0 %v3906
      %3926 = vmatpush1.bf16.msra.mxu0 %v3903
      %3927 = vmatprep.subr.bf16.mxu0 0
      %3928 = vmatpush1.bf16.msra.mxu0 0
      %3929 = vmatprep.subr.bf16.mxu0 0
      %3930 = vmatpush1.bf16.msra.mxu0 0
      %3931 = vmatprep.subr.bf16.mxu0 0
      %3932 = vmatpush1.bf16.msra.mxu0 0
      %3933 = vmatprep.subr.bf16.mxu0 0
      %3934 = vmatpush1.bf16.msra.mxu0 0
      %3935 = vmatprep.subr.bf16.mxu0 0
      %3936 = vmatpush1.bf16.msra.mxu0 0
      %3937 = vmatprep.subr.bf16.mxu0 0
      %3938 = vmatpush1.bf16.msra.mxu0 0
      %3939 = vmatprep.subr.bf16.mxu0 0
      %3940 = vmatpush1.bf16.msra.mxu0 0
      %3941 = vmatprep.subr.bf16.mxu0 0
      %3942 = vmatpush1.bf16.msra.mxu0 0
      %3943 = vmatprep.mubr.bf16.mxu0 0
      %3944 = vmatmul.mubr.bf16.gmra.mrb[0].mxu0 %v3876
      %v3945 = vpop.f32.mrb[0].mxu0
      %v3946 = vadd.f32 0.0, %v3945
      %v3947 = vpop.f32.mrb[0].mxu0
      %v3948 = vadd.f32 0.0, %v3947
      %v3949 = vpop.f32.mrb[0].mxu0
      %v3950 = vadd.f32 0.0, %v3949
      %v3951 = vpop.f32.mrb[0].mxu0
      %v3952 = vadd.f32 0.0, %v3951
      %3953 = vmatprep.mubr.bf16.mxu0 0
      %3954 = vmatmul.mubr.bf16.gmra.mrb[0].mxu0 %v3879
      %v3955 = vpop.f32.mrb[0].mxu0
      %v3956 = vadd.f32 0.0, %v3955
      %v3957 = vpop.f32.mrb[0].mxu0
      %v3958 = vadd.f32 0.0, %v3957
      %v3959 = vpop.f32.mrb[0].mxu0
      %v3960 = vadd.f32 0.0, %v3959
      %v3961 = vpop.f32.mrb[0].mxu0
      %v3962 = vadd.f32 0.0, %v3961
      %3963 = vmatprep.mubr.bf16.mxu0 0
      %3964 = vmatmul.mubr.bf16.gmra.mrb[0].mxu0 %v3882
      %v3965 = vpop.f32.mrb[0].mxu0
      %v3966 = vadd.f32 0.0, %v3965
      %v3967 = vpop.f32.mrb[0].mxu0
      %v3968 = vadd.f32 0.0, %v3967
      %v3969 = vpop.f32.mrb[0].mxu0
      %v3970 = vadd.f32 0.0, %v3969
      %v3971 = vpop.f32.mrb[0].mxu0
      %v3972 = vadd.f32 0.0, %v3971
      %3973 = vmatprep.mubr.bf16.mxu0 0
      %3974 = vmatmul.mubr.bf16.gmra.mrb[0].mxu0 %v3885
      %v3975 = vpop.f32.mrb[0].mxu0
      %v3976 = vadd.f32 0.0, %v3975
      %v3977 = vpop.f32.mrb[0].mxu0
      %v3978 = vadd.f32 0.0, %v3977
      %v3979 = vpop.f32.mrb[0].mxu0
      %v3980 = vadd.f32 0.0, %v3979
      %v3981 = vpop.f32.mrb[0].mxu0
      %v3982 = vadd.f32 0.0, %v3981
      %3983 = vmatprep.mubr.bf16.mxu0 0
      %3984 = vmatmul.mubr.bf16.gmra.mrb[0].mxu0 %v3888
      %v3985 = vpop.f32.mrb[0].mxu0
      %v3986 = vadd.f32 0.0, %v3985
      %v3987 = vpop.f32.mrb[0].mxu0
      %v3988 = vadd.f32 0.0, %v3987
      %v3989 = vpop.f32.mrb[0].mxu0
      %v3990 = vadd.f32 0.0, %v3989
      %v3991 = vpop.f32.mrb[0].mxu0
      %v3992 = vadd.f32 0.0, %v3991
      %3993 = vmatprep.mubr.bf16.mxu0 0
      %3994 = vmatmul.mubr.bf16.gmra.mrb[0].mxu0 %v3891
      %v3995 = vpop.f32.mrb[0].mxu0
      %v3996 = vadd.f32 0.0, %v3995
      %v3997 = vpop.f32.mrb[0].mxu0
      %v3998 = vadd.f32 0.0, %v3997
      %v3999 = vpop.f32.mrb[0].mxu0
      %v4000 = vadd.f32 0.0, %v3999
      %v4001 = vpop.f32.mrb[0].mxu0
      %v4002 = vadd.f32 0.0, %v4001
      %4003 = vmatprep.mubr.bf16.mxu0 0
      %4004 = vmatmul.mubr.bf16.gmra.mrb[0].mxu0 %v3894
      %v4005 = vpop.f32.mrb[0].mxu0
      %v4006 = vadd.f32 0.0, %v4005
      %v4007 = vpop.f32.mrb[0].mxu0
      %v4008 = vadd.f32 0.0, %v4007
      %v4009 = vpop.f32.mrb[0].mxu0
      %v4010 = vadd.f32 0.0, %v4009
      %v4011 = vpop.f32.mrb[0].mxu0
      %v4012 = vadd.f32 0.0, %v4011
      %4013 = vmatprep.mubr.bf16.mxu0 0
      %4014 = vmatmul.mubr.bf16.gmra.mrb[0].mxu0 %v3897
      %v4015 = vpop.f32.mrb[0].mxu0
      %v4016 = vadd.f32 0.0, %v4015
      %v4017 = vpop.f32.mrb[0].mxu0
      %v4018 = vadd.f32 0.0, %v4017
      %v4019 = vpop.f32.mrb[0].mxu0
      %v4020 = vadd.f32 0.0, %v4019
      %v4021 = vpop.f32.mrb[0].mxu0
      %v4022 = vadd.f32 0.0, %v4021
      %4023 = vmatprep.mubr.bf16.mxu0 0
      %4024 = vmatmul.mubr.bf16.gmra.mrb[0].mxu0 %v3900
      %v4025 = vpop.f32.mrb[0].mxu0
      %v4026 = vadd.f32 0.0, %v4025
      %v4027 = vpop.f32.mrb[0].mxu0
      %v4028 = vadd.f32 0.0, %v4027
      %v4029 = vpop.f32.mrb[0].mxu0
      %v4030 = vadd.f32 0.0, %v4029
      %v4031 = vpop.f32.mrb[0].mxu0
      %v4032 = vadd.f32 0.0, %v4031
      %4033 = vdwg.mxu0
      %4034 = vmatprep.subr.bf16.mxu0 0
      %4035 = vmatpush1.bf16.msra.mxu0 %v3832
      %4036 = vmatprep.subr.bf16.mxu0 0
      %4037 = vmatpush1.bf16.msra.mxu0 %v3835
      %4038 = vmatprep.subr.bf16.mxu0 0
      %4039 = vmatpush1.bf16.msra.mxu0 %v3838
      %4040 = vmatprep.subr.bf16.mxu0 0
      %4041 = vmatpush1.bf16.msra.mxu0 %v3841
      %4042 = vmatprep.subr.bf16.mxu0 0
      %4043 = vmatpush1.bf16.msra.mxu0 %v3844
      %4044 = vmatprep.subr.bf16.mxu0 0
      %4045 = vmatpush1.bf16.msra.mxu0 %v3847
      %4046 = vmatprep.subr.bf16.mxu0 0
      %4047 = vmatpush1.bf16.msra.mxu0 %v3850
      %4048 = vmatprep.subr.bf16.mxu0 0
      %4049 = vmatpush1.bf16.msra.mxu0 %v3909
      %4050 = vmatprep.subr.bf16.mxu0 0
      %4051 = vmatpush1.bf16.msra.mxu0 0
      %4052 = vmatprep.subr.bf16.mxu0 0
      %4053 = vmatpush1.bf16.msra.mxu0 0
      %4054 = vmatprep.subr.bf16.mxu0 0
      %4055 = vmatpush1.bf16.msra.mxu0 0
      %4056 = vmatprep.subr.bf16.mxu0 0
      %4057 = vmatpush1.bf16.msra.mxu0 0
      %4058 = vmatprep.subr.bf16.mxu0 0
      %4059 = vmatpush1.bf16.msra.mxu0 0
      %4060 = vmatprep.subr.bf16.mxu0 0
      %4061 = vmatpush1.bf16.msra.mxu0 0
      %4062 = vmatprep.subr.bf16.mxu0 0
      %4063 = vmatpush1.bf16.msra.mxu0 0
      %4064 = vmatprep.subr.bf16.mxu0 0
      %4065 = vmatpush1.bf16.msra.mxu0 0
      %4066 = vmatprep.mubr.bf16.mxu0 0
      %4067 = vmatmul.mubr.bf16.gmra.mrb[0].mxu0 %v3876
      %v4068 = vpop.f32.mrb[0].mxu0
      %v4069 = vadd.f32 0.0, %v4068
      %v4070 = vpop.f32.mrb[0].mxu0
      %v4071 = vpop.f32.mrb[0].mxu0
      %v4072 = vadd.f32 0.0, %v4071
      %v4073 = vpop.f32.mrb[0].mxu0
      %4074 = vmatprep.mubr.bf16.mxu0 0
      %4075 = vmatmul.mubr.bf16.gmra.mrb[0].mxu0 %v3879
      %v4076 = vpop.f32.mrb[0].mxu0
      %v4077 = vadd.f32 0.0, %v4076
      %v4078 = vpop.f32.mrb[0].mxu0
      %v4079 = vpop.f32.mrb[0].mxu0
      %v4080 = vadd.f32 0.0, %v4079
      %v4081 = vpop.f32.mrb[0].mxu0
      %4082 = vmatprep.mubr.bf16.mxu0 0
      %4083 = vmatmul.mubr.bf16.gmra.mrb[0].mxu0 %v3882
      %v4084 = vpop.f32.mrb[0].mxu0
      %v4085 = vadd.f32 0.0, %v4084
      %v4086 = vpop.f32.mrb[0].mxu0
      %v4087 = vpop.f32.mrb[0].mxu0
      %v4088 = vadd.f32 0.0, %v4087
      %v4089 = vpop.f32.mrb[0].mxu0
      %4090 = vmatprep.mubr.bf16.mxu0 0
      %4091 = vmatmul.mubr.bf16.gmra.mrb[0].mxu0 %v3885
      %v4092 = vpop.f32.mrb[0].mxu0
      %v4093 = vadd.f32 0.0, %v4092
      %v4094 = vpop.f32.mrb[0].mxu0
      %v4095 = vpop.f32.mrb[0].mxu0
      %v4096 = vadd.f32 0.0, %v4095
      %v4097 = vpop.f32.mrb[0].mxu0
      %4098 = vmatprep.mubr.bf16.mxu0 0
      %4099 = vmatmul.mubr.bf16.gmra.mrb[0].mxu0 %v3888
      %v4100 = vpop.f32.mrb[0].mxu0
      %v4101 = vadd.f32 0.0, %v4100
      %v4102 = vpop.f32.mrb[0].mxu0
      %v4103 = vpop.f32.mrb[0].mxu0
      %v4104 = vadd.f32 0.0, %v4103
      %v4105 = vpop.f32.mrb[0].mxu0
      %4106 = vmatprep.mubr.bf16.mxu0 0
      %4107 = vmatmul.mubr.bf16.gmra.mrb[0].mxu0 %v3891
      %v4108 = vpop.f32.mrb[0].mxu0
      %v4109 = vadd.f32 0.0, %v4108
      %v4110 = vpop.f32.mrb[0].mxu0
      %v4111 = vpop.f32.mrb[0].mxu0
      %v4112 = vadd.f32 0.0, %v4111
      %v4113 = vpop.f32.mrb[0].mxu0
      %4114 = vmatprep.mubr.bf16.mxu0 0
      %4115 = vmatmul.mubr.bf16.gmra.mrb[0].mxu0 %v3894
      %v4116 = vpop.f32.mrb[0].mxu0
      %v4117 = vadd.f32 0.0, %v4116
      %v4118 = vpop.f32.mrb[0].mxu0
      %v4119 = vpop.f32.mrb[0].mxu0
      %v4120 = vadd.f32 0.0, %v4119
      %v4121 = vpop.f32.mrb[0].mxu0
      %4122 = vmatprep.mubr.bf16.mxu0 0
      %4123 = vmatmul.mubr.bf16.gmra.mrb[0].mxu0 %v3897
      %v4124 = vpop.f32.mrb[0].mxu0
      %v4125 = vadd.f32 0.0, %v4124
      %v4126 = vpop.f32.mrb[0].mxu0
      %v4127 = vpop.f32.mrb[0].mxu0
      %v4128 = vadd.f32 0.0, %v4127
      %v4129 = vpop.f32.mrb[0].mxu0
      %4130 = vmatprep.mubr.bf16.mxu0 0
      %4131 = vmatmul.mubr.bf16.gmra.mrb[0].mxu0 %v3900
      %v4132 = vpop.f32.mrb[0].mxu0
      %v4133 = vadd.f32 0.0, %v4132
      %v4134 = vpop.f32.mrb[0].mxu0
      %v4135 = vpop.f32.mrb[0].mxu0
      %v4136 = vadd.f32 0.0, %v4135
      %v4137 = vpop.f32.mrb[0].mxu0
      %4138 = vdwg.mxu0
      %v4139 = vadd.f32 %v3670, %v3946
      %v4140 = vadd.f32 %v3671, %v3948
      %v4141 = vadd.f32 %v3672, %v4069
      %v4142 = vadd.f32 %v3673, %v3950
      %v4143 = vadd.f32 %v3674, %v3952
      %v4144 = vadd.f32 %v3675, %v4072
      %v4145 = vadd.f32 %v3676, %v3956
      %v4146 = vadd.f32 %v3677, %v3958
      %v4147 = vadd.f32 %v3678, %v4077
      %v4148 = vadd.f32 %v3679, %v3960
      %v4149 = vadd.f32 %v3680, %v3962
      %v4150 = vadd.f32 %v3681, %v4080
      %v4151 = vadd.f32 %v3682, %v3966
      %v4152 = vadd.f32 %v3683, %v3968
      %v4153 = vadd.f32 %v3684, %v4085
      %v4154 = vadd.f32 %v3685, %v3970
      %v4155 = vadd.f32 %v3686, %v3972
      %v4156 = vadd.f32 %v3687, %v4088
      %v4157 = vadd.f32 %v3688, %v3976
      %v4158 = vadd.f32 %v3689, %v3978
      %v4159 = vadd.f32 %v3690, %v4093
      %v4160 = vadd.f32 %v3691, %v3980
      %v4161 = vadd.f32 %v3692, %v3982
      %v4162 = vadd.f32 %v3693, %v4096
      %v4163 = vadd.f32 %v3694, %v3986
      %v4164 = vadd.f32 %v3695, %v3988
      %v4165 = vadd.f32 %v3696, %v4101
      %v4166 = vadd.f32 %v3697, %v3990
      %v4167 = vadd.f32 %v3698, %v3992
      %v4168 = vadd.f32 %v3699, %v4104
      %v4169 = vadd.f32 %v3700, %v3996
      %v4170 = vadd.f32 %v3701, %v3998
      %v4171 = vadd.f32 %v3702, %v4109
      %v4172 = vadd.f32 %v3703, %v4000
      %v4173 = vadd.f32 %v3704, %v4002
      %v4174 = vadd.f32 %v3705, %v4112
      %v4175 = vadd.f32 %v3706, %v4006
      %v4176 = vadd.f32 %v3707, %v4008
      %v4177 = vadd.f32 %v3708, %v4117
      %v4178 = vadd.f32 %v3709, %v4010
      %v4179 = vadd.f32 %v3710, %v4012
      %v4180 = vadd.f32 %v3711, %v4120
      %v4181 = vadd.f32 %v3712, %v4016
      %v4182 = vadd.f32 %v3713, %v4018
      %v4183 = vadd.f32 %v3714, %v4125
      %v4184 = vadd.f32 %v3715, %v4020
      %v4185 = vadd.f32 %v3716, %v4022
      %v4186 = vadd.f32 %v3717, %v4128
      %v4187 = vadd.f32 %v3718, %v4026
      %v4188 = vadd.f32 %v3719, %v4028
      %v4189 = vadd.f32 %v3720, %v4133
      %v4190 = vadd.f32 %v3721, %v4030
      %v4191 = vadd.f32 %v3722, %v4032
      %v4192 = vadd.f32 %v3723, %v4136
      %s4193 = scalar_lea.vmem %s2, 720
      %v4194 = vld [vmem:[%s4193] sm:$0xff]
      %v4195 = vld [vmem:[%s4193 + $0x8] sm:$0xf]
      %v4196 = vld [vmem:[%s4193 + $0xc] sm:$0xff]
      %v4197 = vld [vmem:[%s4193 + $0x14] sm:$0xf]
      %v4198 = vld [vmem:[%s4193 + $0x18] sm:$0xff]
      %v4199 = vld [vmem:[%s4193 + $0x20] sm:$0xf]
      %v4200 = vld [vmem:[%s4193 + $0x24] sm:$0xff]
      %v4201 = vld [vmem:[%s4193 + $0x2c] sm:$0xf]
      %v4202 = vld [vmem:[%s4193 + $0x30] sm:$0xff]
      %v4203 = vld [vmem:[%s4193 + $0x38] sm:$0xf]
      %v4204 = vld [vmem:[%s4193 + $0x3c] sm:$0xff]
      %v4205 = vld [vmem:[%s4193 + $0x44] sm:$0xf]
      %v4206 = vld [vmem:[%s4193 + $0x48] sm:$0xff]
      %v4207 = vld [vmem:[%s4193 + $0x50] sm:$0xf]
      %v4208 = vld [vmem:[%s4193 + $0x54] sm:$0xff]
      %v4209 = vld [vmem:[%s4193 + $0x5c] sm:$0xf]
      %v4210 = vld [vmem:[%s4193 + $0x60] sm:$0xff]
      %v4211 = vld [vmem:[%s4193 + $0x68] sm:$0xf]
      %v4212 = vld [vmem:[%s4193 + $0x6c] sm:$0xff]
      %v4213 = vld [vmem:[%s4193 + $0x74] sm:$0xf]
      %v4214 = vld [vmem:[%s4193 + $0x78] sm:$0xff]
      %v4215 = vld [vmem:[%s4193 + $0x80] sm:$0xf]
      %v4216 = vld [vmem:[%s4193 + $0x84] sm:$0xff]
      %v4217 = vld [vmem:[%s4193 + $0x8c] sm:$0xf]
      %v4218 = vld [vmem:[%s4193 + $0x90] sm:$0xff]
      %v4219 = vld [vmem:[%s4193 + $0x98] sm:$0xf]
      %v4220 = vld [vmem:[%s4193 + $0x9c] sm:$0xff]
      %v4221 = vld [vmem:[%s4193 + $0xa4] sm:$0xf]
      %v4222 = vld [vmem:[%s4193 + $0xa8] sm:$0xff]
      %v4223 = vld [vmem:[%s4193 + $0xb0] sm:$0xf]
      %v4254 = vunpack.c.l.b16 %v4194
      %v4255 = vunpack.c.h.b16 %v4194
      %v4256 = vunpack.c.l.b16 %v4195
      %v4257 = vunpack.c.l.b16 %v4196
      %v4258 = vunpack.c.h.b16 %v4196
      %v4259 = vunpack.c.l.b16 %v4197
      %v4260 = vunpack.c.l.b16 %v4198
      %v4261 = vunpack.c.h.b16 %v4198
      %v4262 = vunpack.c.l.b16 %v4199
      %v4263 = vunpack.c.l.b16 %v4200
      %v4264 = vunpack.c.h.b16 %v4200
      %v4265 = vunpack.c.l.b16 %v4201
      %v4266 = vunpack.c.l.b16 %v4202
      %v4267 = vunpack.c.h.b16 %v4202
      %v4268 = vunpack.c.l.b16 %v4203
      %v4269 = vunpack.c.l.b16 %v4204
      %v4270 = vunpack.c.h.b16 %v4204
      %v4271 = vunpack.c.l.b16 %v4205
      %v4272 = vunpack.c.l.b16 %v4206
      %v4273 = vunpack.c.h.b16 %v4206
      %v4274 = vunpack.c.l.b16 %v4207
      %v4275 = vunpack.c.l.b16 %v4208
      %v4276 = vunpack.c.h.b16 %v4208
      %v4277 = vunpack.c.l.b16 %v4209
      %v4278 = vunpack.c.l.b16 %v4210
      %v4279 = vunpack.c.h.b16 %v4210
      %v4280 = vunpack.c.l.b16 %v4211
      %v4281 = vunpack.c.l.b16 %v4212
      %v4282 = vunpack.c.h.b16 %v4212
      %v4283 = vunpack.c.l.b16 %v4213
      %v4284 = vunpack.c.l.b16 %v4214
      %v4285 = vunpack.c.h.b16 %v4214
      %v4286 = vunpack.c.l.b16 %v4215
      %v4287 = vunpack.c.l.b16 %v4216
      %v4288 = vunpack.c.h.b16 %v4216
      %v4289 = vunpack.c.l.b16 %v4217
      %v4290 = vunpack.c.l.b16 %v4218
      %v4291 = vunpack.c.h.b16 %v4218
      %v4292 = vunpack.c.l.b16 %v4219
      %v4293 = vunpack.c.l.b16 %v4220
      %v4294 = vunpack.c.h.b16 %v4220
      %v4295 = vunpack.c.l.b16 %v4221
      %v4296 = vunpack.c.l.b16 %v4222
      %v4297 = vunpack.c.h.b16 %v4222
      %v4298 = vunpack.c.l.b16 %v4223
      %v4299 = vpack.c.b16 %v4257, %v4254
      %v4300 = vpack.c.b16 %v4258, %v4255
      %v4301 = vpack.c.b16 %v4259, %v4256
      %v4302 = vpack.c.b16 %v4263, %v4260
      %v4303 = vpack.c.b16 %v4264, %v4261
      %v4304 = vpack.c.b16 %v4265, %v4262
      %v4305 = vpack.c.b16 %v4269, %v4266
      %v4306 = vpack.c.b16 %v4270, %v4267
      %v4307 = vpack.c.b16 %v4271, %v4268
      %v4308 = vpack.c.b16 %v4275, %v4272
      %v4309 = vpack.c.b16 %v4276, %v4273
      %v4310 = vpack.c.b16 %v4277, %v4274
      %v4311 = vpack.c.b16 %v4281, %v4278
      %v4312 = vpack.c.b16 %v4282, %v4279
      %v4313 = vpack.c.b16 %v4283, %v4280
      %v4314 = vpack.c.b16 %v4287, %v4284
      %v4315 = vpack.c.b16 %v4288, %v4285
      %v4316 = vpack.c.b16 %v4289, %v4286
      %v4317 = vpack.c.b16 %v4293, %v4290
      %v4318 = vpack.c.b16 %v4294, %v4291
      %v4319 = vpack.c.b16 %v4295, %v4292
      %v4320 = vpack.c.b16 %v4296, %v4296
      %v4321 = vpack.c.b16 %v4297, %v4297
      %v4322 = vpack.c.b16 %v4298, %v4298
      %v4345 = vsel %vm2605, %v2415, 0
      %v4348 = vsel %vm2605, %v2416, 0
      %v4351 = vsel %vm2605, %v2417, 0
      %v4354 = vsel %vm2605, %v2418, 0
      %v4357 = vsel %vm2605, %v2419, 0
      %v4360 = vsel %vm2605, %v2420, 0
      %v4363 = vsel %vm2605, %v2421, 0
      %v4366 = vsel %vm2605, %v2422, 0
      %v4369 = vsel %vm2605, %v2423, 0
      %v4372 = vsel %vm2633, %v4320, 0
      %v4375 = vsel %vm2633, %v4321, 0
      %v4378 = vsel %vm2633, %v4322, 0
      %4380 = vmatprep.subr.bf16.mxu0 %v4300
      %4381 = vmatpush1.bf16.msra.mxu0 %v4299
      %4382 = vmatprep.subr.bf16.mxu0 %v4303
      %4383 = vmatpush1.bf16.msra.mxu0 %v4302
      %4384 = vmatprep.subr.bf16.mxu0 %v4306
      %4385 = vmatpush1.bf16.msra.mxu0 %v4305
      %4386 = vmatprep.subr.bf16.mxu0 %v4309
      %4387 = vmatpush1.bf16.msra.mxu0 %v4308
      %4388 = vmatprep.subr.bf16.mxu0 %v4312
      %4389 = vmatpush1.bf16.msra.mxu0 %v4311
      %4390 = vmatprep.subr.bf16.mxu0 %v4315
      %4391 = vmatpush1.bf16.msra.mxu0 %v4314
      %4392 = vmatprep.subr.bf16.mxu0 %v4318
      %4393 = vmatpush1.bf16.msra.mxu0 %v4317
      %4394 = vmatprep.subr.bf16.mxu0 %v4375
      %4395 = vmatpush1.bf16.msra.mxu0 %v4372
      %4396 = vmatprep.subr.bf16.mxu0 0
      %4397 = vmatpush1.bf16.msra.mxu0 0
      %4398 = vmatprep.subr.bf16.mxu0 0
      %4399 = vmatpush1.bf16.msra.mxu0 0
      %4400 = vmatprep.subr.bf16.mxu0 0
      %4401 = vmatpush1.bf16.msra.mxu0 0
      %4402 = vmatprep.subr.bf16.mxu0 0
      %4403 = vmatpush1.bf16.msra.mxu0 0
      %4404 = vmatprep.subr.bf16.mxu0 0
      %4405 = vmatpush1.bf16.msra.mxu0 0
      %4406 = vmatprep.subr.bf16.mxu0 0
      %4407 = vmatpush1.bf16.msra.mxu0 0
      %4408 = vmatprep.subr.bf16.mxu0 0
      %4409 = vmatpush1.bf16.msra.mxu0 0
      %4410 = vmatprep.subr.bf16.mxu0 0
      %4411 = vmatpush1.bf16.msra.mxu0 0
      %4412 = vmatprep.mubr.bf16.mxu0 0
      %4413 = vmatmul.mubr.bf16.gmra.mrb[0].mxu0 %v4345
      %v4414 = vpop.f32.mrb[0].mxu0
      %v4415 = vadd.f32 0.0, %v4414
      %v4416 = vpop.f32.mrb[0].mxu0
      %v4417 = vadd.f32 0.0, %v4416
      %v4418 = vpop.f32.mrb[0].mxu0
      %v4419 = vadd.f32 0.0, %v4418
      %v4420 = vpop.f32.mrb[0].mxu0
      %v4421 = vadd.f32 0.0, %v4420
      %4422 = vmatprep.mubr.bf16.mxu0 0
      %4423 = vmatmul.mubr.bf16.gmra.mrb[0].mxu0 %v4348
      %v4424 = vpop.f32.mrb[0].mxu0
      %v4425 = vadd.f32 0.0, %v4424
      %v4426 = vpop.f32.mrb[0].mxu0
      %v4427 = vadd.f32 0.0, %v4426
      %v4428 = vpop.f32.mrb[0].mxu0
      %v4429 = vadd.f32 0.0, %v4428
      %v4430 = vpop.f32.mrb[0].mxu0
      %v4431 = vadd.f32 0.0, %v4430
      %4432 = vmatprep.mubr.bf16.mxu0 0
      %4433 = vmatmul.mubr.bf16.gmra.mrb[0].mxu0 %v4351
      %v4434 = vpop.f32.mrb[0].mxu0
      %v4435 = vadd.f32 0.0, %v4434
      %v4436 = vpop.f32.mrb[0].mxu0
      %v4437 = vadd.f32 0.0, %v4436
      %v4438 = vpop.f32.mrb[0].mxu0
      %v4439 = vadd.f32 0.0, %v4438
      %v4440 = vpop.f32.mrb[0].mxu0
      %v4441 = vadd.f32 0.0, %v4440
      %4442 = vmatprep.mubr.bf16.mxu0 0
      %4443 = vmatmul.mubr.bf16.gmra.mrb[0].mxu0 %v4354
      %v4444 = vpop.f32.mrb[0].mxu0
      %v4445 = vadd.f32 0.0, %v4444
      %v4446 = vpop.f32.mrb[0].mxu0
      %v4447 = vadd.f32 0.0, %v4446
      %v4448 = vpop.f32.mrb[0].mxu0
      %v4449 = vadd.f32 0.0, %v4448
      %v4450 = vpop.f32.mrb[0].mxu0
      %v4451 = vadd.f32 0.0, %v4450
      %4452 = vmatprep.mubr.bf16.mxu0 0
      %4453 = vmatmul.mubr.bf16.gmra.mrb[0].mxu0 %v4357
      %v4454 = vpop.f32.mrb[0].mxu0
      %v4455 = vadd.f32 0.0, %v4454
      %v4456 = vpop.f32.mrb[0].mxu0
      %v4457 = vadd.f32 0.0, %v4456
      %v4458 = vpop.f32.mrb[0].mxu0
      %v4459 = vadd.f32 0.0, %v4458
      %v4460 = vpop.f32.mrb[0].mxu0
      %v4461 = vadd.f32 0.0, %v4460
      %4462 = vmatprep.mubr.bf16.mxu0 0
      %4463 = vmatmul.mubr.bf16.gmra.mrb[0].mxu0 %v4360
      %v4464 = vpop.f32.mrb[0].mxu0
      %v4465 = vadd.f32 0.0, %v4464
      %v4466 = vpop.f32.mrb[0].mxu0
      %v4467 = vadd.f32 0.0, %v4466
      %v4468 = vpop.f32.mrb[0].mxu0
      %v4469 = vadd.f32 0.0, %v4468
      %v4470 = vpop.f32.mrb[0].mxu0
      %v4471 = vadd.f32 0.0, %v4470
      %4472 = vmatprep.mubr.bf16.mxu0 0
      %4473 = vmatmul.mubr.bf16.gmra.mrb[0].mxu0 %v4363
      %v4474 = vpop.f32.mrb[0].mxu0
      %v4475 = vadd.f32 0.0, %v4474
      %v4476 = vpop.f32.mrb[0].mxu0
      %v4477 = vadd.f32 0.0, %v4476
      %v4478 = vpop.f32.mrb[0].mxu0
      %v4479 = vadd.f32 0.0, %v4478
      %v4480 = vpop.f32.mrb[0].mxu0
      %v4481 = vadd.f32 0.0, %v4480
      %4482 = vmatprep.mubr.bf16.mxu0 0
      %4483 = vmatmul.mubr.bf16.gmra.mrb[0].mxu0 %v4366
      %v4484 = vpop.f32.mrb[0].mxu0
      %v4485 = vadd.f32 0.0, %v4484
      %v4486 = vpop.f32.mrb[0].mxu0
      %v4487 = vadd.f32 0.0, %v4486
      %v4488 = vpop.f32.mrb[0].mxu0
      %v4489 = vadd.f32 0.0, %v4488
      %v4490 = vpop.f32.mrb[0].mxu0
      %v4491 = vadd.f32 0.0, %v4490
      %4492 = vmatprep.mubr.bf16.mxu0 0
      %4493 = vmatmul.mubr.bf16.gmra.mrb[0].mxu0 %v4369
      %v4494 = vpop.f32.mrb[0].mxu0
      %v4495 = vadd.f32 0.0, %v4494
      %v4496 = vpop.f32.mrb[0].mxu0
      %v4497 = vadd.f32 0.0, %v4496
      %v4498 = vpop.f32.mrb[0].mxu0
      %v4499 = vadd.f32 0.0, %v4498
      %v4500 = vpop.f32.mrb[0].mxu0
      %v4501 = vadd.f32 0.0, %v4500
      %4502 = vdwg.mxu0
      %4503 = vmatprep.subr.bf16.mxu0 0
      %4504 = vmatpush1.bf16.msra.mxu0 %v4301
      %4505 = vmatprep.subr.bf16.mxu0 0
      %4506 = vmatpush1.bf16.msra.mxu0 %v4304
      %4507 = vmatprep.subr.bf16.mxu0 0
      %4508 = vmatpush1.bf16.msra.mxu0 %v4307
      %4509 = vmatprep.subr.bf16.mxu0 0
      %4510 = vmatpush1.bf16.msra.mxu0 %v4310
      %4511 = vmatprep.subr.bf16.mxu0 0
      %4512 = vmatpush1.bf16.msra.mxu0 %v4313
      %4513 = vmatprep.subr.bf16.mxu0 0
      %4514 = vmatpush1.bf16.msra.mxu0 %v4316
      %4515 = vmatprep.subr.bf16.mxu0 0
      %4516 = vmatpush1.bf16.msra.mxu0 %v4319
      %4517 = vmatprep.subr.bf16.mxu0 0
      %4518 = vmatpush1.bf16.msra.mxu0 %v4378
      %4519 = vmatprep.subr.bf16.mxu0 0
      %4520 = vmatpush1.bf16.msra.mxu0 0
      %4521 = vmatprep.subr.bf16.mxu0 0
      %4522 = vmatpush1.bf16.msra.mxu0 0
      %4523 = vmatprep.subr.bf16.mxu0 0
      %4524 = vmatpush1.bf16.msra.mxu0 0
      %4525 = vmatprep.subr.bf16.mxu0 0
      %4526 = vmatpush1.bf16.msra.mxu0 0
      %4527 = vmatprep.subr.bf16.mxu0 0
      %4528 = vmatpush1.bf16.msra.mxu0 0
      %4529 = vmatprep.subr.bf16.mxu0 0
      %4530 = vmatpush1.bf16.msra.mxu0 0
      %4531 = vmatprep.subr.bf16.mxu0 0
      %4532 = vmatpush1.bf16.msra.mxu0 0
      %4533 = vmatprep.subr.bf16.mxu0 0
      %4534 = vmatpush1.bf16.msra.mxu0 0
      %4535 = vmatprep.mubr.bf16.mxu0 0
      %4536 = vmatmul.mubr.bf16.gmra.mrb[0].mxu0 %v4345
      %v4537 = vpop.f32.mrb[0].mxu0
      %v4538 = vadd.f32 0.0, %v4537
      %v4539 = vpop.f32.mrb[0].mxu0
      %v4540 = vpop.f32.mrb[0].mxu0
      %v4541 = vadd.f32 0.0, %v4540
      %v4542 = vpop.f32.mrb[0].mxu0
      %4543 = vmatprep.mubr.bf16.mxu0 0
      %4544 = vmatmul.mubr.bf16.gmra.mrb[0].mxu0 %v4348
      %v4545 = vpop.f32.mrb[0].mxu0
      %v4546 = vadd.f32 0.0, %v4545
      %v4547 = vpop.f32.mrb[0].mxu0
      %v4548 = vpop.f32.mrb[0].mxu0
      %v4549 = vadd.f32 0.0, %v4548
      %v4550 = vpop.f32.mrb[0].mxu0
      %4551 = vmatprep.mubr.bf16.mxu0 0
      %4552 = vmatmul.mubr.bf16.gmra.mrb[0].mxu0 %v4351
      %v4553 = vpop.f32.mrb[0].mxu0
      %v4554 = vadd.f32 0.0, %v4553
      %v4555 = vpop.f32.mrb[0].mxu0
      %v4556 = vpop.f32.mrb[0].mxu0
      %v4557 = vadd.f32 0.0, %v4556
      %v4558 = vpop.f32.mrb[0].mxu0
      %4559 = vmatprep.mubr.bf16.mxu0 0
      %4560 = vmatmul.mubr.bf16.gmra.mrb[0].mxu0 %v4354
      %v4561 = vpop.f32.mrb[0].mxu0
      %v4562 = vadd.f32 0.0, %v4561
      %v4563 = vpop.f32.mrb[0].mxu0
      %v4564 = vpop.f32.mrb[0].mxu0
      %v4565 = vadd.f32 0.0, %v4564
      %v4566 = vpop.f32.mrb[0].mxu0
      %4567 = vmatprep.mubr.bf16.mxu0 0
      %4568 = vmatmul.mubr.bf16.gmra.mrb[0].mxu0 %v4357
      %v4569 = vpop.f32.mrb[0].mxu0
      %v4570 = vadd.f32 0.0, %v4569
      %v4571 = vpop.f32.mrb[0].mxu0
      %v4572 = vpop.f32.mrb[0].mxu0
      %v4573 = vadd.f32 0.0, %v4572
      %v4574 = vpop.f32.mrb[0].mxu0
      %4575 = vmatprep.mubr.bf16.mxu0 0
      %4576 = vmatmul.mubr.bf16.gmra.mrb[0].mxu0 %v4360
      %v4577 = vpop.f32.mrb[0].mxu0
      %v4578 = vadd.f32 0.0, %v4577
      %v4579 = vpop.f32.mrb[0].mxu0
      %v4580 = vpop.f32.mrb[0].mxu0
      %v4581 = vadd.f32 0.0, %v4580
      %v4582 = vpop.f32.mrb[0].mxu0
      %4583 = vmatprep.mubr.bf16.mxu0 0
      %4584 = vmatmul.mubr.bf16.gmra.mrb[0].mxu0 %v4363
      %v4585 = vpop.f32.mrb[0].mxu0
      %v4586 = vadd.f32 0.0, %v4585
      %v4587 = vpop.f32.mrb[0].mxu0
      %v4588 = vpop.f32.mrb[0].mxu0
      %v4589 = vadd.f32 0.0, %v4588
      %v4590 = vpop.f32.mrb[0].mxu0
      %4591 = vmatprep.mubr.bf16.mxu0 0
      %4592 = vmatmul.mubr.bf16.gmra.mrb[0].mxu0 %v4366
      %v4593 = vpop.f32.mrb[0].mxu0
      %v4594 = vadd.f32 0.0, %v4593
      %v4595 = vpop.f32.mrb[0].mxu0
      %v4596 = vpop.f32.mrb[0].mxu0
      %v4597 = vadd.f32 0.0, %v4596
      %v4598 = vpop.f32.mrb[0].mxu0
      %4599 = vmatprep.mubr.bf16.mxu0 0
      %4600 = vmatmul.mubr.bf16.gmra.mrb[0].mxu0 %v4369
      %v4601 = vpop.f32.mrb[0].mxu0
      %v4602 = vadd.f32 0.0, %v4601
      %v4603 = vpop.f32.mrb[0].mxu0
      %v4604 = vpop.f32.mrb[0].mxu0
      %v4605 = vadd.f32 0.0, %v4604
      %v4606 = vpop.f32.mrb[0].mxu0
      %4607 = vdwg.mxu0
      %v4608 = vadd.f32 %v4139, %v4415
      %v4609 = vadd.f32 %v4140, %v4417
      %v4610 = vadd.f32 %v4141, %v4538
      %v4611 = vadd.f32 %v4142, %v4419
      %v4612 = vadd.f32 %v4143, %v4421
      %v4613 = vadd.f32 %v4144, %v4541
      %v4614 = vadd.f32 %v4145, %v4425
      %v4615 = vadd.f32 %v4146, %v4427
      %v4616 = vadd.f32 %v4147, %v4546
      %v4617 = vadd.f32 %v4148, %v4429
      %v4618 = vadd.f32 %v4149, %v4431
      %v4619 = vadd.f32 %v4150, %v4549
      %v4620 = vadd.f32 %v4151, %v4435
      %v4621 = vadd.f32 %v4152, %v4437
      %v4622 = vadd.f32 %v4153, %v4554
      %v4623 = vadd.f32 %v4154, %v4439
      %v4624 = vadd.f32 %v4155, %v4441
      %v4625 = vadd.f32 %v4156, %v4557
      %v4626 = vadd.f32 %v4157, %v4445
      %v4627 = vadd.f32 %v4158, %v4447
      %v4628 = vadd.f32 %v4159, %v4562
      %v4629 = vadd.f32 %v4160, %v4449
      %v4630 = vadd.f32 %v4161, %v4451
      %v4631 = vadd.f32 %v4162, %v4565
      %v4632 = vadd.f32 %v4163, %v4455
      %v4633 = vadd.f32 %v4164, %v4457
      %v4634 = vadd.f32 %v4165, %v4570
      %v4635 = vadd.f32 %v4166, %v4459
      %v4636 = vadd.f32 %v4167, %v4461
      %v4637 = vadd.f32 %v4168, %v4573
      %v4638 = vadd.f32 %v4169, %v4465
      %v4639 = vadd.f32 %v4170, %v4467
      %v4640 = vadd.f32 %v4171, %v4578
      %v4641 = vadd.f32 %v4172, %v4469
      %v4642 = vadd.f32 %v4173, %v4471
      %v4643 = vadd.f32 %v4174, %v4581
      %v4644 = vadd.f32 %v4175, %v4475
      %v4645 = vadd.f32 %v4176, %v4477
      %v4646 = vadd.f32 %v4177, %v4586
      %v4647 = vadd.f32 %v4178, %v4479
      %v4648 = vadd.f32 %v4179, %v4481
      %v4649 = vadd.f32 %v4180, %v4589
      %v4650 = vadd.f32 %v4181, %v4485
      %v4651 = vadd.f32 %v4182, %v4487
      %v4652 = vadd.f32 %v4183, %v4594
      %v4653 = vadd.f32 %v4184, %v4489
      %v4654 = vadd.f32 %v4185, %v4491
      %v4655 = vadd.f32 %v4186, %v4597
      %v4656 = vadd.f32 %v4187, %v4495
      %v4657 = vadd.f32 %v4188, %v4497
      %v4658 = vadd.f32 %v4189, %v4602
      %v4659 = vadd.f32 %v4190, %v4499
      %v4660 = vadd.f32 %v4191, %v4501
      %v4661 = vadd.f32 %v4192, %v4605
      %v4662 = vld [vmem:[%s3] sm:$0x7]
      %v4664 = vlaneseq
      %v4665 = vshrl.u32 %v4664, 7
      %v4666 = vsub.s32 0, %v4665
      %v4667 = vrot.slane %v4662, %v4666
      %v4668 = vlaneseq
      %v4669 = vshrl.u32 %v4668, 7
      %v4670 = vsub.s32 1, %v4669
      %v4671 = vrot.slane %v4662, %v4670
      %v4672 = vlaneseq
      %v4673 = vshrl.u32 %v4672, 7
      %v4674 = vsub.s32 2, %v4673
      %v4675 = vrot.slane %v4662, %v4674
      %v4679 = vadd.f32 %v4608, %v4667
      %v4680 = vadd.f32 %v4609, %v4671
      %v4681 = vadd.f32 %v4610, %v4675
      %v4682 = vadd.f32 %v4611, %v4667
      %v4683 = vadd.f32 %v4612, %v4671
      %v4684 = vadd.f32 %v4613, %v4675
      %v4685 = vadd.f32 %v4614, %v4667
      %v4686 = vadd.f32 %v4615, %v4671
      %v4687 = vadd.f32 %v4616, %v4675
      %v4688 = vadd.f32 %v4617, %v4667
      %v4689 = vadd.f32 %v4618, %v4671
      %v4690 = vadd.f32 %v4619, %v4675
      %v4691 = vadd.f32 %v4620, %v4667
      %v4692 = vadd.f32 %v4621, %v4671
      %v4693 = vadd.f32 %v4622, %v4675
      %v4694 = vadd.f32 %v4623, %v4667
      %v4695 = vadd.f32 %v4624, %v4671
      %v4696 = vadd.f32 %v4625, %v4675
      %v4697 = vadd.f32 %v4626, %v4667
      %v4698 = vadd.f32 %v4627, %v4671
      %v4699 = vadd.f32 %v4628, %v4675
      %v4700 = vadd.f32 %v4629, %v4667
      %v4701 = vadd.f32 %v4630, %v4671
      %v4702 = vadd.f32 %v4631, %v4675
      %v4703 = vadd.f32 %v4632, %v4667
      %v4704 = vadd.f32 %v4633, %v4671
      %v4705 = vadd.f32 %v4634, %v4675
      %v4706 = vadd.f32 %v4635, %v4667
      %v4707 = vadd.f32 %v4636, %v4671
      %v4708 = vadd.f32 %v4637, %v4675
      %v4709 = vadd.f32 %v4638, %v4667
      %v4710 = vadd.f32 %v4639, %v4671
      %v4711 = vadd.f32 %v4640, %v4675
      %v4712 = vadd.f32 %v4641, %v4667
      %v4713 = vadd.f32 %v4642, %v4671
      %v4714 = vadd.f32 %v4643, %v4675
      %v4715 = vadd.f32 %v4644, %v4667
      %v4716 = vadd.f32 %v4645, %v4671
      %v4717 = vadd.f32 %v4646, %v4675
      %v4718 = vadd.f32 %v4647, %v4667
      %v4719 = vadd.f32 %v4648, %v4671
      %v4720 = vadd.f32 %v4649, %v4675
      %v4721 = vadd.f32 %v4650, %v4667
      %v4722 = vadd.f32 %v4651, %v4671
      %v4723 = vadd.f32 %v4652, %v4675
      %v4724 = vadd.f32 %v4653, %v4667
      %v4725 = vadd.f32 %v4654, %v4671
      %v4726 = vadd.f32 %v4655, %v4675
      %v4727 = vadd.f32 %v4656, %v4667
      %v4728 = vadd.f32 %v4657, %v4671
      %v4729 = vadd.f32 %v4658, %v4675
      %v4730 = vadd.f32 %v4659, %v4667
      %v4731 = vadd.f32 %v4660, %v4671
      %v4732 = vadd.f32 %v4661, %v4675
      %v4733 = vmax.f32 %v4679, 0.0
      %v4734 = vmax.f32 %v4680, 0.0
      %v4735 = vmax.f32 %v4681, 0.0
      %v4736 = vmax.f32 %v4682, 0.0
      %v4737 = vmax.f32 %v4683, 0.0
      %v4738 = vmax.f32 %v4684, 0.0
      %v4739 = vmax.f32 %v4685, 0.0
      %v4740 = vmax.f32 %v4686, 0.0
      %v4741 = vmax.f32 %v4687, 0.0
      %v4742 = vmax.f32 %v4688, 0.0
      %v4743 = vmax.f32 %v4689, 0.0
      %v4744 = vmax.f32 %v4690, 0.0
      %v4745 = vmax.f32 %v4691, 0.0
      %v4746 = vmax.f32 %v4692, 0.0
      %v4747 = vmax.f32 %v4693, 0.0
      %v4748 = vmax.f32 %v4694, 0.0
      %v4749 = vmax.f32 %v4695, 0.0
      %v4750 = vmax.f32 %v4696, 0.0
      %v4751 = vmax.f32 %v4697, 0.0
      %v4752 = vmax.f32 %v4698, 0.0
      %v4753 = vmax.f32 %v4699, 0.0
      %v4754 = vmax.f32 %v4700, 0.0
      %v4755 = vmax.f32 %v4701, 0.0
      %v4756 = vmax.f32 %v4702, 0.0
      %v4757 = vmax.f32 %v4703, 0.0
      %v4758 = vmax.f32 %v4704, 0.0
      %v4759 = vmax.f32 %v4705, 0.0
      %v4760 = vmax.f32 %v4706, 0.0
      %v4761 = vmax.f32 %v4707, 0.0
      %v4762 = vmax.f32 %v4708, 0.0
      %v4763 = vmax.f32 %v4709, 0.0
      %v4764 = vmax.f32 %v4710, 0.0
      %v4765 = vmax.f32 %v4711, 0.0
      %v4766 = vmax.f32 %v4712, 0.0
      %v4767 = vmax.f32 %v4713, 0.0
      %v4768 = vmax.f32 %v4714, 0.0
      %v4769 = vmax.f32 %v4715, 0.0
      %v4770 = vmax.f32 %v4716, 0.0
      %v4771 = vmax.f32 %v4717, 0.0
      %v4772 = vmax.f32 %v4718, 0.0
      %v4773 = vmax.f32 %v4719, 0.0
      %v4774 = vmax.f32 %v4720, 0.0
      %v4775 = vmax.f32 %v4721, 0.0
      %v4776 = vmax.f32 %v4722, 0.0
      %v4777 = vmax.f32 %v4723, 0.0
      %v4778 = vmax.f32 %v4724, 0.0
      %v4779 = vmax.f32 %v4725, 0.0
      %v4780 = vmax.f32 %v4726, 0.0
      %v4781 = vmax.f32 %v4727, 0.0
      %v4782 = vmax.f32 %v4728, 0.0
      %v4783 = vmax.f32 %v4729, 0.0
      %v4784 = vmax.f32 %v4730, 0.0
      %v4785 = vmax.f32 %v4731, 0.0
      %v4786 = vmax.f32 %v4732, 0.0
      %v4787 = vpack.c.bf16 %v4736, %v4733
      %v4788 = vpack.c.bf16 %v4737, %v4734
      %v4789 = vpack.c.bf16 %v4738, %v4735
      %v4790 = vpack.c.bf16 %v4742, %v4739
      %v4791 = vpack.c.bf16 %v4743, %v4740
      %v4792 = vpack.c.bf16 %v4744, %v4741
      %v4793 = vpack.c.bf16 %v4748, %v4745
      %v4794 = vpack.c.bf16 %v4749, %v4746
      %v4795 = vpack.c.bf16 %v4750, %v4747
      %v4796 = vpack.c.bf16 %v4754, %v4751
      %v4797 = vpack.c.bf16 %v4755, %v4752
      %v4798 = vpack.c.bf16 %v4756, %v4753
      %v4799 = vpack.c.bf16 %v4760, %v4757
      %v4800 = vpack.c.bf16 %v4761, %v4758
      %v4801 = vpack.c.bf16 %v4762, %v4759
      %v4802 = vpack.c.bf16 %v4766, %v4763
      %v4803 = vpack.c.bf16 %v4767, %v4764
      %v4804 = vpack.c.bf16 %v4768, %v4765
      %v4805 = vpack.c.bf16 %v4772, %v4769
      %v4806 = vpack.c.bf16 %v4773, %v4770
      %v4807 = vpack.c.bf16 %v4774, %v4771
      %v4808 = vpack.c.bf16 %v4778, %v4775
      %v4809 = vpack.c.bf16 %v4779, %v4776
      %v4810 = vpack.c.bf16 %v4780, %v4777
      %v4811 = vpack.c.bf16 %v4784, %v4781
      %v4812 = vpack.c.bf16 %v4785, %v4782
      %v4813 = vpack.c.bf16 %v4786, %v4783
      %v4814 = vld [vmem:[%s4] sm:$0xff]
      %v4815 = vld [vmem:[%s4 + $0x8] sm:$0xff]
      %v4816 = vld [vmem:[%s4 + $0x10] sm:$0xff]
      %v4817 = vld [vmem:[%s4 + $0x18] sm:$0xff]
      %v4818 = vld [vmem:[%s4 + $0x20] sm:$0xff]
      %v4819 = vld [vmem:[%s4 + $0x28] sm:$0xff]
      %v4820 = vld [vmem:[%s4 + $0x30] sm:$0xff]
      %v4821 = vld [vmem:[%s4 + $0x38] sm:$0xff]
      %v4822 = vld [vmem:[%s4 + $0x40] sm:$0xff]
      %v4823 = vld [vmem:[%s4 + $0x48] sm:$0xff]
      %v4824 = vld [vmem:[%s4 + $0x50] sm:$0xff]
      %v4825 = vld [vmem:[%s4 + $0x58] sm:$0xff]
      %v4826 = vld [vmem:[%s4 + $0x60] sm:$0xff]
      %v4827 = vld [vmem:[%s4 + $0x68] sm:$0xff]
      %v4828 = vld [vmem:[%s4 + $0x70] sm:$0xff]
      %v4829 = vld [vmem:[%s4 + $0x78] sm:$0xff]
      %v4830 = vld [vmem:[%s4 + $0x80] sm:$0xff]
      %v4831 = vld [vmem:[%s4 + $0x88] sm:$0xff]
      %v4832 = vld [vmem:[%s4 + $0x90] sm:$0xff]
      %v4833 = vld [vmem:[%s4 + $0x98] sm:$0xff]
      %v4834 = vld [vmem:[%s4 + $0xa0] sm:$0xff]
      %v4835 = vld [vmem:[%s4 + $0xa8] sm:$0xff]
      %v4836 = vld [vmem:[%s4 + $0xb0] sm:$0xff]
      %v4837 = vld [vmem:[%s4 + $0xb8] sm:$0xff]
      %v4838 = vld [vmem:[%s4 + $0xc0] sm:$0xff]
      %v4839 = vld [vmem:[%s4 + $0xc8] sm:$0xff]
      %v4840 = vld [vmem:[%s4 + $0xd0] sm:$0xff]
      %v4841 = vld [vmem:[%s4 + $0xd8] sm:$0xff]
      %v4842 = vld [vmem:[%s4 + $0xe0] sm:$0xff]
      %v4843 = vld [vmem:[%s4 + $0xe8] sm:$0xff]
      %v4844 = vld [vmem:[%s4 + $0xf0] sm:$0xff]
      %v4845 = vld [vmem:[%s4 + $0xf8] sm:$0xff]
      %v4846 = vld [vmem:[%s4 + $0x100] sm:$0xff]
      %v4847 = vld [vmem:[%s4 + $0x108] sm:$0xff]
      %v4848 = vld [vmem:[%s4 + $0x110] sm:$0xff]
      %v4884 = vunpack.c.l.b16 %v4814
      %v4885 = vunpack.c.h.b16 %v4814
      %v4886 = vunpack.c.l.b16 %v4815
      %v4887 = vunpack.c.h.b16 %v4815
      %v4888 = vunpack.c.l.b16 %v4816
      %v4889 = vunpack.c.h.b16 %v4816
      %v4890 = vunpack.c.l.b16 %v4817
      %v4891 = vunpack.c.h.b16 %v4817
      %v4892 = vunpack.c.l.b16 %v4818
      %v4893 = vunpack.c.h.b16 %v4818
      %v4894 = vunpack.c.l.b16 %v4819
      %v4895 = vunpack.c.h.b16 %v4819
      %v4896 = vunpack.c.l.b16 %v4820
      %v4897 = vunpack.c.h.b16 %v4820
      %v4898 = vunpack.c.l.b16 %v4821
      %v4899 = vunpack.c.h.b16 %v4821
      %v4900 = vunpack.c.l.b16 %v4822
      %v4901 = vunpack.c.h.b16 %v4822
      %v4902 = vunpack.c.l.b16 %v4823
      %v4903 = vunpack.c.h.b16 %v4823
      %v4904 = vunpack.c.l.b16 %v4824
      %v4905 = vunpack.c.h.b16 %v4824
      %v4906 = vunpack.c.l.b16 %v4825
      %v4907 = vunpack.c.h.b16 %v4825
      %v4908 = vunpack.c.l.b16 %v4826
      %v4909 = vunpack.c.h.b16 %v4826
      %v4910 = vunpack.c.l.b16 %v4827
      %v4911 = vunpack.c.h.b16 %v4827
      %v4912 = vunpack.c.l.b16 %v4828
      %v4913 = vunpack.c.h.b16 %v4828
      %v4914 = vunpack.c.l.b16 %v4829
      %v4915 = vunpack.c.h.b16 %v4829
      %v4916 = vunpack.c.l.b16 %v4830
      %v4917 = vunpack.c.h.b16 %v4830
      %v4918 = vunpack.c.l.b16 %v4831
      %v4919 = vunpack.c.h.b16 %v4831
      %v4920 = vunpack.c.l.b16 %v4832
      %v4921 = vunpack.c.h.b16 %v4832
      %v4922 = vunpack.c.l.b16 %v4833
      %v4923 = vunpack.c.h.b16 %v4833
      %v4924 = vunpack.c.l.b16 %v4834
      %v4925 = vunpack.c.h.b16 %v4834
      %v4926 = vunpack.c.l.b16 %v4835
      %v4927 = vunpack.c.h.b16 %v4835
      %v4928 = vunpack.c.l.b16 %v4836
      %v4929 = vunpack.c.h.b16 %v4836
      %v4930 = vunpack.c.l.b16 %v4837
      %v4931 = vunpack.c.h.b16 %v4837
      %v4932 = vunpack.c.l.b16 %v4838
      %v4933 = vunpack.c.h.b16 %v4838
      %v4934 = vunpack.c.l.b16 %v4839
      %v4935 = vunpack.c.h.b16 %v4839
      %v4936 = vunpack.c.l.b16 %v4840
      %v4937 = vunpack.c.h.b16 %v4840
      %v4938 = vunpack.c.l.b16 %v4841
      %v4939 = vunpack.c.h.b16 %v4841
      %v4940 = vunpack.c.l.b16 %v4842
      %v4941 = vunpack.c.h.b16 %v4842
      %v4942 = vunpack.c.l.b16 %v4843
      %v4943 = vunpack.c.h.b16 %v4843
      %v4944 = vunpack.c.l.b16 %v4844
      %v4945 = vunpack.c.h.b16 %v4844
      %v4946 = vunpack.c.l.b16 %v4845
      %v4947 = vunpack.c.h.b16 %v4845
      %v4948 = vunpack.c.l.b16 %v4846
      %v4949 = vunpack.c.h.b16 %v4846
      %v4950 = vunpack.c.l.b16 %v4847
      %v4951 = vunpack.c.h.b16 %v4847
      %v4952 = vunpack.c.l.b16 %v4848
      %v4953 = vunpack.c.h.b16 %v4848
      %v4954 = vpack.c.b16 %v4886, %v4884
      %v4955 = vpack.c.b16 %v4887, %v4885
      %v4956 = vpack.c.b16 %v4890, %v4888
      %v4957 = vpack.c.b16 %v4891, %v4889
      %v4958 = vpack.c.b16 %v4894, %v4892
      %v4959 = vpack.c.b16 %v4895, %v4893
      %v4960 = vpack.c.b16 %v4898, %v4896
      %v4961 = vpack.c.b16 %v4899, %v4897
      %v4962 = vpack.c.b16 %v4902, %v4900
      %v4963 = vpack.c.b16 %v4903, %v4901
      %v4964 = vpack.c.b16 %v4906, %v4904
      %v4965 = vpack.c.b16 %v4907, %v4905
      %v4966 = vpack.c.b16 %v4910, %v4908
      %v4967 = vpack.c.b16 %v4911, %v4909
      %v4968 = vpack.c.b16 %v4914, %v4912
      %v4969 = vpack.c.b16 %v4915, %v4913
      %v4970 = vpack.c.b16 %v4918, %v4916
      %v4971 = vpack.c.b16 %v4919, %v4917
      %v4972 = vpack.c.b16 %v4922, %v4920
      %v4973 = vpack.c.b16 %v4923, %v4921
      %v4974 = vpack.c.b16 %v4926, %v4924
      %v4975 = vpack.c.b16 %v4927, %v4925
      %v4976 = vpack.c.b16 %v4930, %v4928
      %v4977 = vpack.c.b16 %v4931, %v4929
      %v4978 = vpack.c.b16 %v4934, %v4932
      %v4979 = vpack.c.b16 %v4935, %v4933
      %v4980 = vpack.c.b16 %v4938, %v4936
      %v4981 = vpack.c.b16 %v4939, %v4937
      %v4982 = vpack.c.b16 %v4942, %v4940
      %v4983 = vpack.c.b16 %v4943, %v4941
      %v4984 = vpack.c.b16 %v4946, %v4944
      %v4985 = vpack.c.b16 %v4947, %v4945
      %v4986 = vpack.c.b16 %v4950, %v4948
      %v4987 = vpack.c.b16 %v4951, %v4949
      %v4988 = vpack.c.b16 %v4952, %v4952
      %v4989 = vpack.c.b16 %v4953, %v4953
      %vm5008 = vcmask 130048
      %v5010 = vsel %vm5008, %v4955, 0
      %v5013 = vsel %vm5008, %v4957, 0
      %v5016 = vsel %vm5008, %v4959, 0
      %v5019 = vsel %vm5008, %v4961, 0
      %v5022 = vsel %vm5008, %v4963, 0
      %v5025 = vsel %vm5008, %v4965, 0
      %v5028 = vsel %vm5008, %v4967, 0
      %v5031 = vsel %vm5008, %v4969, 0
      %v5034 = vsel %vm5008, %v4971, 0
      %v5037 = vsel %vm5008, %v4973, 0
      %v5040 = vsel %vm5008, %v4975, 0
      %v5043 = vsel %vm5008, %v4977, 0
      %v5046 = vsel %vm5008, %v4979, 0
      %v5049 = vsel %vm5008, %v4981, 0
      %v5052 = vsel %vm5008, %v4983, 0
      %v5055 = vsel %vm5008, %v4985, 0
      %v5058 = vsel %vm5008, %v4987, 0
      %v5061 = vsel %vm5008, %v4989, 0
      %5063 = vmatprep.subr.bf16.mxu0 %v4788
      %5064 = vmatpush1.bf16.msra.mxu0 %v4787
      %5065 = vmatprep.subr.bf16.mxu0 %v4791
      %5066 = vmatpush1.bf16.msra.mxu0 %v4790
      %5067 = vmatprep.subr.bf16.mxu0 %v4794
      %5068 = vmatpush1.bf16.msra.mxu0 %v4793
      %5069 = vmatprep.subr.bf16.mxu0 %v4797
      %5070 = vmatpush1.bf16.msra.mxu0 %v4796
      %5071 = vmatprep.subr.bf16.mxu0 %v4800
      %5072 = vmatpush1.bf16.msra.mxu0 %v4799
      %5073 = vmatprep.subr.bf16.mxu0 %v4803
      %5074 = vmatpush1.bf16.msra.mxu0 %v4802
      %5075 = vmatprep.subr.bf16.mxu0 %v4806
      %5076 = vmatpush1.bf16.msra.mxu0 %v4805
      %5077 = vmatprep.subr.bf16.mxu0 %v4809
      %5078 = vmatpush1.bf16.msra.mxu0 %v4808
      %5079 = vmatprep.subr.bf16.mxu0 %v4812
      %5080 = vmatpush1.bf16.msra.mxu0 %v4811
      %5081 = vmatprep.subr.bf16.mxu0 0
      %5082 = vmatpush1.bf16.msra.mxu0 0
      %5083 = vmatprep.subr.bf16.mxu0 0
      %5084 = vmatpush1.bf16.msra.mxu0 0
      %5085 = vmatprep.subr.bf16.mxu0 0
      %5086 = vmatpush1.bf16.msra.mxu0 0
      %5087 = vmatprep.subr.bf16.mxu0 0
      %5088 = vmatpush1.bf16.msra.mxu0 0
      %5089 = vmatprep.subr.bf16.mxu0 0
      %5090 = vmatpush1.bf16.msra.mxu0 0
      %5091 = vmatprep.subr.bf16.mxu0 0
      %5092 = vmatpush1.bf16.msra.mxu0 0
      %5093 = vmatprep.subr.bf16.mxu0 0
      %5094 = vmatpush1.bf16.msra.mxu0 0
      %5095 = vmatprep.mubr.bf16.mxu0 %v5010
      %5096 = vmatmul.mubr.bf16.gmra.mrb[0].mxu0 %v4954
      %v5097 = vpop.f32.mrb[0].mxu0
      %v5098 = vadd.f32 0.0, %v5097
      %v5099 = vpop.f32.mrb[0].mxu0
      %v5100 = vadd.f32 0.0, %v5099
      %v5101 = vpop.f32.mrb[0].mxu0
      %v5102 = vadd.f32 0.0, %v5101
      %v5103 = vpop.f32.mrb[0].mxu0
      %v5104 = vadd.f32 0.0, %v5103
      %5105 = vmatprep.mubr.bf16.mxu0 %v5013
      %5106 = vmatmul.mubr.bf16.gmra.mrb[0].mxu0 %v4956
      %v5107 = vpop.f32.mrb[0].mxu0
      %v5108 = vadd.f32 0.0, %v5107
      %v5109 = vpop.f32.mrb[0].mxu0
      %v5110 = vadd.f32 0.0, %v5109
      %v5111 = vpop.f32.mrb[0].mxu0
      %v5112 = vadd.f32 0.0, %v5111
      %v5113 = vpop.f32.mrb[0].mxu0
      %v5114 = vadd.f32 0.0, %v5113
      %5115 = vmatprep.mubr.bf16.mxu0 %v5016
      %5116 = vmatmul.mubr.bf16.gmra.mrb[0].mxu0 %v4958
      %v5117 = vpop.f32.mrb[0].mxu0
      %v5118 = vadd.f32 0.0, %v5117
      %v5119 = vpop.f32.mrb[0].mxu0
      %v5120 = vadd.f32 0.0, %v5119
      %v5121 = vpop.f32.mrb[0].mxu0
      %v5122 = vadd.f32 0.0, %v5121
      %v5123 = vpop.f32.mrb[0].mxu0
      %v5124 = vadd.f32 0.0, %v5123
      %5125 = vmatprep.mubr.bf16.mxu0 %v5019
      %5126 = vmatmul.mubr.bf16.gmra.mrb[0].mxu0 %v4960
      %v5127 = vpop.f32.mrb[0].mxu0
      %v5128 = vadd.f32 0.0, %v5127
      %v5129 = vpop.f32.mrb[0].mxu0
      %v5130 = vadd.f32 0.0, %v5129
      %v5131 = vpop.f32.mrb[0].mxu0
      %v5132 = vadd.f32 0.0, %v5131
      %v5133 = vpop.f32.mrb[0].mxu0
      %v5134 = vadd.f32 0.0, %v5133
      %5135 = vmatprep.mubr.bf16.mxu0 %v5022
      %5136 = vmatmul.mubr.bf16.gmra.mrb[0].mxu0 %v4962
      %v5137 = vpop.f32.mrb[0].mxu0
      %v5138 = vadd.f32 0.0, %v5137
      %v5139 = vpop.f32.mrb[0].mxu0
      %v5140 = vadd.f32 0.0, %v5139
      %v5141 = vpop.f32.mrb[0].mxu0
      %v5142 = vadd.f32 0.0, %v5141
      %v5143 = vpop.f32.mrb[0].mxu0
      %v5144 = vadd.f32 0.0, %v5143
      %5145 = vmatprep.mubr.bf16.mxu0 %v5025
      %5146 = vmatmul.mubr.bf16.gmra.mrb[0].mxu0 %v4964
      %v5147 = vpop.f32.mrb[0].mxu0
      %v5148 = vadd.f32 0.0, %v5147
      %v5149 = vpop.f32.mrb[0].mxu0
      %v5150 = vadd.f32 0.0, %v5149
      %v5151 = vpop.f32.mrb[0].mxu0
      %v5152 = vadd.f32 0.0, %v5151
      %v5153 = vpop.f32.mrb[0].mxu0
      %v5154 = vadd.f32 0.0, %v5153
      %5155 = vmatprep.mubr.bf16.mxu0 %v5028
      %5156 = vmatmul.mubr.bf16.gmra.mrb[0].mxu0 %v4966
      %v5157 = vpop.f32.mrb[0].mxu0
      %v5158 = vadd.f32 0.0, %v5157
      %v5159 = vpop.f32.mrb[0].mxu0
      %v5160 = vadd.f32 0.0, %v5159
      %v5161 = vpop.f32.mrb[0].mxu0
      %v5162 = vadd.f32 0.0, %v5161
      %v5163 = vpop.f32.mrb[0].mxu0
      %v5164 = vadd.f32 0.0, %v5163
      %5165 = vmatprep.mubr.bf16.mxu0 %v5031
      %5166 = vmatmul.mubr.bf16.gmra.mrb[0].mxu0 %v4968
      %v5167 = vpop.f32.mrb[0].mxu0
      %v5168 = vadd.f32 0.0, %v5167
      %v5169 = vpop.f32.mrb[0].mxu0
      %v5170 = vadd.f32 0.0, %v5169
      %v5171 = vpop.f32.mrb[0].mxu0
      %v5172 = vadd.f32 0.0, %v5171
      %v5173 = vpop.f32.mrb[0].mxu0
      %v5174 = vadd.f32 0.0, %v5173
      %5175 = vmatprep.mubr.bf16.mxu0 %v5034
      %5176 = vmatmul.mubr.bf16.gmra.mrb[0].mxu0 %v4970
      %v5177 = vpop.f32.mrb[0].mxu0
      %v5178 = vadd.f32 0.0, %v5177
      %v5179 = vpop.f32.mrb[0].mxu0
      %v5180 = vadd.f32 0.0, %v5179
      %v5181 = vpop.f32.mrb[0].mxu0
      %v5182 = vadd.f32 0.0, %v5181
      %v5183 = vpop.f32.mrb[0].mxu0
      %v5184 = vadd.f32 0.0, %v5183
      %5185 = vmatprep.mubr.bf16.mxu0 %v5037
      %5186 = vmatmul.mubr.bf16.gmra.mrb[0].mxu0 %v4972
      %v5187 = vpop.f32.mrb[0].mxu0
      %v5188 = vadd.f32 0.0, %v5187
      %v5189 = vpop.f32.mrb[0].mxu0
      %v5190 = vadd.f32 0.0, %v5189
      %v5191 = vpop.f32.mrb[0].mxu0
      %v5192 = vadd.f32 0.0, %v5191
      %v5193 = vpop.f32.mrb[0].mxu0
      %v5194 = vadd.f32 0.0, %v5193
      %5195 = vmatprep.mubr.bf16.mxu0 %v5040
      %5196 = vmatmul.mubr.bf16.gmra.mrb[0].mxu0 %v4974
      %v5197 = vpop.f32.mrb[0].mxu0
      %v5198 = vadd.f32 0.0, %v5197
      %v5199 = vpop.f32.mrb[0].mxu0
      %v5200 = vadd.f32 0.0, %v5199
      %v5201 = vpop.f32.mrb[0].mxu0
      %v5202 = vadd.f32 0.0, %v5201
      %v5203 = vpop.f32.mrb[0].mxu0
      %v5204 = vadd.f32 0.0, %v5203
      %5205 = vmatprep.mubr.bf16.mxu0 %v5043
      %5206 = vmatmul.mubr.bf16.gmra.mrb[0].mxu0 %v4976
      %v5207 = vpop.f32.mrb[0].mxu0
      %v5208 = vadd.f32 0.0, %v5207
      %v5209 = vpop.f32.mrb[0].mxu0
      %v5210 = vadd.f32 0.0, %v5209
      %v5211 = vpop.f32.mrb[0].mxu0
      %v5212 = vadd.f32 0.0, %v5211
      %v5213 = vpop.f32.mrb[0].mxu0
      %v5214 = vadd.f32 0.0, %v5213
      %5215 = vmatprep.mubr.bf16.mxu0 %v5046
      %5216 = vmatmul.mubr.bf16.gmra.mrb[0].mxu0 %v4978
      %v5217 = vpop.f32.mrb[0].mxu0
      %v5218 = vadd.f32 0.0, %v5217
      %v5219 = vpop.f32.mrb[0].mxu0
      %v5220 = vadd.f32 0.0, %v5219
      %v5221 = vpop.f32.mrb[0].mxu0
      %v5222 = vadd.f32 0.0, %v5221
      %v5223 = vpop.f32.mrb[0].mxu0
      %v5224 = vadd.f32 0.0, %v5223
      %5225 = vmatprep.mubr.bf16.mxu0 %v5049
      %5226 = vmatmul.mubr.bf16.gmra.mrb[0].mxu0 %v4980
      %v5227 = vpop.f32.mrb[0].mxu0
      %v5228 = vadd.f32 0.0, %v5227
      %v5229 = vpop.f32.mrb[0].mxu0
      %v5230 = vadd.f32 0.0, %v5229
      %v5231 = vpop.f32.mrb[0].mxu0
      %v5232 = vadd.f32 0.0, %v5231
      %v5233 = vpop.f32.mrb[0].mxu0
      %v5234 = vadd.f32 0.0, %v5233
      %5235 = vmatprep.mubr.bf16.mxu0 %v5052
      %5236 = vmatmul.mubr.bf16.gmra.mrb[0].mxu0 %v4982
      %v5237 = vpop.f32.mrb[0].mxu0
      %v5238 = vadd.f32 0.0, %v5237
      %v5239 = vpop.f32.mrb[0].mxu0
      %v5240 = vadd.f32 0.0, %v5239
      %v5241 = vpop.f32.mrb[0].mxu0
      %v5242 = vadd.f32 0.0, %v5241
      %v5243 = vpop.f32.mrb[0].mxu0
      %v5244 = vadd.f32 0.0, %v5243
      %5245 = vmatprep.mubr.bf16.mxu0 %v5055
      %5246 = vmatmul.mubr.bf16.gmra.mrb[0].mxu0 %v4984
      %v5247 = vpop.f32.mrb[0].mxu0
      %v5248 = vadd.f32 0.0, %v5247
      %v5249 = vpop.f32.mrb[0].mxu0
      %v5250 = vadd.f32 0.0, %v5249
      %v5251 = vpop.f32.mrb[0].mxu0
      %v5252 = vadd.f32 0.0, %v5251
      %v5253 = vpop.f32.mrb[0].mxu0
      %v5254 = vadd.f32 0.0, %v5253
      %5255 = vmatprep.mubr.bf16.mxu0 %v5058
      %5256 = vmatmul.mubr.bf16.gmra.mrb[0].mxu0 %v4986
      %v5257 = vpop.f32.mrb[0].mxu0
      %v5258 = vadd.f32 0.0, %v5257
      %v5259 = vpop.f32.mrb[0].mxu0
      %v5260 = vadd.f32 0.0, %v5259
      %v5261 = vpop.f32.mrb[0].mxu0
      %v5262 = vadd.f32 0.0, %v5261
      %v5263 = vpop.f32.mrb[0].mxu0
      %v5264 = vadd.f32 0.0, %v5263
      %5265 = vmatprep.mubr.bf16.mxu0 %v5061
      %5266 = vmatmul.mubr.bf16.gmra.mrb[0].mxu0 %v4988
      %v5267 = vpop.f32.mrb[0].mxu0
      %v5268 = vadd.f32 0.0, %v5267
      %v5269 = vpop.f32.mrb[0].mxu0
      %v5270 = vadd.f32 0.0, %v5269
      %v5271 = vpop.f32.mrb[0].mxu0
      %v5272 = vpop.f32.mrb[0].mxu0
      %5273 = vdwg.mxu0
      %5274 = vmatprep.subr.bf16.mxu0 0
      %5275 = vmatpush1.bf16.msra.mxu0 %v4789
      %5276 = vmatprep.subr.bf16.mxu0 0
      %5277 = vmatpush1.bf16.msra.mxu0 %v4792
      %5278 = vmatprep.subr.bf16.mxu0 0
      %5279 = vmatpush1.bf16.msra.mxu0 %v4795
      %5280 = vmatprep.subr.bf16.mxu0 0
      %5281 = vmatpush1.bf16.msra.mxu0 %v4798
      %5282 = vmatprep.subr.bf16.mxu0 0
      %5283 = vmatpush1.bf16.msra.mxu0 %v4801
      %5284 = vmatprep.subr.bf16.mxu0 0
      %5285 = vmatpush1.bf16.msra.mxu0 %v4804
      %5286 = vmatprep.subr.bf16.mxu0 0
      %5287 = vmatpush1.bf16.msra.mxu0 %v4807
      %5288 = vmatprep.subr.bf16.mxu0 0
      %5289 = vmatpush1.bf16.msra.mxu0 %v4810
      %5290 = vmatprep.subr.bf16.mxu0 0
      %5291 = vmatpush1.bf16.msra.mxu0 %v4813
      %5292 = vmatprep.subr.bf16.mxu0 0
      %5293 = vmatpush1.bf16.msra.mxu0 0
      %5294 = vmatprep.subr.bf16.mxu0 0
      %5295 = vmatpush1.bf16.msra.mxu0 0
      %5296 = vmatprep.subr.bf16.mxu0 0
      %5297 = vmatpush1.bf16.msra.mxu0 0
      %5298 = vmatprep.subr.bf16.mxu0 0
      %5299 = vmatpush1.bf16.msra.mxu0 0
      %5300 = vmatprep.subr.bf16.mxu0 0
      %5301 = vmatpush1.bf16.msra.mxu0 0
      %5302 = vmatprep.subr.bf16.mxu0 0
      %5303 = vmatpush1.bf16.msra.mxu0 0
      %5304 = vmatprep.subr.bf16.mxu0 0
      %5305 = vmatpush1.bf16.msra.mxu0 0
      %5306 = vmatprep.mubr.bf16.mxu0 %v5010
      %5307 = vmatmul.mubr.bf16.gmra.mrb[0].mxu0 %v4954
      %v5308 = vpop.f32.mrb[0].mxu0
      %v5309 = vadd.f32 0.0, %v5308
      %v5310 = vpop.f32.mrb[0].mxu0
      %v5311 = vpop.f32.mrb[0].mxu0
      %v5312 = vadd.f32 0.0, %v5311
      %v5313 = vpop.f32.mrb[0].mxu0
      %5314 = vmatprep.mubr.bf16.mxu0 %v5013
      %5315 = vmatmul.mubr.bf16.gmra.mrb[0].mxu0 %v4956
      %v5316 = vpop.f32.mrb[0].mxu0
      %v5317 = vadd.f32 0.0, %v5316
      %v5318 = vpop.f32.mrb[0].mxu0
      %v5319 = vpop.f32.mrb[0].mxu0
      %v5320 = vadd.f32 0.0, %v5319
      %v5321 = vpop.f32.mrb[0].mxu0
      %5322 = vmatprep.mubr.bf16.mxu0 %v5016
      %5323 = vmatmul.mubr.bf16.gmra.mrb[0].mxu0 %v4958
      %v5324 = vpop.f32.mrb[0].mxu0
      %v5325 = vadd.f32 0.0, %v5324
      %v5326 = vpop.f32.mrb[0].mxu0
      %v5327 = vpop.f32.mrb[0].mxu0
      %v5328 = vadd.f32 0.0, %v5327
      %v5329 = vpop.f32.mrb[0].mxu0
      %5330 = vmatprep.mubr.bf16.mxu0 %v5019
      %5331 = vmatmul.mubr.bf16.gmra.mrb[0].mxu0 %v4960
      %v5332 = vpop.f32.mrb[0].mxu0
      %v5333 = vadd.f32 0.0, %v5332
      %v5334 = vpop.f32.mrb[0].mxu0
      %v5335 = vpop.f32.mrb[0].mxu0
      %v5336 = vadd.f32 0.0, %v5335
      %v5337 = vpop.f32.mrb[0].mxu0
      %5338 = vmatprep.mubr.bf16.mxu0 %v5022
      %5339 = vmatmul.mubr.bf16.gmra.mrb[0].mxu0 %v4962
      %v5340 = vpop.f32.mrb[0].mxu0
      %v5341 = vadd.f32 0.0, %v5340
      %v5342 = vpop.f32.mrb[0].mxu0
      %v5343 = vpop.f32.mrb[0].mxu0
      %v5344 = vadd.f32 0.0, %v5343
      %v5345 = vpop.f32.mrb[0].mxu0
      %5346 = vmatprep.mubr.bf16.mxu0 %v5025
      %5347 = vmatmul.mubr.bf16.gmra.mrb[0].mxu0 %v4964
      %v5348 = vpop.f32.mrb[0].mxu0
      %v5349 = vadd.f32 0.0, %v5348
      %v5350 = vpop.f32.mrb[0].mxu0
      %v5351 = vpop.f32.mrb[0].mxu0
      %v5352 = vadd.f32 0.0, %v5351
      %v5353 = vpop.f32.mrb[0].mxu0
      %5354 = vmatprep.mubr.bf16.mxu0 %v5028
      %5355 = vmatmul.mubr.bf16.gmra.mrb[0].mxu0 %v4966
      %v5356 = vpop.f32.mrb[0].mxu0
      %v5357 = vadd.f32 0.0, %v5356
      %v5358 = vpop.f32.mrb[0].mxu0
      %v5359 = vpop.f32.mrb[0].mxu0
      %v5360 = vadd.f32 0.0, %v5359
      %v5361 = vpop.f32.mrb[0].mxu0
      %5362 = vmatprep.mubr.bf16.mxu0 %v5031
      %5363 = vmatmul.mubr.bf16.gmra.mrb[0].mxu0 %v4968
      %v5364 = vpop.f32.mrb[0].mxu0
      %v5365 = vadd.f32 0.0, %v5364
      %v5366 = vpop.f32.mrb[0].mxu0
      %v5367 = vpop.f32.mrb[0].mxu0
      %v5368 = vadd.f32 0.0, %v5367
      %v5369 = vpop.f32.mrb[0].mxu0
      %5370 = vmatprep.mubr.bf16.mxu0 %v5034
      %5371 = vmatmul.mubr.bf16.gmra.mrb[0].mxu0 %v4970
      %v5372 = vpop.f32.mrb[0].mxu0
      %v5373 = vadd.f32 0.0, %v5372
      %v5374 = vpop.f32.mrb[0].mxu0
      %v5375 = vpop.f32.mrb[0].mxu0
      %v5376 = vadd.f32 0.0, %v5375
      %v5377 = vpop.f32.mrb[0].mxu0
      %5378 = vmatprep.mubr.bf16.mxu0 %v5037
      %5379 = vmatmul.mubr.bf16.gmra.mrb[0].mxu0 %v4972
      %v5380 = vpop.f32.mrb[0].mxu0
      %v5381 = vadd.f32 0.0, %v5380
      %v5382 = vpop.f32.mrb[0].mxu0
      %v5383 = vpop.f32.mrb[0].mxu0
      %v5384 = vadd.f32 0.0, %v5383
      %v5385 = vpop.f32.mrb[0].mxu0
      %5386 = vmatprep.mubr.bf16.mxu0 %v5040
      %5387 = vmatmul.mubr.bf16.gmra.mrb[0].mxu0 %v4974
      %v5388 = vpop.f32.mrb[0].mxu0
      %v5389 = vadd.f32 0.0, %v5388
      %v5390 = vpop.f32.mrb[0].mxu0
      %v5391 = vpop.f32.mrb[0].mxu0
      %v5392 = vadd.f32 0.0, %v5391
      %v5393 = vpop.f32.mrb[0].mxu0
      %5394 = vmatprep.mubr.bf16.mxu0 %v5043
      %5395 = vmatmul.mubr.bf16.gmra.mrb[0].mxu0 %v4976
      %v5396 = vpop.f32.mrb[0].mxu0
      %v5397 = vadd.f32 0.0, %v5396
      %v5398 = vpop.f32.mrb[0].mxu0
      %v5399 = vpop.f32.mrb[0].mxu0
      %v5400 = vadd.f32 0.0, %v5399
      %v5401 = vpop.f32.mrb[0].mxu0
      %5402 = vmatprep.mubr.bf16.mxu0 %v5046
      %5403 = vmatmul.mubr.bf16.gmra.mrb[0].mxu0 %v4978
      %v5404 = vpop.f32.mrb[0].mxu0
      %v5405 = vadd.f32 0.0, %v5404
      %v5406 = vpop.f32.mrb[0].mxu0
      %v5407 = vpop.f32.mrb[0].mxu0
      %v5408 = vadd.f32 0.0, %v5407
      %v5409 = vpop.f32.mrb[0].mxu0
      %5410 = vmatprep.mubr.bf16.mxu0 %v5049
      %5411 = vmatmul.mubr.bf16.gmra.mrb[0].mxu0 %v4980
      %v5412 = vpop.f32.mrb[0].mxu0
      %v5413 = vadd.f32 0.0, %v5412
      %v5414 = vpop.f32.mrb[0].mxu0
      %v5415 = vpop.f32.mrb[0].mxu0
      %v5416 = vadd.f32 0.0, %v5415
      %v5417 = vpop.f32.mrb[0].mxu0
      %5418 = vmatprep.mubr.bf16.mxu0 %v5052
      %5419 = vmatmul.mubr.bf16.gmra.mrb[0].mxu0 %v4982
      %v5420 = vpop.f32.mrb[0].mxu0
      %v5421 = vadd.f32 0.0, %v5420
      %v5422 = vpop.f32.mrb[0].mxu0
      %v5423 = vpop.f32.mrb[0].mxu0
      %v5424 = vadd.f32 0.0, %v5423
      %v5425 = vpop.f32.mrb[0].mxu0
      %5426 = vmatprep.mubr.bf16.mxu0 %v5055
      %5427 = vmatmul.mubr.bf16.gmra.mrb[0].mxu0 %v4984
      %v5428 = vpop.f32.mrb[0].mxu0
      %v5429 = vadd.f32 0.0, %v5428
      %v5430 = vpop.f32.mrb[0].mxu0
      %v5431 = vpop.f32.mrb[0].mxu0
      %v5432 = vadd.f32 0.0, %v5431
      %v5433 = vpop.f32.mrb[0].mxu0
      %5434 = vmatprep.mubr.bf16.mxu0 %v5058
      %5435 = vmatmul.mubr.bf16.gmra.mrb[0].mxu0 %v4986
      %v5436 = vpop.f32.mrb[0].mxu0
      %v5437 = vadd.f32 0.0, %v5436
      %v5438 = vpop.f32.mrb[0].mxu0
      %v5439 = vpop.f32.mrb[0].mxu0
      %v5440 = vadd.f32 0.0, %v5439
      %v5441 = vpop.f32.mrb[0].mxu0
      %5442 = vmatprep.mubr.bf16.mxu0 %v5061
      %5443 = vmatmul.mubr.bf16.gmra.mrb[0].mxu0 %v4988
      %v5444 = vpop.f32.mrb[0].mxu0
      %v5445 = vadd.f32 0.0, %v5444
      %v5446 = vpop.f32.mrb[0].mxu0
      %v5447 = vpop.f32.mrb[0].mxu0
      %v5448 = vpop.f32.mrb[0].mxu0
      %5449 = vdwg.mxu0
      %v5450 = vpack.c.bf16 %v5102, %v5098
      %v5451 = vpack.c.bf16 %v5104, %v5100
      %v5452 = vpack.c.bf16 %v5312, %v5309
      %v5453 = vpack.c.bf16 %v5112, %v5108
      %v5454 = vpack.c.bf16 %v5114, %v5110
      %v5455 = vpack.c.bf16 %v5320, %v5317
      %v5456 = vpack.c.bf16 %v5122, %v5118
      %v5457 = vpack.c.bf16 %v5124, %v5120
      %v5458 = vpack.c.bf16 %v5328, %v5325
      %v5459 = vpack.c.bf16 %v5132, %v5128
      %v5460 = vpack.c.bf16 %v5134, %v5130
      %v5461 = vpack.c.bf16 %v5336, %v5333
      %v5462 = vpack.c.bf16 %v5142, %v5138
      %v5463 = vpack.c.bf16 %v5144, %v5140
      %v5464 = vpack.c.bf16 %v5344, %v5341
      %v5465 = vpack.c.bf16 %v5152, %v5148
      %v5466 = vpack.c.bf16 %v5154, %v5150
      %v5467 = vpack.c.bf16 %v5352, %v5349
      %v5468 = vpack.c.bf16 %v5162, %v5158
      %v5469 = vpack.c.bf16 %v5164, %v5160
      %v5470 = vpack.c.bf16 %v5360, %v5357
      %v5471 = vpack.c.bf16 %v5172, %v5168
      %v5472 = vpack.c.bf16 %v5174, %v5170
      %v5473 = vpack.c.bf16 %v5368, %v5365
      %v5474 = vpack.c.bf16 %v5182, %v5178
      %v5475 = vpack.c.bf16 %v5184, %v5180
      %v5476 = vpack.c.bf16 %v5376, %v5373
      %v5477 = vpack.c.bf16 %v5192, %v5188
      %v5478 = vpack.c.bf16 %v5194, %v5190
      %v5479 = vpack.c.bf16 %v5384, %v5381
      %v5480 = vpack.c.bf16 %v5202, %v5198
      %v5481 = vpack.c.bf16 %v5204, %v5200
      %v5482 = vpack.c.bf16 %v5392, %v5389
      %v5483 = vpack.c.bf16 %v5212, %v5208
      %v5484 = vpack.c.bf16 %v5214, %v5210
      %v5485 = vpack.c.bf16 %v5400, %v5397
      %v5486 = vpack.c.bf16 %v5222, %v5218
      %v5487 = vpack.c.bf16 %v5224, %v5220
      %v5488 = vpack.c.bf16 %v5408, %v5405
      %v5489 = vpack.c.bf16 %v5232, %v5228
      %v5490 = vpack.c.bf16 %v5234, %v5230
      %v5491 = vpack.c.bf16 %v5416, %v5413
      %v5492 = vpack.c.bf16 %v5242, %v5238
      %v5493 = vpack.c.bf16 %v5244, %v5240
      %v5494 = vpack.c.bf16 %v5424, %v5421
      %v5495 = vpack.c.bf16 %v5252, %v5248
      %v5496 = vpack.c.bf16 %v5254, %v5250
      %v5497 = vpack.c.bf16 %v5432, %v5429
      %v5498 = vpack.c.bf16 %v5262, %v5258
      %v5499 = vpack.c.bf16 %v5264, %v5260
      %v5500 = vpack.c.bf16 %v5440, %v5437
      %v5501 = vpack.c.bf16 %v5268, %v5268
      %v5502 = vpack.c.bf16 %v5270, %v5270
      %v5503 = vpack.c.bf16 %v5445, %v5445
      %v5504 = vld [vmem:[%s5] sm:$0xff]
      %v5505 = vld [vmem:[%s5 + $0x8] sm:$0xff]
      %v5506 = vld [vmem:[%s5 + $0x10] sm:$0xff]
      %v5507 = vld [vmem:[%s5 + $0x18] sm:$0xff]
      %v5508 = vld [vmem:[%s5 + $0x20] sm:$0xff]
      %v5509 = vld [vmem:[%s5 + $0x28] sm:$0xff]
      %v5510 = vld [vmem:[%s5 + $0x30] sm:$0xff]
      %v5511 = vld [vmem:[%s5 + $0x38] sm:$0xff]
      %v5512 = vld [vmem:[%s5 + $0x40] sm:$0xff]
      %v5513 = vld [vmem:[%s5 + $0x48] sm:$0xff]
      %v5514 = vld [vmem:[%s5 + $0x50] sm:$0xff]
      %v5515 = vld [vmem:[%s5 + $0x58] sm:$0xff]
      %v5516 = vld [vmem:[%s5 + $0x60] sm:$0xff]
      %v5517 = vld [vmem:[%s5 + $0x68] sm:$0xff]
      %v5518 = vld [vmem:[%s5 + $0x70] sm:$0xff]
      %v5519 = vld [vmem:[%s5 + $0x78] sm:$0xff]
      %v5520 = vld [vmem:[%s5 + $0x80] sm:$0xff]
      %v5521 = vld [vmem:[%s5 + $0x88] sm:$0xff]
      %v5522 = vld [vmem:[%s5 + $0x90] sm:$0xff]
      %v5523 = vld [vmem:[%s5 + $0x98] sm:$0xff]
      %v5524 = vld [vmem:[%s5 + $0xa0] sm:$0xff]
      %v5525 = vld [vmem:[%s5 + $0xa8] sm:$0xff]
      %v5526 = vld [vmem:[%s5 + $0xb0] sm:$0xff]
      %v5527 = vld [vmem:[%s5 + $0xb8] sm:$0xff]
      %v5528 = vld [vmem:[%s5 + $0xc0] sm:$0xff]
      %v5529 = vld [vmem:[%s5 + $0xc8] sm:$0xff]
      %v5530 = vld [vmem:[%s5 + $0xd0] sm:$0xff]
      %v5531 = vld [vmem:[%s5 + $0xd8] sm:$0xff]
      %v5532 = vld [vmem:[%s5 + $0xe0] sm:$0xff]
      %v5533 = vld [vmem:[%s5 + $0xe8] sm:$0xff]
      %v5534 = vld [vmem:[%s5 + $0xf0] sm:$0xff]
      %v5535 = vld [vmem:[%s5 + $0xf8] sm:$0xff]
      %v5536 = vld [vmem:[%s5 + $0x100] sm:$0xff]
      %v5537 = vld [vmem:[%s5 + $0x108] sm:$0xff]
      %v5538 = vld [vmem:[%s5 + $0x110] sm:$0xff]
      %v5539 = vld [vmem:[%s5 + $0x118] sm:$0xff]
      %s5540 = scalar_lea.vmem %s5, 288
      %v5541 = vld [vmem:[%s5540] sm:$0xff]
      %v5542 = vld [vmem:[%s5540 + $0x8] sm:$0xff]
      %v5543 = vld [vmem:[%s5540 + $0x10] sm:$0xff]
      %v5544 = vld [vmem:[%s5540 + $0x18] sm:$0xff]
      %v5545 = vld [vmem:[%s5540 + $0x20] sm:$0xff]
      %v5546 = vld [vmem:[%s5540 + $0x28] sm:$0xff]
      %v5547 = vld [vmem:[%s5540 + $0x30] sm:$0xff]
      %v5548 = vld [vmem:[%s5540 + $0x38] sm:$0xff]
      %v5549 = vld [vmem:[%s5540 + $0x40] sm:$0xff]
      %v5550 = vld [vmem:[%s5540 + $0x48] sm:$0xff]
      %v5551 = vld [vmem:[%s5540 + $0x50] sm:$0xff]
      %v5552 = vld [vmem:[%s5540 + $0x58] sm:$0xff]
      %v5553 = vld [vmem:[%s5540 + $0x60] sm:$0xff]
      %v5554 = vld [vmem:[%s5540 + $0x68] sm:$0xff]
      %v5555 = vld [vmem:[%s5540 + $0x70] sm:$0xff]
      %v5556 = vld [vmem:[%s5540 + $0x78] sm:$0xff]
      %v5557 = vld [vmem:[%s5540 + $0x80] sm:$0xff]
      %v5558 = vld [vmem:[%s5540 + $0x88] sm:$0xff]
      %v5559 = vld [vmem:[%s5540 + $0x90] sm:$0xff]
      %v5560 = vld [vmem:[%s5540 + $0x98] sm:$0xff]
      %v5561 = vld [vmem:[%s5540 + $0xa0] sm:$0xff]
      %v5562 = vld [vmem:[%s5540 + $0xa8] sm:$0xff]
      %v5563 = vld [vmem:[%s5540 + $0xb0] sm:$0xff]
      %v5564 = vld [vmem:[%s5540 + $0xb8] sm:$0xff]
      %v5565 = vld [vmem:[%s5540 + $0xc0] sm:$0xff]
      %v5566 = vld [vmem:[%s5540 + $0xc8] sm:$0xff]
      %v5567 = vld [vmem:[%s5540 + $0xd0] sm:$0xff]
      %v5568 = vld [vmem:[%s5540 + $0xd8] sm:$0xff]
      %v5569 = vld [vmem:[%s5540 + $0xe0] sm:$0xff]
      %v5570 = vld [vmem:[%s5540 + $0xe8] sm:$0xff]
      %v5571 = vld [vmem:[%s5540 + $0xf0] sm:$0xff]
      %v5572 = vld [vmem:[%s5540 + $0xf8] sm:$0xff]
      %v5573 = vld [vmem:[%s5540 + $0x100] sm:$0xff]
      %v5574 = vld [vmem:[%s5540 + $0x108] sm:$0xff]
      %v5575 = vld [vmem:[%s5540 + $0x110] sm:$0xff]
      %v5576 = vld [vmem:[%s5540 + $0x118] sm:$0xff]
      %vm5589 = vcmask 1043456
      %v5590 = vrot.slane %v5459, 4
      %v5591 = vrot.slane %v5462, 4
      %v5592 = vsel %vm5589, %v5590, %v5591
      %v5593 = vrot.slane %v5460, 4
      %v5594 = vrot.slane %v5463, 4
      %v5595 = vsel %vm5589, %v5593, %v5594
      %v5596 = vrot.slane %v5461, 4
      %v5597 = vrot.slane %v5464, 4
      %v5598 = vsel %vm5589, %v5596, %v5597
      %v5599 = vrot.slane %v5465, 4
      %v5600 = vsel %vm5589, %v5591, %v5599
      %v5601 = vrot.slane %v5466, 4
      %v5602 = vsel %vm5589, %v5594, %v5601
      %v5603 = vrot.slane %v5467, 4
      %v5604 = vsel %vm5589, %v5597, %v5603
      %v5605 = vrot.slane %v5468, 4
      %v5606 = vsel %vm5589, %v5599, %v5605
      %v5607 = vrot.slane %v5469, 4
      %v5608 = vsel %vm5589, %v5601, %v5607
      %v5609 = vrot.slane %v5470, 4
      %v5610 = vsel %vm5589, %v5603, %v5609
      %v5655 = vunpack.c.l.b16 %v5541
      %v5656 = vunpack.c.h.b16 %v5541
      %v5657 = vunpack.c.l.b16 %v5542
      %v5658 = vunpack.c.h.b16 %v5542
      %v5659 = vunpack.c.l.b16 %v5543
      %v5660 = vunpack.c.h.b16 %v5543
      %v5661 = vunpack.c.l.b16 %v5544
      %v5662 = vunpack.c.h.b16 %v5544
      %v5663 = vunpack.c.l.b16 %v5545
      %v5664 = vunpack.c.h.b16 %v5545
      %v5665 = vunpack.c.l.b16 %v5546
      %v5666 = vunpack.c.h.b16 %v5546
      %v5667 = vunpack.c.l.b16 %v5547
      %v5668 = vunpack.c.h.b16 %v5547
      %v5669 = vunpack.c.l.b16 %v5548
      %v5670 = vunpack.c.h.b16 %v5548
      %v5671 = vunpack.c.l.b16 %v5549
      %v5672 = vunpack.c.h.b16 %v5549
      %v5673 = vunpack.c.l.b16 %v5550
      %v5674 = vunpack.c.h.b16 %v5550
      %v5675 = vunpack.c.l.b16 %v5551
      %v5676 = vunpack.c.h.b16 %v5551
      %v5677 = vunpack.c.l.b16 %v5552
      %v5678 = vunpack.c.h.b16 %v5552
      %v5679 = vunpack.c.l.b16 %v5553
      %v5680 = vunpack.c.h.b16 %v5553
      %v5681 = vunpack.c.l.b16 %v5554
      %v5682 = vunpack.c.h.b16 %v5554
      %v5683 = vunpack.c.l.b16 %v5555
      %v5684 = vunpack.c.h.b16 %v5555
      %v5685 = vunpack.c.l.b16 %v5556
      %v5686 = vunpack.c.h.b16 %v5556
      %v5687 = vunpack.c.l.b16 %v5557
      %v5688 = vunpack.c.h.b16 %v5557
      %v5689 = vunpack.c.l.b16 %v5558
      %v5690 = vunpack.c.h.b16 %v5558
      %v5691 = vunpack.c.l.b16 %v5559
      %v5692 = vunpack.c.h.b16 %v5559
      %v5693 = vunpack.c.l.b16 %v5560
      %v5694 = vunpack.c.h.b16 %v5560
      %v5695 = vunpack.c.l.b16 %v5561
      %v5696 = vunpack.c.h.b16 %v5561
      %v5697 = vunpack.c.l.b16 %v5562
      %v5698 = vunpack.c.h.b16 %v5562
      %v5699 = vunpack.c.l.b16 %v5563
      %v5700 = vunpack.c.h.b16 %v5563
      %v5701 = vunpack.c.l.b16 %v5564
      %v5702 = vunpack.c.h.b16 %v5564
      %v5703 = vunpack.c.l.b16 %v5565
      %v5704 = vunpack.c.h.b16 %v5565
      %v5705 = vunpack.c.l.b16 %v5566
      %v5706 = vunpack.c.h.b16 %v5566
      %v5707 = vunpack.c.l.b16 %v5567
      %v5708 = vunpack.c.h.b16 %v5567
      %v5709 = vunpack.c.l.b16 %v5568
      %v5710 = vunpack.c.h.b16 %v5568
      %v5711 = vunpack.c.l.b16 %v5569
      %v5712 = vunpack.c.h.b16 %v5569
      %v5713 = vunpack.c.l.b16 %v5570
      %v5714 = vunpack.c.h.b16 %v5570
      %v5715 = vunpack.c.l.b16 %v5571
      %v5716 = vunpack.c.h.b16 %v5571
      %v5717 = vunpack.c.l.b16 %v5572
      %v5718 = vunpack.c.h.b16 %v5572
      %v5719 = vunpack.c.l.b16 %v5573
      %v5720 = vunpack.c.h.b16 %v5573
      %v5721 = vunpack.c.l.b16 %v5574
      %v5722 = vunpack.c.h.b16 %v5574
      %v5723 = vunpack.c.l.b16 %v5575
      %v5724 = vunpack.c.h.b16 %v5575
      %v5725 = vunpack.c.l.b16 %v5576
      %v5726 = vunpack.c.h.b16 %v5576
      %v5727 = vpack.c.b16 %v5657, %v5655
      %v5728 = vpack.c.b16 %v5658, %v5656
      %v5729 = vpack.c.b16 %v5661, %v5659
      %v5730 = vpack.c.b16 %v5662, %v5660
      %v5731 = vpack.c.b16 %v5665, %v5663
      %v5732 = vpack.c.b16 %v5666, %v5664
      %v5733 = vpack.c.b16 %v5669, %v5667
      %v5734 = vpack.c.b16 %v5670, %v5668
      %v5735 = vpack.c.b16 %v5673, %v5671
      %v5736 = vpack.c.b16 %v5674, %v5672
      %v5737 = vpack.c.b16 %v5677, %v5675
      %v5738 = vpack.c.b16 %v5678, %v5676
      %v5739 = vpack.c.b16 %v5681, %v5679
      %v5740 = vpack.c.b16 %v5682, %v5680
      %v5741 = vpack.c.b16 %v5685, %v5683
      %v5742 = vpack.c.b16 %v5686, %v5684
      %v5743 = vpack.c.b16 %v5689, %v5687
      %v5744 = vpack.c.b16 %v5690, %v5688
      %v5745 = vpack.c.b16 %v5693, %v5691
      %v5746 = vpack.c.b16 %v5694, %v5692
      %v5747 = vpack.c.b16 %v5697, %v5695
      %v5748 = vpack.c.b16 %v5698, %v5696
      %v5749 = vpack.c.b16 %v5701, %v5699
      %v5750 = vpack.c.b16 %v5702, %v5700
      %v5751 = vpack.c.b16 %v5705, %v5703
      %v5752 = vpack.c.b16 %v5706, %v5704
      %v5753 = vpack.c.b16 %v5709, %v5707
      %v5754 = vpack.c.b16 %v5710, %v5708
      %v5755 = vpack.c.b16 %v5713, %v5711
      %v5756 = vpack.c.b16 %v5714, %v5712
      %v5757 = vpack.c.b16 %v5717, %v5715
      %v5758 = vpack.c.b16 %v5718, %v5716
      %v5759 = vpack.c.b16 %v5721, %v5719
      %v5760 = vpack.c.b16 %v5722, %v5720
      %v5761 = vpack.c.b16 %v5725, %v5723
      %v5762 = vpack.c.b16 %v5726, %v5724
      %vm5799 = vcmask 261120
      %v5801 = vsel %vm5799, %v5598, 0
      %v5804 = vsel %vm5799, %v5604, 0
      %v5807 = vsel %vm5799, %v5610, 0
      %v5810 = vsel %vm5799, %v5609, 0
      %5812 = vmatprep.subr.bf16.mxu0 %v5728
      %5813 = vmatpush1.bf16.msra.mxu0 %v5727
      %5814 = vmatprep.subr.bf16.mxu0 %v5730
      %5815 = vmatpush1.bf16.msra.mxu0 %v5729
      %5816 = vmatprep.subr.bf16.mxu0 %v5732
      %5817 = vmatpush1.bf16.msra.mxu0 %v5731
      %5818 = vmatprep.subr.bf16.mxu0 %v5734
      %5819 = vmatpush1.bf16.msra.mxu0 %v5733
      %5820 = vmatprep.subr.bf16.mxu0 %v5736
      %5821 = vmatpush1.bf16.msra.mxu0 %v5735
      %5822 = vmatprep.subr.bf16.mxu0 %v5738
      %5823 = vmatpush1.bf16.msra.mxu0 %v5737
      %5824 = vmatprep.subr.bf16.mxu0 %v5740
      %5825 = vmatpush1.bf16.msra.mxu0 %v5739
      %5826 = vmatprep.subr.bf16.mxu0 %v5742
      %5827 = vmatpush1.bf16.msra.mxu0 %v5741
      %5828 = vmatprep.subr.bf16.mxu0 %v5744
      %5829 = vmatpush1.bf16.msra.mxu0 %v5743
      %5830 = vmatprep.subr.bf16.mxu0 %v5746
      %5831 = vmatpush1.bf16.msra.mxu0 %v5745
      %5832 = vmatprep.subr.bf16.mxu0 %v5748
      %5833 = vmatpush1.bf16.msra.mxu0 %v5747
      %5834 = vmatprep.subr.bf16.mxu0 %v5750
      %5835 = vmatpush1.bf16.msra.mxu0 %v5749
      %5836 = vmatprep.subr.bf16.mxu0 %v5752
      %5837 = vmatpush1.bf16.msra.mxu0 %v5751
      %5838 = vmatprep.subr.bf16.mxu0 %v5754
      %5839 = vmatpush1.bf16.msra.mxu0 %v5753
      %5840 = vmatprep.subr.bf16.mxu0 %v5756
      %5841 = vmatpush1.bf16.msra.mxu0 %v5755
      %5842 = vmatprep.subr.bf16.mxu0 %v5758
      %5843 = vmatpush1.bf16.msra.mxu0 %v5757
      %5844 = vmatprep.mubr.bf16.mxu0 %v5595
      %5845 = vmatmul.mubr.bf16.gmra.mrb[0].mxu0 %v5592
      %v5846 = vpop.f32.mrb[0].mxu0
      %v5847 = vadd.f32 0.0, %v5846
      %v5848 = vpop.f32.mrb[0].mxu0
      %v5849 = vadd.f32 0.0, %v5848
      %v5850 = vpop.f32.mrb[0].mxu0
      %v5851 = vadd.f32 0.0, %v5850
      %v5852 = vpop.f32.mrb[0].mxu0
      %v5853 = vadd.f32 0.0, %v5852
      %5854 = vmatprep.mubr.bf16.mxu0 %v5602
      %5855 = vmatmul.mubr.bf16.gmra.mrb[0].mxu0 %v5600
      %v5856 = vpop.f32.mrb[0].mxu0
      %v5857 = vadd.f32 0.0, %v5856
      %v5858 = vpop.f32.mrb[0].mxu0
      %v5859 = vadd.f32 0.0, %v5858
      %v5860 = vpop.f32.mrb[0].mxu0
      %v5861 = vadd.f32 0.0, %v5860
      %v5862 = vpop.f32.mrb[0].mxu0
      %v5863 = vadd.f32 0.0, %v5862
      %5864 = vmatprep.mubr.bf16.mxu0 %v5608
      %5865 = vmatmul.mubr.bf16.gmra.mrb[0].mxu0 %v5606
      %v5866 = vpop.f32.mrb[0].mxu0
      %v5867 = vadd.f32 0.0, %v5866
      %v5868 = vpop.f32.mrb[0].mxu0
      %v5869 = vadd.f32 0.0, %v5868
      %v5870 = vpop.f32.mrb[0].mxu0
      %v5871 = vadd.f32 0.0, %v5870
      %v5872 = vpop.f32.mrb[0].mxu0
      %v5873 = vadd.f32 0.0, %v5872
      %5874 = vmatprep.mubr.bf16.mxu0 %v5607
      %5875 = vmatmul.mubr.bf16.gmra.mrb[0].mxu0 %v5605
      %v5876 = vpop.f32.mrb[0].mxu0
      %v5877 = vadd.f32 0.0, %v5876
      %v5878 = vpop.f32.mrb[0].mxu0
      %v5879 = vadd.f32 0.0, %v5878
      %v5880 = vpop.f32.mrb[0].mxu0
      %v5881 = vpop.f32.mrb[0].mxu0
      %5882 = vdwg.mxu0
      %5883 = vmatprep.subr.bf16.mxu0 %v5760
      %5884 = vmatpush1.bf16.msra.mxu0 %v5759
      %5885 = vmatprep.subr.bf16.mxu0 %v5762
      %5886 = vmatpush1.bf16.msra.mxu0 %v5761
      %5887 = vmatprep.subr.bf16.mxu0 0
      %5888 = vmatpush1.bf16.msra.mxu0 0
      %5889 = vmatprep.subr.bf16.mxu0 0
      %5890 = vmatpush1.bf16.msra.mxu0 0
      %5891 = vmatprep.subr.bf16.mxu0 0
      %5892 = vmatpush1.bf16.msra.mxu0 0
      %5893 = vmatprep.subr.bf16.mxu0 0
      %5894 = vmatpush1.bf16.msra.mxu0 0
      %5895 = vmatprep.subr.bf16.mxu0 0
      %5896 = vmatpush1.bf16.msra.mxu0 0
      %5897 = vmatprep.subr.bf16.mxu0 0
      %5898 = vmatpush1.bf16.msra.mxu0 0
      %5899 = vmatprep.subr.bf16.mxu0 0
      %5900 = vmatpush1.bf16.msra.mxu0 0
      %5901 = vmatprep.subr.bf16.mxu0 0
      %5902 = vmatpush1.bf16.msra.mxu0 0
      %5903 = vmatprep.subr.bf16.mxu0 0
      %5904 = vmatpush1.bf16.msra.mxu0 0
      %5905 = vmatprep.subr.bf16.mxu0 0
      %5906 = vmatpush1.bf16.msra.mxu0 0
      %5907 = vmatprep.subr.bf16.mxu0 0
      %5908 = vmatpush1.bf16.msra.mxu0 0
      %5909 = vmatprep.subr.bf16.mxu0 0
      %5910 = vmatpush1.bf16.msra.mxu0 0
      %5911 = vmatprep.subr.bf16.mxu0 0
      %5912 = vmatpush1.bf16.msra.mxu0 0
      %5913 = vmatprep.subr.bf16.mxu0 0
      %5914 = vmatpush1.bf16.msra.mxu0 0
      %5915 = vmatprep.mubr.bf16.mxu0 0
      %5916 = vmatmul.mubr.bf16.gmra.mrb[0].mxu0 %v5801
      %v5917 = vpop.f32.mrb[0].mxu0
      %v5918 = vadd.f32 %v5847, %v5917
      %v5919 = vpop.f32.mrb[0].mxu0
      %v5920 = vadd.f32 %v5849, %v5919
      %v5921 = vpop.f32.mrb[0].mxu0
      %v5922 = vadd.f32 %v5851, %v5921
      %v5923 = vpop.f32.mrb[0].mxu0
      %v5924 = vadd.f32 %v5853, %v5923
      %5925 = vmatprep.mubr.bf16.mxu0 0
      %5926 = vmatmul.mubr.bf16.gmra.mrb[0].mxu0 %v5804
      %v5927 = vpop.f32.mrb[0].mxu0
      %v5928 = vadd.f32 %v5857, %v5927
      %v5929 = vpop.f32.mrb[0].mxu0
      %v5930 = vadd.f32 %v5859, %v5929
      %v5931 = vpop.f32.mrb[0].mxu0
      %v5932 = vadd.f32 %v5861, %v5931
      %v5933 = vpop.f32.mrb[0].mxu0
      %v5934 = vadd.f32 %v5863, %v5933
      %5935 = vmatprep.mubr.bf16.mxu0 0
      %5936 = vmatmul.mubr.bf16.gmra.mrb[0].mxu0 %v5807
      %v5937 = vpop.f32.mrb[0].mxu0
      %v5938 = vadd.f32 %v5867, %v5937
      %v5939 = vpop.f32.mrb[0].mxu0
      %v5940 = vadd.f32 %v5869, %v5939
      %v5941 = vpop.f32.mrb[0].mxu0
      %v5942 = vadd.f32 %v5871, %v5941
      %v5943 = vpop.f32.mrb[0].mxu0
      %v5944 = vadd.f32 %v5873, %v5943
      %5945 = vmatprep.mubr.bf16.mxu0 0
      %5946 = vmatmul.mubr.bf16.gmra.mrb[0].mxu0 %v5810
      %v5947 = vpop.f32.mrb[0].mxu0
      %v5948 = vadd.f32 %v5877, %v5947
      %v5949 = vpop.f32.mrb[0].mxu0
      %v5950 = vadd.f32 %v5879, %v5949
      %v5951 = vpop.f32.mrb[0].mxu0
      %v5952 = vpop.f32.mrb[0].mxu0
      %5953 = vdwg.mxu0
      %v5990 = vunpack.c.l.b16 %v5504
      %v5991 = vunpack.c.h.b16 %v5504
      %v5992 = vunpack.c.l.b16 %v5505
      %v5993 = vunpack.c.h.b16 %v5505
      %v5994 = vunpack.c.l.b16 %v5506
      %v5995 = vunpack.c.h.b16 %v5506
      %v5996 = vunpack.c.l.b16 %v5507
      %v5997 = vunpack.c.h.b16 %v5507
      %v5998 = vunpack.c.l.b16 %v5508
      %v5999 = vunpack.c.h.b16 %v5508
      %v6000 = vunpack.c.l.b16 %v5509
      %v6001 = vunpack.c.h.b16 %v5509
      %v6002 = vunpack.c.l.b16 %v5510
      %v6003 = vunpack.c.h.b16 %v5510
      %v6004 = vunpack.c.l.b16 %v5511
      %v6005 = vunpack.c.h.b16 %v5511
      %v6006 = vunpack.c.l.b16 %v5512
      %v6007 = vunpack.c.h.b16 %v5512
      %v6008 = vunpack.c.l.b16 %v5513
      %v6009 = vunpack.c.h.b16 %v5513
      %v6010 = vunpack.c.l.b16 %v5514
      %v6011 = vunpack.c.h.b16 %v5514
      %v6012 = vunpack.c.l.b16 %v5515
      %v6013 = vunpack.c.h.b16 %v5515
      %v6014 = vunpack.c.l.b16 %v5516
      %v6015 = vunpack.c.h.b16 %v5516
      %v6016 = vunpack.c.l.b16 %v5517
      %v6017 = vunpack.c.h.b16 %v5517
      %v6018 = vunpack.c.l.b16 %v5518
      %v6019 = vunpack.c.h.b16 %v5518
      %v6020 = vunpack.c.l.b16 %v5519
      %v6021 = vunpack.c.h.b16 %v5519
      %v6022 = vunpack.c.l.b16 %v5520
      %v6023 = vunpack.c.h.b16 %v5520
      %v6024 = vunpack.c.l.b16 %v5521
      %v6025 = vunpack.c.h.b16 %v5521
      %v6026 = vunpack.c.l.b16 %v5522
      %v6027 = vunpack.c.h.b16 %v5522
      %v6028 = vunpack.c.l.b16 %v5523
      %v6029 = vunpack.c.h.b16 %v5523
      %v6030 = vunpack.c.l.b16 %v5524
      %v6031 = vunpack.c.h.b16 %v5524
      %v6032 = vunpack.c.l.b16 %v5525
      %v6033 = vunpack.c.h.b16 %v5525
      %v6034 = vunpack.c.l.b16 %v5526
      %v6035 = vunpack.c.h.b16 %v5526
      %v6036 = vunpack.c.l.b16 %v5527
      %v6037 = vunpack.c.h.b16 %v5527
      %v6038 = vunpack.c.l.b16 %v5528
      %v6039 = vunpack.c.h.b16 %v5528
      %v6040 = vunpack.c.l.b16 %v5529
      %v6041 = vunpack.c.h.b16 %v5529
      %v6042 = vunpack.c.l.b16 %v5530
      %v6043 = vunpack.c.h.b16 %v5530
      %v6044 = vunpack.c.l.b16 %v5531
      %v6045 = vunpack.c.h.b16 %v5531
      %v6046 = vunpack.c.l.b16 %v5532
      %v6047 = vunpack.c.h.b16 %v5532
      %v6048 = vunpack.c.l.b16 %v5533
      %v6049 = vunpack.c.h.b16 %v5533
      %v6050 = vunpack.c.l.b16 %v5534
      %v6051 = vunpack.c.h.b16 %v5534
      %v6052 = vunpack.c.l.b16 %v5535
      %v6053 = vunpack.c.h.b16 %v5535
      %v6054 = vunpack.c.l.b16 %v5536
      %v6055 = vunpack.c.h.b16 %v5536
      %v6056 = vunpack.c.l.b16 %v5537
      %v6057 = vunpack.c.h.b16 %v5537
      %v6058 = vunpack.c.l.b16 %v5538
      %v6059 = vunpack.c.h.b16 %v5538
      %v6060 = vunpack.c.l.b16 %v5539
      %v6061 = vunpack.c.h.b16 %v5539
      %v6062 = vpack.c.b16 %v5992, %v5990
      %v6063 = vpack.c.b16 %v5993, %v5991
      %v6064 = vpack.c.b16 %v5996, %v5994
      %v6065 = vpack.c.b16 %v5997, %v5995
      %v6066 = vpack.c.b16 %v6000, %v5998
      %v6067 = vpack.c.b16 %v6001, %v5999
      %v6068 = vpack.c.b16 %v6004, %v6002
      %v6069 = vpack.c.b16 %v6005, %v6003
      %v6070 = vpack.c.b16 %v6008, %v6006
      %v6071 = vpack.c.b16 %v6009, %v6007
      %v6072 = vpack.c.b16 %v6012, %v6010
      %v6073 = vpack.c.b16 %v6013, %v6011
      %v6074 = vpack.c.b16 %v6016, %v6014
      %v6075 = vpack.c.b16 %v6017, %v6015
      %v6076 = vpack.c.b16 %v6020, %v6018
      %v6077 = vpack.c.b16 %v6021, %v6019
      %v6078 = vpack.c.b16 %v6024, %v6022
      %v6079 = vpack.c.b16 %v6025, %v6023
      %v6080 = vpack.c.b16 %v6028, %v6026
      %v6081 = vpack.c.b16 %v6029, %v6027
      %v6082 = vpack.c.b16 %v6032, %v6030
      %v6083 = vpack.c.b16 %v6033, %v6031
      %v6084 = vpack.c.b16 %v6036, %v6034
      %v6085 = vpack.c.b16 %v6037, %v6035
      %v6086 = vpack.c.b16 %v6040, %v6038
      %v6087 = vpack.c.b16 %v6041, %v6039
      %v6088 = vpack.c.b16 %v6044, %v6042
      %v6089 = vpack.c.b16 %v6045, %v6043
      %v6090 = vpack.c.b16 %v6048, %v6046
      %v6091 = vpack.c.b16 %v6049, %v6047
      %v6092 = vpack.c.b16 %v6052, %v6050
      %v6093 = vpack.c.b16 %v6053, %v6051
      %v6094 = vpack.c.b16 %v6056, %v6054
      %v6095 = vpack.c.b16 %v6057, %v6055
      %v6096 = vpack.c.b16 %v6060, %v6058
      %v6097 = vpack.c.b16 %v6061, %v6059
      %v6135 = vsel %vm5799, %v5452, 0
      %v6138 = vsel %vm5799, %v5455, 0
      %v6141 = vsel %vm5799, %v5458, 0
      %v6144 = vsel %vm5799, %v5461, 0
      %6146 = vmatprep.subr.bf16.mxu0 %v6063
      %6147 = vmatpush1.bf16.msra.mxu0 %v6062
      %6148 = vmatprep.subr.bf16.mxu0 %v6065
      %6149 = vmatpush1.bf16.msra.mxu0 %v6064
      %6150 = vmatprep.subr.bf16.mxu0 %v6067
      %6151 = vmatpush1.bf16.msra.mxu0 %v6066
      %6152 = vmatprep.subr.bf16.mxu0 %v6069
      %6153 = vmatpush1.bf16.msra.mxu0 %v6068
      %6154 = vmatprep.subr.bf16.mxu0 %v6071
      %6155 = vmatpush1.bf16.msra.mxu0 %v6070
      %6156 = vmatprep.subr.bf16.mxu0 %v6073
      %6157 = vmatpush1.bf16.msra.mxu0 %v6072
      %6158 = vmatprep.subr.bf16.mxu0 %v6075
      %6159 = vmatpush1.bf16.msra.mxu0 %v6074
      %6160 = vmatprep.subr.bf16.mxu0 %v6077
      %6161 = vmatpush1.bf16.msra.mxu0 %v6076
      %6162 = vmatprep.subr.bf16.mxu0 %v6079
      %6163 = vmatpush1.bf16.msra.mxu0 %v6078
      %6164 = vmatprep.subr.bf16.mxu0 %v6081
      %6165 = vmatpush1.bf16.msra.mxu0 %v6080
      %6166 = vmatprep.subr.bf16.mxu0 %v6083
      %6167 = vmatpush1.bf16.msra.mxu0 %v6082
      %6168 = vmatprep.subr.bf16.mxu0 %v6085
      %6169 = vmatpush1.bf16.msra.mxu0 %v6084
      %6170 = vmatprep.subr.bf16.mxu0 %v6087
      %6171 = vmatpush1.bf16.msra.mxu0 %v6086
      %6172 = vmatprep.subr.bf16.mxu0 %v6089
      %6173 = vmatpush1.bf16.msra.mxu0 %v6088
      %6174 = vmatprep.subr.bf16.mxu0 %v6091
      %6175 = vmatpush1.bf16.msra.mxu0 %v6090
      %6176 = vmatprep.subr.bf16.mxu0 %v6093
      %6177 = vmatpush1.bf16.msra.mxu0 %v6092
      %6178 = vmatprep.mubr.bf16.mxu0 %v5451
      %6179 = vmatmul.mubr.bf16.gmra.mrb[0].mxu0 %v5450
      %v6180 = vpop.f32.mrb[0].mxu0
      %v6181 = vadd.f32 %v5918, %v6180
      %v6182 = vpop.f32.mrb[0].mxu0
      %v6183 = vadd.f32 %v5920, %v6182
      %v6184 = vpop.f32.mrb[0].mxu0
      %v6185 = vadd.f32 %v5922, %v6184
      %v6186 = vpop.f32.mrb[0].mxu0
      %v6187 = vadd.f32 %v5924, %v6186
      %6188 = vmatprep.mubr.bf16.mxu0 %v5454
      %6189 = vmatmul.mubr.bf16.gmra.mrb[0].mxu0 %v5453
      %v6190 = vpop.f32.mrb[0].mxu0
      %v6191 = vadd.f32 %v5928, %v6190
      %v6192 = vpop.f32.mrb[0].mxu0
      %v6193 = vadd.f32 %v5930, %v6192
      %v6194 = vpop.f32.mrb[0].mxu0
      %v6195 = vadd.f32 %v5932, %v6194
      %v6196 = vpop.f32.mrb[0].mxu0
      %v6197 = vadd.f32 %v5934, %v6196
      %6198 = vmatprep.mubr.bf16.mxu0 %v5457
      %6199 = vmatmul.mubr.bf16.gmra.mrb[0].mxu0 %v5456
      %v6200 = vpop.f32.mrb[0].mxu0
      %v6201 = vadd.f32 %v5938, %v6200
      %v6202 = vpop.f32.mrb[0].mxu0
      %v6203 = vadd.f32 %v5940, %v6202
      %v6204 = vpop.f32.mrb[0].mxu0
      %v6205 = vadd.f32 %v5942, %v6204
      %v6206 = vpop.f32.mrb[0].mxu0
      %v6207 = vadd.f32 %v5944, %v6206
      %6208 = vmatprep.mubr.bf16.mxu0 %v5460
      %6209 = vmatmul.mubr.bf16.gmra.mrb[0].mxu0 %v5459
      %v6210 = vpop.f32.mrb[0].mxu0
      %v6211 = vadd.f32 %v5948, %v6210
      %v6212 = vpop.f32.mrb[0].mxu0
      %v6213 = vadd.f32 %v5950, %v6212
      %v6214 = vpop.f32.mrb[0].mxu0
      %v6215 = vpop.f32.mrb[0].mxu0
      %6216 = vdwg.mxu0
      %6217 = vmatprep.subr.bf16.mxu0 %v6095
      %6218 = vmatpush1.bf16.msra.mxu0 %v6094
      %6219 = vmatprep.subr.bf16.mxu0 %v6097
      %6220 = vmatpush1.bf16.msra.mxu0 %v6096
      %6221 = vmatprep.subr.bf16.mxu0 0
      %6222 = vmatpush1.bf16.msra.mxu0 0
      %6223 = vmatprep.subr.bf16.mxu0 0
      %6224 = vmatpush1.bf16.msra.mxu0 0
      %6225 = vmatprep.subr.bf16.mxu0 0
      %6226 = vmatpush1.bf16.msra.mxu0 0
      %6227 = vmatprep.subr.bf16.mxu0 0
      %6228 = vmatpush1.bf16.msra.mxu0 0
      %6229 = vmatprep.subr.bf16.mxu0 0
      %6230 = vmatpush1.bf16.msra.mxu0 0
      %6231 = vmatprep.subr.bf16.mxu0 0
      %6232 = vmatpush1.bf16.msra.mxu0 0
      %6233 = vmatprep.subr.bf16.mxu0 0
      %6234 = vmatpush1.bf16.msra.mxu0 0
      %6235 = vmatprep.subr.bf16.mxu0 0
      %6236 = vmatpush1.bf16.msra.mxu0 0
      %6237 = vmatprep.subr.bf16.mxu0 0
      %6238 = vmatpush1.bf16.msra.mxu0 0
      %6239 = vmatprep.subr.bf16.mxu0 0
      %6240 = vmatpush1.bf16.msra.mxu0 0
      %6241 = vmatprep.subr.bf16.mxu0 0
      %6242 = vmatpush1.bf16.msra.mxu0 0
      %6243 = vmatprep.subr.bf16.mxu0 0
      %6244 = vmatpush1.bf16.msra.mxu0 0
      %6245 = vmatprep.subr.bf16.mxu0 0
      %6246 = vmatpush1.bf16.msra.mxu0 0
      %6247 = vmatprep.subr.bf16.mxu0 0
      %6248 = vmatpush1.bf16.msra.mxu0 0
      %6249 = vmatprep.mubr.bf16.mxu0 0
      %6250 = vmatmul.mubr.bf16.gmra.mrb[0].mxu0 %v6135
      %v6251 = vpop.f32.mrb[0].mxu0
      %v6252 = vadd.f32 %v6181, %v6251
      %v6253 = vpop.f32.mrb[0].mxu0
      %v6254 = vadd.f32 %v6183, %v6253
      %v6255 = vpop.f32.mrb[0].mxu0
      %v6256 = vadd.f32 %v6185, %v6255
      %v6257 = vpop.f32.mrb[0].mxu0
      %v6258 = vadd.f32 %v6187, %v6257
      %6259 = vmatprep.mubr.bf16.mxu0 0
      %6260 = vmatmul.mubr.bf16.gmra.mrb[0].mxu0 %v6138
      %v6261 = vpop.f32.mrb[0].mxu0
      %v6262 = vadd.f32 %v6191, %v6261
      %v6263 = vpop.f32.mrb[0].mxu0
      %v6264 = vadd.f32 %v6193, %v6263
      %v6265 = vpop.f32.mrb[0].mxu0
      %v6266 = vadd.f32 %v6195, %v6265
      %v6267 = vpop.f32.mrb[0].mxu0
      %v6268 = vadd.f32 %v6197, %v6267
      %6269 = vmatprep.mubr.bf16.mxu0 0
      %6270 = vmatmul.mubr.bf16.gmra.mrb[0].mxu0 %v6141
      %v6271 = vpop.f32.mrb[0].mxu0
      %v6272 = vadd.f32 %v6201, %v6271
      %v6273 = vpop.f32.mrb[0].mxu0
      %v6274 = vadd.f32 %v6203, %v6273
      %v6275 = vpop.f32.mrb[0].mxu0
      %v6276 = vadd.f32 %v6205, %v6275
      %v6277 = vpop.f32.mrb[0].mxu0
      %v6278 = vadd.f32 %v6207, %v6277
      %6279 = vmatprep.mubr.bf16.mxu0 0
      %6280 = vmatmul.mubr.bf16.gmra.mrb[0].mxu0 %v6144
      %v6281 = vpop.f32.mrb[0].mxu0
      %v6282 = vadd.f32 %v6211, %v6281
      %v6283 = vpop.f32.mrb[0].mxu0
      %v6284 = vadd.f32 %v6213, %v6283
      %v6285 = vpop.f32.mrb[0].mxu0
      %v6286 = vpop.f32.mrb[0].mxu0
      %6287 = vdwg.mxu0
      %s6288 = scalar_lea.vmem %s5, 576
      %v6289 = vld [vmem:[%s6288] sm:$0xff]
      %v6290 = vld [vmem:[%s6288 + $0x8] sm:$0xff]
      %v6291 = vld [vmem:[%s6288 + $0x10] sm:$0xff]
      %v6292 = vld [vmem:[%s6288 + $0x18] sm:$0xff]
      %v6293 = vld [vmem:[%s6288 + $0x20] sm:$0xff]
      %v6294 = vld [vmem:[%s6288 + $0x28] sm:$0xff]
      %v6295 = vld [vmem:[%s6288 + $0x30] sm:$0xff]
      %v6296 = vld [vmem:[%s6288 + $0x38] sm:$0xff]
      %v6297 = vld [vmem:[%s6288 + $0x40] sm:$0xff]
      %v6298 = vld [vmem:[%s6288 + $0x48] sm:$0xff]
      %v6299 = vld [vmem:[%s6288 + $0x50] sm:$0xff]
      %v6300 = vld [vmem:[%s6288 + $0x58] sm:$0xff]
      %v6301 = vld [vmem:[%s6288 + $0x60] sm:$0xff]
      %v6302 = vld [vmem:[%s6288 + $0x68] sm:$0xff]
      %v6303 = vld [vmem:[%s6288 + $0x70] sm:$0xff]
      %v6304 = vld [vmem:[%s6288 + $0x78] sm:$0xff]
      %v6305 = vld [vmem:[%s6288 + $0x80] sm:$0xff]
      %v6306 = vld [vmem:[%s6288 + $0x88] sm:$0xff]
      %v6307 = vld [vmem:[%s6288 + $0x90] sm:$0xff]
      %v6308 = vld [vmem:[%s6288 + $0x98] sm:$0xff]
      %v6309 = vld [vmem:[%s6288 + $0xa0] sm:$0xff]
      %v6310 = vld [vmem:[%s6288 + $0xa8] sm:$0xff]
      %v6311 = vld [vmem:[%s6288 + $0xb0] sm:$0xff]
      %v6312 = vld [vmem:[%s6288 + $0xb8] sm:$0xff]
      %v6313 = vld [vmem:[%s6288 + $0xc0] sm:$0xff]
      %v6314 = vld [vmem:[%s6288 + $0xc8] sm:$0xff]
      %v6315 = vld [vmem:[%s6288 + $0xd0] sm:$0xff]
      %v6316 = vld [vmem:[%s6288 + $0xd8] sm:$0xff]
      %v6317 = vld [vmem:[%s6288 + $0xe0] sm:$0xff]
      %v6318 = vld [vmem:[%s6288 + $0xe8] sm:$0xff]
      %v6319 = vld [vmem:[%s6288 + $0xf0] sm:$0xff]
      %v6320 = vld [vmem:[%s6288 + $0xf8] sm:$0xff]
      %v6321 = vld [vmem:[%s6288 + $0x100] sm:$0xff]
      %v6322 = vld [vmem:[%s6288 + $0x108] sm:$0xff]
      %v6323 = vld [vmem:[%s6288 + $0x110] sm:$0xff]
      %v6324 = vld [vmem:[%s6288 + $0x118] sm:$0xff]
      %v6361 = vunpack.c.l.b16 %v6289
      %v6362 = vunpack.c.h.b16 %v6289
      %v6363 = vunpack.c.l.b16 %v6290
      %v6364 = vunpack.c.h.b16 %v6290
      %v6365 = vunpack.c.l.b16 %v6291
      %v6366 = vunpack.c.h.b16 %v6291
      %v6367 = vunpack.c.l.b16 %v6292
      %v6368 = vunpack.c.h.b16 %v6292
      %v6369 = vunpack.c.l.b16 %v6293
      %v6370 = vunpack.c.h.b16 %v6293
      %v6371 = vunpack.c.l.b16 %v6294
      %v6372 = vunpack.c.h.b16 %v6294
      %v6373 = vunpack.c.l.b16 %v6295
      %v6374 = vunpack.c.h.b16 %v6295
      %v6375 = vunpack.c.l.b16 %v6296
      %v6376 = vunpack.c.h.b16 %v6296
      %v6377 = vunpack.c.l.b16 %v6297
      %v6378 = vunpack.c.h.b16 %v6297
      %v6379 = vunpack.c.l.b16 %v6298
      %v6380 = vunpack.c.h.b16 %v6298
      %v6381 = vunpack.c.l.b16 %v6299
      %v6382 = vunpack.c.h.b16 %v6299
      %v6383 = vunpack.c.l.b16 %v6300
      %v6384 = vunpack.c.h.b16 %v6300
      %v6385 = vunpack.c.l.b16 %v6301
      %v6386 = vunpack.c.h.b16 %v6301
      %v6387 = vunpack.c.l.b16 %v6302
      %v6388 = vunpack.c.h.b16 %v6302
      %v6389 = vunpack.c.l.b16 %v6303
      %v6390 = vunpack.c.h.b16 %v6303
      %v6391 = vunpack.c.l.b16 %v6304
      %v6392 = vunpack.c.h.b16 %v6304
      %v6393 = vunpack.c.l.b16 %v6305
      %v6394 = vunpack.c.h.b16 %v6305
      %v6395 = vunpack.c.l.b16 %v6306
      %v6396 = vunpack.c.h.b16 %v6306
      %v6397 = vunpack.c.l.b16 %v6307
      %v6398 = vunpack.c.h.b16 %v6307
      %v6399 = vunpack.c.l.b16 %v6308
      %v6400 = vunpack.c.h.b16 %v6308
      %v6401 = vunpack.c.l.b16 %v6309
      %v6402 = vunpack.c.h.b16 %v6309
      %v6403 = vunpack.c.l.b16 %v6310
      %v6404 = vunpack.c.h.b16 %v6310
      %v6405 = vunpack.c.l.b16 %v6311
      %v6406 = vunpack.c.h.b16 %v6311
      %v6407 = vunpack.c.l.b16 %v6312
      %v6408 = vunpack.c.h.b16 %v6312
      %v6409 = vunpack.c.l.b16 %v6313
      %v6410 = vunpack.c.h.b16 %v6313
      %v6411 = vunpack.c.l.b16 %v6314
      %v6412 = vunpack.c.h.b16 %v6314
      %v6413 = vunpack.c.l.b16 %v6315
      %v6414 = vunpack.c.h.b16 %v6315
      %v6415 = vunpack.c.l.b16 %v6316
      %v6416 = vunpack.c.h.b16 %v6316
      %v6417 = vunpack.c.l.b16 %v6317
      %v6418 = vunpack.c.h.b16 %v6317
      %v6419 = vunpack.c.l.b16 %v6318
      %v6420 = vunpack.c.h.b16 %v6318
      %v6421 = vunpack.c.l.b16 %v6319
      %v6422 = vunpack.c.h.b16 %v6319
      %v6423 = vunpack.c.l.b16 %v6320
      %v6424 = vunpack.c.h.b16 %v6320
      %v6425 = vunpack.c.l.b16 %v6321
      %v6426 = vunpack.c.h.b16 %v6321
      %v6427 = vunpack.c.l.b16 %v6322
      %v6428 = vunpack.c.h.b16 %v6322
      %v6429 = vunpack.c.l.b16 %v6323
      %v6430 = vunpack.c.h.b16 %v6323
      %v6431 = vunpack.c.l.b16 %v6324
      %v6432 = vunpack.c.h.b16 %v6324
      %v6433 = vpack.c.b16 %v6363, %v6361
      %v6434 = vpack.c.b16 %v6364, %v6362
      %v6435 = vpack.c.b16 %v6367, %v6365
      %v6436 = vpack.c.b16 %v6368, %v6366
      %v6437 = vpack.c.b16 %v6371, %v6369
      %v6438 = vpack.c.b16 %v6372, %v6370
      %v6439 = vpack.c.b16 %v6375, %v6373
      %v6440 = vpack.c.b16 %v6376, %v6374
      %v6441 = vpack.c.b16 %v6379, %v6377
      %v6442 = vpack.c.b16 %v6380, %v6378
      %v6443 = vpack.c.b16 %v6383, %v6381
      %v6444 = vpack.c.b16 %v6384, %v6382
      %v6445 = vpack.c.b16 %v6387, %v6385
      %v6446 = vpack.c.b16 %v6388, %v6386
      %v6447 = vpack.c.b16 %v6391, %v6389
      %v6448 = vpack.c.b16 %v6392, %v6390
      %v6449 = vpack.c.b16 %v6395, %v6393
      %v6450 = vpack.c.b16 %v6396, %v6394
      %v6451 = vpack.c.b16 %v6399, %v6397
      %v6452 = vpack.c.b16 %v6400, %v6398
      %v6453 = vpack.c.b16 %v6403, %v6401
      %v6454 = vpack.c.b16 %v6404, %v6402
      %v6455 = vpack.c.b16 %v6407, %v6405
      %v6456 = vpack.c.b16 %v6408, %v6406
      %v6457 = vpack.c.b16 %v6411, %v6409
      %v6458 = vpack.c.b16 %v6412, %v6410
      %v6459 = vpack.c.b16 %v6415, %v6413
      %v6460 = vpack.c.b16 %v6416, %v6414
      %v6461 = vpack.c.b16 %v6419, %v6417
      %v6462 = vpack.c.b16 %v6420, %v6418
      %v6463 = vpack.c.b16 %v6423, %v6421
      %v6464 = vpack.c.b16 %v6424, %v6422
      %v6465 = vpack.c.b16 %v6427, %v6425
      %v6466 = vpack.c.b16 %v6428, %v6426
      %v6467 = vpack.c.b16 %v6431, %v6429
      %v6468 = vpack.c.b16 %v6432, %v6430
      %v6506 = vsel %vm5799, %v5473, 0
      %v6509 = vsel %vm5799, %v5476, 0
      %v6512 = vsel %vm5799, %v5479, 0
      %v6515 = vsel %vm5799, %v5482, 0
      %6517 = vmatprep.subr.bf16.mxu0 %v6434
      %6518 = vmatpush1.bf16.msra.mxu0 %v6433
      %6519 = vmatprep.subr.bf16.mxu0 %v6436
      %6520 = vmatpush1.bf16.msra.mxu0 %v6435
      %6521 = vmatprep.subr.bf16.mxu0 %v6438
      %6522 = vmatpush1.bf16.msra.mxu0 %v6437
      %6523 = vmatprep.subr.bf16.mxu0 %v6440
      %6524 = vmatpush1.bf16.msra.mxu0 %v6439
      %6525 = vmatprep.subr.bf16.mxu0 %v6442
      %6526 = vmatpush1.bf16.msra.mxu0 %v6441
      %6527 = vmatprep.subr.bf16.mxu0 %v6444
      %6528 = vmatpush1.bf16.msra.mxu0 %v6443
      %6529 = vmatprep.subr.bf16.mxu0 %v6446
      %6530 = vmatpush1.bf16.msra.mxu0 %v6445
      %6531 = vmatprep.subr.bf16.mxu0 %v6448
      %6532 = vmatpush1.bf16.msra.mxu0 %v6447
      %6533 = vmatprep.subr.bf16.mxu0 %v6450
      %6534 = vmatpush1.bf16.msra.mxu0 %v6449
      %6535 = vmatprep.subr.bf16.mxu0 %v6452
      %6536 = vmatpush1.bf16.msra.mxu0 %v6451
      %6537 = vmatprep.subr.bf16.mxu0 %v6454
      %6538 = vmatpush1.bf16.msra.mxu0 %v6453
      %6539 = vmatprep.subr.bf16.mxu0 %v6456
      %6540 = vmatpush1.bf16.msra.mxu0 %v6455
      %6541 = vmatprep.subr.bf16.mxu0 %v6458
      %6542 = vmatpush1.bf16.msra.mxu0 %v6457
      %6543 = vmatprep.subr.bf16.mxu0 %v6460
      %6544 = vmatpush1.bf16.msra.mxu0 %v6459
      %6545 = vmatprep.subr.bf16.mxu0 %v6462
      %6546 = vmatpush1.bf16.msra.mxu0 %v6461
      %6547 = vmatprep.subr.bf16.mxu0 %v6464
      %6548 = vmatpush1.bf16.msra.mxu0 %v6463
      %6549 = vmatprep.mubr.bf16.mxu0 %v5472
      %6550 = vmatmul.mubr.bf16.gmra.mrb[0].mxu0 %v5471
      %v6551 = vpop.f32.mrb[0].mxu0
      %v6552 = vadd.f32 0.0, %v6551
      %v6553 = vpop.f32.mrb[0].mxu0
      %v6554 = vadd.f32 0.0, %v6553
      %v6555 = vpop.f32.mrb[0].mxu0
      %v6556 = vadd.f32 0.0, %v6555
      %v6557 = vpop.f32.mrb[0].mxu0
      %v6558 = vadd.f32 0.0, %v6557
      %6559 = vmatprep.mubr.bf16.mxu0 %v5475
      %6560 = vmatmul.mubr.bf16.gmra.mrb[0].mxu0 %v5474
      %v6561 = vpop.f32.mrb[0].mxu0
      %v6562 = vadd.f32 0.0, %v6561
      %v6563 = vpop.f32.mrb[0].mxu0
      %v6564 = vadd.f32 0.0, %v6563
      %v6565 = vpop.f32.mrb[0].mxu0
      %v6566 = vadd.f32 0.0, %v6565
      %v6567 = vpop.f32.mrb[0].mxu0
      %v6568 = vadd.f32 0.0, %v6567
      %6569 = vmatprep.mubr.bf16.mxu0 %v5478
      %6570 = vmatmul.mubr.bf16.gmra.mrb[0].mxu0 %v5477
      %v6571 = vpop.f32.mrb[0].mxu0
      %v6572 = vadd.f32 0.0, %v6571
      %v6573 = vpop.f32.mrb[0].mxu0
      %v6574 = vadd.f32 0.0, %v6573
      %v6575 = vpop.f32.mrb[0].mxu0
      %v6576 = vadd.f32 0.0, %v6575
      %v6577 = vpop.f32.mrb[0].mxu0
      %v6578 = vadd.f32 0.0, %v6577
      %6579 = vmatprep.mubr.bf16.mxu0 %v5481
      %6580 = vmatmul.mubr.bf16.gmra.mrb[0].mxu0 %v5480
      %v6581 = vpop.f32.mrb[0].mxu0
      %v6582 = vadd.f32 0.0, %v6581
      %v6583 = vpop.f32.mrb[0].mxu0
      %v6584 = vadd.f32 0.0, %v6583
      %v6585 = vpop.f32.mrb[0].mxu0
      %v6586 = vpop.f32.mrb[0].mxu0
      %6587 = vdwg.mxu0
      %6588 = vmatprep.subr.bf16.mxu0 %v6466
      %6589 = vmatpush1.bf16.msra.mxu0 %v6465
      %6590 = vmatprep.subr.bf16.mxu0 %v6468
      %6591 = vmatpush1.bf16.msra.mxu0 %v6467
      %6592 = vmatprep.subr.bf16.mxu0 0
      %6593 = vmatpush1.bf16.msra.mxu0 0
      %6594 = vmatprep.subr.bf16.mxu0 0
      %6595 = vmatpush1.bf16.msra.mxu0 0
      %6596 = vmatprep.subr.bf16.mxu0 0
      %6597 = vmatpush1.bf16.msra.mxu0 0
      %6598 = vmatprep.subr.bf16.mxu0 0
      %6599 = vmatpush1.bf16.msra.mxu0 0
      %6600 = vmatprep.subr.bf16.mxu0 0
      %6601 = vmatpush1.bf16.msra.mxu0 0
      %6602 = vmatprep.subr.bf16.mxu0 0
      %6603 = vmatpush1.bf16.msra.mxu0 0
      %6604 = vmatprep.subr.bf16.mxu0 0
      %6605 = vmatpush1.bf16.msra.mxu0 0
      %6606 = vmatprep.subr.bf16.mxu0 0
      %6607 = vmatpush1.bf16.msra.mxu0 0
      %6608 = vmatprep.subr.bf16.mxu0 0
      %6609 = vmatpush1.bf16.msra.mxu0 0
      %6610 = vmatprep.subr.bf16.mxu0 0
      %6611 = vmatpush1.bf16.msra.mxu0 0
      %6612 = vmatprep.subr.bf16.mxu0 0
      %6613 = vmatpush1.bf16.msra.mxu0 0
      %6614 = vmatprep.subr.bf16.mxu0 0
      %6615 = vmatpush1.bf16.msra.mxu0 0
      %6616 = vmatprep.subr.bf16.mxu0 0
      %6617 = vmatpush1.bf16.msra.mxu0 0
      %6618 = vmatprep.subr.bf16.mxu0 0
      %6619 = vmatpush1.bf16.msra.mxu0 0
      %6620 = vmatprep.mubr.bf16.mxu0 0
      %6621 = vmatmul.mubr.bf16.gmra.mrb[0].mxu0 %v6506
      %v6622 = vpop.f32.mrb[0].mxu0
      %v6623 = vadd.f32 %v6552, %v6622
      %v6624 = vpop.f32.mrb[0].mxu0
      %v6625 = vadd.f32 %v6554, %v6624
      %v6626 = vpop.f32.mrb[0].mxu0
      %v6627 = vadd.f32 %v6556, %v6626
      %v6628 = vpop.f32.mrb[0].mxu0
      %v6629 = vadd.f32 %v6558, %v6628
      %6630 = vmatprep.mubr.bf16.mxu0 0
      %6631 = vmatmul.mubr.bf16.gmra.mrb[0].mxu0 %v6509
      %v6632 = vpop.f32.mrb[0].mxu0
      %v6633 = vadd.f32 %v6562, %v6632
      %v6634 = vpop.f32.mrb[0].mxu0
      %v6635 = vadd.f32 %v6564, %v6634
      %v6636 = vpop.f32.mrb[0].mxu0
      %v6637 = vadd.f32 %v6566, %v6636
      %v6638 = vpop.f32.mrb[0].mxu0
      %v6639 = vadd.f32 %v6568, %v6638
      %6640 = vmatprep.mubr.bf16.mxu0 0
      %6641 = vmatmul.mubr.bf16.gmra.mrb[0].mxu0 %v6512
      %v6642 = vpop.f32.mrb[0].mxu0
      %v6643 = vadd.f32 %v6572, %v6642
      %v6644 = vpop.f32.mrb[0].mxu0
      %v6645 = vadd.f32 %v6574, %v6644
      %v6646 = vpop.f32.mrb[0].mxu0
      %v6647 = vadd.f32 %v6576, %v6646
      %v6648 = vpop.f32.mrb[0].mxu0
      %v6649 = vadd.f32 %v6578, %v6648
      %6650 = vmatprep.mubr.bf16.mxu0 0
      %6651 = vmatmul.mubr.bf16.gmra.mrb[0].mxu0 %v6515
      %v6652 = vpop.f32.mrb[0].mxu0
      %v6653 = vadd.f32 %v6582, %v6652
      %v6654 = vpop.f32.mrb[0].mxu0
      %v6655 = vadd.f32 %v6584, %v6654
      %v6656 = vpop.f32.mrb[0].mxu0
      %v6657 = vpop.f32.mrb[0].mxu0
      %6658 = vdwg.mxu0
      %v6659 = vadd.f32 %v6252, %v6623
      %v6660 = vadd.f32 %v6254, %v6625
      %v6661 = vadd.f32 %v6256, %v6627
      %v6662 = vadd.f32 %v6258, %v6629
      %v6663 = vadd.f32 %v6262, %v6633
      %v6664 = vadd.f32 %v6264, %v6635
      %v6665 = vadd.f32 %v6266, %v6637
      %v6666 = vadd.f32 %v6268, %v6639
      %v6667 = vadd.f32 %v6272, %v6643
      %v6668 = vadd.f32 %v6274, %v6645
      %v6669 = vadd.f32 %v6276, %v6647
      %v6670 = vadd.f32 %v6278, %v6649
      %v6671 = vadd.f32 %v6282, %v6653
      %v6672 = vadd.f32 %v6284, %v6655
      %s6673 = scalar_lea.vmem %s5, 864
      %v6674 = vld [vmem:[%s6673] sm:$0xff]
      %v6675 = vld [vmem:[%s6673 + $0x8] sm:$0xff]
      %v6676 = vld [vmem:[%s6673 + $0x10] sm:$0xff]
      %v6677 = vld [vmem:[%s6673 + $0x18] sm:$0xff]
      %v6678 = vld [vmem:[%s6673 + $0x20] sm:$0xff]
      %v6679 = vld [vmem:[%s6673 + $0x28] sm:$0xff]
      %v6680 = vld [vmem:[%s6673 + $0x30] sm:$0xff]
      %v6681 = vld [vmem:[%s6673 + $0x38] sm:$0xff]
      %v6682 = vld [vmem:[%s6673 + $0x40] sm:$0xff]
      %v6683 = vld [vmem:[%s6673 + $0x48] sm:$0xff]
      %v6684 = vld [vmem:[%s6673 + $0x50] sm:$0xff]
      %v6685 = vld [vmem:[%s6673 + $0x58] sm:$0xff]
      %v6686 = vld [vmem:[%s6673 + $0x60] sm:$0xff]
      %v6687 = vld [vmem:[%s6673 + $0x68] sm:$0xff]
      %v6688 = vld [vmem:[%s6673 + $0x70] sm:$0xff]
      %v6689 = vld [vmem:[%s6673 + $0x78] sm:$0xff]
      %v6690 = vld [vmem:[%s6673 + $0x80] sm:$0xff]
      %v6691 = vld [vmem:[%s6673 + $0x88] sm:$0xff]
      %v6692 = vld [vmem:[%s6673 + $0x90] sm:$0xff]
      %v6693 = vld [vmem:[%s6673 + $0x98] sm:$0xff]
      %v6694 = vld [vmem:[%s6673 + $0xa0] sm:$0xff]
      %v6695 = vld [vmem:[%s6673 + $0xa8] sm:$0xff]
      %v6696 = vld [vmem:[%s6673 + $0xb0] sm:$0xff]
      %v6697 = vld [vmem:[%s6673 + $0xb8] sm:$0xff]
      %v6698 = vld [vmem:[%s6673 + $0xc0] sm:$0xff]
      %v6699 = vld [vmem:[%s6673 + $0xc8] sm:$0xff]
      %v6700 = vld [vmem:[%s6673 + $0xd0] sm:$0xff]
      %v6701 = vld [vmem:[%s6673 + $0xd8] sm:$0xff]
      %v6702 = vld [vmem:[%s6673 + $0xe0] sm:$0xff]
      %v6703 = vld [vmem:[%s6673 + $0xe8] sm:$0xff]
      %v6704 = vld [vmem:[%s6673 + $0xf0] sm:$0xff]
      %v6705 = vld [vmem:[%s6673 + $0xf8] sm:$0xff]
      %v6706 = vld [vmem:[%s6673 + $0x100] sm:$0xff]
      %v6707 = vld [vmem:[%s6673 + $0x108] sm:$0xff]
      %v6708 = vld [vmem:[%s6673 + $0x110] sm:$0xff]
      %v6709 = vld [vmem:[%s6673 + $0x118] sm:$0xff]
      %v6722 = vrot.slane %v5480, 4
      %v6723 = vrot.slane %v5483, 4
      %v6724 = vsel %vm5589, %v6722, %v6723
      %v6725 = vrot.slane %v5481, 4
      %v6726 = vrot.slane %v5484, 4
      %v6727 = vsel %vm5589, %v6725, %v6726
      %v6728 = vrot.slane %v5482, 4
      %v6729 = vrot.slane %v5485, 4
      %v6730 = vsel %vm5589, %v6728, %v6729
      %v6731 = vrot.slane %v5486, 4
      %v6732 = vsel %vm5589, %v6723, %v6731
      %v6733 = vrot.slane %v5487, 4
      %v6734 = vsel %vm5589, %v6726, %v6733
      %v6735 = vrot.slane %v5488, 4
      %v6736 = vsel %vm5589, %v6729, %v6735
      %v6737 = vrot.slane %v5489, 4
      %v6738 = vsel %vm5589, %v6731, %v6737
      %v6739 = vrot.slane %v5490, 4
      %v6740 = vsel %vm5589, %v6733, %v6739
      %v6741 = vrot.slane %v5491, 4
      %v6742 = vsel %vm5589, %v6735, %v6741
      %v6787 = vunpack.c.l.b16 %v6674
      %v6788 = vunpack.c.h.b16 %v6674
      %v6789 = vunpack.c.l.b16 %v6675
      %v6790 = vunpack.c.h.b16 %v6675
      %v6791 = vunpack.c.l.b16 %v6676
      %v6792 = vunpack.c.h.b16 %v6676
      %v6793 = vunpack.c.l.b16 %v6677
      %v6794 = vunpack.c.h.b16 %v6677
      %v6795 = vunpack.c.l.b16 %v6678
      %v6796 = vunpack.c.h.b16 %v6678
      %v6797 = vunpack.c.l.b16 %v6679
      %v6798 = vunpack.c.h.b16 %v6679
      %v6799 = vunpack.c.l.b16 %v6680
      %v6800 = vunpack.c.h.b16 %v6680
      %v6801 = vunpack.c.l.b16 %v6681
      %v6802 = vunpack.c.h.b16 %v6681
      %v6803 = vunpack.c.l.b16 %v6682
      %v6804 = vunpack.c.h.b16 %v6682
      %v6805 = vunpack.c.l.b16 %v6683
      %v6806 = vunpack.c.h.b16 %v6683
      %v6807 = vunpack.c.l.b16 %v6684
      %v6808 = vunpack.c.h.b16 %v6684
      %v6809 = vunpack.c.l.b16 %v6685
      %v6810 = vunpack.c.h.b16 %v6685
      %v6811 = vunpack.c.l.b16 %v6686
      %v6812 = vunpack.c.h.b16 %v6686
      %v6813 = vunpack.c.l.b16 %v6687
      %v6814 = vunpack.c.h.b16 %v6687
      %v6815 = vunpack.c.l.b16 %v6688
      %v6816 = vunpack.c.h.b16 %v6688
      %v6817 = vunpack.c.l.b16 %v6689
      %v6818 = vunpack.c.h.b16 %v6689
      %v6819 = vunpack.c.l.b16 %v6690
      %v6820 = vunpack.c.h.b16 %v6690
      %v6821 = vunpack.c.l.b16 %v6691
      %v6822 = vunpack.c.h.b16 %v6691
      %v6823 = vunpack.c.l.b16 %v6692
      %v6824 = vunpack.c.h.b16 %v6692
      %v6825 = vunpack.c.l.b16 %v6693
      %v6826 = vunpack.c.h.b16 %v6693
      %v6827 = vunpack.c.l.b16 %v6694
      %v6828 = vunpack.c.h.b16 %v6694
      %v6829 = vunpack.c.l.b16 %v6695
      %v6830 = vunpack.c.h.b16 %v6695
      %v6831 = vunpack.c.l.b16 %v6696
      %v6832 = vunpack.c.h.b16 %v6696
      %v6833 = vunpack.c.l.b16 %v6697
      %v6834 = vunpack.c.h.b16 %v6697
      %v6835 = vunpack.c.l.b16 %v6698
      %v6836 = vunpack.c.h.b16 %v6698
      %v6837 = vunpack.c.l.b16 %v6699
      %v6838 = vunpack.c.h.b16 %v6699
      %v6839 = vunpack.c.l.b16 %v6700
      %v6840 = vunpack.c.h.b16 %v6700
      %v6841 = vunpack.c.l.b16 %v6701
      %v6842 = vunpack.c.h.b16 %v6701
      %v6843 = vunpack.c.l.b16 %v6702
      %v6844 = vunpack.c.h.b16 %v6702
      %v6845 = vunpack.c.l.b16 %v6703
      %v6846 = vunpack.c.h.b16 %v6703
      %v6847 = vunpack.c.l.b16 %v6704
      %v6848 = vunpack.c.h.b16 %v6704
      %v6849 = vunpack.c.l.b16 %v6705
      %v6850 = vunpack.c.h.b16 %v6705
      %v6851 = vunpack.c.l.b16 %v6706
      %v6852 = vunpack.c.h.b16 %v6706
      %v6853 = vunpack.c.l.b16 %v6707
      %v6854 = vunpack.c.h.b16 %v6707
      %v6855 = vunpack.c.l.b16 %v6708
      %v6856 = vunpack.c.h.b16 %v6708
      %v6857 = vunpack.c.l.b16 %v6709
      %v6858 = vunpack.c.h.b16 %v6709
      %v6859 = vpack.c.b16 %v6789, %v6787
      %v6860 = vpack.c.b16 %v6790, %v6788
      %v6861 = vpack.c.b16 %v6793, %v6791
      %v6862 = vpack.c.b16 %v6794, %v6792
      %v6863 = vpack.c.b16 %v6797, %v6795
      %v6864 = vpack.c.b16 %v6798, %v6796
      %v6865 = vpack.c.b16 %v6801, %v6799
      %v6866 = vpack.c.b16 %v6802, %v6800
      %v6867 = vpack.c.b16 %v6805, %v6803
      %v6868 = vpack.c.b16 %v6806, %v6804
      %v6869 = vpack.c.b16 %v6809, %v6807
      %v6870 = vpack.c.b16 %v6810, %v6808
      %v6871 = vpack.c.b16 %v6813, %v6811
      %v6872 = vpack.c.b16 %v6814, %v6812
      %v6873 = vpack.c.b16 %v6817, %v6815
      %v6874 = vpack.c.b16 %v6818, %v6816
      %v6875 = vpack.c.b16 %v6821, %v6819
      %v6876 = vpack.c.b16 %v6822, %v6820
      %v6877 = vpack.c.b16 %v6825, %v6823
      %v6878 = vpack.c.b16 %v6826, %v6824
      %v6879 = vpack.c.b16 %v6829, %v6827
      %v6880 = vpack.c.b16 %v6830, %v6828
      %v6881 = vpack.c.b16 %v6833, %v6831
      %v6882 = vpack.c.b16 %v6834, %v6832
      %v6883 = vpack.c.b16 %v6837, %v6835
      %v6884 = vpack.c.b16 %v6838, %v6836
      %v6885 = vpack.c.b16 %v6841, %v6839
      %v6886 = vpack.c.b16 %v6842, %v6840
      %v6887 = vpack.c.b16 %v6845, %v6843
      %v6888 = vpack.c.b16 %v6846, %v6844
      %v6889 = vpack.c.b16 %v6849, %v6847
      %v6890 = vpack.c.b16 %v6850, %v6848
      %v6891 = vpack.c.b16 %v6853, %v6851
      %v6892 = vpack.c.b16 %v6854, %v6852
      %v6893 = vpack.c.b16 %v6857, %v6855
      %v6894 = vpack.c.b16 %v6858, %v6856
      %v6932 = vsel %vm5799, %v6730, 0
      %v6935 = vsel %vm5799, %v6736, 0
      %v6938 = vsel %vm5799, %v6742, 0
      %v6941 = vsel %vm5799, %v6741, 0
      %6943 = vmatprep.subr.bf16.mxu0 %v6860
      %6944 = vmatpush1.bf16.msra.mxu0 %v6859
      %6945 = vmatprep.subr.bf16.mxu0 %v6862
      %6946 = vmatpush1.bf16.msra.mxu0 %v6861
      %6947 = vmatprep.subr.bf16.mxu0 %v6864
      %6948 = vmatpush1.bf16.msra.mxu0 %v6863
      %6949 = vmatprep.subr.bf16.mxu0 %v6866
      %6950 = vmatpush1.bf16.msra.mxu0 %v6865
      %6951 = vmatprep.subr.bf16.mxu0 %v6868
      %6952 = vmatpush1.bf16.msra.mxu0 %v6867
      %6953 = vmatprep.subr.bf16.mxu0 %v6870
      %6954 = vmatpush1.bf16.msra.mxu0 %v6869
      %6955 = vmatprep.subr.bf16.mxu0 %v6872
      %6956 = vmatpush1.bf16.msra.mxu0 %v6871
      %6957 = vmatprep.subr.bf16.mxu0 %v6874
      %6958 = vmatpush1.bf16.msra.mxu0 %v6873
      %6959 = vmatprep.subr.bf16.mxu0 %v6876
      %6960 = vmatpush1.bf16.msra.mxu0 %v6875
      %6961 = vmatprep.subr.bf16.mxu0 %v6878
      %6962 = vmatpush1.bf16.msra.mxu0 %v6877
      %6963 = vmatprep.subr.bf16.mxu0 %v6880
      %6964 = vmatpush1.bf16.msra.mxu0 %v6879
      %6965 = vmatprep.subr.bf16.mxu0 %v6882
      %6966 = vmatpush1.bf16.msra.mxu0 %v6881
      %6967 = vmatprep.subr.bf16.mxu0 %v6884
      %6968 = vmatpush1.bf16.msra.mxu0 %v6883
      %6969 = vmatprep.subr.bf16.mxu0 %v6886
      %6970 = vmatpush1.bf16.msra.mxu0 %v6885
      %6971 = vmatprep.subr.bf16.mxu0 %v6888
      %6972 = vmatpush1.bf16.msra.mxu0 %v6887
      %6973 = vmatprep.subr.bf16.mxu0 %v6890
      %6974 = vmatpush1.bf16.msra.mxu0 %v6889
      %6975 = vmatprep.mubr.bf16.mxu0 %v6727
      %6976 = vmatmul.mubr.bf16.gmra.mrb[0].mxu0 %v6724
      %v6977 = vpop.f32.mrb[0].mxu0
      %v6978 = vadd.f32 0.0, %v6977
      %v6979 = vpop.f32.mrb[0].mxu0
      %v6980 = vadd.f32 0.0, %v6979
      %v6981 = vpop.f32.mrb[0].mxu0
      %v6982 = vadd.f32 0.0, %v6981
      %v6983 = vpop.f32.mrb[0].mxu0
      %v6984 = vadd.f32 0.0, %v6983
      %6985 = vmatprep.mubr.bf16.mxu0 %v6734
      %6986 = vmatmul.mubr.bf16.gmra.mrb[0].mxu0 %v6732
      %v6987 = vpop.f32.mrb[0].mxu0
      %v6988 = vadd.f32 0.0, %v6987
      %v6989 = vpop.f32.mrb[0].mxu0
      %v6990 = vadd.f32 0.0, %v6989
      %v6991 = vpop.f32.mrb[0].mxu0
      %v6992 = vadd.f32 0.0, %v6991
      %v6993 = vpop.f32.mrb[0].mxu0
      %v6994 = vadd.f32 0.0, %v6993
      %6995 = vmatprep.mubr.bf16.mxu0 %v6740
      %6996 = vmatmul.mubr.bf16.gmra.mrb[0].mxu0 %v6738
      %v6997 = vpop.f32.mrb[0].mxu0
      %v6998 = vadd.f32 0.0, %v6997
      %v6999 = vpop.f32.mrb[0].mxu0
      %v7000 = vadd.f32 0.0, %v6999
      %v7001 = vpop.f32.mrb[0].mxu0
      %v7002 = vadd.f32 0.0, %v7001
      %v7003 = vpop.f32.mrb[0].mxu0
      %v7004 = vadd.f32 0.0, %v7003
      %7005 = vmatprep.mubr.bf16.mxu0 %v6739
      %7006 = vmatmul.mubr.bf16.gmra.mrb[0].mxu0 %v6737
      %v7007 = vpop.f32.mrb[0].mxu0
      %v7008 = vadd.f32 0.0, %v7007
      %v7009 = vpop.f32.mrb[0].mxu0
      %v7010 = vadd.f32 0.0, %v7009
      %v7011 = vpop.f32.mrb[0].mxu0
      %v7012 = vpop.f32.mrb[0].mxu0
      %7013 = vdwg.mxu0
      %7014 = vmatprep.subr.bf16.mxu0 %v6892
      %7015 = vmatpush1.bf16.msra.mxu0 %v6891
      %7016 = vmatprep.subr.bf16.mxu0 %v6894
      %7017 = vmatpush1.bf16.msra.mxu0 %v6893
      %7018 = vmatprep.subr.bf16.mxu0 0
      %7019 = vmatpush1.bf16.msra.mxu0 0
      %7020 = vmatprep.subr.bf16.mxu0 0
      %7021 = vmatpush1.bf16.msra.mxu0 0
      %7022 = vmatprep.subr.bf16.mxu0 0
      %7023 = vmatpush1.bf16.msra.mxu0 0
      %7024 = vmatprep.subr.bf16.mxu0 0
      %7025 = vmatpush1.bf16.msra.mxu0 0
      %7026 = vmatprep.subr.bf16.mxu0 0
      %7027 = vmatpush1.bf16.msra.mxu0 0
      %7028 = vmatprep.subr.bf16.mxu0 0
      %7029 = vmatpush1.bf16.msra.mxu0 0
      %7030 = vmatprep.subr.bf16.mxu0 0
      %7031 = vmatpush1.bf16.msra.mxu0 0
      %7032 = vmatprep.subr.bf16.mxu0 0
      %7033 = vmatpush1.bf16.msra.mxu0 0
      %7034 = vmatprep.subr.bf16.mxu0 0
      %7035 = vmatpush1.bf16.msra.mxu0 0
      %7036 = vmatprep.subr.bf16.mxu0 0
      %7037 = vmatpush1.bf16.msra.mxu0 0
      %7038 = vmatprep.subr.bf16.mxu0 0
      %7039 = vmatpush1.bf16.msra.mxu0 0
      %7040 = vmatprep.subr.bf16.mxu0 0
      %7041 = vmatpush1.bf16.msra.mxu0 0
      %7042 = vmatprep.subr.bf16.mxu0 0
      %7043 = vmatpush1.bf16.msra.mxu0 0
      %7044 = vmatprep.subr.bf16.mxu0 0
      %7045 = vmatpush1.bf16.msra.mxu0 0
      %7046 = vmatprep.mubr.bf16.mxu0 0
      %7047 = vmatmul.mubr.bf16.gmra.mrb[0].mxu0 %v6932
      %v7048 = vpop.f32.mrb[0].mxu0
      %v7049 = vadd.f32 %v6978, %v7048
      %v7050 = vpop.f32.mrb[0].mxu0
      %v7051 = vadd.f32 %v6980, %v7050
      %v7052 = vpop.f32.mrb[0].mxu0
      %v7053 = vadd.f32 %v6982, %v7052
      %v7054 = vpop.f32.mrb[0].mxu0
      %v7055 = vadd.f32 %v6984, %v7054
      %7056 = vmatprep.mubr.bf16.mxu0 0
      %7057 = vmatmul.mubr.bf16.gmra.mrb[0].mxu0 %v6935
      %v7058 = vpop.f32.mrb[0].mxu0
      %v7059 = vadd.f32 %v6988, %v7058
      %v7060 = vpop.f32.mrb[0].mxu0
      %v7061 = vadd.f32 %v6990, %v7060
      %v7062 = vpop.f32.mrb[0].mxu0
      %v7063 = vadd.f32 %v6992, %v7062
      %v7064 = vpop.f32.mrb[0].mxu0
      %v7065 = vadd.f32 %v6994, %v7064
      %7066 = vmatprep.mubr.bf16.mxu0 0
      %7067 = vmatmul.mubr.bf16.gmra.mrb[0].mxu0 %v6938
      %v7068 = vpop.f32.mrb[0].mxu0
      %v7069 = vadd.f32 %v6998, %v7068
      %v7070 = vpop.f32.mrb[0].mxu0
      %v7071 = vadd.f32 %v7000, %v7070
      %v7072 = vpop.f32.mrb[0].mxu0
      %v7073 = vadd.f32 %v7002, %v7072
      %v7074 = vpop.f32.mrb[0].mxu0
      %v7075 = vadd.f32 %v7004, %v7074
      %7076 = vmatprep.mubr.bf16.mxu0 0
      %7077 = vmatmul.mubr.bf16.gmra.mrb[0].mxu0 %v6941
      %v7078 = vpop.f32.mrb[0].mxu0
      %v7079 = vadd.f32 %v7008, %v7078
      %v7080 = vpop.f32.mrb[0].mxu0
      %v7081 = vadd.f32 %v7010, %v7080
      %v7082 = vpop.f32.mrb[0].mxu0
      %v7083 = vpop.f32.mrb[0].mxu0
      %7084 = vdwg.mxu0
      %v7085 = vadd.f32 %v6659, %v7049
      %v7086 = vadd.f32 %v6660, %v7051
      %v7087 = vadd.f32 %v6661, %v7053
      %v7088 = vadd.f32 %v6662, %v7055
      %v7089 = vadd.f32 %v6663, %v7059
      %v7090 = vadd.f32 %v6664, %v7061
      %v7091 = vadd.f32 %v6665, %v7063
      %v7092 = vadd.f32 %v6666, %v7065
      %v7093 = vadd.f32 %v6667, %v7069
      %v7094 = vadd.f32 %v6668, %v7071
      %v7095 = vadd.f32 %v6669, %v7073
      %v7096 = vadd.f32 %v6670, %v7075
      %v7097 = vadd.f32 %v6671, %v7079
      %v7098 = vadd.f32 %v6672, %v7081
      %s7099 = scalar_lea.vmem %s5, 1152
      %v7100 = vld [vmem:[%s7099] sm:$0xff]
      %v7101 = vld [vmem:[%s7099 + $0x8] sm:$0xff]
      %v7102 = vld [vmem:[%s7099 + $0x10] sm:$0xff]
      %v7103 = vld [vmem:[%s7099 + $0x18] sm:$0xff]
      %v7104 = vld [vmem:[%s7099 + $0x20] sm:$0xff]
      %v7105 = vld [vmem:[%s7099 + $0x28] sm:$0xff]
      %v7106 = vld [vmem:[%s7099 + $0x30] sm:$0xff]
      %v7107 = vld [vmem:[%s7099 + $0x38] sm:$0xff]
      %v7108 = vld [vmem:[%s7099 + $0x40] sm:$0xff]
      %v7109 = vld [vmem:[%s7099 + $0x48] sm:$0xff]
      %v7110 = vld [vmem:[%s7099 + $0x50] sm:$0xff]
      %v7111 = vld [vmem:[%s7099 + $0x58] sm:$0xff]
      %v7112 = vld [vmem:[%s7099 + $0x60] sm:$0xff]
      %v7113 = vld [vmem:[%s7099 + $0x68] sm:$0xff]
      %v7114 = vld [vmem:[%s7099 + $0x70] sm:$0xff]
      %v7115 = vld [vmem:[%s7099 + $0x78] sm:$0xff]
      %v7116 = vld [vmem:[%s7099 + $0x80] sm:$0xff]
      %v7117 = vld [vmem:[%s7099 + $0x88] sm:$0xff]
      %v7118 = vld [vmem:[%s7099 + $0x90] sm:$0xff]
      %v7119 = vld [vmem:[%s7099 + $0x98] sm:$0xff]
      %v7120 = vld [vmem:[%s7099 + $0xa0] sm:$0xff]
      %v7121 = vld [vmem:[%s7099 + $0xa8] sm:$0xff]
      %v7122 = vld [vmem:[%s7099 + $0xb0] sm:$0xff]
      %v7123 = vld [vmem:[%s7099 + $0xb8] sm:$0xff]
      %v7124 = vld [vmem:[%s7099 + $0xc0] sm:$0xff]
      %v7125 = vld [vmem:[%s7099 + $0xc8] sm:$0xff]
      %v7126 = vld [vmem:[%s7099 + $0xd0] sm:$0xff]
      %v7127 = vld [vmem:[%s7099 + $0xd8] sm:$0xff]
      %v7128 = vld [vmem:[%s7099 + $0xe0] sm:$0xff]
      %v7129 = vld [vmem:[%s7099 + $0xe8] sm:$0xff]
      %v7130 = vld [vmem:[%s7099 + $0xf0] sm:$0xff]
      %v7131 = vld [vmem:[%s7099 + $0xf8] sm:$0xff]
      %v7132 = vld [vmem:[%s7099 + $0x100] sm:$0xff]
      %v7133 = vld [vmem:[%s7099 + $0x108] sm:$0xff]
      %v7134 = vld [vmem:[%s7099 + $0x110] sm:$0xff]
      %v7135 = vld [vmem:[%s7099 + $0x118] sm:$0xff]
      %v7172 = vunpack.c.l.b16 %v7100
      %v7173 = vunpack.c.h.b16 %v7100
      %v7174 = vunpack.c.l.b16 %v7101
      %v7175 = vunpack.c.h.b16 %v7101
      %v7176 = vunpack.c.l.b16 %v7102
      %v7177 = vunpack.c.h.b16 %v7102
      %v7178 = vunpack.c.l.b16 %v7103
      %v7179 = vunpack.c.h.b16 %v7103
      %v7180 = vunpack.c.l.b16 %v7104
      %v7181 = vunpack.c.h.b16 %v7104
      %v7182 = vunpack.c.l.b16 %v7105
      %v7183 = vunpack.c.h.b16 %v7105
      %v7184 = vunpack.c.l.b16 %v7106
      %v7185 = vunpack.c.h.b16 %v7106
      %v7186 = vunpack.c.l.b16 %v7107
      %v7187 = vunpack.c.h.b16 %v7107
      %v7188 = vunpack.c.l.b16 %v7108
      %v7189 = vunpack.c.h.b16 %v7108
      %v7190 = vunpack.c.l.b16 %v7109
      %v7191 = vunpack.c.h.b16 %v7109
      %v7192 = vunpack.c.l.b16 %v7110
      %v7193 = vunpack.c.h.b16 %v7110
      %v7194 = vunpack.c.l.b16 %v7111
      %v7195 = vunpack.c.h.b16 %v7111
      %v7196 = vunpack.c.l.b16 %v7112
      %v7197 = vunpack.c.h.b16 %v7112
      %v7198 = vunpack.c.l.b16 %v7113
      %v7199 = vunpack.c.h.b16 %v7113
      %v7200 = vunpack.c.l.b16 %v7114
      %v7201 = vunpack.c.h.b16 %v7114
      %v7202 = vunpack.c.l.b16 %v7115
      %v7203 = vunpack.c.h.b16 %v7115
      %v7204 = vunpack.c.l.b16 %v7116
      %v7205 = vunpack.c.h.b16 %v7116
      %v7206 = vunpack.c.l.b16 %v7117
      %v7207 = vunpack.c.h.b16 %v7117
      %v7208 = vunpack.c.l.b16 %v7118
      %v7209 = vunpack.c.h.b16 %v7118
      %v7210 = vunpack.c.l.b16 %v7119
      %v7211 = vunpack.c.h.b16 %v7119
      %v7212 = vunpack.c.l.b16 %v7120
      %v7213 = vunpack.c.h.b16 %v7120
      %v7214 = vunpack.c.l.b16 %v7121
      %v7215 = vunpack.c.h.b16 %v7121
      %v7216 = vunpack.c.l.b16 %v7122
      %v7217 = vunpack.c.h.b16 %v7122
      %v7218 = vunpack.c.l.b16 %v7123
      %v7219 = vunpack.c.h.b16 %v7123
      %v7220 = vunpack.c.l.b16 %v7124
      %v7221 = vunpack.c.h.b16 %v7124
      %v7222 = vunpack.c.l.b16 %v7125
      %v7223 = vunpack.c.h.b16 %v7125
      %v7224 = vunpack.c.l.b16 %v7126
      %v7225 = vunpack.c.h.b16 %v7126
      %v7226 = vunpack.c.l.b16 %v7127
      %v7227 = vunpack.c.h.b16 %v7127
      %v7228 = vunpack.c.l.b16 %v7128
      %v7229 = vunpack.c.h.b16 %v7128
      %v7230 = vunpack.c.l.b16 %v7129
      %v7231 = vunpack.c.h.b16 %v7129
      %v7232 = vunpack.c.l.b16 %v7130
      %v7233 = vunpack.c.h.b16 %v7130
      %v7234 = vunpack.c.l.b16 %v7131
      %v7235 = vunpack.c.h.b16 %v7131
      %v7236 = vunpack.c.l.b16 %v7132
      %v7237 = vunpack.c.h.b16 %v7132
      %v7238 = vunpack.c.l.b16 %v7133
      %v7239 = vunpack.c.h.b16 %v7133
      %v7240 = vunpack.c.l.b16 %v7134
      %v7241 = vunpack.c.h.b16 %v7134
      %v7242 = vunpack.c.l.b16 %v7135
      %v7243 = vunpack.c.h.b16 %v7135
      %v7244 = vpack.c.b16 %v7174, %v7172
      %v7245 = vpack.c.b16 %v7175, %v7173
      %v7246 = vpack.c.b16 %v7178, %v7176
      %v7247 = vpack.c.b16 %v7179, %v7177
      %v7248 = vpack.c.b16 %v7182, %v7180
      %v7249 = vpack.c.b16 %v7183, %v7181
      %v7250 = vpack.c.b16 %v7186, %v7184
      %v7251 = vpack.c.b16 %v7187, %v7185
      %v7252 = vpack.c.b16 %v7190, %v7188
      %v7253 = vpack.c.b16 %v7191, %v7189
      %v7254 = vpack.c.b16 %v7194, %v7192
      %v7255 = vpack.c.b16 %v7195, %v7193
      %v7256 = vpack.c.b16 %v7198, %v7196
      %v7257 = vpack.c.b16 %v7199, %v7197
      %v7258 = vpack.c.b16 %v7202, %v7200
      %v7259 = vpack.c.b16 %v7203, %v7201
      %v7260 = vpack.c.b16 %v7206, %v7204
      %v7261 = vpack.c.b16 %v7207, %v7205
      %v7262 = vpack.c.b16 %v7210, %v7208
      %v7263 = vpack.c.b16 %v7211, %v7209
      %v7264 = vpack.c.b16 %v7214, %v7212
      %v7265 = vpack.c.b16 %v7215, %v7213
      %v7266 = vpack.c.b16 %v7218, %v7216
      %v7267 = vpack.c.b16 %v7219, %v7217
      %v7268 = vpack.c.b16 %v7222, %v7220
      %v7269 = vpack.c.b16 %v7223, %v7221
      %v7270 = vpack.c.b16 %v7226, %v7224
      %v7271 = vpack.c.b16 %v7227, %v7225
      %v7272 = vpack.c.b16 %v7230, %v7228
      %v7273 = vpack.c.b16 %v7231, %v7229
      %v7274 = vpack.c.b16 %v7234, %v7232
      %v7275 = vpack.c.b16 %v7235, %v7233
      %v7276 = vpack.c.b16 %v7238, %v7236
      %v7277 = vpack.c.b16 %v7239, %v7237
      %v7278 = vpack.c.b16 %v7242, %v7240
      %v7279 = vpack.c.b16 %v7243, %v7241
      %v7317 = vsel %vm5799, %v5494, 0
      %v7320 = vsel %vm5799, %v5497, 0
      %v7323 = vsel %vm5799, %v5500, 0
      %v7326 = vsel %vm5799, %v5503, 0
      %7328 = vmatprep.subr.bf16.mxu0 %v7245
      %7329 = vmatpush1.bf16.msra.mxu0 %v7244
      %7330 = vmatprep.subr.bf16.mxu0 %v7247
      %7331 = vmatpush1.bf16.msra.mxu0 %v7246
      %7332 = vmatprep.subr.bf16.mxu0 %v7249
      %7333 = vmatpush1.bf16.msra.mxu0 %v7248
      %7334 = vmatprep.subr.bf16.mxu0 %v7251
      %7335 = vmatpush1.bf16.msra.mxu0 %v7250
      %7336 = vmatprep.subr.bf16.mxu0 %v7253
      %7337 = vmatpush1.bf16.msra.mxu0 %v7252
      %7338 = vmatprep.subr.bf16.mxu0 %v7255
      %7339 = vmatpush1.bf16.msra.mxu0 %v7254
      %7340 = vmatprep.subr.bf16.mxu0 %v7257
      %7341 = vmatpush1.bf16.msra.mxu0 %v7256
      %7342 = vmatprep.subr.bf16.mxu0 %v7259
      %7343 = vmatpush1.bf16.msra.mxu0 %v7258
      %7344 = vmatprep.subr.bf16.mxu0 %v7261
      %7345 = vmatpush1.bf16.msra.mxu0 %v7260
      %7346 = vmatprep.subr.bf16.mxu0 %v7263
      %7347 = vmatpush1.bf16.msra.mxu0 %v7262
      %7348 = vmatprep.subr.bf16.mxu0 %v7265
      %7349 = vmatpush1.bf16.msra.mxu0 %v7264
      %7350 = vmatprep.subr.bf16.mxu0 %v7267
      %7351 = vmatpush1.bf16.msra.mxu0 %v7266
      %7352 = vmatprep.subr.bf16.mxu0 %v7269
      %7353 = vmatpush1.bf16.msra.mxu0 %v7268
      %7354 = vmatprep.subr.bf16.mxu0 %v7271
      %7355 = vmatpush1.bf16.msra.mxu0 %v7270
      %7356 = vmatprep.subr.bf16.mxu0 %v7273
      %7357 = vmatpush1.bf16.msra.mxu0 %v7272
      %7358 = vmatprep.subr.bf16.mxu0 %v7275
      %7359 = vmatpush1.bf16.msra.mxu0 %v7274
      %7360 = vmatprep.mubr.bf16.mxu0 %v5493
      %7361 = vmatmul.mubr.bf16.gmra.mrb[0].mxu0 %v5492
      %v7362 = vpop.f32.mrb[0].mxu0
      %v7363 = vadd.f32 0.0, %v7362
      %v7364 = vpop.f32.mrb[0].mxu0
      %v7365 = vadd.f32 0.0, %v7364
      %v7366 = vpop.f32.mrb[0].mxu0
      %v7367 = vadd.f32 0.0, %v7366
      %v7368 = vpop.f32.mrb[0].mxu0
      %v7369 = vadd.f32 0.0, %v7368
      %7370 = vmatprep.mubr.bf16.mxu0 %v5496
      %7371 = vmatmul.mubr.bf16.gmra.mrb[0].mxu0 %v5495
      %v7372 = vpop.f32.mrb[0].mxu0
      %v7373 = vadd.f32 0.0, %v7372
      %v7374 = vpop.f32.mrb[0].mxu0
      %v7375 = vadd.f32 0.0, %v7374
      %v7376 = vpop.f32.mrb[0].mxu0
      %v7377 = vadd.f32 0.0, %v7376
      %v7378 = vpop.f32.mrb[0].mxu0
      %v7379 = vadd.f32 0.0, %v7378
      %7380 = vmatprep.mubr.bf16.mxu0 %v5499
      %7381 = vmatmul.mubr.bf16.gmra.mrb[0].mxu0 %v5498
      %v7382 = vpop.f32.mrb[0].mxu0
      %v7383 = vadd.f32 0.0, %v7382
      %v7384 = vpop.f32.mrb[0].mxu0
      %v7385 = vadd.f32 0.0, %v7384
      %v7386 = vpop.f32.mrb[0].mxu0
      %v7387 = vadd.f32 0.0, %v7386
      %v7388 = vpop.f32.mrb[0].mxu0
      %v7389 = vadd.f32 0.0, %v7388
      %7390 = vmatprep.mubr.bf16.mxu0 %v5502
      %7391 = vmatmul.mubr.bf16.gmra.mrb[0].mxu0 %v5501
      %v7392 = vpop.f32.mrb[0].mxu0
      %v7393 = vadd.f32 0.0, %v7392
      %v7394 = vpop.f32.mrb[0].mxu0
      %v7395 = vadd.f32 0.0, %v7394
      %v7396 = vpop.f32.mrb[0].mxu0
      %v7397 = vpop.f32.mrb[0].mxu0
      %7398 = vdwg.mxu0
      %7399 = vmatprep.subr.bf16.mxu0 %v7277
      %7400 = vmatpush1.bf16.msra.mxu0 %v7276
      %7401 = vmatprep.subr.bf16.mxu0 %v7279
      %7402 = vmatpush1.bf16.msra.mxu0 %v7278
      %7403 = vmatprep.subr.bf16.mxu0 0
      %7404 = vmatpush1.bf16.msra.mxu0 0
      %7405 = vmatprep.subr.bf16.mxu0 0
      %7406 = vmatpush1.bf16.msra.mxu0 0
      %7407 = vmatprep.subr.bf16.mxu0 0
      %7408 = vmatpush1.bf16.msra.mxu0 0
      %7409 = vmatprep.subr.bf16.mxu0 0
      %7410 = vmatpush1.bf16.msra.mxu0 0
      %7411 = vmatprep.subr.bf16.mxu0 0
      %7412 = vmatpush1.bf16.msra.mxu0 0
      %7413 = vmatprep.subr.bf16.mxu0 0
      %7414 = vmatpush1.bf16.msra.mxu0 0
      %7415 = vmatprep.subr.bf16.mxu0 0
      %7416 = vmatpush1.bf16.msra.mxu0 0
      %7417 = vmatprep.subr.bf16.mxu0 0
      %7418 = vmatpush1.bf16.msra.mxu0 0
      %7419 = vmatprep.subr.bf16.mxu0 0
      %7420 = vmatpush1.bf16.msra.mxu0 0
      %7421 = vmatprep.subr.bf16.mxu0 0
      %7422 = vmatpush1.bf16.msra.mxu0 0
      %7423 = vmatprep.subr.bf16.mxu0 0
      %7424 = vmatpush1.bf16.msra.mxu0 0
      %7425 = vmatprep.subr.bf16.mxu0 0
      %7426 = vmatpush1.bf16.msra.mxu0 0
      %7427 = vmatprep.subr.bf16.mxu0 0
      %7428 = vmatpush1.bf16.msra.mxu0 0
      %7429 = vmatprep.subr.bf16.mxu0 0
      %7430 = vmatpush1.bf16.msra.mxu0 0
      %7431 = vmatprep.mubr.bf16.mxu0 0
      %7432 = vmatmul.mubr.bf16.gmra.mrb[0].mxu0 %v7317
      %v7433 = vpop.f32.mrb[0].mxu0
      %v7434 = vadd.f32 %v7363, %v7433
      %v7435 = vpop.f32.mrb[0].mxu0
      %v7436 = vadd.f32 %v7365, %v7435
      %v7437 = vpop.f32.mrb[0].mxu0
      %v7438 = vadd.f32 %v7367, %v7437
      %v7439 = vpop.f32.mrb[0].mxu0
      %v7440 = vadd.f32 %v7369, %v7439
      %7441 = vmatprep.mubr.bf16.mxu0 0
      %7442 = vmatmul.mubr.bf16.gmra.mrb[0].mxu0 %v7320
      %v7443 = vpop.f32.mrb[0].mxu0
      %v7444 = vadd.f32 %v7373, %v7443
      %v7445 = vpop.f32.mrb[0].mxu0
      %v7446 = vadd.f32 %v7375, %v7445
      %v7447 = vpop.f32.mrb[0].mxu0
      %v7448 = vadd.f32 %v7377, %v7447
      %v7449 = vpop.f32.mrb[0].mxu0
      %v7450 = vadd.f32 %v7379, %v7449
      %7451 = vmatprep.mubr.bf16.mxu0 0
      %7452 = vmatmul.mubr.bf16.gmra.mrb[0].mxu0 %v7323
      %v7453 = vpop.f32.mrb[0].mxu0
      %v7454 = vadd.f32 %v7383, %v7453
      %v7455 = vpop.f32.mrb[0].mxu0
      %v7456 = vadd.f32 %v7385, %v7455
      %v7457 = vpop.f32.mrb[0].mxu0
      %v7458 = vadd.f32 %v7387, %v7457
      %v7459 = vpop.f32.mrb[0].mxu0
      %v7460 = vadd.f32 %v7389, %v7459
      %7461 = vmatprep.mubr.bf16.mxu0 0
      %7462 = vmatmul.mubr.bf16.gmra.mrb[0].mxu0 %v7326
      %v7463 = vpop.f32.mrb[0].mxu0
      %v7464 = vadd.f32 %v7393, %v7463
      %v7465 = vpop.f32.mrb[0].mxu0
      %v7466 = vadd.f32 %v7395, %v7465
      %v7467 = vpop.f32.mrb[0].mxu0
      %v7468 = vpop.f32.mrb[0].mxu0
      %7469 = vdwg.mxu0
      %v7470 = vadd.f32 %v7085, %v7434
      %v7471 = vadd.f32 %v7086, %v7436
      %v7472 = vadd.f32 %v7087, %v7438
      %v7473 = vadd.f32 %v7088, %v7440
      %v7474 = vadd.f32 %v7089, %v7444
      %v7475 = vadd.f32 %v7090, %v7446
      %v7476 = vadd.f32 %v7091, %v7448
      %v7477 = vadd.f32 %v7092, %v7450
      %v7478 = vadd.f32 %v7093, %v7454
      %v7479 = vadd.f32 %v7094, %v7456
      %v7480 = vadd.f32 %v7095, %v7458
      %v7481 = vadd.f32 %v7096, %v7460
      %v7482 = vadd.f32 %v7097, %v7464
      %v7483 = vadd.f32 %v7098, %v7466
      %v7484 = vld [vmem:[%s6] sm:$0x3]
      %v7486 = vlaneseq
      %v7487 = vshrl.u32 %v7486, 7
      %v7488 = vsub.s32 0, %v7487
      %v7489 = vrot.slane %v7484, %v7488
      %v7490 = vlaneseq
      %v7491 = vshrl.u32 %v7490, 7
      %v7492 = vsub.s32 1, %v7491
      %v7493 = vrot.slane %v7484, %v7492
      %v7496 = vadd.f32 %v7470, %v7489
      %v7497 = vadd.f32 %v7471, %v7493
      %v7498 = vadd.f32 %v7472, %v7489
      %v7499 = vadd.f32 %v7473, %v7493
      %v7500 = vadd.f32 %v7474, %v7489
      %v7501 = vadd.f32 %v7475, %v7493
      %v7502 = vadd.f32 %v7476, %v7489
      %v7503 = vadd.f32 %v7477, %v7493
      %v7504 = vadd.f32 %v7478, %v7489
      %v7505 = vadd.f32 %v7479, %v7493
      %v7506 = vadd.f32 %v7480, %v7489
      %v7507 = vadd.f32 %v7481, %v7493
      %v7508 = vadd.f32 %v7482, %v7489
      %v7509 = vadd.f32 %v7483, %v7493
      %v7510 = vmax.f32 %v7496, 0.0
      %v7511 = vmax.f32 %v7497, 0.0
      %v7512 = vmax.f32 %v7498, 0.0
      %v7513 = vmax.f32 %v7499, 0.0
      %v7514 = vmax.f32 %v7500, 0.0
      %v7515 = vmax.f32 %v7501, 0.0
      %v7516 = vmax.f32 %v7502, 0.0
      %v7517 = vmax.f32 %v7503, 0.0
      %v7518 = vmax.f32 %v7504, 0.0
      %v7519 = vmax.f32 %v7505, 0.0
      %v7520 = vmax.f32 %v7506, 0.0
      %v7521 = vmax.f32 %v7507, 0.0
      %v7522 = vmax.f32 %v7508, 0.0
      %v7523 = vmax.f32 %v7509, 0.0
      %v7524 = vpack.c.bf16 %v7512, %v7510
      %v7525 = vpack.c.bf16 %v7513, %v7511
      %v7526 = vpack.c.bf16 %v7516, %v7514
      %v7527 = vpack.c.bf16 %v7517, %v7515
      %v7528 = vpack.c.bf16 %v7520, %v7518
      %v7529 = vpack.c.bf16 %v7521, %v7519
      %v7530 = vpack.c.bf16 %v7522, %v7522
      %v7531 = vpack.c.bf16 %v7523, %v7523
      %v7532 = vld [vmem:[%s7] sm:$0xf]
      %v7533 = vld [vmem:[%s7 + $0x4] sm:$0xf]
      %v7534 = vld [vmem:[%s7 + $0x8] sm:$0xf]
      %v7535 = vld [vmem:[%s7 + $0xc] sm:$0xf]
      %v7536 = vld [vmem:[%s7 + $0x10] sm:$0xf]
      %v7537 = vld [vmem:[%s7 + $0x14] sm:$0xf]
      %v7538 = vld [vmem:[%s7 + $0x18] sm:$0xf]
      %v7539 = vld [vmem:[%s7 + $0x1c] sm:$0xf]
      %v7540 = vld [vmem:[%s7 + $0x20] sm:$0xf]
      %v7541 = vld [vmem:[%s7 + $0x24] sm:$0xf]
      %v7552 = vunpack.c.l.b16 %v7532
      %v7553 = vunpack.c.l.b16 %v7533
      %v7554 = vunpack.c.l.b16 %v7534
      %v7555 = vunpack.c.l.b16 %v7535
      %v7556 = vunpack.c.l.b16 %v7536
      %v7557 = vunpack.c.l.b16 %v7537
      %v7558 = vunpack.c.l.b16 %v7538
      %v7559 = vunpack.c.l.b16 %v7539
      %v7560 = vunpack.c.l.b16 %v7540
      %v7561 = vunpack.c.l.b16 %v7541
      %v7562 = vpack.c.b16 %v7553, %v7552
      %v7563 = vpack.c.b16 %v7555, %v7554
      %v7564 = vpack.c.b16 %v7557, %v7556
      %v7565 = vpack.c.b16 %v7559, %v7558
      %v7566 = vpack.c.b16 %v7561, %v7560
      %vm7567 = vcmask 457728
      %v7569 = vsel %vm7567, %v7562, 0
      %v7572 = vsel %vm7567, %v7563, 0
      %v7575 = vsel %vm7567, %v7564, 0
      %v7578 = vsel %vm7567, %v7565, 0
      %v7581 = vsel %vm7567, %v7566, 0
      %v7584 = vsel %vm2633, %v7530, 0
      %v7587 = vsel %vm2633, %v7531, 0
      %7589 = vmatprep.subr.bf16.mxu0 %v7525
      %7590 = vmatpush1.bf16.msra.mxu0 %v7524
      %7591 = vmatprep.subr.bf16.mxu0 %v7527
      %7592 = vmatpush1.bf16.msra.mxu0 %v7526
      %7593 = vmatprep.subr.bf16.mxu0 %v7529
      %7594 = vmatpush1.bf16.msra.mxu0 %v7528
      %7595 = vmatprep.subr.bf16.mxu0 %v7587
      %7596 = vmatpush1.bf16.msra.mxu0 %v7584
      %7597 = vmatprep.subr.bf16.mxu0 0
      %7598 = vmatpush1.bf16.msra.mxu0 0
      %7599 = vmatprep.subr.bf16.mxu0 0
      %7600 = vmatpush1.bf16.msra.mxu0 0
      %7601 = vmatprep.subr.bf16.mxu0 0
      %7602 = vmatpush1.bf16.msra.mxu0 0
      %7603 = vmatprep.subr.bf16.mxu0 0
      %7604 = vmatpush1.bf16.msra.mxu0 0
      %7605 = vmatprep.subr.bf16.mxu0 0
      %7606 = vmatpush1.bf16.msra.mxu0 0
      %7607 = vmatprep.subr.bf16.mxu0 0
      %7608 = vmatpush1.bf16.msra.mxu0 0
      %7609 = vmatprep.subr.bf16.mxu0 0
      %7610 = vmatpush1.bf16.msra.mxu0 0
      %7611 = vmatprep.subr.bf16.mxu0 0
      %7612 = vmatpush1.bf16.msra.mxu0 0
      %7613 = vmatprep.subr.bf16.mxu0 0
      %7614 = vmatpush1.bf16.msra.mxu0 0
      %7615 = vmatprep.subr.bf16.mxu0 0
      %7616 = vmatpush1.bf16.msra.mxu0 0
      %7617 = vmatprep.subr.bf16.mxu0 0
      %7618 = vmatpush1.bf16.msra.mxu0 0
      %7619 = vmatprep.subr.bf16.mxu0 0
      %7620 = vmatpush1.bf16.msra.mxu0 0
      %7621 = vmatprep.mubr.bf16.mxu0 0
      %7622 = vmatmul.mubr.bf16.gmra.mrb[0].mxu0 %v7569
      %v7623 = vpop.f32.mrb[0].mxu0
      %v7624 = vadd.f32 0.0, %v7623
      %v7625 = vpop.f32.mrb[0].mxu0
      %v7626 = vadd.f32 0.0, %v7625
      %v7627 = vpop.f32.mrb[0].mxu0
      %v7628 = vadd.f32 0.0, %v7627
      %v7629 = vpop.f32.mrb[0].mxu0
      %v7630 = vadd.f32 0.0, %v7629
      %7631 = vmatprep.mubr.bf16.mxu0 0
      %7632 = vmatmul.mubr.bf16.gmra.mrb[0].mxu0 %v7572
      %v7633 = vpop.f32.mrb[0].mxu0
      %v7634 = vadd.f32 0.0, %v7633
      %v7635 = vpop.f32.mrb[0].mxu0
      %v7636 = vadd.f32 0.0, %v7635
      %v7637 = vpop.f32.mrb[0].mxu0
      %v7638 = vadd.f32 0.0, %v7637
      %v7639 = vpop.f32.mrb[0].mxu0
      %v7640 = vadd.f32 0.0, %v7639
      %7641 = vmatprep.mubr.bf16.mxu0 0
      %7642 = vmatmul.mubr.bf16.gmra.mrb[0].mxu0 %v7575
      %v7643 = vpop.f32.mrb[0].mxu0
      %v7644 = vadd.f32 0.0, %v7643
      %v7645 = vpop.f32.mrb[0].mxu0
      %v7646 = vadd.f32 0.0, %v7645
      %v7647 = vpop.f32.mrb[0].mxu0
      %v7648 = vadd.f32 0.0, %v7647
      %v7649 = vpop.f32.mrb[0].mxu0
      %v7650 = vadd.f32 0.0, %v7649
      %7651 = vmatprep.mubr.bf16.mxu0 0
      %7652 = vmatmul.mubr.bf16.gmra.mrb[0].mxu0 %v7578
      %v7653 = vpop.f32.mrb[0].mxu0
      %v7654 = vadd.f32 0.0, %v7653
      %v7655 = vpop.f32.mrb[0].mxu0
      %v7656 = vadd.f32 0.0, %v7655
      %v7657 = vpop.f32.mrb[0].mxu0
      %v7658 = vadd.f32 0.0, %v7657
      %v7659 = vpop.f32.mrb[0].mxu0
      %v7660 = vadd.f32 0.0, %v7659
      %7661 = vmatprep.mubr.bf16.mxu0 0
      %7662 = vmatmul.mubr.bf16.gmra.mrb[0].mxu0 %v7581
      %v7663 = vpop.f32.mrb[0].mxu0
      %v7664 = vadd.f32 0.0, %v7663
      %v7665 = vpop.f32.mrb[0].mxu0
      %v7666 = vadd.f32 0.0, %v7665
      %v7667 = vpop.f32.mrb[0].mxu0
      %v7668 = vadd.f32 0.0, %v7667
      %v7669 = vpop.f32.mrb[0].mxu0
      %v7670 = vadd.f32 0.0, %v7669
      %7671 = vdwg.mxu0
      %v7672 = vpack.c.bf16 %v7628, %v7624
      %v7673 = vpack.c.bf16 %v7630, %v7626
      %v7674 = vpack.c.bf16 %v7638, %v7634
      %v7675 = vpack.c.bf16 %v7640, %v7636
      %v7676 = vpack.c.bf16 %v7648, %v7644
      %v7677 = vpack.c.bf16 %v7650, %v7646
      %v7678 = vpack.c.bf16 %v7658, %v7654
      %v7679 = vpack.c.bf16 %v7660, %v7656
      %v7680 = vpack.c.bf16 %v7668, %v7664
      %v7681 = vpack.c.bf16 %v7670, %v7666
      %v7682 = vld [vmem:[%s8] sm:$0xf]
      %v7683 = vld [vmem:[%s8 + $0x4] sm:$0xf]
      %v7684 = vld [vmem:[%s8 + $0x8] sm:$0xf]
      %v7685 = vld [vmem:[%s8 + $0xc] sm:$0xf]
      %v7686 = vld [vmem:[%s8 + $0x10] sm:$0xf]
      %v7687 = vld [vmem:[%s8 + $0x14] sm:$0xf]
      %v7688 = vld [vmem:[%s8 + $0x18] sm:$0xf]
      %v7689 = vld [vmem:[%s8 + $0x1c] sm:$0xf]
      %v7690 = vld [vmem:[%s8 + $0x20] sm:$0xf]
      %v7691 = vld [vmem:[%s8 + $0x24] sm:$0xf]
      %v7692 = vld [vmem:[%s8 + $0x28] sm:$0xf]
      %v7693 = vld [vmem:[%s8 + $0x2c] sm:$0xf]
      %v7694 = vld [vmem:[%s8 + $0x30] sm:$0xf]
      %v7695 = vld [vmem:[%s8 + $0x34] sm:$0xf]
      %v7696 = vld [vmem:[%s8 + $0x38] sm:$0xf]
      %v7697 = vld [vmem:[%s8 + $0x3c] sm:$0xf]
      %v7698 = vld [vmem:[%s8 + $0x40] sm:$0xf]
      %v7699 = vld [vmem:[%s8 + $0x44] sm:$0xf]
      %v7700 = vld [vmem:[%s8 + $0x48] sm:$0xf]
      %v7701 = vld [vmem:[%s8 + $0x4c] sm:$0xf]
      %v7702 = vld [vmem:[%s8 + $0x50] sm:$0xf]
      %v7703 = vld [vmem:[%s8 + $0x54] sm:$0xf]
      %v7704 = vld [vmem:[%s8 + $0x58] sm:$0xf]
      %v7705 = vld [vmem:[%s8 + $0x5c] sm:$0xf]
      %v7706 = vld [vmem:[%s8 + $0x60] sm:$0xf]
      %v7707 = vld [vmem:[%s8 + $0x64] sm:$0xf]
      %v7708 = vld [vmem:[%s8 + $0x68] sm:$0xf]
      %v7709 = vld [vmem:[%s8 + $0x6c] sm:$0xf]
      %s7710 = scalar_lea.vmem %s8, 112
      %v7711 = vld [vmem:[%s7710] sm:$0xf]
      %v7712 = vld [vmem:[%s7710 + $0x4] sm:$0xf]
      %v7713 = vld [vmem:[%s7710 + $0x8] sm:$0xf]
      %v7714 = vld [vmem:[%s7710 + $0xc] sm:$0xf]
      %v7715 = vld [vmem:[%s7710 + $0x10] sm:$0xf]
      %v7716 = vld [vmem:[%s7710 + $0x14] sm:$0xf]
      %v7717 = vld [vmem:[%s7710 + $0x18] sm:$0xf]
      %v7718 = vld [vmem:[%s7710 + $0x1c] sm:$0xf]
      %v7719 = vld [vmem:[%s7710 + $0x20] sm:$0xf]
      %v7720 = vld [vmem:[%s7710 + $0x24] sm:$0xf]
      %v7721 = vld [vmem:[%s7710 + $0x28] sm:$0xf]
      %v7722 = vld [vmem:[%s7710 + $0x2c] sm:$0xf]
      %v7723 = vld [vmem:[%s7710 + $0x30] sm:$0xf]
      %v7724 = vld [vmem:[%s7710 + $0x34] sm:$0xf]
      %v7725 = vld [vmem:[%s7710 + $0x38] sm:$0xf]
      %v7726 = vld [vmem:[%s7710 + $0x3c] sm:$0xf]
      %v7727 = vld [vmem:[%s7710 + $0x40] sm:$0xf]
      %v7728 = vld [vmem:[%s7710 + $0x44] sm:$0xf]
      %v7729 = vld [vmem:[%s7710 + $0x48] sm:$0xf]
      %v7730 = vld [vmem:[%s7710 + $0x4c] sm:$0xf]
      %v7731 = vld [vmem:[%s7710 + $0x50] sm:$0xf]
      %v7732 = vld [vmem:[%s7710 + $0x54] sm:$0xf]
      %v7733 = vld [vmem:[%s7710 + $0x58] sm:$0xf]
      %v7734 = vld [vmem:[%s7710 + $0x5c] sm:$0xf]
      %v7735 = vld [vmem:[%s7710 + $0x60] sm:$0xf]
      %v7736 = vld [vmem:[%s7710 + $0x64] sm:$0xf]
      %v7737 = vld [vmem:[%s7710 + $0x68] sm:$0xf]
      %v7738 = vld [vmem:[%s7710 + $0x6c] sm:$0xf]
      %v7767 = vunpack.c.l.b16 %v7711
      %v7768 = vunpack.c.l.b16 %v7712
      %v7769 = vunpack.c.l.b16 %v7713
      %v7770 = vunpack.c.l.b16 %v7714
      %v7771 = vunpack.c.l.b16 %v7715
      %v7772 = vunpack.c.l.b16 %v7716
      %v7773 = vunpack.c.l.b16 %v7717
      %v7774 = vunpack.c.l.b16 %v7718
      %v7775 = vunpack.c.l.b16 %v7719
      %v7776 = vunpack.c.l.b16 %v7720
      %v7777 = vunpack.c.l.b16 %v7721
      %v7778 = vunpack.c.l.b16 %v7722
      %v7779 = vunpack.c.l.b16 %v7723
      %v7780 = vunpack.c.l.b16 %v7724
      %v7781 = vunpack.c.l.b16 %v7725
      %v7782 = vunpack.c.l.b16 %v7726
      %v7783 = vunpack.c.l.b16 %v7727
      %v7784 = vunpack.c.l.b16 %v7728
      %v7785 = vunpack.c.l.b16 %v7729
      %v7786 = vunpack.c.l.b16 %v7730
      %v7787 = vunpack.c.l.b16 %v7731
      %v7788 = vunpack.c.l.b16 %v7732
      %v7789 = vunpack.c.l.b16 %v7733
      %v7790 = vunpack.c.l.b16 %v7734
      %v7791 = vunpack.c.l.b16 %v7735
      %v7792 = vunpack.c.l.b16 %v7736
      %v7793 = vunpack.c.l.b16 %v7737
      %v7794 = vunpack.c.l.b16 %v7738
      %v7795 = vpack.c.b16 %v7768, %v7767
      %v7796 = vpack.c.b16 %v7770, %v7769
      %v7797 = vpack.c.b16 %v7772, %v7771
      %v7798 = vpack.c.b16 %v7774, %v7773
      %v7799 = vpack.c.b16 %v7776, %v7775
      %v7800 = vpack.c.b16 %v7778, %v7777
      %v7801 = vpack.c.b16 %v7780, %v7779
      %v7802 = vpack.c.b16 %v7782, %v7781
      %v7803 = vpack.c.b16 %v7784, %v7783
      %v7804 = vpack.c.b16 %v7786, %v7785
      %v7805 = vpack.c.b16 %v7788, %v7787
      %v7806 = vpack.c.b16 %v7790, %v7789
      %v7807 = vpack.c.b16 %v7792, %v7791
      %v7808 = vpack.c.b16 %v7794, %v7793
      %vm7823 = vcmask 785408
      %v7825 = vsel %vm7823, %v7675, 0
      %7827 = vmatprep.subr.bf16.mxu0 0
      %7828 = vmatpush1.bf16.msra.mxu0 %v7795
      %7829 = vmatprep.subr.bf16.mxu0 0
      %7830 = vmatpush1.bf16.msra.mxu0 %v7796
      %7831 = vmatprep.subr.bf16.mxu0 0
      %7832 = vmatpush1.bf16.msra.mxu0 %v7797
      %7833 = vmatprep.subr.bf16.mxu0 0
      %7834 = vmatpush1.bf16.msra.mxu0 %v7798
      %7835 = vmatprep.subr.bf16.mxu0 0
      %7836 = vmatpush1.bf16.msra.mxu0 %v7799
      %7837 = vmatprep.subr.bf16.mxu0 0
      %7838 = vmatpush1.bf16.msra.mxu0 %v7800
      %7839 = vmatprep.subr.bf16.mxu0 0
      %7840 = vmatpush1.bf16.msra.mxu0 %v7801
      %7841 = vmatprep.subr.bf16.mxu0 0
      %7842 = vmatpush1.bf16.msra.mxu0 %v7802
      %7843 = vmatprep.subr.bf16.mxu0 0
      %7844 = vmatpush1.bf16.msra.mxu0 %v7803
      %7845 = vmatprep.subr.bf16.mxu0 0
      %7846 = vmatpush1.bf16.msra.mxu0 %v7804
      %7847 = vmatprep.subr.bf16.mxu0 0
      %7848 = vmatpush1.bf16.msra.mxu0 %v7805
      %7849 = vmatprep.subr.bf16.mxu0 0
      %7850 = vmatpush1.bf16.msra.mxu0 %v7806
      %7851 = vmatprep.subr.bf16.mxu0 0
      %7852 = vmatpush1.bf16.msra.mxu0 %v7807
      %7853 = vmatprep.subr.bf16.mxu0 0
      %7854 = vmatpush1.bf16.msra.mxu0 %v7808
      %7855 = vmatprep.subr.bf16.mxu0 0
      %7856 = vmatpush1.bf16.msra.mxu0 0
      %7857 = vmatprep.subr.bf16.mxu0 0
      %7858 = vmatpush1.bf16.msra.mxu0 0
      %7859 = vmatprep.mubr.bf16.mxu0 %v7825
      %7860 = vmatmul.mubr.bf16.gmra.mrb[0].mxu0 %v7674
      %v7861 = vpop.f32.mrb[0].mxu0
      %v7862 = vadd.f32 0.0, %v7861
      %v7863 = vpop.f32.mrb[0].mxu0
      %v7864 = vpop.f32.mrb[0].mxu0
      %v7865 = vadd.f32 0.0, %v7864
      %v7866 = vpop.f32.mrb[0].mxu0
      %7867 = vdwg.mxu0
      %v7896 = vunpack.c.l.b16 %v7682
      %v7897 = vunpack.c.l.b16 %v7683
      %v7898 = vunpack.c.l.b16 %v7684
      %v7899 = vunpack.c.l.b16 %v7685
      %v7900 = vunpack.c.l.b16 %v7686
      %v7901 = vunpack.c.l.b16 %v7687
      %v7902 = vunpack.c.l.b16 %v7688
      %v7903 = vunpack.c.l.b16 %v7689
      %v7904 = vunpack.c.l.b16 %v7690
      %v7905 = vunpack.c.l.b16 %v7691
      %v7906 = vunpack.c.l.b16 %v7692
      %v7907 = vunpack.c.l.b16 %v7693
      %v7908 = vunpack.c.l.b16 %v7694
      %v7909 = vunpack.c.l.b16 %v7695
      %v7910 = vunpack.c.l.b16 %v7696
      %v7911 = vunpack.c.l.b16 %v7697
      %v7912 = vunpack.c.l.b16 %v7698
      %v7913 = vunpack.c.l.b16 %v7699
      %v7914 = vunpack.c.l.b16 %v7700
      %v7915 = vunpack.c.l.b16 %v7701
      %v7916 = vunpack.c.l.b16 %v7702
      %v7917 = vunpack.c.l.b16 %v7703
      %v7918 = vunpack.c.l.b16 %v7704
      %v7919 = vunpack.c.l.b16 %v7705
      %v7920 = vunpack.c.l.b16 %v7706
      %v7921 = vunpack.c.l.b16 %v7707
      %v7922 = vunpack.c.l.b16 %v7708
      %v7923 = vunpack.c.l.b16 %v7709
      %v7924 = vpack.c.b16 %v7897, %v7896
      %v7925 = vpack.c.b16 %v7899, %v7898
      %v7926 = vpack.c.b16 %v7901, %v7900
      %v7927 = vpack.c.b16 %v7903, %v7902
      %v7928 = vpack.c.b16 %v7905, %v7904
      %v7929 = vpack.c.b16 %v7907, %v7906
      %v7930 = vpack.c.b16 %v7909, %v7908
      %v7931 = vpack.c.b16 %v7911, %v7910
      %v7932 = vpack.c.b16 %v7913, %v7912
      %v7933 = vpack.c.b16 %v7915, %v7914
      %v7934 = vpack.c.b16 %v7917, %v7916
      %v7935 = vpack.c.b16 %v7919, %v7918
      %v7936 = vpack.c.b16 %v7921, %v7920
      %v7937 = vpack.c.b16 %v7923, %v7922
      %v7953 = vsel %vm7823, %v7673, 0
      %7955 = vmatprep.subr.bf16.mxu0 0
      %7956 = vmatpush1.bf16.msra.mxu0 %v7924
      %7957 = vmatprep.subr.bf16.mxu0 0
      %7958 = vmatpush1.bf16.msra.mxu0 %v7925
      %7959 = vmatprep.subr.bf16.mxu0 0
      %7960 = vmatpush1.bf16.msra.mxu0 %v7926
      %7961 = vmatprep.subr.bf16.mxu0 0
      %7962 = vmatpush1.bf16.msra.mxu0 %v7927
      %7963 = vmatprep.subr.bf16.mxu0 0
      %7964 = vmatpush1.bf16.msra.mxu0 %v7928
      %7965 = vmatprep.subr.bf16.mxu0 0
      %7966 = vmatpush1.bf16.msra.mxu0 %v7929
      %7967 = vmatprep.subr.bf16.mxu0 0
      %7968 = vmatpush1.bf16.msra.mxu0 %v7930
      %7969 = vmatprep.subr.bf16.mxu0 0
      %7970 = vmatpush1.bf16.msra.mxu0 %v7931
      %7971 = vmatprep.subr.bf16.mxu0 0
      %7972 = vmatpush1.bf16.msra.mxu0 %v7932
      %7973 = vmatprep.subr.bf16.mxu0 0
      %7974 = vmatpush1.bf16.msra.mxu0 %v7933
      %7975 = vmatprep.subr.bf16.mxu0 0
      %7976 = vmatpush1.bf16.msra.mxu0 %v7934
      %7977 = vmatprep.subr.bf16.mxu0 0
      %7978 = vmatpush1.bf16.msra.mxu0 %v7935
      %7979 = vmatprep.subr.bf16.mxu0 0
      %7980 = vmatpush1.bf16.msra.mxu0 %v7936
      %7981 = vmatprep.subr.bf16.mxu0 0
      %7982 = vmatpush1.bf16.msra.mxu0 %v7937
      %7983 = vmatprep.subr.bf16.mxu0 0
      %7984 = vmatpush1.bf16.msra.mxu0 0
      %7985 = vmatprep.subr.bf16.mxu0 0
      %7986 = vmatpush1.bf16.msra.mxu0 0
      %7987 = vmatprep.mubr.bf16.mxu0 %v7953
      %7988 = vmatmul.mubr.bf16.gmra.mrb[0].mxu0 %v7672
      %v7989 = vpop.f32.mrb[0].mxu0
      %v7990 = vadd.f32 %v7862, %v7989
      %v7991 = vpop.f32.mrb[0].mxu0
      %v7992 = vpop.f32.mrb[0].mxu0
      %v7993 = vadd.f32 %v7865, %v7992
      %v7994 = vpop.f32.mrb[0].mxu0
      %7995 = vdwg.mxu0
      %s7996 = scalar_lea.vmem %s8, 224
      %v7997 = vld [vmem:[%s7996] sm:$0xf]
      %v7998 = vld [vmem:[%s7996 + $0x4] sm:$0xf]
      %v7999 = vld [vmem:[%s7996 + $0x8] sm:$0xf]
      %v8000 = vld [vmem:[%s7996 + $0xc] sm:$0xf]
      %v8001 = vld [vmem:[%s7996 + $0x10] sm:$0xf]
      %v8002 = vld [vmem:[%s7996 + $0x14] sm:$0xf]
      %v8003 = vld [vmem:[%s7996 + $0x18] sm:$0xf]
      %v8004 = vld [vmem:[%s7996 + $0x1c] sm:$0xf]
      %v8005 = vld [vmem:[%s7996 + $0x20] sm:$0xf]
      %v8006 = vld [vmem:[%s7996 + $0x24] sm:$0xf]
      %v8007 = vld [vmem:[%s7996 + $0x28] sm:$0xf]
      %v8008 = vld [vmem:[%s7996 + $0x2c] sm:$0xf]
      %v8009 = vld [vmem:[%s7996 + $0x30] sm:$0xf]
      %v8010 = vld [vmem:[%s7996 + $0x34] sm:$0xf]
      %v8011 = vld [vmem:[%s7996 + $0x38] sm:$0xf]
      %v8012 = vld [vmem:[%s7996 + $0x3c] sm:$0xf]
      %v8013 = vld [vmem:[%s7996 + $0x40] sm:$0xf]
      %v8014 = vld [vmem:[%s7996 + $0x44] sm:$0xf]
      %v8015 = vld [vmem:[%s7996 + $0x48] sm:$0xf]
      %v8016 = vld [vmem:[%s7996 + $0x4c] sm:$0xf]
      %v8017 = vld [vmem:[%s7996 + $0x50] sm:$0xf]
      %v8018 = vld [vmem:[%s7996 + $0x54] sm:$0xf]
      %v8019 = vld [vmem:[%s7996 + $0x58] sm:$0xf]
      %v8020 = vld [vmem:[%s7996 + $0x5c] sm:$0xf]
      %v8021 = vld [vmem:[%s7996 + $0x60] sm:$0xf]
      %v8022 = vld [vmem:[%s7996 + $0x64] sm:$0xf]
      %v8023 = vld [vmem:[%s7996 + $0x68] sm:$0xf]
      %v8024 = vld [vmem:[%s7996 + $0x6c] sm:$0xf]
      %v8053 = vunpack.c.l.b16 %v7997
      %v8054 = vunpack.c.l.b16 %v7998
      %v8055 = vunpack.c.l.b16 %v7999
      %v8056 = vunpack.c.l.b16 %v8000
      %v8057 = vunpack.c.l.b16 %v8001
      %v8058 = vunpack.c.l.b16 %v8002
      %v8059 = vunpack.c.l.b16 %v8003
      %v8060 = vunpack.c.l.b16 %v8004
      %v8061 = vunpack.c.l.b16 %v8005
      %v8062 = vunpack.c.l.b16 %v8006
      %v8063 = vunpack.c.l.b16 %v8007
      %v8064 = vunpack.c.l.b16 %v8008
      %v8065 = vunpack.c.l.b16 %v8009
      %v8066 = vunpack.c.l.b16 %v8010
      %v8067 = vunpack.c.l.b16 %v8011
      %v8068 = vunpack.c.l.b16 %v8012
      %v8069 = vunpack.c.l.b16 %v8013
      %v8070 = vunpack.c.l.b16 %v8014
      %v8071 = vunpack.c.l.b16 %v8015
      %v8072 = vunpack.c.l.b16 %v8016
      %v8073 = vunpack.c.l.b16 %v8017
      %v8074 = vunpack.c.l.b16 %v8018
      %v8075 = vunpack.c.l.b16 %v8019
      %v8076 = vunpack.c.l.b16 %v8020
      %v8077 = vunpack.c.l.b16 %v8021
      %v8078 = vunpack.c.l.b16 %v8022
      %v8079 = vunpack.c.l.b16 %v8023
      %v8080 = vunpack.c.l.b16 %v8024
      %v8081 = vpack.c.b16 %v8054, %v8053
      %v8082 = vpack.c.b16 %v8056, %v8055
      %v8083 = vpack.c.b16 %v8058, %v8057
      %v8084 = vpack.c.b16 %v8060, %v8059
      %v8085 = vpack.c.b16 %v8062, %v8061
      %v8086 = vpack.c.b16 %v8064, %v8063
      %v8087 = vpack.c.b16 %v8066, %v8065
      %v8088 = vpack.c.b16 %v8068, %v8067
      %v8089 = vpack.c.b16 %v8070, %v8069
      %v8090 = vpack.c.b16 %v8072, %v8071
      %v8091 = vpack.c.b16 %v8074, %v8073
      %v8092 = vpack.c.b16 %v8076, %v8075
      %v8093 = vpack.c.b16 %v8078, %v8077
      %v8094 = vpack.c.b16 %v8080, %v8079
      %v8110 = vsel %vm7823, %v7677, 0
      %8112 = vmatprep.subr.bf16.mxu0 0
      %8113 = vmatpush1.bf16.msra.mxu0 %v8081
      %8114 = vmatprep.subr.bf16.mxu0 0
      %8115 = vmatpush1.bf16.msra.mxu0 %v8082
      %8116 = vmatprep.subr.bf16.mxu0 0
      %8117 = vmatpush1.bf16.msra.mxu0 %v8083
      %8118 = vmatprep.subr.bf16.mxu0 0
      %8119 = vmatpush1.bf16.msra.mxu0 %v8084
      %8120 = vmatprep.subr.bf16.mxu0 0
      %8121 = vmatpush1.bf16.msra.mxu0 %v8085
      %8122 = vmatprep.subr.bf16.mxu0 0
      %8123 = vmatpush1.bf16.msra.mxu0 %v8086
      %8124 = vmatprep.subr.bf16.mxu0 0
      %8125 = vmatpush1.bf16.msra.mxu0 %v8087
      %8126 = vmatprep.subr.bf16.mxu0 0
      %8127 = vmatpush1.bf16.msra.mxu0 %v8088
      %8128 = vmatprep.subr.bf16.mxu0 0
      %8129 = vmatpush1.bf16.msra.mxu0 %v8089
      %8130 = vmatprep.subr.bf16.mxu0 0
      %8131 = vmatpush1.bf16.msra.mxu0 %v8090
      %8132 = vmatprep.subr.bf16.mxu0 0
      %8133 = vmatpush1.bf16.msra.mxu0 %v8091
      %8134 = vmatprep.subr.bf16.mxu0 0
      %8135 = vmatpush1.bf16.msra.mxu0 %v8092
      %8136 = vmatprep.subr.bf16.mxu0 0
      %8137 = vmatpush1.bf16.msra.mxu0 %v8093
      %8138 = vmatprep.subr.bf16.mxu0 0
      %8139 = vmatpush1.bf16.msra.mxu0 %v8094
      %8140 = vmatprep.subr.bf16.mxu0 0
      %8141 = vmatpush1.bf16.msra.mxu0 0
      %8142 = vmatprep.subr.bf16.mxu0 0
      %8143 = vmatpush1.bf16.msra.mxu0 0
      %8144 = vmatprep.mubr.bf16.mxu0 %v8110
      %8145 = vmatmul.mubr.bf16.gmra.mrb[0].mxu0 %v7676
      %v8146 = vpop.f32.mrb[0].mxu0
      %v8147 = vadd.f32 0.0, %v8146
      %v8148 = vpop.f32.mrb[0].mxu0
      %v8149 = vpop.f32.mrb[0].mxu0
      %v8150 = vadd.f32 0.0, %v8149
      %v8151 = vpop.f32.mrb[0].mxu0
      %8152 = vdwg.mxu0
      %v8153 = vadd.f32 %v7990, %v8147
      %v8154 = vadd.f32 %v7993, %v8150
      %s8155 = scalar_lea.vmem %s8, 336
      %v8156 = vld [vmem:[%s8155] sm:$0xf]
      %v8157 = vld [vmem:[%s8155 + $0x4] sm:$0xf]
      %v8158 = vld [vmem:[%s8155 + $0x8] sm:$0xf]
      %v8159 = vld [vmem:[%s8155 + $0xc] sm:$0xf]
      %v8160 = vld [vmem:[%s8155 + $0x10] sm:$0xf]
      %v8161 = vld [vmem:[%s8155 + $0x14] sm:$0xf]
      %v8162 = vld [vmem:[%s8155 + $0x18] sm:$0xf]
      %v8163 = vld [vmem:[%s8155 + $0x1c] sm:$0xf]
      %v8164 = vld [vmem:[%s8155 + $0x20] sm:$0xf]
      %v8165 = vld [vmem:[%s8155 + $0x24] sm:$0xf]
      %v8166 = vld [vmem:[%s8155 + $0x28] sm:$0xf]
      %v8167 = vld [vmem:[%s8155 + $0x2c] sm:$0xf]
      %v8168 = vld [vmem:[%s8155 + $0x30] sm:$0xf]
      %v8169 = vld [vmem:[%s8155 + $0x34] sm:$0xf]
      %v8170 = vld [vmem:[%s8155 + $0x38] sm:$0xf]
      %v8171 = vld [vmem:[%s8155 + $0x3c] sm:$0xf]
      %v8172 = vld [vmem:[%s8155 + $0x40] sm:$0xf]
      %v8173 = vld [vmem:[%s8155 + $0x44] sm:$0xf]
      %v8174 = vld [vmem:[%s8155 + $0x48] sm:$0xf]
      %v8175 = vld [vmem:[%s8155 + $0x4c] sm:$0xf]
      %v8176 = vld [vmem:[%s8155 + $0x50] sm:$0xf]
      %v8177 = vld [vmem:[%s8155 + $0x54] sm:$0xf]
      %v8178 = vld [vmem:[%s8155 + $0x58] sm:$0xf]
      %v8179 = vld [vmem:[%s8155 + $0x5c] sm:$0xf]
      %v8180 = vld [vmem:[%s8155 + $0x60] sm:$0xf]
      %v8181 = vld [vmem:[%s8155 + $0x64] sm:$0xf]
      %v8182 = vld [vmem:[%s8155 + $0x68] sm:$0xf]
      %v8183 = vld [vmem:[%s8155 + $0x6c] sm:$0xf]
      %v8212 = vunpack.c.l.b16 %v8156
      %v8213 = vunpack.c.l.b16 %v8157
      %v8214 = vunpack.c.l.b16 %v8158
      %v8215 = vunpack.c.l.b16 %v8159
      %v8216 = vunpack.c.l.b16 %v8160
      %v8217 = vunpack.c.l.b16 %v8161
      %v8218 = vunpack.c.l.b16 %v8162
      %v8219 = vunpack.c.l.b16 %v8163
      %v8220 = vunpack.c.l.b16 %v8164
      %v8221 = vunpack.c.l.b16 %v8165
      %v8222 = vunpack.c.l.b16 %v8166
      %v8223 = vunpack.c.l.b16 %v8167
      %v8224 = vunpack.c.l.b16 %v8168
      %v8225 = vunpack.c.l.b16 %v8169
      %v8226 = vunpack.c.l.b16 %v8170
      %v8227 = vunpack.c.l.b16 %v8171
      %v8228 = vunpack.c.l.b16 %v8172
      %v8229 = vunpack.c.l.b16 %v8173
      %v8230 = vunpack.c.l.b16 %v8174
      %v8231 = vunpack.c.l.b16 %v8175
      %v8232 = vunpack.c.l.b16 %v8176
      %v8233 = vunpack.c.l.b16 %v8177
      %v8234 = vunpack.c.l.b16 %v8178
      %v8235 = vunpack.c.l.b16 %v8179
      %v8236 = vunpack.c.l.b16 %v8180
      %v8237 = vunpack.c.l.b16 %v8181
      %v8238 = vunpack.c.l.b16 %v8182
      %v8239 = vunpack.c.l.b16 %v8183
      %v8240 = vpack.c.b16 %v8213, %v8212
      %v8241 = vpack.c.b16 %v8215, %v8214
      %v8242 = vpack.c.b16 %v8217, %v8216
      %v8243 = vpack.c.b16 %v8219, %v8218
      %v8244 = vpack.c.b16 %v8221, %v8220
      %v8245 = vpack.c.b16 %v8223, %v8222
      %v8246 = vpack.c.b16 %v8225, %v8224
      %v8247 = vpack.c.b16 %v8227, %v8226
      %v8248 = vpack.c.b16 %v8229, %v8228
      %v8249 = vpack.c.b16 %v8231, %v8230
      %v8250 = vpack.c.b16 %v8233, %v8232
      %v8251 = vpack.c.b16 %v8235, %v8234
      %v8252 = vpack.c.b16 %v8237, %v8236
      %v8253 = vpack.c.b16 %v8239, %v8238
      %v8269 = vsel %vm7823, %v7679, 0
      %8271 = vmatprep.subr.bf16.mxu0 0
      %8272 = vmatpush1.bf16.msra.mxu0 %v8240
      %8273 = vmatprep.subr.bf16.mxu0 0
      %8274 = vmatpush1.bf16.msra.mxu0 %v8241
      %8275 = vmatprep.subr.bf16.mxu0 0
      %8276 = vmatpush1.bf16.msra.mxu0 %v8242
      %8277 = vmatprep.subr.bf16.mxu0 0
      %8278 = vmatpush1.bf16.msra.mxu0 %v8243
      %8279 = vmatprep.subr.bf16.mxu0 0
      %8280 = vmatpush1.bf16.msra.mxu0 %v8244
      %8281 = vmatprep.subr.bf16.mxu0 0
      %8282 = vmatpush1.bf16.msra.mxu0 %v8245
      %8283 = vmatprep.subr.bf16.mxu0 0
      %8284 = vmatpush1.bf16.msra.mxu0 %v8246
      %8285 = vmatprep.subr.bf16.mxu0 0
      %8286 = vmatpush1.bf16.msra.mxu0 %v8247
      %8287 = vmatprep.subr.bf16.mxu0 0
      %8288 = vmatpush1.bf16.msra.mxu0 %v8248
      %8289 = vmatprep.subr.bf16.mxu0 0
      %8290 = vmatpush1.bf16.msra.mxu0 %v8249
      %8291 = vmatprep.subr.bf16.mxu0 0
      %8292 = vmatpush1.bf16.msra.mxu0 %v8250
      %8293 = vmatprep.subr.bf16.mxu0 0
      %8294 = vmatpush1.bf16.msra.mxu0 %v8251
      %8295 = vmatprep.subr.bf16.mxu0 0
      %8296 = vmatpush1.bf16.msra.mxu0 %v8252
      %8297 = vmatprep.subr.bf16.mxu0 0
      %8298 = vmatpush1.bf16.msra.mxu0 %v8253
      %8299 = vmatprep.subr.bf16.mxu0 0
      %8300 = vmatpush1.bf16.msra.mxu0 0
      %8301 = vmatprep.subr.bf16.mxu0 0
      %8302 = vmatpush1.bf16.msra.mxu0 0
      %8303 = vmatprep.mubr.bf16.mxu0 %v8269
      %8304 = vmatmul.mubr.bf16.gmra.mrb[0].mxu0 %v7678
      %v8305 = vpop.f32.mrb[0].mxu0
      %v8306 = vadd.f32 0.0, %v8305
      %v8307 = vpop.f32.mrb[0].mxu0
      %v8308 = vpop.f32.mrb[0].mxu0
      %v8309 = vadd.f32 0.0, %v8308
      %v8310 = vpop.f32.mrb[0].mxu0
      %8311 = vdwg.mxu0
      %v8312 = vadd.f32 %v8153, %v8306
      %v8313 = vadd.f32 %v8154, %v8309
      %s8314 = scalar_lea.vmem %s8, 448
      %v8315 = vld [vmem:[%s8314] sm:$0xf]
      %v8316 = vld [vmem:[%s8314 + $0x4] sm:$0xf]
      %v8317 = vld [vmem:[%s8314 + $0x8] sm:$0xf]
      %v8318 = vld [vmem:[%s8314 + $0xc] sm:$0xf]
      %v8319 = vld [vmem:[%s8314 + $0x10] sm:$0xf]
      %v8320 = vld [vmem:[%s8314 + $0x14] sm:$0xf]
      %v8321 = vld [vmem:[%s8314 + $0x18] sm:$0xf]
      %v8322 = vld [vmem:[%s8314 + $0x1c] sm:$0xf]
      %v8323 = vld [vmem:[%s8314 + $0x20] sm:$0xf]
      %v8324 = vld [vmem:[%s8314 + $0x24] sm:$0xf]
      %v8325 = vld [vmem:[%s8314 + $0x28] sm:$0xf]
      %v8326 = vld [vmem:[%s8314 + $0x2c] sm:$0xf]
      %v8327 = vld [vmem:[%s8314 + $0x30] sm:$0xf]
      %v8328 = vld [vmem:[%s8314 + $0x34] sm:$0xf]
      %v8329 = vld [vmem:[%s8314 + $0x38] sm:$0xf]
      %v8330 = vld [vmem:[%s8314 + $0x3c] sm:$0xf]
      %v8331 = vld [vmem:[%s8314 + $0x40] sm:$0xf]
      %v8332 = vld [vmem:[%s8314 + $0x44] sm:$0xf]
      %v8333 = vld [vmem:[%s8314 + $0x48] sm:$0xf]
      %v8334 = vld [vmem:[%s8314 + $0x4c] sm:$0xf]
      %v8335 = vld [vmem:[%s8314 + $0x50] sm:$0xf]
      %v8336 = vld [vmem:[%s8314 + $0x54] sm:$0xf]
      %v8337 = vld [vmem:[%s8314 + $0x58] sm:$0xf]
      %v8338 = vld [vmem:[%s8314 + $0x5c] sm:$0xf]
      %v8339 = vld [vmem:[%s8314 + $0x60] sm:$0xf]
      %v8340 = vld [vmem:[%s8314 + $0x64] sm:$0xf]
      %v8341 = vld [vmem:[%s8314 + $0x68] sm:$0xf]
      %v8342 = vld [vmem:[%s8314 + $0x6c] sm:$0xf]
      %v8371 = vunpack.c.l.b16 %v8315
      %v8372 = vunpack.c.l.b16 %v8316
      %v8373 = vunpack.c.l.b16 %v8317
      %v8374 = vunpack.c.l.b16 %v8318
      %v8375 = vunpack.c.l.b16 %v8319
      %v8376 = vunpack.c.l.b16 %v8320
      %v8377 = vunpack.c.l.b16 %v8321
      %v8378 = vunpack.c.l.b16 %v8322
      %v8379 = vunpack.c.l.b16 %v8323
      %v8380 = vunpack.c.l.b16 %v8324
      %v8381 = vunpack.c.l.b16 %v8325
      %v8382 = vunpack.c.l.b16 %v8326
      %v8383 = vunpack.c.l.b16 %v8327
      %v8384 = vunpack.c.l.b16 %v8328
      %v8385 = vunpack.c.l.b16 %v8329
      %v8386 = vunpack.c.l.b16 %v8330
      %v8387 = vunpack.c.l.b16 %v8331
      %v8388 = vunpack.c.l.b16 %v8332
      %v8389 = vunpack.c.l.b16 %v8333
      %v8390 = vunpack.c.l.b16 %v8334
      %v8391 = vunpack.c.l.b16 %v8335
      %v8392 = vunpack.c.l.b16 %v8336
      %v8393 = vunpack.c.l.b16 %v8337
      %v8394 = vunpack.c.l.b16 %v8338
      %v8395 = vunpack.c.l.b16 %v8339
      %v8396 = vunpack.c.l.b16 %v8340
      %v8397 = vunpack.c.l.b16 %v8341
      %v8398 = vunpack.c.l.b16 %v8342
      %v8399 = vpack.c.b16 %v8372, %v8371
      %v8400 = vpack.c.b16 %v8374, %v8373
      %v8401 = vpack.c.b16 %v8376, %v8375
      %v8402 = vpack.c.b16 %v8378, %v8377
      %v8403 = vpack.c.b16 %v8380, %v8379
      %v8404 = vpack.c.b16 %v8382, %v8381
      %v8405 = vpack.c.b16 %v8384, %v8383
      %v8406 = vpack.c.b16 %v8386, %v8385
      %v8407 = vpack.c.b16 %v8388, %v8387
      %v8408 = vpack.c.b16 %v8390, %v8389
      %v8409 = vpack.c.b16 %v8392, %v8391
      %v8410 = vpack.c.b16 %v8394, %v8393
      %v8411 = vpack.c.b16 %v8396, %v8395
      %v8412 = vpack.c.b16 %v8398, %v8397
      %v8428 = vsel %vm7823, %v7681, 0
      %8430 = vmatprep.subr.bf16.mxu0 0
      %8431 = vmatpush1.bf16.msra.mxu0 %v8399
      %8432 = vmatprep.subr.bf16.mxu0 0
      %8433 = vmatpush1.bf16.msra.mxu0 %v8400
      %8434 = vmatprep.subr.bf16.mxu0 0
      %8435 = vmatpush1.bf16.msra.mxu0 %v8401
      %8436 = vmatprep.subr.bf16.mxu0 0
      %8437 = vmatpush1.bf16.msra.mxu0 %v8402
      %8438 = vmatprep.subr.bf16.mxu0 0
      %8439 = vmatpush1.bf16.msra.mxu0 %v8403
      %8440 = vmatprep.subr.bf16.mxu0 0
      %8441 = vmatpush1.bf16.msra.mxu0 %v8404
      %8442 = vmatprep.subr.bf16.mxu0 0
      %8443 = vmatpush1.bf16.msra.mxu0 %v8405
      %8444 = vmatprep.subr.bf16.mxu0 0
      %8445 = vmatpush1.bf16.msra.mxu0 %v8406
      %8446 = vmatprep.subr.bf16.mxu0 0
      %8447 = vmatpush1.bf16.msra.mxu0 %v8407
      %8448 = vmatprep.subr.bf16.mxu0 0
      %8449 = vmatpush1.bf16.msra.mxu0 %v8408
      %8450 = vmatprep.subr.bf16.mxu0 0
      %8451 = vmatpush1.bf16.msra.mxu0 %v8409
      %8452 = vmatprep.subr.bf16.mxu0 0
      %8453 = vmatpush1.bf16.msra.mxu0 %v8410
      %8454 = vmatprep.subr.bf16.mxu0 0
      %8455 = vmatpush1.bf16.msra.mxu0 %v8411
      %8456 = vmatprep.subr.bf16.mxu0 0
      %8457 = vmatpush1.bf16.msra.mxu0 %v8412
      %8458 = vmatprep.subr.bf16.mxu0 0
      %8459 = vmatpush1.bf16.msra.mxu0 0
      %8460 = vmatprep.subr.bf16.mxu0 0
      %8461 = vmatpush1.bf16.msra.mxu0 0
      %8462 = vmatprep.mubr.bf16.mxu0 %v8428
      %8463 = vmatmul.mubr.bf16.gmra.mrb[0].mxu0 %v7680
      %v8464 = vpop.f32.mrb[0].mxu0
      %v8465 = vadd.f32 0.0, %v8464
      %v8466 = vpop.f32.mrb[0].mxu0
      %v8467 = vpop.f32.mrb[0].mxu0
      %v8468 = vadd.f32 0.0, %v8467
      %v8469 = vpop.f32.mrb[0].mxu0
      %8470 = vdwg.mxu0
      %v8471 = vadd.f32 %v8312, %v8465
      %v8472 = vadd.f32 %v8313, %v8468
      %v8473 = vld [vmem:[%s9] sm:$0x1]
      %v8475 = vlaneseq
      %v8476 = vshrl.u32 %v8475, 7
      %v8477 = vsub.s32 0, %v8476
      %v8478 = vrot.slane %v8473, %v8477
      %v8480 = vadd.f32 %v8471, %v8478
      %v8481 = vadd.f32 %v8472, %v8478
      %v8482 = vmax.f32 %v8480, 0.0
      %v8483 = vmax.f32 %v8481, 0.0
      %v8484 = vpack.c.bf16 %v8483, %v8482
      %v8485 = vld [vmem:[%s10] sm:$0xf]
      %v8487 = vsel %vm5008, %v8485, 0
      %8489 = vmatprep.subr.bf16.mxu0 0
      %8490 = vmatpush1.bf16.msra.mxu0 %v8484
      %8491 = vmatprep.subr.bf16.mxu0 0
      %8492 = vmatpush1.bf16.msra.mxu0 0
      %8493 = vmatprep.subr.bf16.mxu0 0
      %8494 = vmatpush1.bf16.msra.mxu0 0
      %8495 = vmatprep.subr.bf16.mxu0 0
      %8496 = vmatpush1.bf16.msra.mxu0 0
      %8497 = vmatprep.subr.bf16.mxu0 0
      %8498 = vmatpush1.bf16.msra.mxu0 0
      %8499 = vmatprep.subr.bf16.mxu0 0
      %8500 = vmatpush1.bf16.msra.mxu0 0
      %8501 = vmatprep.subr.bf16.mxu0 0
      %8502 = vmatpush1.bf16.msra.mxu0 0
      %8503 = vmatprep.subr.bf16.mxu0 0
      %8504 = vmatpush1.bf16.msra.mxu0 0
      %8505 = vmatprep.subr.bf16.mxu0 0
      %8506 = vmatpush1.bf16.msra.mxu0 0
      %8507 = vmatprep.subr.bf16.mxu0 0
      %8508 = vmatpush1.bf16.msra.mxu0 0
      %8509 = vmatprep.subr.bf16.mxu0 0
      %8510 = vmatpush1.bf16.msra.mxu0 0
      %8511 = vmatprep.subr.bf16.mxu0 0
      %8512 = vmatpush1.bf16.msra.mxu0 0
      %8513 = vmatprep.subr.bf16.mxu0 0
      %8514 = vmatpush1.bf16.msra.mxu0 0
      %8515 = vmatprep.subr.bf16.mxu0 0
      %8516 = vmatpush1.bf16.msra.mxu0 0
      %8517 = vmatprep.subr.bf16.mxu0 0
      %8518 = vmatpush1.bf16.msra.mxu0 0
      %8519 = vmatprep.subr.bf16.mxu0 0
      %8520 = vmatpush1.bf16.msra.mxu0 0
      %8521 = vmatprep.mubr.bf16.mxu0 0
      %8522 = vmatmul.mubr.bf16.gmra.mrb[0].mxu0 %v8487
      %v8523 = vpop.f32.mrb[0].mxu0
      %v8524 = vadd.f32 0.0, %v8523
      %v8525 = vpop.f32.mrb[0].mxu0
      %v8526 = vpop.f32.mrb[0].mxu0
      %v8527 = vpop.f32.mrb[0].mxu0
      %8528 = vdwg.mxu0
      %v8529 = vpack.c.bf16 %v8524, %v8524
      %v8530 = vld [vmem:[%s11] sm:$0xf]
      %v8531 = vld [vmem:[%s11 + $0x4] sm:$0xf]
      %v8532 = vld [vmem:[%s11 + $0x8] sm:$0xf]
      %v8533 = vld [vmem:[%s11 + $0xc] sm:$0xf]
      %v8534 = vld [vmem:[%s11 + $0x10] sm:$0xf]
      %v8535 = vld [vmem:[%s11 + $0x14] sm:$0xf]
      %v8536 = vld [vmem:[%s11 + $0x18] sm:$0xf]
      %v8537 = vld [vmem:[%s11 + $0x1c] sm:$0xf]
      %s8538 = scalar_lea.vmem %s10, 4
      %v8539 = vld [vmem:[%s8538] sm:$0xf]
      %v8541 = vsel %vm5008, %v8539, 0
      %8543 = vmatprep.subr.bf16.mxu0 0
      %8544 = vmatpush1.bf16.msra.mxu0 %v8484
      %8545 = vmatprep.subr.bf16.mxu0 0
      %8546 = vmatpush1.bf16.msra.mxu0 0
      %8547 = vmatprep.subr.bf16.mxu0 0
      %8548 = vmatpush1.bf16.msra.mxu0 0
      %8549 = vmatprep.subr.bf16.mxu0 0
      %8550 = vmatpush1.bf16.msra.mxu0 0
      %8551 = vmatprep.subr.bf16.mxu0 0
      %8552 = vmatpush1.bf16.msra.mxu0 0
      %8553 = vmatprep.subr.bf16.mxu0 0
      %8554 = vmatpush1.bf16.msra.mxu0 0
      %8555 = vmatprep.subr.bf16.mxu0 0
      %8556 = vmatpush1.bf16.msra.mxu0 0
      %8557 = vmatprep.subr.bf16.mxu0 0
      %8558 = vmatpush1.bf16.msra.mxu0 0
      %8559 = vmatprep.subr.bf16.mxu0 0
      %8560 = vmatpush1.bf16.msra.mxu0 0
      %8561 = vmatprep.subr.bf16.mxu0 0
      %8562 = vmatpush1.bf16.msra.mxu0 0
      %8563 = vmatprep.subr.bf16.mxu0 0
      %8564 = vmatpush1.bf16.msra.mxu0 0
      %8565 = vmatprep.subr.bf16.mxu0 0
      %8566 = vmatpush1.bf16.msra.mxu0 0
      %8567 = vmatprep.subr.bf16.mxu0 0
      %8568 = vmatpush1.bf16.msra.mxu0 0
      %8569 = vmatprep.subr.bf16.mxu0 0
      %8570 = vmatpush1.bf16.msra.mxu0 0
      %8571 = vmatprep.subr.bf16.mxu0 0
      %8572 = vmatpush1.bf16.msra.mxu0 0
      %8573 = vmatprep.subr.bf16.mxu0 0
      %8574 = vmatpush1.bf16.msra.mxu0 0
      %8575 = vmatprep.mubr.bf16.mxu0 0
      %8576 = vmatmul.mubr.bf16.gmra.mrb[0].mxu0 %v8541
      %v8577 = vpop.f32.mrb[0].mxu0
      %v8578 = vadd.f32 0.0, %v8577
      %v8579 = vpop.f32.mrb[0].mxu0
      %v8580 = vpop.f32.mrb[0].mxu0
      %v8581 = vpop.f32.mrb[0].mxu0
      %8582 = vdwg.mxu0
      %v8583 = vpack.c.bf16 %v8578, %v8578
      %s8584 = scalar_lea.vmem %s11, 32
      %v8585 = vld [vmem:[%s8584] sm:$0xf]
      %v8586 = vld [vmem:[%s8584 + $0x4] sm:$0xf]
      %v8587 = vld [vmem:[%s8584 + $0x8] sm:$0xf]
      %v8588 = vld [vmem:[%s8584 + $0xc] sm:$0xf]
      %v8589 = vld [vmem:[%s8584 + $0x10] sm:$0xf]
      %v8590 = vld [vmem:[%s8584 + $0x14] sm:$0xf]
      %v8591 = vld [vmem:[%s8584 + $0x18] sm:$0xf]
      %v8592 = vld [vmem:[%s8584 + $0x1c] sm:$0xf]
      %v8601 = vunpack.c.l.b16 %v8585
      %v8602 = vunpack.c.l.b16 %v8586
      %v8603 = vunpack.c.l.b16 %v8587
      %v8604 = vunpack.c.l.b16 %v8588
      %v8605 = vunpack.c.l.b16 %v8589
      %v8606 = vunpack.c.l.b16 %v8590
      %v8607 = vunpack.c.l.b16 %v8591
      %v8608 = vunpack.c.l.b16 %v8592
      %v8609 = vpack.c.b16 %v8602, %v8601
      %v8610 = vpack.c.b16 %v8604, %v8603
      %v8611 = vpack.c.b16 %v8606, %v8605
      %v8612 = vpack.c.b16 %v8608, %v8607
      %v8618 = vsel %vm1457, %v8583, 0
      %8620 = vmatprep.subr.bf16.mxu0 0
      %8621 = vmatpush1.bf16.msra.mxu0 %v8609
      %8622 = vmatprep.subr.bf16.mxu0 0
      %8623 = vmatpush1.bf16.msra.mxu0 %v8610
      %8624 = vmatprep.subr.bf16.mxu0 0
      %8625 = vmatpush1.bf16.msra.mxu0 %v8611
      %8626 = vmatprep.subr.bf16.mxu0 0
      %8627 = vmatpush1.bf16.msra.mxu0 %v8612
      %8628 = vmatprep.subr.bf16.mxu0 0
      %8629 = vmatpush1.bf16.msra.mxu0 0
      %8630 = vmatprep.subr.bf16.mxu0 0
      %8631 = vmatpush1.bf16.msra.mxu0 0
      %8632 = vmatprep.subr.bf16.mxu0 0
      %8633 = vmatpush1.bf16.msra.mxu0 0
      %8634 = vmatprep.subr.bf16.mxu0 0
      %8635 = vmatpush1.bf16.msra.mxu0 0
      %8636 = vmatprep.subr.bf16.mxu0 0
      %8637 = vmatpush1.bf16.msra.mxu0 0
      %8638 = vmatprep.subr.bf16.mxu0 0
      %8639 = vmatpush1.bf16.msra.mxu0 0
      %8640 = vmatprep.subr.bf16.mxu0 0
      %8641 = vmatpush1.bf16.msra.mxu0 0
      %8642 = vmatprep.subr.bf16.mxu0 0
      %8643 = vmatpush1.bf16.msra.mxu0 0
      %8644 = vmatprep.subr.bf16.mxu0 0
      %8645 = vmatpush1.bf16.msra.mxu0 0
      %8646 = vmatprep.subr.bf16.mxu0 0
      %8647 = vmatpush1.bf16.msra.mxu0 0
      %8648 = vmatprep.subr.bf16.mxu0 0
      %8649 = vmatpush1.bf16.msra.mxu0 0
      %8650 = vmatprep.subr.bf16.mxu0 0
      %8651 = vmatpush1.bf16.msra.mxu0 0
      %8652 = vmatprep.mubr.bf16.mxu0 0
      %8653 = vmatmul.mubr.bf16.gmra.mrb[0].mxu0 %v8618
      %v8654 = vpop.f32.mrb[0].mxu0
      %v8655 = vadd.f32 0.0, %v8654
      %v8656 = vpop.f32.mrb[0].mxu0
      %v8657 = vpop.f32.mrb[0].mxu0
      %v8658 = vpop.f32.mrb[0].mxu0
      %8659 = vdwg.mxu0
      %v8668 = vunpack.c.l.b16 %v8530
      %v8669 = vunpack.c.l.b16 %v8531
      %v8670 = vunpack.c.l.b16 %v8532
      %v8671 = vunpack.c.l.b16 %v8533
      %v8672 = vunpack.c.l.b16 %v8534
      %v8673 = vunpack.c.l.b16 %v8535
      %v8674 = vunpack.c.l.b16 %v8536
      %v8675 = vunpack.c.l.b16 %v8537
      %v8676 = vpack.c.b16 %v8669, %v8668
      %v8677 = vpack.c.b16 %v8671, %v8670
      %v8678 = vpack.c.b16 %v8673, %v8672
      %v8679 = vpack.c.b16 %v8675, %v8674
      %v8685 = vsel %vm1457, %v8529, 0
      %8687 = vmatprep.subr.bf16.mxu0 0
      %8688 = vmatpush1.bf16.msra.mxu0 %v8676
      %8689 = vmatprep.subr.bf16.mxu0 0
      %8690 = vmatpush1.bf16.msra.mxu0 %v8677
      %8691 = vmatprep.subr.bf16.mxu0 0
      %8692 = vmatpush1.bf16.msra.mxu0 %v8678
      %8693 = vmatprep.subr.bf16.mxu0 0
      %8694 = vmatpush1.bf16.msra.mxu0 %v8679
      %8695 = vmatprep.subr.bf16.mxu0 0
      %8696 = vmatpush1.bf16.msra.mxu0 0
      %8697 = vmatprep.subr.bf16.mxu0 0
      %8698 = vmatpush1.bf16.msra.mxu0 0
      %8699 = vmatprep.subr.bf16.mxu0 0
      %8700 = vmatpush1.bf16.msra.mxu0 0
      %8701 = vmatprep.subr.bf16.mxu0 0
      %8702 = vmatpush1.bf16.msra.mxu0 0
      %8703 = vmatprep.subr.bf16.mxu0 0
      %8704 = vmatpush1.bf16.msra.mxu0 0
      %8705 = vmatprep.subr.bf16.mxu0 0
      %8706 = vmatpush1.bf16.msra.mxu0 0
      %8707 = vmatprep.subr.bf16.mxu0 0
      %8708 = vmatpush1.bf16.msra.mxu0 0
      %8709 = vmatprep.subr.bf16.mxu0 0
      %8710 = vmatpush1.bf16.msra.mxu0 0
      %8711 = vmatprep.subr.bf16.mxu0 0
      %8712 = vmatpush1.bf16.msra.mxu0 0
      %8713 = vmatprep.subr.bf16.mxu0 0
      %8714 = vmatpush1.bf16.msra.mxu0 0
      %8715 = vmatprep.subr.bf16.mxu0 0
      %8716 = vmatpush1.bf16.msra.mxu0 0
      %8717 = vmatprep.subr.bf16.mxu0 0
      %8718 = vmatpush1.bf16.msra.mxu0 0
      %8719 = vmatprep.mubr.bf16.mxu0 0
      %8720 = vmatmul.mubr.bf16.gmra.mrb[0].mxu0 %v8685
      %v8721 = vpop.f32.mrb[0].mxu0
      %v8722 = vadd.f32 %v8655, %v8721
      %v8723 = vpop.f32.mrb[0].mxu0
      %v8724 = vpop.f32.mrb[0].mxu0
      %v8725 = vpop.f32.mrb[0].mxu0
      %8726 = vdwg.mxu0
      %v8727 = vld [vmem:[%s12] sm:$0x1]
      %v8729 = vlaneseq
      %v8730 = vshrl.u32 %v8729, 7
      %v8731 = vsub.s32 0, %v8730
      %v8732 = vrot.slane %v8727, %v8731
      %v8734 = vadd.f32 %v8722, %v8732
      %vm8735 = vcmask 31744
      %8736 = vst.msk [vmem:[%s440] sm:$0xff] %vm8735, %v8734
      %p8737 = scmp.lt.s32.totalorder %s24, 1
      %s8738 = scalar_select %p8737, %s24, 1
      %s8739 = smul.addr %s8738, 8
      %s8740 = scalar_lea.vmem %s13, %s8739
      // Predicated region
      $region73: #{forward.1} parent=71 // pred_check
        %p8741 = pneg %p320
      $region74: #{forward.1} parent=71 // pred_check_branch
        %8743 = sbr.rel (%p8741) target = $region76
      $region75: #{forward.1} parent=71 // pred_region
        _
      $region76: #{forward.1} parent=71 // pred_fallthru
        _
    $region72: #{forward.1} parent=5 // pred_fallthru
      _
    %p8744 = scmp.le.s32.totalorder 2, %s19
    // Predicated region
    $region77: #{forward.1} parent=5 // pred_check
      %p8745 = pneg %p8744
    $region78: #{forward.1} parent=5 // pred_check_branch
      %8747 = sbr.rel (%p8745) target = $region80
    $region79: #{forward.1} parent=5 // pred_region
      %s8748 = ssub.s32 %s19, 2
      // Predicated region
      $region81: #{forward.1} parent=79 // pred_check
        %p8749 = pneg %p326
      $region82: #{forward.1} parent=79 // pred_check_branch
        %8751 = sbr.rel (%p8749) target = $region84
      $region83: #{forward.1} parent=79 // pred_region
        %p8752 = scmp.lt.s32.totalorder %s25, 1
        %s8753 = scalar_select %p8752, %s25, 1
        %s8754 = smul.addr %s8753, 8
        %s8755 = scalar_lea.vmem %s13, %s8754
      $region84: #{forward.1} parent=79 // pred_fallthru
        _
    $region80: #{forward.1} parent=5 // pred_fallthru
      _
  $region6: #{forward.1} parent=0 // loop_footer
    %s23 = sadd.s32 1, %s19
  $region7: #{forward.1} parent=0 // loop_footer_branch
    %18 = sbr.rel target = $region3
  $region8: #{forward.1} parent=0 // loop_exit
    _

</llo_original>
